<compile_context>
chip_gen: v7x
topology: tpu7x:2x2x1
jax: 0.10.0
libtpu: 0.0.40
codegen_flags: <defaults>
</compile_context>

<pallas_src>
import math
import functools

import jax
import jax.numpy as jnp
from jax.experimental import pallas as pl
from jax.experimental.pallas import tpu as pltpu


NEG_INF = -1e9
LN_EPS = 1e-5


# ----------------------------------------------------------------------------
# In-kernel building blocks (pure functions on VMEM-resident values)
# ----------------------------------------------------------------------------
def _layernorm(x, g, b):
    mu = jnp.mean(x, axis=-1, keepdims=True)
    var = jnp.mean((x - mu) ** 2, axis=-1, keepdims=True)
    return (x - mu) * jax.lax.rsqrt(var + LN_EPS) * g + b


def _packed_attention(qt, kt, vt, causal):
    """All-heads attention with a single batched matmul pair + one softmax.

    qt: [H, Dh, Sq]  (per-head transposed queries, f32)
    kt: [H, Dh, Sk]  (per-head transposed keys,    f32)
    vt: [H, Dh, Sk]  (per-head transposed values,  f32)
    returns [Sq, H*Dh] f32
    """
    H, Dh, Sq = qt.shape
    Sk = kt.shape[-1]
    scale = 1.0 / math.sqrt(Dh)

    # [H, Dh, Sq] -> [H, Sq, Dh] (batched minor-dims transpose), cast once.
    qh = jnp.swapaxes(qt, 1, 2).astype(jnp.bfloat16)
    kt_bf = kt.astype(jnp.bfloat16)
    vt_bf = vt.astype(jnp.bfloat16)

    # scores for ALL heads in one batched NN matmul -> [H, Sq, Sk] (f32 acc).
    s = jnp.einsum("hqd,hdk->hqk", qh, kt_bf,
                   preferred_element_type=jnp.float32) * scale
    if causal:
        rows = jax.lax.broadcasted_iota(jnp.int32, (Sq, Sk), 0)
        cols = jax.lax.broadcasted_iota(jnp.int32, (Sq, Sk), 1)
        s = s + jnp.where(cols <= rows, 0.0, NEG_INF).astype(jnp.float32)

    # one softmax over all heads (stats in f32).
    m = jnp.max(s, axis=-1, keepdims=True)
    p = jnp.exp(s - m)
    denom = jnp.sum(p, axis=-1, keepdims=True)
    p = (p * pl.reciprocal(denom, approx=True)).astype(jnp.bfloat16)

    # out^T for ALL heads in one batched NT matmul -> [H, Dh, Sq].
    ot = jnp.einsum("hdk,hqk->hdq", vt_bf, p,
                    preferred_element_type=jnp.float32)
    # [H, Dh, Sq] -> [D, Sq] (layout-free major merge) -> [Sq, D].
    return ot.reshape(H * Dh, Sq).T


def _self_attention(x, wqkv, bqkv, wo, bo, n_heads, causal):
    S, D = x.shape
    Dh = D // n_heads
    qkv = jnp.dot(x.astype(jnp.bfloat16), wqkv,
                  preferred_element_type=jnp.float32) + bqkv       # [S, 3D]
    # [S, 3D] -> [3D, S] -> [3H, Dh, S] (transpose + free major split).
    qkvt = qkv.T.reshape(3 * n_heads, Dh, S)
    attn = _packed_attention(qkvt[:n_heads],
                             qkvt[n_heads:2 * n_heads],
                             qkvt[2 * n_heads:],
                             causal)                               # [S, D]
    return jnp.dot(attn.astype(jnp.bfloat16), wo,
                   preferred_element_type=jnp.float32) + bo


def _cross_attention(x, ctx_bf, wq, bq, wkv, bkv, wo, bo, n_heads):
    S, D = x.shape
    Dh = D // n_heads
    Ss = ctx_bf.shape[0]
    q = jnp.dot(x.astype(jnp.bfloat16), wq,
                preferred_element_type=jnp.float32) + bq           # [St, D]
    qt = q.T.reshape(n_heads, Dh, S)                               # [H, Dh, St]
    kv = jnp.dot(ctx_bf, wkv, preferred_element_type=jnp.float32) + bkv  # [Ss, 2D]
    kvt = kv.T.reshape(2 * n_heads, Dh, Ss)                        # [2H, Dh, Ss]
    attn = _packed_attention(qt, kvt[:n_heads], kvt[n_heads:],
                             causal=False)                         # [St, D]
    return jnp.dot(attn.astype(jnp.bfloat16), wo,
                   preferred_element_type=jnp.float32) + bo


def _ffn(x, w1, b1, w2, b2):
    h = jnp.dot(x.astype(jnp.bfloat16), w1,
                preferred_element_type=jnp.float32) + b1
    h = jnp.maximum(h, 0.0)
    return jnp.dot(h.astype(jnp.bfloat16), w2,
                   preferred_element_type=jnp.float32) + b2


# ----------------------------------------------------------------------------
# Fused per-STACK kernels.  grid = (batch, layer); the running activation is
# carried in a VMEM scratch across the "arbitrary" layer axis.
# ----------------------------------------------------------------------------
def _encoder_stack_kernel(x_ref,
                          wqkv_ref, bqkv_ref, wo_ref, bo_ref,
                          ln1g_ref, ln1b_ref,
                          w1_ref, b1_ref, w2_ref, b2_ref,
                          ln2g_ref, ln2b_ref,
                          o_ref, carry_ref, *, n_heads):
    layer = pl.program_id(1)
    n_layers = pl.num_programs(1)

    @pl.when(layer == 0)
    def _():
        carry_ref[...] = x_ref[0]

    x = carry_ref[...]                                             # [S, D] f32
    a = _self_attention(x, wqkv_ref[0], bqkv_ref[0], wo_ref[0], bo_ref[0],
                        n_heads=n_heads, causal=False)
    x = _layernorm(x + a, ln1g_ref[0], ln1b_ref[0])
    f = _ffn(x, w1_ref[0], b1_ref[0], w2_ref[0], b2_ref[0])
    x = _layernorm(x + f, ln2g_ref[0], ln2b_ref[0])
    carry_ref[...] = x

    @pl.when(layer == n_layers - 1)
    def _():
        o_ref[0] = x                                               # lane-dense [S, D] store


def _decoder_stack_kernel(x_ref, ctx_ref,
                          sa_wqkv_ref, sa_bqkv_ref, sa_wo_ref, sa_bo_ref,
                          ln1g_ref, ln1b_ref,
                          ca_wq_ref, ca_bq_ref, ca_wkv_ref, ca_bkv_ref,
                          ca_wo_ref, ca_bo_ref,
                          ln2g_ref, ln2b_ref,
                          w1_ref, b1_ref, w2_ref, b2_ref,
                          ln3g_ref, ln3b_ref,
                          o_ref, carry_ref, *, n_heads):
    layer = pl.program_id(1)
    n_layers = pl.num_programs(1)

    @pl.when(layer == 0)
    def _():
        carry_ref[...] = x_ref[0]

    ctx_bf = ctx_ref[0].astype(jnp.bfloat16)                       # cast once per step

    x = carry_ref[...]                                             # [St, D] f32
    a = _self_attention(x, sa_wqkv_ref[0], sa_bqkv_ref[0], sa_wo_ref[0],
                        sa_bo_ref[0], n_heads=n_heads, causal=True)
    x = _layernorm(x + a, ln1g_ref[0], ln1b_ref[0])
    c = _cross_attention(x, ctx_bf, ca_wq_ref[0], ca_bq_ref[0],
                         ca_wkv_ref[0], ca_bkv_ref[0],
                         ca_wo_ref[0], ca_bo_ref[0], n_heads=n_heads)
    x = _layernorm(x + c, ln2g_ref[0], ln2b_ref[0])
    f = _ffn(x, w1_ref[0], b1_ref[0], w2_ref[0], b2_ref[0])
    x = _layernorm(x + f, ln3g_ref[0], ln3b_ref[0])
    carry_ref[...] = x

    @pl.when(layer == n_layers - 1)
    def _():
        o_ref[0] = x


# ----------------------------------------------------------------------------
# pallas_call wrappers
# ----------------------------------------------------------------------------
def _act_spec(seq, d):
    # constant across the layer axis -> fetched once per batch row, resident.
    return pl.BlockSpec((1, seq, d), lambda b, l: (b, 0, 0))


def _layer_spec(r, c):
    # one layer slice of the stacked [L, r, c] parameter per inner grid step.
    return pl.BlockSpec((1, r, c), lambda b, l: (l, 0, 0))


def encoder_stack(x, p, n_heads):
    B, S, D = x.shape
    L = p["wqkv"].shape[0]
    Hf = p["w1"].shape[-1]
    kern = functools.partial(_encoder_stack_kernel, n_heads=n_heads)
    return pl.pallas_call(
        kern,
        out_shape=jax.ShapeDtypeStruct((B, S, D), jnp.float32),
        grid=(B, L),
        in_specs=[
            _act_spec(S, D),
            _layer_spec(D, 3 * D), _layer_spec(1, 3 * D),
            _layer_spec(D, D), _layer_spec(1, D),
            _layer_spec(1, D), _layer_spec(1, D),
            _layer_spec(D, Hf), _layer_spec(1, Hf),
            _layer_spec(Hf, D), _layer_spec(1, D),
            _layer_spec(1, D), _layer_spec(1, D),
        ],
        out_specs=_act_spec(S, D),
        scratch_shapes=[pltpu.VMEM((S, D), jnp.float32)],
        compiler_params=pltpu.CompilerParams(
            dimension_semantics=("parallel", "arbitrary")),
    )(x, p["wqkv"], p["bqkv"], p["wo"], p["bo"],
      p["ln1_g"], p["ln1_b"],
      p["w1"], p["b1"], p["w2"], p["b2"],
      p["ln2_g"], p["ln2_b"])


def decoder_stack(x, context, p, n_heads):
    B, St, D = x.shape
    Ss = context.shape[1]
    L = p["sa_wqkv"].shape[0]
    Hf = p["w1"].shape[-1]
    kern = functools.partial(_decoder_stack_kernel, n_heads=n_heads)
    return pl.pallas_call(
        kern,
        out_shape=jax.ShapeDtypeStruct((B, St, D), jnp.float32),
        grid=(B, L),
        in_specs=[
            _act_spec(St, D), _act_spec(Ss, D),
            _layer_spec(D, 3 * D), _layer_spec(1, 3 * D),
            _layer_spec(D, D), _layer_spec(1, D),
            _layer_spec(1, D), _layer_spec(1, D),
            _layer_spec(D, D), _layer_spec(1, D),
            _layer_spec(D, 2 * D), _layer_spec(1, 2 * D),
            _layer_spec(D, D), _layer_spec(1, D),
            _layer_spec(1, D), _layer_spec(1, D),
            _layer_spec(D, Hf), _layer_spec(1, Hf),
            _layer_spec(Hf, D), _layer_spec(1, D),
            _layer_spec(1, D), _layer_spec(1, D),
        ],
        out_specs=_act_spec(St, D),
        scratch_shapes=[pltpu.VMEM((St, D), jnp.float32)],
        compiler_params=pltpu.CompilerParams(
            dimension_semantics=("parallel", "arbitrary")),
    )(x, context,
      p["sa_wqkv"], p["sa_bqkv"], p["sa_wo"], p["sa_bo"],
      p["ln1_g"], p["ln1_b"],
      p["ca_wq"], p["ca_bq"], p["ca_wkv"], p["ca_bkv"],
      p["ca_wo"], p["ca_bo"],
      p["ln2_g"], p["ln2_b"],
      p["w1"], p["b1"], p["w2"], p["b2"],
      p["ln3_g"], p["ln3_b"])


# ----------------------------------------------------------------------------
# Model glue (embedding gather + positional encoding are plain JAX)
# ----------------------------------------------------------------------------
def sinusoidal_pe(max_length, d_model):
    pos = jnp.arange(max_length, dtype=jnp.float32)[:, None]
    div = jnp.exp(
        jnp.arange(0, d_model, 2, dtype=jnp.float32) * (-math.log(10000.0) / d_model)
    )
    pe = jnp.zeros((max_length, d_model), dtype=jnp.float32)
    pe = pe.at[:, 0::2].set(jnp.sin(pos * div))
    pe = pe.at[:, 1::2].set(jnp.cos(pos * div))
    return pe


def transformer_forward(params, src_ids, tgt_ids, n_heads):
    S_src = src_ids.shape[1]
    S_tgt = tgt_ids.shape[1]

    src = jnp.take(params["embedding"], src_ids, axis=0) + params["pe"][:S_src]
    tgt = jnp.take(params["embedding"], tgt_ids, axis=0) + params["pe"][:S_tgt]

    # TODO(synk): dropout (train-time stochastic op) is an eval-mode identity here.
    context = encoder_stack(src, params["encoder"], n_heads)
    out = decoder_stack(tgt, context, params["decoder"], n_heads)
    return out


# ----------------------------------------------------------------------------
# Deterministic parameter init: per-layer weights stacked along a leading L
# axis (matmul weights bf16, biases / LN params f32).
# ----------------------------------------------------------------------------
def init_params(key, vocab_size, d_model, num_layers, hidden_size, max_length):
    D, L, Hf = d_model, num_layers, hidden_size
    keys = jax.random.split(key, 12)

    def w(k, *shape):
        return (jax.random.normal(k, shape, jnp.float32) * 0.02).astype(jnp.bfloat16)

    def zeros(*shape):
        return jnp.zeros(shape, jnp.float32)

    def ones(*shape):
        return jnp.ones(shape, jnp.float32)

    encoder = {
        "wqkv": w(keys[1], L, D, 3 * D), "bqkv": zeros(L, 1, 3 * D),
        "wo": w(keys[2], L, D, D), "bo": zeros(L, 1, D),
        "ln1_g": ones(L, 1, D), "ln1_b": zeros(L, 1, D),
        "w1": w(keys[3], L, D, Hf), "b1": zeros(L, 1, Hf),
        "w2": w(keys[4], L, Hf, D), "b2": zeros(L, 1, D),
        "ln2_g": ones(L, 1, D), "ln2_b": zeros(L, 1, D),
    }
    decoder = {
        "sa_wqkv": w(keys[5], L, D, 3 * D), "sa_bqkv": zeros(L, 1, 3 * D),
        "sa_wo": w(keys[6], L, D, D), "sa_bo": zeros(L, 1, D),
        "ln1_g": ones(L, 1, D), "ln1_b": zeros(L, 1, D),
        "ca_wq": w(keys[7], L, D, D), "ca_bq": zeros(L, 1, D),
        "ca_wkv": w(keys[8], L, D, 2 * D), "ca_bkv": zeros(L, 1, 2 * D),
        "ca_wo": w(keys[9], L, D, D), "ca_bo": zeros(L, 1, D),
        "ln2_g": ones(L, 1, D), "ln2_b": zeros(L, 1, D),
        "w1": w(keys[10], L, D, Hf), "b1": zeros(L, 1, Hf),
        "w2": w(keys[11], L, Hf, D), "b2": zeros(L, 1, D),
        "ln3_g": ones(L, 1, D), "ln3_b": zeros(L, 1, D),
    }
    return {
        "embedding": jax.random.normal(keys[0], (vocab_size, d_model),
                                       jnp.float32) * 0.02,
        "pe": sinusoidal_pe(max_length, d_model),
        "encoder": encoder,
        "decoder": decoder,
    }


# ----------------------------------------------------------------------------
# Driver
# ----------------------------------------------------------------------------
if __name__ == "__main__":
    vocab_size = 100
    d_model = 128          # lane-dense activations (last dim == 128-lane vreg width)
    n_heads = 4
    num_layers = 2
    hidden_size = 256
    max_length = 64

    B, S_src, S_tgt = 2, 8, 8

    key = jax.random.PRNGKey(0)
    k_param, k_src, k_tgt = jax.random.split(key, 3)

    params = init_params(k_param, vocab_size, d_model, num_layers,
                         hidden_size, max_length)
    src_ids = jax.random.randint(k_src, (B, S_src), 0, vocab_size, dtype=jnp.int32)
    tgt_ids = jax.random.randint(k_tgt, (B, S_tgt), 0, vocab_size, dtype=jnp.int32)

    fwd = jax.jit(functools.partial(transformer_forward, n_heads=n_heads))
    out = jax.block_until_ready(fwd(params, src_ids, tgt_ids))

    assert out.shape == (B, S_tgt, d_model), out.shape
    assert bool(jnp.all(jnp.isfinite(out)))
    print("KERNEL_OK")
</pallas_src>

<mosaic_0001>
module attributes {stable_mosaic.version = 11 : i64} {
  func.func @_encoder_stack_kernel(%arg0: i32, %arg1: i32, %arg2: memref<1x8x128xf32, #tpu.memory_space<vmem>>, %arg3: memref<1x128x384xbf16, #tpu.memory_space<vmem>>, %arg4: memref<1x1x384xf32, #tpu.memory_space<vmem>>, %arg5: memref<1x128x128xbf16, #tpu.memory_space<vmem>>, %arg6: memref<1x1x128xf32, #tpu.memory_space<vmem>>, %arg7: memref<1x1x128xf32, #tpu.memory_space<vmem>>, %arg8: memref<1x1x128xf32, #tpu.memory_space<vmem>>, %arg9: memref<1x128x256xbf16, #tpu.memory_space<vmem>>, %arg10: memref<1x1x256xf32, #tpu.memory_space<vmem>>, %arg11: memref<1x256x128xbf16, #tpu.memory_space<vmem>>, %arg12: memref<1x1x128xf32, #tpu.memory_space<vmem>>, %arg13: memref<1x1x128xf32, #tpu.memory_space<vmem>>, %arg14: memref<1x1x128xf32, #tpu.memory_space<vmem>>, %arg15: memref<1x8x128xf32, #tpu.memory_space<vmem>>, %arg16: memref<8x128xf32, #tpu.memory_space<vmem>>) attributes {dimension_semantics = [#tpu.dimension_semantics<parallel>, #tpu.dimension_semantics<arbitrary>], iteration_bounds = array<i64: 2, 2>, scalar_prefetch = 0 : i64, scratch_operands = 1 : i64, tpu.core_type = #tpu.core_type<tc>, window_params = [{transform_indices = @transform_0, window_bounds = array<i64: 1, 8, 128>}, {transform_indices = @transform_1, window_bounds = array<i64: 1, 128, 384>}, {transform_indices = @transform_2, window_bounds = array<i64: 1, 1, 384>}, {transform_indices = @transform_3, window_bounds = array<i64: 1, 128, 128>}, {transform_indices = @transform_4, window_bounds = array<i64: 1, 1, 128>}, {transform_indices = @transform_5, window_bounds = array<i64: 1, 1, 128>}, {transform_indices = @transform_6, window_bounds = array<i64: 1, 1, 128>}, {transform_indices = @transform_7, window_bounds = array<i64: 1, 128, 256>}, {transform_indices = @transform_8, window_bounds = array<i64: 1, 1, 256>}, {transform_indices = @transform_9, window_bounds = array<i64: 1, 256, 128>}, {transform_indices = @transform_10, window_bounds = array<i64: 1, 1, 128>}, {transform_indices = @transform_11, window_bounds = array<i64: 1, 1, 128>}, {transform_indices = @transform_12, window_bounds = array<i64: 1, 1, 128>}, {transform_indices = @transform_13, window_bounds = array<i64: 1, 8, 128>}]} {
    %c0_i32 = arith.constant 0 : i32
    %0 = arith.cmpi eq, %arg1, %c0_i32 : i32
    %1 = arith.extui %0 : i1 to i32
    %c0_i32_0 = arith.constant 0 : i32
    %2 = arith.cmpi ne, %1, %c0_i32_0 : i32
    scf.if %2 {
      %c0_60 = arith.constant 0 : index
      %c0_61 = arith.constant 0 : index
      %c0_62 = arith.constant 0 : index
      %122 = vector.load %arg2[%c0_60, %c0_61, %c0_62] : memref<1x8x128xf32, #tpu.memory_space<vmem>>, vector<1x8x128xf32>
      %123 = vector.shape_cast %122 : vector<1x8x128xf32> to vector<8x128xf32>
      %c0_63 = arith.constant 0 : index
      %c0_64 = arith.constant 0 : index
      %124 = vector.load %arg16[%c0_63, %c0_64] : memref<8x128xf32, #tpu.memory_space<vmem>>, vector<8x128xf32>
      tpu.vector_store %arg16[%c0_63, %c0_64], %123 {strides = array<i32>} : memref<8x128xf32, #tpu.memory_space<vmem>>, vector<8x128xf32>,
    } else {
    }
    %c0 = arith.constant 0 : index
    %c0_1 = arith.constant 0 : index
    %3 = vector.load %arg16[%c0, %c0_1] : memref<8x128xf32, #tpu.memory_space<vmem>>, vector<8x128xf32>
    %c0_2 = arith.constant 0 : index
    %c0_3 = arith.constant 0 : index
    %c0_4 = arith.constant 0 : index
    %4 = vector.load %arg3[%c0_2, %c0_3, %c0_4] : memref<1x128x384xbf16, #tpu.memory_space<vmem>>, vector<1x128x384xbf16>
    %5 = vector.shape_cast %4 : vector<1x128x384xbf16> to vector<128x384xbf16>
    %c0_5 = arith.constant 0 : index
    %c0_6 = arith.constant 0 : index
    %c0_7 = arith.constant 0 : index
    %6 = vector.load %arg4[%c0_5, %c0_6, %c0_7] : memref<1x1x384xf32, #tpu.memory_space<vmem>>, vector<1x1x384xf32>
    %7 = vector.shape_cast %6 : vector<1x1x384xf32> to vector<1x384xf32>
    %c0_8 = arith.constant 0 : index
    %c0_9 = arith.constant 0 : index
    %c0_10 = arith.constant 0 : index
    %8 = vector.load %arg5[%c0_8, %c0_9, %c0_10] : memref<1x128x128xbf16, #tpu.memory_space<vmem>>, vector<1x128x128xbf16>
    %9 = vector.shape_cast %8 : vector<1x128x128xbf16> to vector<128x128xbf16>
    %c0_11 = arith.constant 0 : index
    %c0_12 = arith.constant 0 : index
    %c0_13 = arith.constant 0 : index
    %10 = vector.load %arg6[%c0_11, %c0_12, %c0_13] : memref<1x1x128xf32, #tpu.memory_space<vmem>>, vector<1x1x128xf32>
    %11 = vector.shape_cast %10 : vector<1x1x128xf32> to vector<1x128xf32>
    %12 = arith.truncf %3 : vector<8x128xf32> to vector<8x128xbf16>
    %cst = arith.constant dense<0.000000e+00> : vector<8x384xf32>
    %13 = tpu.matmul %12, %5, %cst {dimension_numbers = #tpu.dot_dimension_numbers<[1], [0], [0], [1], [0, 0, 1, 1], [], []>} : vector<8x128xbf16>, vector<128x384xbf16>, vector<8x384xf32> -> vector<8x384xf32>
    %14 = vector.broadcast %7 : vector<1x384xf32> to vector<8x384xf32>
    %15 = arith.addf %13, %14 : vector<8x384xf32>
    %16 = tpu.transpose %15, [1, 0] : vector<8x384xf32> -> vector<384x8xf32>
    %17 = vector.shape_cast %16 : vector<384x8xf32> to vector<12x32x8xf32>
    %18 = vector.extract_strided_slice %17 {offsets = [0, 0, 0], sizes = [4, 32, 8], strides = [1, 1, 1]} : vector<12x32x8xf32> to vector<4x32x8xf32>
    %19 = vector.extract_strided_slice %17 {offsets = [4, 0, 0], sizes = [4, 32, 8], strides = [1, 1, 1]} : vector<12x32x8xf32> to vector<4x32x8xf32>
    %20 = vector.extract_strided_slice %17 {offsets = [8, 0, 0], sizes = [4, 32, 8], strides = [1, 1, 1]} : vector<12x32x8xf32> to vector<4x32x8xf32>
    %21 = tpu.transpose %18, [0, 2, 1] : vector<4x32x8xf32> -> vector<4x8x32xf32>
    %22 = arith.truncf %21 : vector<4x8x32xf32> to vector<4x8x32xbf16>
    %23 = arith.truncf %19 : vector<4x32x8xf32> to vector<4x32x8xbf16>
    %24 = arith.truncf %20 : vector<4x32x8xf32> to vector<4x32x8xbf16>
    "tpu.trace_start"() <{level = 10 : i32, message = "hqd,hdk->hqk"}> : () -> ()
    %cst_14 = arith.constant dense<0.000000e+00> : vector<4x8x8xf32>
    %25 = tpu.matmul %22, %23, %cst_14 {dimension_numbers = #tpu.dot_dimension_numbers<[2], [1], [1], [2], [0, 0, 0, 1, 1, 2], [0], [0]>} : vector<4x8x32xbf16>, vector<4x32x8xbf16>, vector<4x8x8xf32> -> vector<4x8x8xf32>
    "tpu.trace_stop"() : () -> ()
    %cst_15 = arith.constant 0.176776692 : f32
    %26 = vector.broadcast %cst_15 : f32 to vector<4x8x8xf32>
    %27 = arith.mulf %25, %26 : vector<4x8x8xf32>
    %cst_16 = arith.constant dense<0xFF800000> : vector<4x8xf32>
    %28 = vector.multi_reduction <maximumf>, %27, %cst_16 [2] : vector<4x8x8xf32> to vector<4x8xf32>
    %29 = vector.shape_cast %28 : vector<4x8xf32> to vector<4x8x1xf32>
    %30 = vector.broadcast %29 : vector<4x8x1xf32> to vector<4x8x8xf32>
    %31 = arith.subf %27, %30 : vector<4x8x8xf32>
    %32 = math.exp %31 : vector<4x8x8xf32>
    %cst_17 = arith.constant dense<0.000000e+00> : vector<4x8xf32>
    %33 = vector.multi_reduction <add>, %32, %cst_17 [2] : vector<4x8x8xf32> to vector<4x8xf32>
    %34 = vector.shape_cast %33 : vector<4x8xf32> to vector<4x8x1xf32>
    %35 = tpu.reciprocal %34 {approx = true} : vector<4x8x1xf32> -> vector<4x8x1xf32>
    %36 = vector.broadcast %35 : vector<4x8x1xf32> to vector<4x8x8xf32>
    %37 = arith.mulf %32, %36 : vector<4x8x8xf32>
    %38 = arith.truncf %37 : vector<4x8x8xf32> to vector<4x8x8xbf16>
    "tpu.trace_start"() <{level = 10 : i32, message = "hdk,hqk->hdq"}> : () -> ()
    %cst_18 = arith.constant dense<0.000000e+00> : vector<4x32x8xf32>
    %39 = tpu.matmul %24, %38, %cst_18 {dimension_numbers = #tpu.dot_dimension_numbers<[2], [2], [1], [1], [0, 0, 0, 1, 1, 1], [0], [0]>} : vector<4x32x8xbf16>, vector<4x8x8xbf16>, vector<4x32x8xf32> -> vector<4x32x8xf32>
    "tpu.trace_stop"() : () -> ()
    %40 = vector.shape_cast %39 : vector<4x32x8xf32> to vector<128x8xf32>
    %41 = tpu.transpose %40, [1, 0] : vector<128x8xf32> -> vector<8x128xf32>
    %42 = arith.truncf %41 : vector<8x128xf32> to vector<8x128xbf16>
    %cst_19 = arith.constant dense<0.000000e+00> : vector<8x128xf32>
    %43 = tpu.matmul %42, %9, %cst_19 {dimension_numbers = #tpu.dot_dimension_numbers<[1], [0], [0], [1], [0, 0, 1, 1], [], []>} : vector<8x128xbf16>, vector<128x128xbf16>, vector<8x128xf32> -> vector<8x128xf32>
    %44 = vector.broadcast %11 : vector<1x128xf32> to vector<8x128xf32>
    %45 = arith.addf %43, %44 : vector<8x128xf32>
    %46 = arith.addf %3, %45 : vector<8x128xf32>
    %c0_20 = arith.constant 0 : index
    %c0_21 = arith.constant 0 : index
    %c0_22 = arith.constant 0 : index
    %47 = vector.load %arg7[%c0_20, %c0_21, %c0_22] : memref<1x1x128xf32, #tpu.memory_space<vmem>>, vector<1x1x128xf32>
    %48 = vector.shape_cast %47 : vector<1x1x128xf32> to vector<1x128xf32>
    %c0_23 = arith.constant 0 : index
    %c0_24 = arith.constant 0 : index
    %c0_25 = arith.constant 0 : index
    %49 = vector.load %arg8[%c0_23, %c0_24, %c0_25] : memref<1x1x128xf32, #tpu.memory_space<vmem>>, vector<1x1x128xf32>
    %50 = vector.shape_cast %49 : vector<1x1x128xf32> to vector<1x128xf32>
    %cst_26 = arith.constant dense<0.000000e+00> : vector<8xf32>
    %51 = vector.multi_reduction <add>, %46, %cst_26 [1] : vector<8x128xf32> to vector<8xf32>
    %52 = vector.shape_cast %51 : vector<8xf32> to vector<8x1xf32>
    %cst_27 = arith.constant 1.280000e+02 : f32
    %53 = vector.broadcast %cst_27 : f32 to vector<8x1xf32>
    %54 = arith.divf %52, %53 : vector<8x1xf32>
    %55 = vector.broadcast %54 : vector<8x1xf32> to vector<8x128xf32>
    %56 = arith.subf %46, %55 : vector<8x128xf32>
    %57 = arith.mulf %56, %56 : vector<8x128xf32>
    %cst_28 = arith.constant dense<0.000000e+00> : vector<8xf32>
    %58 = vector.multi_reduction <add>, %57, %cst_28 [1] : vector<8x128xf32> to vector<8xf32>
    %59 = vector.shape_cast %58 : vector<8xf32> to vector<8x1xf32>
    %cst_29 = arith.constant 1.280000e+02 : f32
    %60 = vector.broadcast %cst_29 : f32 to vector<8x1xf32>
    %61 = arith.divf %59, %60 : vector<8x1xf32>
    %62 = vector.broadcast %54 : vector<8x1xf32> to vector<8x128xf32>
    %63 = arith.subf %46, %62 : vector<8x128xf32>
    %cst_30 = arith.constant 9.99999974E-6 : f32
    %64 = vector.broadcast %cst_30 : f32 to vector<8x1xf32>
    %65 = arith.addf %61, %64 : vector<8x1xf32>
    %66 = math.rsqrt %65 : vector<8x1xf32>
    %67 = vector.broadcast %66 : vector<8x1xf32> to vector<8x128xf32>
    %68 = arith.mulf %63, %67 : vector<8x128xf32>
    %69 = vector.broadcast %48 : vector<1x128xf32> to vector<8x128xf32>
    %70 = arith.mulf %68, %69 : vector<8x128xf32>
    %71 = vector.broadcast %50 : vector<1x128xf32> to vector<8x128xf32>
    %72 = arith.addf %70, %71 : vector<8x128xf32>
    %c0_31 = arith.constant 0 : index
    %c0_32 = arith.constant 0 : index
    %c0_33 = arith.constant 0 : index
    %73 = vector.load %arg9[%c0_31, %c0_32, %c0_33] : memref<1x128x256xbf16, #tpu.memory_space<vmem>>, vector<1x128x256xbf16>
    %74 = vector.shape_cast %73 : vector<1x128x256xbf16> to vector<128x256xbf16>
    %c0_34 = arith.constant 0 : index
    %c0_35 = arith.constant 0 : index
    %c0_36 = arith.constant 0 : index
    %75 = vector.load %arg10[%c0_34, %c0_35, %c0_36] : memref<1x1x256xf32, #tpu.memory_space<vmem>>, vector<1x1x256xf32>
    %76 = vector.shape_cast %75 : vector<1x1x256xf32> to vector<1x256xf32>
    %c0_37 = arith.constant 0 : index
    %c0_38 = arith.constant 0 : index
    %c0_39 = arith.constant 0 : index
    %77 = vector.load %arg11[%c0_37, %c0_38, %c0_39] : memref<1x256x128xbf16, #tpu.memory_space<vmem>>, vector<1x256x128xbf16>
    %78 = vector.shape_cast %77 : vector<1x256x128xbf16> to vector<256x128xbf16>
    %c0_40 = arith.constant 0 : index
    %c0_41 = arith.constant 0 : index
    %c0_42 = arith.constant 0 : index
    %79 = vector.load %arg12[%c0_40, %c0_41, %c0_42] : memref<1x1x128xf32, #tpu.memory_space<vmem>>, vector<1x1x128xf32>
    %80 = vector.shape_cast %79 : vector<1x1x128xf32> to vector<1x128xf32>
    %81 = arith.truncf %72 : vector<8x128xf32> to vector<8x128xbf16>
    %cst_43 = arith.constant dense<0.000000e+00> : vector<8x256xf32>
    %82 = tpu.matmul %81, %74, %cst_43 {dimension_numbers = #tpu.dot_dimension_numbers<[1], [0], [0], [1], [0, 0, 1, 1], [], []>} : vector<8x128xbf16>, vector<128x256xbf16>, vector<8x256xf32> -> vector<8x256xf32>
    %83 = vector.broadcast %76 : vector<1x256xf32> to vector<8x256xf32>
    %84 = arith.addf %82, %83 : vector<8x256xf32>
    %cst_44 = arith.constant 0.000000e+00 : f32
    %85 = vector.broadcast %cst_44 : f32 to vector<8x256xf32>
    %86 = arith.maximumf %84, %85 : vector<8x256xf32>
    %87 = arith.truncf %86 : vector<8x256xf32> to vector<8x256xbf16>
    %cst_45 = arith.constant dense<0.000000e+00> : vector<8x128xf32>
    %88 = tpu.matmul %87, %78, %cst_45 {dimension_numbers = #tpu.dot_dimension_numbers<[1], [0], [0], [1], [0, 0, 1, 1], [], []>} : vector<8x256xbf16>, vector<256x128xbf16>, vector<8x128xf32> -> vector<8x128xf32>
    %89 = vector.broadcast %80 : vector<1x128xf32> to vector<8x128xf32>
    %90 = arith.addf %88, %89 : vector<8x128xf32>
    %91 = arith.addf %72, %90 : vector<8x128xf32>
    %c0_46 = arith.constant 0 : index
    %c0_47 = arith.constant 0 : index
    %c0_48 = arith.constant 0 : index
    %92 = vector.load %arg13[%c0_46, %c0_47, %c0_48] : memref<1x1x128xf32, #tpu.memory_space<vmem>>, vector<1x1x128xf32>
    %93 = vector.shape_cast %92 : vector<1x1x128xf32> to vector<1x128xf32>
    %c0_49 = arith.constant 0 : index
    %c0_50 = arith.constant 0 : index
    %c0_51 = arith.constant 0 : index
    %94 = vector.load %arg14[%c0_49, %c0_50, %c0_51] : memref<1x1x128xf32, #tpu.memory_space<vmem>>, vector<1x1x128xf32>
    %95 = vector.shape_cast %94 : vector<1x1x128xf32> to vector<1x128xf32>
    %cst_52 = arith.constant dense<0.000000e+00> : vector<8xf32>
    %96 = vector.multi_reduction <add>, %91, %cst_52 [1] : vector<8x128xf32> to vector<8xf32>
    %97 = vector.shape_cast %96 : vector<8xf32> to vector<8x1xf32>
    %cst_53 = arith.constant 1.280000e+02 : f32
    %98 = vector.broadcast %cst_53 : f32 to vector<8x1xf32>
    %99 = arith.divf %97, %98 : vector<8x1xf32>
    %100 = vector.broadcast %99 : vector<8x1xf32> to vector<8x128xf32>
    %101 = arith.subf %91, %100 : vector<8x128xf32>
    %102 = arith.mulf %101, %101 : vector<8x128xf32>
    %cst_54 = arith.constant dense<0.000000e+00> : vector<8xf32>
    %103 = vector.multi_reduction <add>, %102, %cst_54 [1] : vector<8x128xf32> to vector<8xf32>
    %104 = vector.shape_cast %103 : vector<8xf32> to vector<8x1xf32>
    %cst_55 = arith.constant 1.280000e+02 : f32
    %105 = vector.broadcast %cst_55 : f32 to vector<8x1xf32>
    %106 = arith.divf %104, %105 : vector<8x1xf32>
    %107 = vector.broadcast %99 : vector<8x1xf32> to vector<8x128xf32>
    %108 = arith.subf %91, %107 : vector<8x128xf32>
    %cst_56 = arith.constant 9.99999974E-6 : f32
    %109 = vector.broadcast %cst_56 : f32 to vector<8x1xf32>
    %110 = arith.addf %106, %109 : vector<8x1xf32>
    %111 = math.rsqrt %110 : vector<8x1xf32>
    %112 = vector.broadcast %111 : vector<8x1xf32> to vector<8x128xf32>
    %113 = arith.mulf %108, %112 : vector<8x128xf32>
    %114 = vector.broadcast %93 : vector<1x128xf32> to vector<8x128xf32>
    %115 = arith.mulf %113, %114 : vector<8x128xf32>
    %116 = vector.broadcast %95 : vector<1x128xf32> to vector<8x128xf32>
    %117 = arith.addf %115, %116 : vector<8x128xf32>
    %c0_57 = arith.constant 0 : index
    %c0_58 = arith.constant 0 : index
    %118 = vector.load %arg16[%c0_57, %c0_58] : memref<8x128xf32, #tpu.memory_space<vmem>>, vector<8x128xf32>
    tpu.vector_store %arg16[%c0_57, %c0_58], %117 {strides = array<i32>} : memref<8x128xf32, #tpu.memory_space<vmem>>, vector<8x128xf32>,
    %c1_i32 = arith.constant 1 : i32
    %119 = arith.cmpi eq, %arg1, %c1_i32 : i32
    %120 = arith.extui %119 : i1 to i32
    %c0_i32_59 = arith.constant 0 : i32
    %121 = arith.cmpi ne, %120, %c0_i32_59 : i32
    scf.if %121 {
      %c0_60 = arith.constant 0 : index
      %c0_61 = arith.constant 0 : index
      %c0_62 = arith.constant 0 : index
      %122 = vector.load %arg15[%c0_60, %c0_61, %c0_62] : memref<1x8x128xf32, #tpu.memory_space<vmem>>, vector<1x8x128xf32>
      %123 = vector.shape_cast %122 : vector<1x8x128xf32> to vector<8x128xf32>
      %124 = vector.shape_cast %117 : vector<8x128xf32> to vector<1x8x128xf32>
      tpu.vector_store %arg15[%c0_60, %c0_61, %c0_62], %124 {strides = array<i32>} : memref<1x8x128xf32, #tpu.memory_space<vmem>>, vector<1x8x128xf32>,
    } else {
    }
    return
  }
  func.func @transform_0(%arg0: i32, %arg1: i32) -> (i32, i32, i32) {
    %c0_i32 = arith.constant 0 : i32
    %c0_i32_0 = arith.constant 0 : i32
    %c0_i32_1 = arith.constant 0 : i32
    return %arg0, %c0_i32, %c0_i32_0 : i32, i32, i32
  }
  func.func @transform_1(%arg0: i32, %arg1: i32) -> (i32, i32, i32) {
    %c0_i32 = arith.constant 0 : i32
    %c0_i32_0 = arith.constant 0 : i32
    %c0_i32_1 = arith.constant 0 : i32
    return %arg1, %c0_i32, %c0_i32_0 : i32, i32, i32
  }
  func.func @transform_2(%arg0: i32, %arg1: i32) -> (i32, i32, i32) {
    %c0_i32 = arith.constant 0 : i32
    %c0_i32_0 = arith.constant 0 : i32
    %c0_i32_1 = arith.constant 0 : i32
    return %arg1, %c0_i32, %c0_i32_0 : i32, i32, i32
  }
  func.func @transform_3(%arg0: i32, %arg1: i32) -> (i32, i32, i32) {
    %c0_i32 = arith.constant 0 : i32
    %c0_i32_0 = arith.constant 0 : i32
    %c0_i32_1 = arith.constant 0 : i32
    return %arg1, %c0_i32, %c0_i32_0 : i32, i32, i32
  }
  func.func @transform_4(%arg0: i32, %arg1: i32) -> (i32, i32, i32) {
    %c0_i32 = arith.constant 0 : i32
    %c0_i32_0 = arith.constant 0 : i32
    %c0_i32_1 = arith.constant 0 : i32
    return %arg1, %c0_i32, %c0_i32_0 : i32, i32, i32
  }
  func.func @transform_5(%arg0: i32, %arg1: i32) -> (i32, i32, i32) {
    %c0_i32 = arith.constant 0 : i32
    %c0_i32_0 = arith.constant 0 : i32
    %c0_i32_1 = arith.constant 0 : i32
    return %arg1, %c0_i32, %c0_i32_0 : i32, i32, i32
  }
  func.func @transform_6(%arg0: i32, %arg1: i32) -> (i32, i32, i32) {
    %c0_i32 = arith.constant 0 : i32
    %c0_i32_0 = arith.constant 0 : i32
    %c0_i32_1 = arith.constant 0 : i32
    return %arg1, %c0_i32, %c0_i32_0 : i32, i32, i32
  }
  func.func @transform_7(%arg0: i32, %arg1: i32) -> (i32, i32, i32) {
    %c0_i32 = arith.constant 0 : i32
    %c0_i32_0 = arith.constant 0 : i32
    %c0_i32_1 = arith.constant 0 : i32
    return %arg1, %c0_i32, %c0_i32_0 : i32, i32, i32
  }
  func.func @transform_8(%arg0: i32, %arg1: i32) -> (i32, i32, i32) {
    %c0_i32 = arith.constant 0 : i32
    %c0_i32_0 = arith.constant 0 : i32
    %c0_i32_1 = arith.constant 0 : i32
    return %arg1, %c0_i32, %c0_i32_0 : i32, i32, i32
  }
  func.func @transform_9(%arg0: i32, %arg1: i32) -> (i32, i32, i32) {
    %c0_i32 = arith.constant 0 : i32
    %c0_i32_0 = arith.constant 0 : i32
    %c0_i32_1 = arith.constant 0 : i32
    return %arg1, %c0_i32, %c0_i32_0 : i32, i32, i32
  }
  func.func @transform_10(%arg0: i32, %arg1: i32) -> (i32, i32, i32) {
    %c0_i32 = arith.constant 0 : i32
    %c0_i32_0 = arith.constant 0 : i32
    %c0_i32_1 = arith.constant 0 : i32
    return %arg1, %c0_i32, %c0_i32_0 : i32, i32, i32
  }
  func.func @transform_11(%arg0: i32, %arg1: i32) -> (i32, i32, i32) {
    %c0_i32 = arith.constant 0 : i32
    %c0_i32_0 = arith.constant 0 : i32
    %c0_i32_1 = arith.constant 0 : i32
    return %arg1, %c0_i32, %c0_i32_0 : i32, i32, i32
  }
  func.func @transform_12(%arg0: i32, %arg1: i32) -> (i32, i32, i32) {
    %c0_i32 = arith.constant 0 : i32
    %c0_i32_0 = arith.constant 0 : i32
    %c0_i32_1 = arith.constant 0 : i32
    return %arg1, %c0_i32, %c0_i32_0 : i32, i32, i32
  }
  func.func @transform_13(%arg0: i32, %arg1: i32) -> (i32, i32, i32) {
    %c0_i32 = arith.constant 0 : i32
    %c0_i32_0 = arith.constant 0 : i32
    %c0_i32_1 = arith.constant 0 : i32
    return %arg0, %c0_i32, %c0_i32_0 : i32, i32, i32
  }
}

module attributes {stable_mosaic.version = 11 : i64} {
  func.func @_decoder_stack_kernel(%arg0: i32, %arg1: i32, %arg2: memref<1x8x128xf32, #tpu.memory_space<vmem>>, %arg3: memref<1x8x128xf32, #tpu.memory_space<vmem>>, %arg4: memref<1x128x384xbf16, #tpu.memory_space<vmem>>, %arg5: memref<1x1x384xf32, #tpu.memory_space<vmem>>, %arg6: memref<1x128x128xbf16, #tpu.memory_space<vmem>>, %arg7: memref<1x1x128xf32, #tpu.memory_space<vmem>>, %arg8: memref<1x1x128xf32, #tpu.memory_space<vmem>>, %arg9: memref<1x1x128xf32, #tpu.memory_space<vmem>>, %arg10: memref<1x128x128xbf16, #tpu.memory_space<vmem>>, %arg11: memref<1x1x128xf32, #tpu.memory_space<vmem>>, %arg12: memref<1x128x256xbf16, #tpu.memory_space<vmem>>, %arg13: memref<1x1x256xf32, #tpu.memory_space<vmem>>, %arg14: memref<1x128x128xbf16, #tpu.memory_space<vmem>>, %arg15: memref<1x1x128xf32, #tpu.memory_space<vmem>>, %arg16: memref<1x1x128xf32, #tpu.memory_space<vmem>>, %arg17: memref<1x1x128xf32, #tpu.memory_space<vmem>>, %arg18: memref<1x128x256xbf16, #tpu.memory_space<vmem>>, %arg19: memref<1x1x256xf32, #tpu.memory_space<vmem>>, %arg20: memref<1x256x128xbf16, #tpu.memory_space<vmem>>, %arg21: memref<1x1x128xf32, #tpu.memory_space<vmem>>, %arg22: memref<1x1x128xf32, #tpu.memory_space<vmem>>, %arg23: memref<1x1x128xf32, #tpu.memory_space<vmem>>, %arg24: memref<1x8x128xf32, #tpu.memory_space<vmem>>, %arg25: memref<8x128xf32, #tpu.memory_space<vmem>>) attributes {dimension_semantics = [#tpu.dimension_semantics<parallel>, #tpu.dimension_semantics<arbitrary>], iteration_bounds = array<i64: 2, 2>, scalar_prefetch = 0 : i64, scratch_operands = 1 : i64, tpu.core_type = #tpu.core_type<tc>, window_params = [{transform_indices = @transform_0, window_bounds = array<i64: 1, 8, 128>}, {transform_indices = @transform_1, window_bounds = array<i64: 1, 8, 128>}, {transform_indices = @transform_2, window_bounds = array<i64: 1, 128, 384>}, {transform_indices = @transform_3, window_bounds = array<i64: 1, 1, 384>}, {transform_indices = @transform_4, window_bounds = array<i64: 1, 128, 128>}, {transform_indices = @transform_5, window_bounds = array<i64: 1, 1, 128>}, {transform_indices = @transform_6, window_bounds = array<i64: 1, 1, 128>}, {transform_indices = @transform_7, window_bounds = array<i64: 1, 1, 128>}, {transform_indices = @transform_8, window_bounds = array<i64: 1, 128, 128>}, {transform_indices = @transform_9, window_bounds = array<i64: 1, 1, 128>}, {transform_indices = @transform_10, window_bounds = array<i64: 1, 128, 256>}, {transform_indices = @transform_11, window_bounds = array<i64: 1, 1, 256>}, {transform_indices = @transform_12, window_bounds = array<i64: 1, 128, 128>}, {transform_indices = @transform_13, window_bounds = array<i64: 1, 1, 128>}, {transform_indices = @transform_14, window_bounds = array<i64: 1, 1, 128>}, {transform_indices = @transform_15, window_bounds = array<i64: 1, 1, 128>}, {transform_indices = @transform_16, window_bounds = array<i64: 1, 128, 256>}, {transform_indices = @transform_17, window_bounds = array<i64: 1, 1, 256>}, {transform_indices = @transform_18, window_bounds = array<i64: 1, 256, 128>}, {transform_indices = @transform_19, window_bounds = array<i64: 1, 1, 128>}, {transform_indices = @transform_20, window_bounds = array<i64: 1, 1, 128>}, {transform_indices = @transform_21, window_bounds = array<i64: 1, 1, 128>}, {transform_indices = @transform_22, window_bounds = array<i64: 1, 8, 128>}]} {
    %c0_i32 = arith.constant 0 : i32
    %0 = arith.cmpi eq, %arg1, %c0_i32 : i32
    %1 = arith.extui %0 : i1 to i32
    %c0_i32_0 = arith.constant 0 : i32
    %2 = arith.cmpi ne, %1, %c0_i32_0 : i32
    scf.if %2 {
      %c0_102 = arith.constant 0 : index
      %c0_103 = arith.constant 0 : index
      %c0_104 = arith.constant 0 : index
      %211 = vector.load %arg2[%c0_102, %c0_103, %c0_104] : memref<1x8x128xf32, #tpu.memory_space<vmem>>, vector<1x8x128xf32>
      %212 = vector.shape_cast %211 : vector<1x8x128xf32> to vector<8x128xf32>
      %c0_105 = arith.constant 0 : index
      %c0_106 = arith.constant 0 : index
      %213 = vector.load %arg25[%c0_105, %c0_106] : memref<8x128xf32, #tpu.memory_space<vmem>>, vector<8x128xf32>
      tpu.vector_store %arg25[%c0_105, %c0_106], %212 {strides = array<i32>} : memref<8x128xf32, #tpu.memory_space<vmem>>, vector<8x128xf32>,
    } else {
    }
    %c0 = arith.constant 0 : index
    %c0_1 = arith.constant 0 : index
    %c0_2 = arith.constant 0 : index
    %3 = vector.load %arg3[%c0, %c0_1, %c0_2] : memref<1x8x128xf32, #tpu.memory_space<vmem>>, vector<1x8x128xf32>
    %4 = vector.shape_cast %3 : vector<1x8x128xf32> to vector<8x128xf32>
    %5 = arith.truncf %4 : vector<8x128xf32> to vector<8x128xbf16>
    %c0_3 = arith.constant 0 : index
    %c0_4 = arith.constant 0 : index
    %6 = vector.load %arg25[%c0_3, %c0_4] : memref<8x128xf32, #tpu.memory_space<vmem>>, vector<8x128xf32>
    %c0_5 = arith.constant 0 : index
    %c0_6 = arith.constant 0 : index
    %c0_7 = arith.constant 0 : index
    %7 = vector.load %arg4[%c0_5, %c0_6, %c0_7] : memref<1x128x384xbf16, #tpu.memory_space<vmem>>, vector<1x128x384xbf16>
    %8 = vector.shape_cast %7 : vector<1x128x384xbf16> to vector<128x384xbf16>
    %c0_8 = arith.constant 0 : index
    %c0_9 = arith.constant 0 : index
    %c0_10 = arith.constant 0 : index
    %9 = vector.load %arg5[%c0_8, %c0_9, %c0_10] : memref<1x1x384xf32, #tpu.memory_space<vmem>>, vector<1x1x384xf32>
    %10 = vector.shape_cast %9 : vector<1x1x384xf32> to vector<1x384xf32>
    %c0_11 = arith.constant 0 : index
    %c0_12 = arith.constant 0 : index
    %c0_13 = arith.constant 0 : index
    %11 = vector.load %arg6[%c0_11, %c0_12, %c0_13] : memref<1x128x128xbf16, #tpu.memory_space<vmem>>, vector<1x128x128xbf16>
    %12 = vector.shape_cast %11 : vector<1x128x128xbf16> to vector<128x128xbf16>
    %c0_14 = arith.constant 0 : index
    %c0_15 = arith.constant 0 : index
    %c0_16 = arith.constant 0 : index
    %13 = vector.load %arg7[%c0_14, %c0_15, %c0_16] : memref<1x1x128xf32, #tpu.memory_space<vmem>>, vector<1x1x128xf32>
    %14 = vector.shape_cast %13 : vector<1x1x128xf32> to vector<1x128xf32>
    %15 = arith.truncf %6 : vector<8x128xf32> to vector<8x128xbf16>
    %cst = arith.constant dense<0.000000e+00> : vector<8x384xf32>
    %16 = tpu.matmul %15, %8, %cst {dimension_numbers = #tpu.dot_dimension_numbers<[1], [0], [0], [1], [0, 0, 1, 1], [], []>} : vector<8x128xbf16>, vector<128x384xbf16>, vector<8x384xf32> -> vector<8x384xf32>
    %17 = vector.broadcast %10 : vector<1x384xf32> to vector<8x384xf32>
    %18 = arith.addf %16, %17 : vector<8x384xf32>
    %19 = tpu.transpose %18, [1, 0] : vector<8x384xf32> -> vector<384x8xf32>
    %20 = vector.shape_cast %19 : vector<384x8xf32> to vector<12x32x8xf32>
    %21 = vector.extract_strided_slice %20 {offsets = [0, 0, 0], sizes = [4, 32, 8], strides = [1, 1, 1]} : vector<12x32x8xf32> to vector<4x32x8xf32>
    %22 = vector.extract_strided_slice %20 {offsets = [4, 0, 0], sizes = [4, 32, 8], strides = [1, 1, 1]} : vector<12x32x8xf32> to vector<4x32x8xf32>
    %23 = vector.extract_strided_slice %20 {offsets = [8, 0, 0], sizes = [4, 32, 8], strides = [1, 1, 1]} : vector<12x32x8xf32> to vector<4x32x8xf32>
    %24 = tpu.transpose %21, [0, 2, 1] : vector<4x32x8xf32> -> vector<4x8x32xf32>
    %25 = arith.truncf %24 : vector<4x8x32xf32> to vector<4x8x32xbf16>
    %26 = arith.truncf %22 : vector<4x32x8xf32> to vector<4x32x8xbf16>
    %27 = arith.truncf %23 : vector<4x32x8xf32> to vector<4x32x8xbf16>
    "tpu.trace_start"() <{level = 10 : i32, message = "hqd,hdk->hqk"}> : () -> ()
    %cst_17 = arith.constant dense<0.000000e+00> : vector<4x8x8xf32>
    %28 = tpu.matmul %25, %26, %cst_17 {dimension_numbers = #tpu.dot_dimension_numbers<[2], [1], [1], [2], [0, 0, 0, 1, 1, 2], [0], [0]>} : vector<4x8x32xbf16>, vector<4x32x8xbf16>, vector<4x8x8xf32> -> vector<4x8x8xf32>
    "tpu.trace_stop"() : () -> ()
    %cst_18 = arith.constant 0.176776692 : f32
    %29 = vector.broadcast %cst_18 : f32 to vector<4x8x8xf32>
    %30 = arith.mulf %28, %29 : vector<4x8x8xf32>
    %31 = tpu.iota {dimensions = array<i32: 0>} : vector<8x8xi32>
    %32 = tpu.iota {dimensions = array<i32: 1>} : vector<8x8xi32>
    %33 = arith.cmpi sle, %32, %31 : vector<8x8xi32>
    %cst_19 = arith.constant 0.000000e+00 : f32
    %cst_20 = arith.constant -1.000000e+09 : f32
    %34 = vector.broadcast %cst_19 : f32 to vector<8x8xf32>
    %35 = vector.broadcast %cst_20 : f32 to vector<8x8xf32>
    %36 = arith.select %33, %34, %35 : vector<8x8xi1>, vector<8x8xf32>
    %37 = vector.shape_cast %36 : vector<8x8xf32> to vector<1x8x8xf32>
    %38 = vector.broadcast %37 : vector<1x8x8xf32> to vector<4x8x8xf32>
    %39 = arith.addf %30, %38 : vector<4x8x8xf32>
    %cst_21 = arith.constant dense<0xFF800000> : vector<4x8xf32>
    %40 = vector.multi_reduction <maximumf>, %39, %cst_21 [2] : vector<4x8x8xf32> to vector<4x8xf32>
    %41 = vector.shape_cast %40 : vector<4x8xf32> to vector<4x8x1xf32>
    %42 = vector.broadcast %41 : vector<4x8x1xf32> to vector<4x8x8xf32>
    %43 = arith.subf %39, %42 : vector<4x8x8xf32>
    %44 = math.exp %43 : vector<4x8x8xf32>
    %cst_22 = arith.constant dense<0.000000e+00> : vector<4x8xf32>
    %45 = vector.multi_reduction <add>, %44, %cst_22 [2] : vector<4x8x8xf32> to vector<4x8xf32>
    %46 = vector.shape_cast %45 : vector<4x8xf32> to vector<4x8x1xf32>
    %47 = tpu.reciprocal %46 {approx = true} : vector<4x8x1xf32> -> vector<4x8x1xf32>
    %48 = vector.broadcast %47 : vector<4x8x1xf32> to vector<4x8x8xf32>
    %49 = arith.mulf %44, %48 : vector<4x8x8xf32>
    %50 = arith.truncf %49 : vector<4x8x8xf32> to vector<4x8x8xbf16>
    "tpu.trace_start"() <{level = 10 : i32, message = "hdk,hqk->hdq"}> : () -> ()
    %cst_23 = arith.constant dense<0.000000e+00> : vector<4x32x8xf32>
    %51 = tpu.matmul %27, %50, %cst_23 {dimension_numbers = #tpu.dot_dimension_numbers<[2], [2], [1], [1], [0, 0, 0, 1, 1, 1], [0], [0]>} : vector<4x32x8xbf16>, vector<4x8x8xbf16>, vector<4x32x8xf32> -> vector<4x32x8xf32>
    "tpu.trace_stop"() : () -> ()
    %52 = vector.shape_cast %51 : vector<4x32x8xf32> to vector<128x8xf32>
    %53 = tpu.transpose %52, [1, 0] : vector<128x8xf32> -> vector<8x128xf32>
    %54 = arith.truncf %53 : vector<8x128xf32> to vector<8x128xbf16>
    %cst_24 = arith.constant dense<0.000000e+00> : vector<8x128xf32>
    %55 = tpu.matmul %54, %12, %cst_24 {dimension_numbers = #tpu.dot_dimension_numbers<[1], [0], [0], [1], [0, 0, 1, 1], [], []>} : vector<8x128xbf16>, vector<128x128xbf16>, vector<8x128xf32> -> vector<8x128xf32>
    %56 = vector.broadcast %14 : vector<1x128xf32> to vector<8x128xf32>
    %57 = arith.addf %55, %56 : vector<8x128xf32>
    %58 = arith.addf %6, %57 : vector<8x128xf32>
    %c0_25 = arith.constant 0 : index
    %c0_26 = arith.constant 0 : index
    %c0_27 = arith.constant 0 : index
    %59 = vector.load %arg8[%c0_25, %c0_26, %c0_27] : memref<1x1x128xf32, #tpu.memory_space<vmem>>, vector<1x1x128xf32>
    %60 = vector.shape_cast %59 : vector<1x1x128xf32> to vector<1x128xf32>
    %c0_28 = arith.constant 0 : index
    %c0_29 = arith.constant 0 : index
    %c0_30 = arith.constant 0 : index
    %61 = vector.load %arg9[%c0_28, %c0_29, %c0_30] : memref<1x1x128xf32, #tpu.memory_space<vmem>>, vector<1x1x128xf32>
    %62 = vector.shape_cast %61 : vector<1x1x128xf32> to vector<1x128xf32>
    %cst_31 = arith.constant dense<0.000000e+00> : vector<8xf32>
    %63 = vector.multi_reduction <add>, %58, %cst_31 [1] : vector<8x128xf32> to vector<8xf32>
    %64 = vector.shape_cast %63 : vector<8xf32> to vector<8x1xf32>
    %cst_32 = arith.constant 1.280000e+02 : f32
    %65 = vector.broadcast %cst_32 : f32 to vector<8x1xf32>
    %66 = arith.divf %64, %65 : vector<8x1xf32>
    %67 = vector.broadcast %66 : vector<8x1xf32> to vector<8x128xf32>
    %68 = arith.subf %58, %67 : vector<8x128xf32>
    %69 = arith.mulf %68, %68 : vector<8x128xf32>
    %cst_33 = arith.constant dense<0.000000e+00> : vector<8xf32>
    %70 = vector.multi_reduction <add>, %69, %cst_33 [1] : vector<8x128xf32> to vector<8xf32>
    %71 = vector.shape_cast %70 : vector<8xf32> to vector<8x1xf32>
    %cst_34 = arith.constant 1.280000e+02 : f32
    %72 = vector.broadcast %cst_34 : f32 to vector<8x1xf32>
    %73 = arith.divf %71, %72 : vector<8x1xf32>
    %74 = vector.broadcast %66 : vector<8x1xf32> to vector<8x128xf32>
    %75 = arith.subf %58, %74 : vector<8x128xf32>
    %cst_35 = arith.constant 9.99999974E-6 : f32
    %76 = vector.broadcast %cst_35 : f32 to vector<8x1xf32>
    %77 = arith.addf %73, %76 : vector<8x1xf32>
    %78 = math.rsqrt %77 : vector<8x1xf32>
    %79 = vector.broadcast %78 : vector<8x1xf32> to vector<8x128xf32>
    %80 = arith.mulf %75, %79 : vector<8x128xf32>
    %81 = vector.broadcast %60 : vector<1x128xf32> to vector<8x128xf32>
    %82 = arith.mulf %80, %81 : vector<8x128xf32>
    %83 = vector.broadcast %62 : vector<1x128xf32> to vector<8x128xf32>
    %84 = arith.addf %82, %83 : vector<8x128xf32>
    %c0_36 = arith.constant 0 : index
    %c0_37 = arith.constant 0 : index
    %c0_38 = arith.constant 0 : index
    %85 = vector.load %arg10[%c0_36, %c0_37, %c0_38] : memref<1x128x128xbf16, #tpu.memory_space<vmem>>, vector<1x128x128xbf16>
    %86 = vector.shape_cast %85 : vector<1x128x128xbf16> to vector<128x128xbf16>
    %c0_39 = arith.constant 0 : index
    %c0_40 = arith.constant 0 : index
    %c0_41 = arith.constant 0 : index
    %87 = vector.load %arg11[%c0_39, %c0_40, %c0_41] : memref<1x1x128xf32, #tpu.memory_space<vmem>>, vector<1x1x128xf32>
    %88 = vector.shape_cast %87 : vector<1x1x128xf32> to vector<1x128xf32>
    %c0_42 = arith.constant 0 : index
    %c0_43 = arith.constant 0 : index
    %c0_44 = arith.constant 0 : index
    %89 = vector.load %arg12[%c0_42, %c0_43, %c0_44] : memref<1x128x256xbf16, #tpu.memory_space<vmem>>, vector<1x128x256xbf16>
    %90 = vector.shape_cast %89 : vector<1x128x256xbf16> to vector<128x256xbf16>
    %c0_45 = arith.constant 0 : index
    %c0_46 = arith.constant 0 : index
    %c0_47 = arith.constant 0 : index
    %91 = vector.load %arg13[%c0_45, %c0_46, %c0_47] : memref<1x1x256xf32, #tpu.memory_space<vmem>>, vector<1x1x256xf32>
    %92 = vector.shape_cast %91 : vector<1x1x256xf32> to vector<1x256xf32>
    %c0_48 = arith.constant 0 : index
    %c0_49 = arith.constant 0 : index
    %c0_50 = arith.constant 0 : index
    %93 = vector.load %arg14[%c0_48, %c0_49, %c0_50] : memref<1x128x128xbf16, #tpu.memory_space<vmem>>, vector<1x128x128xbf16>
    %94 = vector.shape_cast %93 : vector<1x128x128xbf16> to vector<128x128xbf16>
    %c0_51 = arith.constant 0 : index
    %c0_52 = arith.constant 0 : index
    %c0_53 = arith.constant 0 : index
    %95 = vector.load %arg15[%c0_51, %c0_52, %c0_53] : memref<1x1x128xf32, #tpu.memory_space<vmem>>, vector<1x1x128xf32>
    %96 = vector.shape_cast %95 : vector<1x1x128xf32> to vector<1x128xf32>
    %97 = arith.truncf %84 : vector<8x128xf32> to vector<8x128xbf16>
    %cst_54 = arith.constant dense<0.000000e+00> : vector<8x128xf32>
    %98 = tpu.matmul %97, %86, %cst_54 {dimension_numbers = #tpu.dot_dimension_numbers<[1], [0], [0], [1], [0, 0, 1, 1], [], []>} : vector<8x128xbf16>, vector<128x128xbf16>, vector<8x128xf32> -> vector<8x128xf32>
    %99 = vector.broadcast %88 : vector<1x128xf32> to vector<8x128xf32>
    %100 = arith.addf %98, %99 : vector<8x128xf32>
    %101 = tpu.transpose %100, [1, 0] : vector<8x128xf32> -> vector<128x8xf32>
    %102 = vector.shape_cast %101 : vector<128x8xf32> to vector<4x32x8xf32>
    %cst_55 = arith.constant dense<0.000000e+00> : vector<8x256xf32>
    %103 = tpu.matmul %5, %90, %cst_55 {dimension_numbers = #tpu.dot_dimension_numbers<[1], [0], [0], [1], [0, 0, 1, 1], [], []>} : vector<8x128xbf16>, vector<128x256xbf16>, vector<8x256xf32> -> vector<8x256xf32>
    %104 = vector.broadcast %92 : vector<1x256xf32> to vector<8x256xf32>
    %105 = arith.addf %103, %104 : vector<8x256xf32>
    %106 = tpu.transpose %105, [1, 0] : vector<8x256xf32> -> vector<256x8xf32>
    %107 = vector.shape_cast %106 : vector<256x8xf32> to vector<8x32x8xf32>
    %108 = vector.extract_strided_slice %107 {offsets = [0, 0, 0], sizes = [4, 32, 8], strides = [1, 1, 1]} : vector<8x32x8xf32> to vector<4x32x8xf32>
    %109 = vector.extract_strided_slice %107 {offsets = [4, 0, 0], sizes = [4, 32, 8], strides = [1, 1, 1]} : vector<8x32x8xf32> to vector<4x32x8xf32>
    %110 = tpu.transpose %102, [0, 2, 1] : vector<4x32x8xf32> -> vector<4x8x32xf32>
    %111 = arith.truncf %110 : vector<4x8x32xf32> to vector<4x8x32xbf16>
    %112 = arith.truncf %108 : vector<4x32x8xf32> to vector<4x32x8xbf16>
    %113 = arith.truncf %109 : vector<4x32x8xf32> to vector<4x32x8xbf16>
    "tpu.trace_start"() <{level = 10 : i32, message = "hqd,hdk->hqk"}> : () -> ()
    %cst_56 = arith.constant dense<0.000000e+00> : vector<4x8x8xf32>
    %114 = tpu.matmul %111, %112, %cst_56 {dimension_numbers = #tpu.dot_dimension_numbers<[2], [1], [1], [2], [0, 0, 0, 1, 1, 2], [0], [0]>} : vector<4x8x32xbf16>, vector<4x32x8xbf16>, vector<4x8x8xf32> -> vector<4x8x8xf32>
    "tpu.trace_stop"() : () -> ()
    %cst_57 = arith.constant 0.176776692 : f32
    %115 = vector.broadcast %cst_57 : f32 to vector<4x8x8xf32>
    %116 = arith.mulf %114, %115 : vector<4x8x8xf32>
    %cst_58 = arith.constant dense<0xFF800000> : vector<4x8xf32>
    %117 = vector.multi_reduction <maximumf>, %116, %cst_58 [2] : vector<4x8x8xf32> to vector<4x8xf32>
    %118 = vector.shape_cast %117 : vector<4x8xf32> to vector<4x8x1xf32>
    %119 = vector.broadcast %118 : vector<4x8x1xf32> to vector<4x8x8xf32>
    %120 = arith.subf %116, %119 : vector<4x8x8xf32>
    %121 = math.exp %120 : vector<4x8x8xf32>
    %cst_59 = arith.constant dense<0.000000e+00> : vector<4x8xf32>
    %122 = vector.multi_reduction <add>, %121, %cst_59 [2] : vector<4x8x8xf32> to vector<4x8xf32>
    %123 = vector.shape_cast %122 : vector<4x8xf32> to vector<4x8x1xf32>
    %124 = tpu.reciprocal %123 {approx = true} : vector<4x8x1xf32> -> vector<4x8x1xf32>
    %125 = vector.broadcast %124 : vector<4x8x1xf32> to vector<4x8x8xf32>
    %126 = arith.mulf %121, %125 : vector<4x8x8xf32>
    %127 = arith.truncf %126 : vector<4x8x8xf32> to vector<4x8x8xbf16>
    "tpu.trace_start"() <{level = 10 : i32, message = "hdk,hqk->hdq"}> : () -> ()
    %cst_60 = arith.constant dense<0.000000e+00> : vector<4x32x8xf32>
    %128 = tpu.matmul %113, %127, %cst_60 {dimension_numbers = #tpu.dot_dimension_numbers<[2], [2], [1], [1], [0, 0, 0, 1, 1, 1], [0], [0]>} : vector<4x32x8xbf16>, vector<4x8x8xbf16>, vector<4x32x8xf32> -> vector<4x32x8xf32>
    "tpu.trace_stop"() : () -> ()
    %129 = vector.shape_cast %128 : vector<4x32x8xf32> to vector<128x8xf32>
    %130 = tpu.transpose %129, [1, 0] : vector<128x8xf32> -> vector<8x128xf32>
    %131 = arith.truncf %130 : vector<8x128xf32> to vector<8x128xbf16>
    %cst_61 = arith.constant dense<0.000000e+00> : vector<8x128xf32>
    %132 = tpu.matmul %131, %94, %cst_61 {dimension_numbers = #tpu.dot_dimension_numbers<[1], [0], [0], [1], [0, 0, 1, 1], [], []>} : vector<8x128xbf16>, vector<128x128xbf16>, vector<8x128xf32> -> vector<8x128xf32>
    %133 = vector.broadcast %96 : vector<1x128xf32> to vector<8x128xf32>
    %134 = arith.addf %132, %133 : vector<8x128xf32>
    %135 = arith.addf %84, %134 : vector<8x128xf32>
    %c0_62 = arith.constant 0 : index
    %c0_63 = arith.constant 0 : index
    %c0_64 = arith.constant 0 : index
    %136 = vector.load %arg16[%c0_62, %c0_63, %c0_64] : memref<1x1x128xf32, #tpu.memory_space<vmem>>, vector<1x1x128xf32>
    %137 = vector.shape_cast %136 : vector<1x1x128xf32> to vector<1x128xf32>
    %c0_65 = arith.constant 0 : index
    %c0_66 = arith.constant 0 : index
    %c0_67 = arith.constant 0 : index
    %138 = vector.load %arg17[%c0_65, %c0_66, %c0_67] : memref<1x1x128xf32, #tpu.memory_space<vmem>>, vector<1x1x128xf32>
    %139 = vector.shape_cast %138 : vector<1x1x128xf32> to vector<1x128xf32>
    %cst_68 = arith.constant dense<0.000000e+00> : vector<8xf32>
    %140 = vector.multi_reduction <add>, %135, %cst_68 [1] : vector<8x128xf32> to vector<8xf32>
    %141 = vector.shape_cast %140 : vector<8xf32> to vector<8x1xf32>
    %cst_69 = arith.constant 1.280000e+02 : f32
    %142 = vector.broadcast %cst_69 : f32 to vector<8x1xf32>
    %143 = arith.divf %141, %142 : vector<8x1xf32>
    %144 = vector.broadcast %143 : vector<8x1xf32> to vector<8x128xf32>
    %145 = arith.subf %135, %144 : vector<8x128xf32>
    %146 = arith.mulf %145, %145 : vector<8x128xf32>
    %cst_70 = arith.constant dense<0.000000e+00> : vector<8xf32>
    %147 = vector.multi_reduction <add>, %146, %cst_70 [1] : vector<8x128xf32> to vector<8xf32>
    %148 = vector.shape_cast %147 : vector<8xf32> to vector<8x1xf32>
    %cst_71 = arith.constant 1.280000e+02 : f32
    %149 = vector.broadcast %cst_71 : f32 to vector<8x1xf32>
    %150 = arith.divf %148, %149 : vector<8x1xf32>
    %151 = vector.broadcast %143 : vector<8x1xf32> to vector<8x128xf32>
    %152 = arith.subf %135, %151 : vector<8x128xf32>
    %cst_72 = arith.constant 9.99999974E-6 : f32
    %153 = vector.broadcast %cst_72 : f32 to vector<8x1xf32>
    %154 = arith.addf %150, %153 : vector<8x1xf32>
    %155 = math.rsqrt %154 : vector<8x1xf32>
    %156 = vector.broadcast %155 : vector<8x1xf32> to vector<8x128xf32>
    %157 = arith.mulf %152, %156 : vector<8x128xf32>
    %158 = vector.broadcast %137 : vector<1x128xf32> to vector<8x128xf32>
    %159 = arith.mulf %157, %158 : vector<8x128xf32>
    %160 = vector.broadcast %139 : vector<1x128xf32> to vector<8x128xf32>
    %161 = arith.addf %159, %160 : vector<8x128xf32>
    %c0_73 = arith.constant 0 : index
    %c0_74 = arith.constant 0 : index
    %c0_75 = arith.constant 0 : index
    %162 = vector.load %arg18[%c0_73, %c0_74, %c0_75] : memref<1x128x256xbf16, #tpu.memory_space<vmem>>, vector<1x128x256xbf16>
    %163 = vector.shape_cast %162 : vector<1x128x256xbf16> to vector<128x256xbf16>
    %c0_76 = arith.constant 0 : index
    %c0_77 = arith.constant 0 : index
    %c0_78 = arith.constant 0 : index
    %164 = vector.load %arg19[%c0_76, %c0_77, %c0_78] : memref<1x1x256xf32, #tpu.memory_space<vmem>>, vector<1x1x256xf32>
    %165 = vector.shape_cast %164 : vector<1x1x256xf32> to vector<1x256xf32>
    %c0_79 = arith.constant 0 : index
    %c0_80 = arith.constant 0 : index
    %c0_81 = arith.constant 0 : index
    %166 = vector.load %arg20[%c0_79, %c0_80, %c0_81] : memref<1x256x128xbf16, #tpu.memory_space<vmem>>, vector<1x256x128xbf16>
    %167 = vector.shape_cast %166 : vector<1x256x128xbf16> to vector<256x128xbf16>
    %c0_82 = arith.constant 0 : index
    %c0_83 = arith.constant 0 : index
    %c0_84 = arith.constant 0 : index
    %168 = vector.load %arg21[%c0_82, %c0_83, %c0_84] : memref<1x1x128xf32, #tpu.memory_space<vmem>>, vector<1x1x128xf32>
    %169 = vector.shape_cast %168 : vector<1x1x128xf32> to vector<1x128xf32>
    %170 = arith.truncf %161 : vector<8x128xf32> to vector<8x128xbf16>
    %cst_85 = arith.constant dense<0.000000e+00> : vector<8x256xf32>
    %171 = tpu.matmul %170, %163, %cst_85 {dimension_numbers = #tpu.dot_dimension_numbers<[1], [0], [0], [1], [0, 0, 1, 1], [], []>} : vector<8x128xbf16>, vector<128x256xbf16>, vector<8x256xf32> -> vector<8x256xf32>
    %172 = vector.broadcast %165 : vector<1x256xf32> to vector<8x256xf32>
    %173 = arith.addf %171, %172 : vector<8x256xf32>
    %cst_86 = arith.constant 0.000000e+00 : f32
    %174 = vector.broadcast %cst_86 : f32 to vector<8x256xf32>
    %175 = arith.maximumf %173, %174 : vector<8x256xf32>
    %176 = arith.truncf %175 : vector<8x256xf32> to vector<8x256xbf16>
    %cst_87 = arith.constant dense<0.000000e+00> : vector<8x128xf32>
    %177 = tpu.matmul %176, %167, %cst_87 {dimension_numbers = #tpu.dot_dimension_numbers<[1], [0], [0], [1], [0, 0, 1, 1], [], []>} : vector<8x256xbf16>, vector<256x128xbf16>, vector<8x128xf32> -> vector<8x128xf32>
    %178 = vector.broadcast %169 : vector<1x128xf32> to vector<8x128xf32>
    %179 = arith.addf %177, %178 : vector<8x128xf32>
    %180 = arith.addf %161, %179 : vector<8x128xf32>
    %c0_88 = arith.constant 0 : index
    %c0_89 = arith.constant 0 : index
    %c0_90 = arith.constant 0 : index
    %181 = vector.load %arg22[%c0_88, %c0_89, %c0_90] : memref<1x1x128xf32, #tpu.memory_space<vmem>>, vector<1x1x128xf32>
    %182 = vector.shape_cast %181 : vector<1x1x128xf32> to vector<1x128xf32>
    %c0_91 = arith.constant 0 : index
    %c0_92 = arith.constant 0 : index
    %c0_93 = arith.constant 0 : index
    %183 = vector.load %arg23[%c0_91, %c0_92, %c0_93] : memref<1x1x128xf32, #tpu.memory_space<vmem>>, vector<1x1x128xf32>
    %184 = vector.shape_cast %183 : vector<1x1x128xf32> to vector<1x128xf32>
    %cst_94 = arith.constant dense<0.000000e+00> : vector<8xf32>
    %185 = vector.multi_reduction <add>, %180, %cst_94 [1] : vector<8x128xf32> to vector<8xf32>
    %186 = vector.shape_cast %185 : vector<8xf32> to vector<8x1xf32>
    %cst_95 = arith.constant 1.280000e+02 : f32
    %187 = vector.broadcast %cst_95 : f32 to vector<8x1xf32>
    %188 = arith.divf %186, %187 : vector<8x1xf32>
    %189 = vector.broadcast %188 : vector<8x1xf32> to vector<8x128xf32>
    %190 = arith.subf %180, %189 : vector<8x128xf32>
    %191 = arith.mulf %190, %190 : vector<8x128xf32>
    %cst_96 = arith.constant dense<0.000000e+00> : vector<8xf32>
    %192 = vector.multi_reduction <add>, %191, %cst_96 [1] : vector<8x128xf32> to vector<8xf32>
    %193 = vector.shape_cast %192 : vector<8xf32> to vector<8x1xf32>
    %cst_97 = arith.constant 1.280000e+02 : f32
    %194 = vector.broadcast %cst_97 : f32 to vector<8x1xf32>
    %195 = arith.divf %193, %194 : vector<8x1xf32>
    %196 = vector.broadcast %188 : vector<8x1xf32> to vector<8x128xf32>
    %197 = arith.subf %180, %196 : vector<8x128xf32>
    %cst_98 = arith.constant 9.99999974E-6 : f32
    %198 = vector.broadcast %cst_98 : f32 to vector<8x1xf32>
    %199 = arith.addf %195, %198 : vector<8x1xf32>
    %200 = math.rsqrt %199 : vector<8x1xf32>
    %201 = vector.broadcast %200 : vector<8x1xf32> to vector<8x128xf32>
    %202 = arith.mulf %197, %201 : vector<8x128xf32>
    %203 = vector.broadcast %182 : vector<1x128xf32> to vector<8x128xf32>
    %204 = arith.mulf %202, %203 : vector<8x128xf32>
    %205 = vector.broadcast %184 : vector<1x128xf32> to vector<8x128xf32>
    %206 = arith.addf %204, %205 : vector<8x128xf32>
    %c0_99 = arith.constant 0 : index
    %c0_100 = arith.constant 0 : index
    %207 = vector.load %arg25[%c0_99, %c0_100] : memref<8x128xf32, #tpu.memory_space<vmem>>, vector<8x128xf32>
    tpu.vector_store %arg25[%c0_99, %c0_100], %206 {strides = array<i32>} : memref<8x128xf32, #tpu.memory_space<vmem>>, vector<8x128xf32>,
    %c1_i32 = arith.constant 1 : i32
    %208 = arith.cmpi eq, %arg1, %c1_i32 : i32
    %209 = arith.extui %208 : i1 to i32
    %c0_i32_101 = arith.constant 0 : i32
    %210 = arith.cmpi ne, %209, %c0_i32_101 : i32
    scf.if %210 {
      %c0_102 = arith.constant 0 : index
      %c0_103 = arith.constant 0 : index
      %c0_104 = arith.constant 0 : index
      %211 = vector.load %arg24[%c0_102, %c0_103, %c0_104] : memref<1x8x128xf32, #tpu.memory_space<vmem>>, vector<1x8x128xf32>
      %212 = vector.shape_cast %211 : vector<1x8x128xf32> to vector<8x128xf32>
      %213 = vector.shape_cast %206 : vector<8x128xf32> to vector<1x8x128xf32>
      tpu.vector_store %arg24[%c0_102, %c0_103, %c0_104], %213 {strides = array<i32>} : memref<1x8x128xf32, #tpu.memory_space<vmem>>, vector<1x8x128xf32>,
    } else {
    }
    return
  }
  func.func @transform_0(%arg0: i32, %arg1: i32) -> (i32, i32, i32) {
    %c0_i32 = arith.constant 0 : i32
    %c0_i32_0 = arith.constant 0 : i32
    %c0_i32_1 = arith.constant 0 : i32
    return %arg0, %c0_i32, %c0_i32_0 : i32, i32, i32
  }
  func.func @transform_1(%arg0: i32, %arg1: i32) -> (i32, i32, i32) {
    %c0_i32 = arith.constant 0 : i32
    %c0_i32_0 = arith.constant 0 : i32
    %c0_i32_1 = arith.constant 0 : i32
    return %arg0, %c0_i32, %c0_i32_0 : i32, i32, i32
  }
  func.func @transform_2(%arg0: i32, %arg1: i32) -> (i32, i32, i32) {
    %c0_i32 = arith.constant 0 : i32
    %c0_i32_0 = arith.constant 0 : i32
    %c0_i32_1 = arith.constant 0 : i32
    return %arg1, %c0_i32, %c0_i32_0 : i32, i32, i32
  }
  func.func @transform_3(%arg0: i32, %arg1: i32) -> (i32, i32, i32) {
    %c0_i32 = arith.constant 0 : i32
    %c0_i32_0 = arith.constant 0 : i32
    %c0_i32_1 = arith.constant 0 : i32
    return %arg1, %c0_i32, %c0_i32_0 : i32, i32, i32
  }
  func.func @transform_4(%arg0: i32, %arg1: i32) -> (i32, i32, i32) {
    %c0_i32 = arith.constant 0 : i32
    %c0_i32_0 = arith.constant 0 : i32
    %c0_i32_1 = arith.constant 0 : i32
    return %arg1, %c0_i32, %c0_i32_0 : i32, i32, i32
  }
  func.func @transform_5(%arg0: i32, %arg1: i32) -> (i32, i32, i32) {
    %c0_i32 = arith.constant 0 : i32
    %c0_i32_0 = arith.constant 0 : i32
    %c0_i32_1 = arith.constant 0 : i32
    return %arg1, %c0_i32, %c0_i32_0 : i32, i32, i32
  }
  func.func @transform_6(%arg0: i32, %arg1: i32) -> (i32, i32, i32) {
    %c0_i32 = arith.constant 0 : i32
    %c0_i32_0 = arith.constant 0 : i32
    %c0_i32_1 = arith.constant 0 : i32
    return %arg1, %c0_i32, %c0_i32_0 : i32, i32, i32
  }
  func.func @transform_7(%arg0: i32, %arg1: i32) -> (i32, i32, i32) {
    %c0_i32 = arith.constant 0 : i32
    %c0_i32_0 = arith.constant 0 : i32
    %c0_i32_1 = arith.constant 0 : i32
    return %arg1, %c0_i32, %c0_i32_0 : i32, i32, i32
  }
  func.func @transform_8(%arg0: i32, %arg1: i32) -> (i32, i32, i32) {
    %c0_i32 = arith.constant 0 : i32
    %c0_i32_0 = arith.constant 0 : i32
    %c0_i32_1 = arith.constant 0 : i32
    return %arg1, %c0_i32, %c0_i32_0 : i32, i32, i32
  }
  func.func @transform_9(%arg0: i32, %arg1: i32) -> (i32, i32, i32) {
    %c0_i32 = arith.constant 0 : i32
    %c0_i32_0 = arith.constant 0 : i32
    %c0_i32_1 = arith.constant 0 : i32
    return %arg1, %c0_i32, %c0_i32_0 : i32, i32, i32
  }
  func.func @transform_10(%arg0: i32, %arg1: i32) -> (i32, i32, i32) {
    %c0_i32 = arith.constant 0 : i32
    %c0_i32_0 = arith.constant 0 : i32
    %c0_i32_1 = arith.constant 0 : i32
    return %arg1, %c0_i32, %c0_i32_0 : i32, i32, i32
  }
  func.func @transform_11(%arg0: i32, %arg1: i32) -> (i32, i32, i32) {
    %c0_i32 = arith.constant 0 : i32
    %c0_i32_0 = arith.constant 0 : i32
    %c0_i32_1 = arith.constant 0 : i32
    return %arg1, %c0_i32, %c0_i32_0 : i32, i32, i32
  }
  func.func @transform_12(%arg0: i32, %arg1: i32) -> (i32, i32, i32) {
    %c0_i32 = arith.constant 0 : i32
    %c0_i32_0 = arith.constant 0 : i32
    %c0_i32_1 = arith.constant 0 : i32
    return %arg1, %c0_i32, %c0_i32_0 : i32, i32, i32
  }
  func.func @transform_13(%arg0: i32, %arg1: i32) -> (i32, i32, i32) {
    %c0_i32 = arith.constant 0 : i32
    %c0_i32_0 = arith.constant 0 : i32
    %c0_i32_1 = arith.constant 0 : i32
    return %arg1, %c0_i32, %c0_i32_0 : i32, i32, i32
  }
  func.func @transform_14(%arg0: i32, %arg1: i32) -> (i32, i32, i32) {
    %c0_i32 = arith.constant 0 : i32
    %c0_i32_0 = arith.constant 0 : i32
    %c0_i32_1 = arith.constant 0 : i32
    return %arg1, %c0_i32, %c0_i32_0 : i32, i32, i32
  }
  func.func @transform_15(%arg0: i32, %arg1: i32) -> (i32, i32, i32) {
    %c0_i32 = arith.constant 0 : i32
    %c0_i32_0 = arith.constant 0 : i32
    %c0_i32_1 = arith.constant 0 : i32
    return %arg1, %c0_i32, %c0_i32_0 : i32, i32, i32
  }
  func.func @transform_16(%arg0: i32, %arg1: i32) -> (i32, i32, i32) {
    %c0_i32 = arith.constant 0 : i32
    %c0_i32_0 = arith.constant 0 : i32
    %c0_i32_1 = arith.constant 0 : i32
    return %arg1, %c0_i32, %c0_i32_0 : i32, i32, i32
  }
  func.func @transform_17(%arg0: i32, %arg1: i32) -> (i32, i32, i32) {
    %c0_i32 = arith.constant 0 : i32
    %c0_i32_0 = arith.constant 0 : i32
    %c0_i32_1 = arith.constant 0 : i32
    return %arg1, %c0_i32, %c0_i32_0 : i32, i32, i32
  }
  func.func @transform_18(%arg0: i32, %arg1: i32) -> (i32, i32, i32) {
    %c0_i32 = arith.constant 0 : i32
    %c0_i32_0 = arith.constant 0 : i32
    %c0_i32_1 = arith.constant 0 : i32
    return %arg1, %c0_i32, %c0_i32_0 : i32, i32, i32
  }
  func.func @transform_19(%arg0: i32, %arg1: i32) -> (i32, i32, i32) {
    %c0_i32 = arith.constant 0 : i32
    %c0_i32_0 = arith.constant 0 : i32
    %c0_i32_1 = arith.constant 0 : i32
    return %arg1, %c0_i32, %c0_i32_0 : i32, i32, i32
  }
  func.func @transform_20(%arg0: i32, %arg1: i32) -> (i32, i32, i32) {
    %c0_i32 = arith.constant 0 : i32
    %c0_i32_0 = arith.constant 0 : i32
    %c0_i32_1 = arith.constant 0 : i32
    return %arg1, %c0_i32, %c0_i32_0 : i32, i32, i32
  }
  func.func @transform_21(%arg0: i32, %arg1: i32) -> (i32, i32, i32) {
    %c0_i32 = arith.constant 0 : i32
    %c0_i32_0 = arith.constant 0 : i32
    %c0_i32_1 = arith.constant 0 : i32
    return %arg1, %c0_i32, %c0_i32_0 : i32, i32, i32
  }
  func.func @transform_22(%arg0: i32, %arg1: i32) -> (i32, i32, i32) {
    %c0_i32 = arith.constant 0 : i32
    %c0_i32_0 = arith.constant 0 : i32
    %c0_i32_1 = arith.constant 0 : i32
    return %arg0, %c0_i32, %c0_i32_0 : i32, i32, i32
  }
}

</mosaic_0001>

<llo_original>
// kernel: transformer_forward.2
$region0: #{transformer_forward.2}
  #allocation0 [shape = 'u32[]', space=smem, size = 0x4, offset = 0x4, fixed_abs, tag = 'smem constant byte address 0x4 - core index']
  #allocation1 [shape = 'u32[144,128]{1,0:T(1,128)}', space=vmem, size = 0x12000, scoped, tag = 'internal scratch']
  #allocation2 [shape = 'f32[8,128]{1,0:T(8,128)}', space=vmem, size = 0x1000, scoped, tag = 'scratch operand']
  %s0 = inlined_call_operand.vmem [shape: f32[2,8,128], index: 0, kind: input, shape index: {}]
  %s1 = inlined_call_operand.vmem [shape: bf16[2,128,384], index: 1, kind: input, shape index: {}]
  %s2 = inlined_call_operand.vmem [shape: f32[2,1,384], index: 2, kind: input, shape index: {}]
  %s3 = inlined_call_operand.hbm [shape: bf16[2,128,128], index: 3, kind: input, shape index: {}]
  %s4 = inlined_call_operand.vmem [shape: f32[2,1,128], index: 4, kind: input, shape index: {}]
  %s5 = inlined_call_operand.vmem [shape: f32[2,1,128], index: 5, kind: input, shape index: {}]
  %s6 = inlined_call_operand.vmem [shape: f32[2,1,128], index: 6, kind: input, shape index: {}]
  %s7 = inlined_call_operand.hbm [shape: bf16[2,128,256], index: 7, kind: input, shape index: {}]
  %s8 = inlined_call_operand.vmem [shape: f32[2,1,256], index: 8, kind: input, shape index: {}]
  %s9 = inlined_call_operand.hbm [shape: bf16[2,256,128], index: 9, kind: input, shape index: {}]
  %s10 = inlined_call_operand.vmem [shape: f32[2,1,128], index: 10, kind: input, shape index: {}]
  %s11 = inlined_call_operand.vmem [shape: f32[2,1,128], index: 11, kind: input, shape index: {}]
  %s12 = inlined_call_operand.vmem [shape: f32[2,1,128], index: 12, kind: input, shape index: {}]
  %s13 = inlined_call_operand.vmem [shape: f32[2,8,128], index: 13, kind: output, shape index: {}]
  %s14 = sld [smem:[#allocation0]]
  $region105: #{transformer_forward.2} parent=0
    _
  %s16 = ssub.s32 1, %s14
  %s17 = scalar_select 0, %s16, %s14
  $region1: #{transformer_forward.2} parent=0
    #allocation3 [shape = 'u8[65536]{0}', space=vmem, size = 0x10000, scoped, tag = 'input window, operand 3']
    #allocation4 [shape = 's32[2]{0}', space=sflag, size = 0x8, scoped, tag = 'scoped memory for transformer_forward.2']
    #allocation5 [shape = 'u8[131072]{0}', space=vmem, size = 0x20000, scoped, tag = 'input window, operand 7']
    #allocation6 [shape = 's32[2]{0}', space=sflag, size = 0x8, scoped, tag = 'scoped memory for transformer_forward.2']
    #allocation7 [shape = 'u8[131072]{0}', space=vmem, size = 0x20000, scoped, tag = 'input window, operand 9']
    %18 = vsyncpa [#allocation4], 0
    %s19 = scalar_lea.sflag [#allocation4], 1
    %20 = vsyncpa %s19, 0
    %21 = vsyncpa [#allocation6], 0
    %s22 = scalar_lea.sflag [#allocation6], 1
    %23 = vsyncpa %s22, 0
    loop: start=0, step=1, limit=6
    $region2: #{transformer_forward.2} parent=1 // loop_pre_header
      _
    $region3: #{transformer_forward.2} parent=1 // loop_header
      %s25 = sphi 0, %s29
      %p26 = scmp.ge.s32.totalorder %s25, 6
      %s32 = sphi 0, %s44
      %s33 = sphi 0, %s40
      %s34 = sphi 0, %s32
      %s35 = sphi 0, %s33
      %s36 = sphi 0, %s34
      %s37 = sphi 0, %s35
      %s47 = sphi 0, %s49
      %s50 = sphi 0, %s47
      %s51 = sphi 0, %s50
      %s67 = sphi 0, %s51
      %s73 = sphi 0, %s75
      %s76 = sphi 0, %s73
      %s77 = sphi 0, %s76
      %s93 = sphi 0, %s77
      %s99 = sphi 0, %s101
      %s102 = sphi 0, %s99
      %s103 = sphi 0, %s102
      %s119 = sphi 0, %s103
      %s125 = sphi 0, %s127
      %s128 = sphi 0, %s125
      %s129 = sphi 0, %s128
      %s145 = sphi 0, %s129
      %s151 = sphi 0, %s153
      %s154 = sphi 0, %s151
      %s155 = sphi 0, %s154
      %s171 = sphi 0, %s155
      %s177 = sphi 0, %s179
      %s180 = sphi 0, %s177
      %s181 = sphi 0, %s180
      %s197 = sphi 0, %s181
      %s203 = sphi 0, %s205
      %s206 = sphi 0, %s203
      %s207 = sphi 0, %s206
      %s223 = sphi 0, %s207
      %s229 = sphi 0, %s231
      %s232 = sphi 0, %s229
      %s233 = sphi 0, %s232
      %s249 = sphi 0, %s233
      %s255 = sphi 0, %s257
      %s258 = sphi 0, %s255
      %s259 = sphi 0, %s258
      %s275 = sphi 0, %s259
      %s281 = sphi 0, %s283
      %s284 = sphi 0, %s281
      %s285 = sphi 0, %s284
      %s301 = sphi 0, %s285
      %s307 = sphi 0, %s309
      %s310 = sphi 0, %s307
      %s311 = sphi 0, %s310
      %s327 = sphi 0, %s311
      %s333 = sphi 0, %s335
      %s336 = sphi 0, %s333
      %s337 = sphi 0, %s336
      %s353 = sphi 0, %s337
      %s359 = sphi 0, %s361
      %s362 = sphi 0, %s359
      %s363 = sphi 0, %s362
      %s379 = sphi 0, %s363
      %s385 = sphi 0, %s387
      %s388 = sphi 0, %s385
      %s389 = sphi 0, %s388
      %s405 = sphi 0, %s389
    $region4: #{transformer_forward.2} parent=1 // loop_header_branch
      %28 = sbr.rel (%p26) target = $region8
    $region5: #{transformer_forward.2} parent=1 // loop_body
      %s30 = ssub.s32 %s25, 1
      %s31 = ssub.s32 %s25, 2
      %s38 = sadd.s32 1, %s33
      %p39 = scmp.ge.s32.totalorder %s38, 2
      %s40 = scalar_select %p39, 0, %s38
      %s41 = sadd.s32 1, %s32
      %s42 = scalar_select %p39, %s41, %s32
      %p43 = scmp.ge.s32.totalorder %s42, 2
      %s44 = scalar_select %p43, 0, %s42
      %s45 = ssub.s32 %s32, %s44
      %p46 = scmp.eq.s32.totalorder %s45, 0
      %s48 = sadd.s32 %s47, 1
      %s49 = scalar_select %p46, %s47, %s48
      %p52 = pneg %p46
      %p53 = scmp.eq.s32.totalorder %s25, 3
      %p54 = por %p52, %p53
      %p55 = scmp.ne.s32.totalorder %s47, %s50
      %p56 = scmp.eq.s32.totalorder %s25, 0
      %p57 = por %p55, %p56
      %p58 = scmp.ne.s32.totalorder %s47, %s50
      %p59 = scmp.eq.s32.totalorder %s30, 3
      %p60 = por %p58, %p59
      %p61 = scmp.ne.s32.totalorder %s50, %s51
      %p62 = scmp.eq.s32.totalorder %s30, 0
      %p63 = por %p61, %p62
      %p64 = scmp.ne.s32.totalorder %s50, %s51
      %p65 = scmp.eq.s32.totalorder %s31, 3
      %p66 = por %p64, %p65
      %p68 = scmp.ne.s32.totalorder %s51, %s67
      %p69 = scmp.eq.s32.totalorder %s31, 0
      %p70 = por %p68, %p69
      %s71 = ssub.s32 %s33, %s40
      %p72 = scmp.eq.s32.totalorder %s71, 0
      %s74 = sadd.s32 %s73, 1
      %s75 = scalar_select %p72, %s73, %s74
      %p78 = pneg %p72
      %p79 = scmp.eq.s32.totalorder %s25, 3
      %p80 = por %p78, %p79
      %p81 = scmp.ne.s32.totalorder %s73, %s76
      %p82 = scmp.eq.s32.totalorder %s25, 0
      %p83 = por %p81, %p82
      %p84 = scmp.ne.s32.totalorder %s73, %s76
      %p85 = scmp.eq.s32.totalorder %s30, 3
      %p86 = por %p84, %p85
      %p87 = scmp.ne.s32.totalorder %s76, %s77
      %p88 = scmp.eq.s32.totalorder %s30, 0
      %p89 = por %p87, %p88
      %p90 = scmp.ne.s32.totalorder %s76, %s77
      %p91 = scmp.eq.s32.totalorder %s31, 3
      %p92 = por %p90, %p91
      %p94 = scmp.ne.s32.totalorder %s77, %s93
      %p95 = scmp.eq.s32.totalorder %s31, 0
      %p96 = por %p94, %p95
      %s97 = ssub.s32 %s33, %s40
      %p98 = scmp.eq.s32.totalorder %s97, 0
      %s100 = sadd.s32 %s99, 1
      %s101 = scalar_select %p98, %s99, %s100
      %p104 = pneg %p98
      %p105 = scmp.eq.s32.totalorder %s25, 3
      %p106 = por %p104, %p105
      %p107 = scmp.ne.s32.totalorder %s99, %s102
      %p108 = scmp.eq.s32.totalorder %s25, 0
      %p109 = por %p107, %p108
      %p110 = scmp.ne.s32.totalorder %s99, %s102
      %p111 = scmp.eq.s32.totalorder %s30, 3
      %p112 = por %p110, %p111
      %p113 = scmp.ne.s32.totalorder %s102, %s103
      %p114 = scmp.eq.s32.totalorder %s30, 0
      %p115 = por %p113, %p114
      %p116 = scmp.ne.s32.totalorder %s102, %s103
      %p117 = scmp.eq.s32.totalorder %s31, 3
      %p118 = por %p116, %p117
      %p120 = scmp.ne.s32.totalorder %s103, %s119
      %p121 = scmp.eq.s32.totalorder %s31, 0
      %p122 = por %p120, %p121
      %s123 = ssub.s32 %s33, %s40
      %p124 = scmp.eq.s32.totalorder %s123, 0
      %s126 = sadd.s32 %s125, 1
      %s127 = scalar_select %p124, %s125, %s126
      %p130 = pneg %p124
      %p131 = scmp.eq.s32.totalorder %s25, 3
      %p132 = por %p130, %p131
      %p133 = scmp.ne.s32.totalorder %s125, %s128
      %p134 = scmp.eq.s32.totalorder %s25, 0
      %p135 = por %p133, %p134
      %p136 = scmp.ne.s32.totalorder %s125, %s128
      %p137 = scmp.eq.s32.totalorder %s30, 3
      %p138 = por %p136, %p137
      %p139 = scmp.ne.s32.totalorder %s128, %s129
      %p140 = scmp.eq.s32.totalorder %s30, 0
      %p141 = por %p139, %p140
      %p142 = scmp.ne.s32.totalorder %s128, %s129
      %p143 = scmp.eq.s32.totalorder %s31, 3
      %p144 = por %p142, %p143
      %p146 = scmp.ne.s32.totalorder %s129, %s145
      %p147 = scmp.eq.s32.totalorder %s31, 0
      %p148 = por %p146, %p147
      %s149 = ssub.s32 %s33, %s40
      %p150 = scmp.eq.s32.totalorder %s149, 0
      %s152 = sadd.s32 %s151, 1
      %s153 = scalar_select %p150, %s151, %s152
      %p156 = pneg %p150
      %p157 = scmp.eq.s32.totalorder %s25, 3
      %p158 = por %p156, %p157
      %p159 = scmp.ne.s32.totalorder %s151, %s154
      %p160 = scmp.eq.s32.totalorder %s25, 0
      %p161 = por %p159, %p160
      %p162 = scmp.ne.s32.totalorder %s151, %s154
      %p163 = scmp.eq.s32.totalorder %s30, 3
      %p164 = por %p162, %p163
      %p165 = scmp.ne.s32.totalorder %s154, %s155
      %p166 = scmp.eq.s32.totalorder %s30, 0
      %p167 = por %p165, %p166
      %p168 = scmp.ne.s32.totalorder %s154, %s155
      %p169 = scmp.eq.s32.totalorder %s31, 3
      %p170 = por %p168, %p169
      %p172 = scmp.ne.s32.totalorder %s155, %s171
      %p173 = scmp.eq.s32.totalorder %s31, 0
      %p174 = por %p172, %p173
      %s175 = ssub.s32 %s33, %s40
      %p176 = scmp.eq.s32.totalorder %s175, 0
      %s178 = sadd.s32 %s177, 1
      %s179 = scalar_select %p176, %s177, %s178
      %p182 = pneg %p176
      %p183 = scmp.eq.s32.totalorder %s25, 3
      %p184 = por %p182, %p183
      %p185 = scmp.ne.s32.totalorder %s177, %s180
      %p186 = scmp.eq.s32.totalorder %s25, 0
      %p187 = por %p185, %p186
      %p188 = scmp.ne.s32.totalorder %s177, %s180
      %p189 = scmp.eq.s32.totalorder %s30, 3
      %p190 = por %p188, %p189
      %p191 = scmp.ne.s32.totalorder %s180, %s181
      %p192 = scmp.eq.s32.totalorder %s30, 0
      %p193 = por %p191, %p192
      %p194 = scmp.ne.s32.totalorder %s180, %s181
      %p195 = scmp.eq.s32.totalorder %s31, 3
      %p196 = por %p194, %p195
      %p198 = scmp.ne.s32.totalorder %s181, %s197
      %p199 = scmp.eq.s32.totalorder %s31, 0
      %p200 = por %p198, %p199
      %s201 = ssub.s32 %s33, %s40
      %p202 = scmp.eq.s32.totalorder %s201, 0
      %s204 = sadd.s32 %s203, 1
      %s205 = scalar_select %p202, %s203, %s204
      %p208 = pneg %p202
      %p209 = scmp.eq.s32.totalorder %s25, 3
      %p210 = por %p208, %p209
      %p211 = scmp.ne.s32.totalorder %s203, %s206
      %p212 = scmp.eq.s32.totalorder %s25, 0
      %p213 = por %p211, %p212
      %p214 = scmp.ne.s32.totalorder %s203, %s206
      %p215 = scmp.eq.s32.totalorder %s30, 3
      %p216 = por %p214, %p215
      %p217 = scmp.ne.s32.totalorder %s206, %s207
      %p218 = scmp.eq.s32.totalorder %s30, 0
      %p219 = por %p217, %p218
      %p220 = scmp.ne.s32.totalorder %s206, %s207
      %p221 = scmp.eq.s32.totalorder %s31, 3
      %p222 = por %p220, %p221
      %p224 = scmp.ne.s32.totalorder %s207, %s223
      %p225 = scmp.eq.s32.totalorder %s31, 0
      %p226 = por %p224, %p225
      %s227 = ssub.s32 %s33, %s40
      %p228 = scmp.eq.s32.totalorder %s227, 0
      %s230 = sadd.s32 %s229, 1
      %s231 = scalar_select %p228, %s229, %s230
      %p234 = pneg %p228
      %p235 = scmp.eq.s32.totalorder %s25, 3
      %p236 = por %p234, %p235
      %p237 = scmp.ne.s32.totalorder %s229, %s232
      %p238 = scmp.eq.s32.totalorder %s25, 0
      %p239 = por %p237, %p238
      %p240 = scmp.ne.s32.totalorder %s229, %s232
      %p241 = scmp.eq.s32.totalorder %s30, 3
      %p242 = por %p240, %p241
      %p243 = scmp.ne.s32.totalorder %s232, %s233
      %p244 = scmp.eq.s32.totalorder %s30, 0
      %p245 = por %p243, %p244
      %p246 = scmp.ne.s32.totalorder %s232, %s233
      %p247 = scmp.eq.s32.totalorder %s31, 3
      %p248 = por %p246, %p247
      %p250 = scmp.ne.s32.totalorder %s233, %s249
      %p251 = scmp.eq.s32.totalorder %s31, 0
      %p252 = por %p250, %p251
      %s253 = ssub.s32 %s33, %s40
      %p254 = scmp.eq.s32.totalorder %s253, 0
      %s256 = sadd.s32 %s255, 1
      %s257 = scalar_select %p254, %s255, %s256
      %p260 = pneg %p254
      %p261 = scmp.eq.s32.totalorder %s25, 3
      %p262 = por %p260, %p261
      %p263 = scmp.ne.s32.totalorder %s255, %s258
      %p264 = scmp.eq.s32.totalorder %s25, 0
      %p265 = por %p263, %p264
      %p266 = scmp.ne.s32.totalorder %s255, %s258
      %p267 = scmp.eq.s32.totalorder %s30, 3
      %p268 = por %p266, %p267
      %p269 = scmp.ne.s32.totalorder %s258, %s259
      %p270 = scmp.eq.s32.totalorder %s30, 0
      %p271 = por %p269, %p270
      %p272 = scmp.ne.s32.totalorder %s258, %s259
      %p273 = scmp.eq.s32.totalorder %s31, 3
      %p274 = por %p272, %p273
      %p276 = scmp.ne.s32.totalorder %s259, %s275
      %p277 = scmp.eq.s32.totalorder %s31, 0
      %p278 = por %p276, %p277
      %s279 = ssub.s32 %s33, %s40
      %p280 = scmp.eq.s32.totalorder %s279, 0
      %s282 = sadd.s32 %s281, 1
      %s283 = scalar_select %p280, %s281, %s282
      %p286 = pneg %p280
      %p287 = scmp.eq.s32.totalorder %s25, 3
      %p288 = por %p286, %p287
      %p289 = scmp.ne.s32.totalorder %s281, %s284
      %p290 = scmp.eq.s32.totalorder %s25, 0
      %p291 = por %p289, %p290
      %p292 = scmp.ne.s32.totalorder %s281, %s284
      %p293 = scmp.eq.s32.totalorder %s30, 3
      %p294 = por %p292, %p293
      %p295 = scmp.ne.s32.totalorder %s284, %s285
      %p296 = scmp.eq.s32.totalorder %s30, 0
      %p297 = por %p295, %p296
      %p298 = scmp.ne.s32.totalorder %s284, %s285
      %p299 = scmp.eq.s32.totalorder %s31, 3
      %p300 = por %p298, %p299
      %p302 = scmp.ne.s32.totalorder %s285, %s301
      %p303 = scmp.eq.s32.totalorder %s31, 0
      %p304 = por %p302, %p303
      %s305 = ssub.s32 %s33, %s40
      %p306 = scmp.eq.s32.totalorder %s305, 0
      %s308 = sadd.s32 %s307, 1
      %s309 = scalar_select %p306, %s307, %s308
      %p312 = pneg %p306
      %p313 = scmp.eq.s32.totalorder %s25, 3
      %p314 = por %p312, %p313
      %p315 = scmp.ne.s32.totalorder %s307, %s310
      %p316 = scmp.eq.s32.totalorder %s25, 0
      %p317 = por %p315, %p316
      %p318 = scmp.ne.s32.totalorder %s307, %s310
      %p319 = scmp.eq.s32.totalorder %s30, 3
      %p320 = por %p318, %p319
      %p321 = scmp.ne.s32.totalorder %s310, %s311
      %p322 = scmp.eq.s32.totalorder %s30, 0
      %p323 = por %p321, %p322
      %p324 = scmp.ne.s32.totalorder %s310, %s311
      %p325 = scmp.eq.s32.totalorder %s31, 3
      %p326 = por %p324, %p325
      %p328 = scmp.ne.s32.totalorder %s311, %s327
      %p329 = scmp.eq.s32.totalorder %s31, 0
      %p330 = por %p328, %p329
      %s331 = ssub.s32 %s33, %s40
      %p332 = scmp.eq.s32.totalorder %s331, 0
      %s334 = sadd.s32 %s333, 1
      %s335 = scalar_select %p332, %s333, %s334
      %p338 = pneg %p332
      %p339 = scmp.eq.s32.totalorder %s25, 3
      %p340 = por %p338, %p339
      %p341 = scmp.ne.s32.totalorder %s333, %s336
      %p342 = scmp.eq.s32.totalorder %s25, 0
      %p343 = por %p341, %p342
      %p344 = scmp.ne.s32.totalorder %s333, %s336
      %p345 = scmp.eq.s32.totalorder %s30, 3
      %p346 = por %p344, %p345
      %p347 = scmp.ne.s32.totalorder %s336, %s337
      %p348 = scmp.eq.s32.totalorder %s30, 0
      %p349 = por %p347, %p348
      %p350 = scmp.ne.s32.totalorder %s336, %s337
      %p351 = scmp.eq.s32.totalorder %s31, 3
      %p352 = por %p350, %p351
      %p354 = scmp.ne.s32.totalorder %s337, %s353
      %p355 = scmp.eq.s32.totalorder %s31, 0
      %p356 = por %p354, %p355
      %s357 = ssub.s32 %s33, %s40
      %p358 = scmp.eq.s32.totalorder %s357, 0
      %s360 = sadd.s32 %s359, 1
      %s361 = scalar_select %p358, %s359, %s360
      %p364 = pneg %p358
      %p365 = scmp.eq.s32.totalorder %s25, 3
      %p366 = por %p364, %p365
      %p367 = scmp.ne.s32.totalorder %s359, %s362
      %p368 = scmp.eq.s32.totalorder %s25, 0
      %p369 = por %p367, %p368
      %p370 = scmp.ne.s32.totalorder %s359, %s362
      %p371 = scmp.eq.s32.totalorder %s30, 3
      %p372 = por %p370, %p371
      %p373 = scmp.ne.s32.totalorder %s362, %s363
      %p374 = scmp.eq.s32.totalorder %s30, 0
      %p375 = por %p373, %p374
      %p376 = scmp.ne.s32.totalorder %s362, %s363
      %p377 = scmp.eq.s32.totalorder %s31, 3
      %p378 = por %p376, %p377
      %p380 = scmp.ne.s32.totalorder %s363, %s379
      %p381 = scmp.eq.s32.totalorder %s31, 0
      %p382 = por %p380, %p381
      %s383 = ssub.s32 %s32, %s44
      %p384 = scmp.eq.s32.totalorder %s383, 0
      %s386 = sadd.s32 %s385, 1
      %s387 = scalar_select %p384, %s385, %s386
      %p390 = pneg %p384
      %p391 = scmp.eq.s32.totalorder %s25, 3
      %p392 = por %p390, %p391
      %p393 = scmp.ne.s32.totalorder %s385, %s388
      %p394 = scmp.eq.s32.totalorder %s25, 0
      %p395 = por %p393, %p394
      %p396 = scmp.ne.s32.totalorder %s385, %s388
      %p397 = scmp.eq.s32.totalorder %s30, 3
      %p398 = por %p396, %p397
      %p399 = scmp.ne.s32.totalorder %s388, %s389
      %p400 = scmp.eq.s32.totalorder %s30, 0
      %p401 = por %p399, %p400
      %p402 = scmp.ne.s32.totalorder %s388, %s389
      %p403 = scmp.eq.s32.totalorder %s31, 3
      %p404 = por %p402, %p403
      %p406 = scmp.ne.s32.totalorder %s389, %s405
      %p407 = scmp.eq.s32.totalorder %s31, 0
      %p408 = por %p406, %p407
      %p409 = scmp.le.s32.totalorder 1, %s25
      %p410 = scmp.lt.s32.totalorder %s25, 5
      %p411 = pnand %p409, %p410
      %p412 = pneg %p411
      // Predicated region
      $region9: #{transformer_forward.2} parent=5 // pred_check
        _
      $region10: #{transformer_forward.2} parent=5 // pred_check_branch
        %414 = sbr.rel (%p411) target = $region12
      $region11: #{transformer_forward.2} parent=5 // pred_region
        %s415 = ssub.s32 %s25, 1
      $region12: #{transformer_forward.2} parent=5 // pred_fallthru
        _
      %p416 = scmp.lt.s32.totalorder %s25, 4
      // Predicated region
      $region13: #{transformer_forward.2} parent=5 // pred_check
        %p417 = pneg %p416
      $region14: #{transformer_forward.2} parent=5 // pred_check_branch
        %419 = sbr.rel (%p417) target = $region16
      $region15: #{transformer_forward.2} parent=5 // pred_region
        // Predicated region
        $region17: #{transformer_forward.2} parent=15 // pred_check
          %p420 = pneg %p57
        $region18: #{transformer_forward.2} parent=15 // pred_check_branch
          %422 = sbr.rel (%p420) target = $region20
        $region19: #{transformer_forward.2} parent=15 // pred_region
          %p423 = scmp.lt.s32.totalorder %s32, 1
          %s424 = scalar_select %p423, %s32, 1
          %s425 = smul.addr %s424, 8
          %s426 = scalar_lea.vmem %s0, %s425
        $region20: #{transformer_forward.2} parent=15 // pred_fallthru
          _
        // Predicated region
        $region21: #{transformer_forward.2} parent=15 // pred_check
          %p427 = pneg %p83
        $region22: #{transformer_forward.2} parent=15 // pred_check_branch
          %429 = sbr.rel (%p427) target = $region24
        $region23: #{transformer_forward.2} parent=15 // pred_region
          %p430 = scmp.lt.s32.totalorder %s33, 1
          %s431 = scalar_select %p430, %s33, 1
          %s432 = smul.addr %s431, 48
          %s433 = smul.addr %s432, 4
          %s434 = scalar_lea.vmem %s1, %s433
        $region24: #{transformer_forward.2} parent=15 // pred_fallthru
          _
        // Predicated region
        $region25: #{transformer_forward.2} parent=15 // pred_check
          %p435 = pneg %p109
        $region26: #{transformer_forward.2} parent=15 // pred_check_branch
          %437 = sbr.rel (%p435) target = $region28
        $region27: #{transformer_forward.2} parent=15 // pred_region
          %p438 = scmp.lt.s32.totalorder %s33, 1
          %s439 = scalar_select %p438, %s33, 1
          %s440 = smul.addr %s439, 3
          %s441 = scalar_lea.vmem %s2, %s440
        $region28: #{transformer_forward.2} parent=15 // pred_fallthru
          _
        // Predicated region
        $region29: #{transformer_forward.2} parent=15 // pred_check
          %p442 = pneg %p135
        $region30: #{transformer_forward.2} parent=15 // pred_check_branch
          %444 = sbr.rel (%p442) target = $region32
        $region31: #{transformer_forward.2} parent=15 // pred_region
          %s445 = sand.u32 %s125, 1
          %s446 = scalar_lea.sflag [#allocation4], %s445
          %s447 = sand.u32 %s125, 1
          %s448 = smul.addr %s447, 64
          %s449 = scalar_lea.vmem [#allocation3], %s448
          %s451 = ssub.s32 1024, 1024
          %452 = vsyncadd %s446, %s451
          %s453 = smul.addr %s33, 16
          %s454 = smul.addr %s453, 64
          %s455 = scalar_lea.hbm %s3, %s454
          %s456 = sshll.u32 %s449, 4
          %s457 = int_to_ptr.vmem [resolvable:$true] %s456
          %462 = dma.hbm_to_vmem [thread:$0]  %s455, 1024, %s457, %s446, 64, 64, 4
        $region32: #{transformer_forward.2} parent=15 // pred_fallthru
          _
        // Predicated region
        $region33: #{transformer_forward.2} parent=15 // pred_check
          %p463 = pneg %p161
        $region34: #{transformer_forward.2} parent=15 // pred_check_branch
          %465 = sbr.rel (%p463) target = $region36
        $region35: #{transformer_forward.2} parent=15 // pred_region
          %p466 = scmp.lt.s32.totalorder %s33, 1
          %s467 = scalar_select %p466, %s33, 1
          %s468 = scalar_lea.vmem %s4, %s467
        $region36: #{transformer_forward.2} parent=15 // pred_fallthru
          _
        // Predicated region
        $region37: #{transformer_forward.2} parent=15 // pred_check
          %p469 = pneg %p187
        $region38: #{transformer_forward.2} parent=15 // pred_check_branch
          %471 = sbr.rel (%p469) target = $region40
        $region39: #{transformer_forward.2} parent=15 // pred_region
          %p472 = scmp.lt.s32.totalorder %s33, 1
          %s473 = scalar_select %p472, %s33, 1
          %s474 = scalar_lea.vmem %s5, %s473
        $region40: #{transformer_forward.2} parent=15 // pred_fallthru
          _
        // Predicated region
        $region41: #{transformer_forward.2} parent=15 // pred_check
          %p475 = pneg %p213
        $region42: #{transformer_forward.2} parent=15 // pred_check_branch
          %477 = sbr.rel (%p475) target = $region44
        $region43: #{transformer_forward.2} parent=15 // pred_region
          %p478 = scmp.lt.s32.totalorder %s33, 1
          %s479 = scalar_select %p478, %s33, 1
          %s480 = scalar_lea.vmem %s6, %s479
        $region44: #{transformer_forward.2} parent=15 // pred_fallthru
          _
        // Predicated region
        $region45: #{transformer_forward.2} parent=15 // pred_check
          %p481 = pneg %p239
        $region46: #{transformer_forward.2} parent=15 // pred_check_branch
          %483 = sbr.rel (%p481) target = $region48
        $region47: #{transformer_forward.2} parent=15 // pred_region
          %s484 = sand.u32 %s25, 1
          %s485 = scalar_lea.sflag [#allocation6], %s484
          %s486 = sand.u32 %s229, 1
          %s487 = smul.addr %s486, 128
          %s488 = scalar_lea.vmem [#allocation5], %s487
          %s490 = ssub.s32 2048, 2048
          %491 = vsyncadd %s485, %s490
          %s492 = smul.addr %s33, 32
          %s493 = smul.addr %s492, 64
          %s494 = scalar_lea.hbm %s7, %s493
          %s495 = sshll.u32 %s488, 4
          %s496 = int_to_ptr.vmem [resolvable:$true] %s495
          %501 = dma.hbm_to_vmem [thread:$0]  %s494, 2048, %s496, %s485, 128, 128, 8
        $region48: #{transformer_forward.2} parent=15 // pred_fallthru
          _
        // Predicated region
        $region49: #{transformer_forward.2} parent=15 // pred_check
          %p502 = pneg %p265
        $region50: #{transformer_forward.2} parent=15 // pred_check_branch
          %504 = sbr.rel (%p502) target = $region52
        $region51: #{transformer_forward.2} parent=15 // pred_region
          %p505 = scmp.lt.s32.totalorder %s33, 1
          %s506 = scalar_select %p505, %s33, 1
          %s507 = smul.addr %s506, 2
          %s508 = scalar_lea.vmem %s8, %s507
        $region52: #{transformer_forward.2} parent=15 // pred_fallthru
          _
        // Predicated region
        $region53: #{transformer_forward.2} parent=15 // pred_check
          %p509 = pneg %p291
        $region54: #{transformer_forward.2} parent=15 // pred_check_branch
          %511 = sbr.rel (%p509) target = $region56
        $region55: #{transformer_forward.2} parent=15 // pred_region
          %s512 = sand.u32 %s25, 1
          %s513 = scalar_lea.sflag [#allocation6], %s512
          %s514 = sand.u32 %s281, 1
          %s515 = smul.addr %s514, 128
          %s516 = scalar_lea.vmem [#allocation7], %s515
          %s518 = ssub.s32 2048, 2048
          %519 = vsyncadd %s513, %s518
          %s520 = smul.addr %s33, 32
          %s521 = smul.addr %s520, 64
          %s522 = scalar_lea.hbm %s9, %s521
          %s523 = sshll.u32 %s516, 4
          %s524 = int_to_ptr.vmem [resolvable:$true] %s523
          %529 = dma.hbm_to_vmem [thread:$0]  %s522, 2048, %s524, %s513, 64, 64, 4
        $region56: #{transformer_forward.2} parent=15 // pred_fallthru
          _
        // Predicated region
        $region57: #{transformer_forward.2} parent=15 // pred_check
          %p530 = pneg %p317
        $region58: #{transformer_forward.2} parent=15 // pred_check_branch
          %532 = sbr.rel (%p530) target = $region60
        $region59: #{transformer_forward.2} parent=15 // pred_region
          %p533 = scmp.lt.s32.totalorder %s33, 1
          %s534 = scalar_select %p533, %s33, 1
          %s535 = scalar_lea.vmem %s10, %s534
        $region60: #{transformer_forward.2} parent=15 // pred_fallthru
          _
        // Predicated region
        $region61: #{transformer_forward.2} parent=15 // pred_check
          %p536 = pneg %p343
        $region62: #{transformer_forward.2} parent=15 // pred_check_branch
          %538 = sbr.rel (%p536) target = $region64
        $region63: #{transformer_forward.2} parent=15 // pred_region
          %p539 = scmp.lt.s32.totalorder %s33, 1
          %s540 = scalar_select %p539, %s33, 1
          %s541 = scalar_lea.vmem %s11, %s540
        $region64: #{transformer_forward.2} parent=15 // pred_fallthru
          _
        // Predicated region
        $region65: #{transformer_forward.2} parent=15 // pred_check
          %p542 = pneg %p369
        $region66: #{transformer_forward.2} parent=15 // pred_check_branch
          %544 = sbr.rel (%p542) target = $region68
        $region67: #{transformer_forward.2} parent=15 // pred_region
          %p545 = scmp.lt.s32.totalorder %s33, 1
          %s546 = scalar_select %p545, %s33, 1
          %s547 = scalar_lea.vmem %s12, %s546
        $region68: #{transformer_forward.2} parent=15 // pred_fallthru
          _
      $region16: #{transformer_forward.2} parent=5 // pred_fallthru
        _
      %p548 = scmp.le.s32.totalorder 1, %s25
      %p549 = scmp.lt.s32.totalorder %s25, 5
      %p550 = pnand %p548, %p549
      %p551 = pneg %p550
      // Predicated region
      $region69: #{transformer_forward.2} parent=5 // pred_check
        _
      $region70: #{transformer_forward.2} parent=5 // pred_check_branch
        %553 = sbr.rel (%p550) target = $region72
      $region71: #{transformer_forward.2} parent=5 // pred_region
        %s554 = ssub.s32 %s25, 1
        %s555 = sand.u32 %s128, 1
        %s556 = scalar_lea.sflag [#allocation4], %s555
        %s557 = sand.u32 %s128, 1
        %s558 = smul.addr %s557, 64
        %s559 = scalar_lea.vmem [#allocation3], %s558
        // Predicated region
        $region73: #{transformer_forward.2} parent=71 // pred_check
          %p560 = pneg %p141
        $region74: #{transformer_forward.2} parent=71 // pred_check_branch
          %562 = sbr.rel (%p560) target = $region76
        $region75: #{transformer_forward.2} parent=71 // pred_region
          %563 = dma.done %s556, 1024
        $region76: #{transformer_forward.2} parent=71 // pred_fallthru
          _
        %s564 = sand.u32 %s30, 1
        %s565 = scalar_lea.sflag [#allocation6], %s564
        %s566 = sand.u32 %s232, 1
        %s567 = smul.addr %s566, 128
        %s568 = scalar_lea.vmem [#allocation5], %s567
        // Predicated region
        $region77: #{transformer_forward.2} parent=71 // pred_check
          %p569 = pneg %p245
        $region78: #{transformer_forward.2} parent=71 // pred_check_branch
          %571 = sbr.rel (%p569) target = $region80
        $region79: #{transformer_forward.2} parent=71 // pred_region
          %572 = dma.done %s565, 2048
        $region80: #{transformer_forward.2} parent=71 // pred_fallthru
          _
        %s573 = sand.u32 %s30, 1
        %s574 = scalar_lea.sflag [#allocation6], %s573
        %s575 = sand.u32 %s284, 1
        %s576 = smul.addr %s575, 128
        %s577 = scalar_lea.vmem [#allocation7], %s576
        // Predicated region
        $region81: #{transformer_forward.2} parent=71 // pred_check
          %p578 = pneg %p297
        $region82: #{transformer_forward.2} parent=71 // pred_check_branch
          %580 = sbr.rel (%p578) target = $region84
        $region83: #{transformer_forward.2} parent=71 // pred_region
          %581 = dma.done %s574, 2048
        $region84: #{transformer_forward.2} parent=71 // pred_fallthru
          _
        %p582 = scmp.lt.s32.totalorder %s34, 1
        %s583 = scalar_select %p582, %s34, 1
        %s584 = smul.addr %s583, 8
        %s585 = scalar_lea.vmem %s0, %s584
        %p586 = pneg %p63
        %p587 = pneg %p60
        %p588 = scmp.lt.s32.totalorder %s35, 1
        %s589 = scalar_select %p588, %s35, 1
        %s590 = smul.addr %s589, 48
        %s591 = smul.addr %s590, 4
        %s592 = scalar_lea.vmem %s1, %s591
        %p593 = pneg %p89
        %p594 = pneg %p86
        %p595 = scmp.lt.s32.totalorder %s35, 1
        %s596 = scalar_select %p595, %s35, 1
        %s597 = smul.addr %s596, 3
        %s598 = scalar_lea.vmem %s2, %s597
        %p599 = pneg %p115
        %p600 = pneg %p112
        %s601 = sand.u32 %s128, 1
        %s602 = scalar_lea.sflag [#allocation4], %s601
        %s603 = sand.u32 %s128, 1
        %s604 = smul.addr %s603, 64
        %s605 = scalar_lea.vmem [#allocation3], %s604
        %p606 = pneg %p141
        %p607 = pneg %p138
        %p608 = scmp.lt.s32.totalorder %s35, 1
        %s609 = scalar_select %p608, %s35, 1
        %s610 = scalar_lea.vmem %s4, %s609
        %p611 = pneg %p167
        %p612 = pneg %p164
        %p613 = scmp.lt.s32.totalorder %s35, 1
        %s614 = scalar_select %p613, %s35, 1
        %s615 = scalar_lea.vmem %s5, %s614
        %p616 = pneg %p193
        %p617 = pneg %p190
        %p618 = scmp.lt.s32.totalorder %s35, 1
        %s619 = scalar_select %p618, %s35, 1
        %s620 = scalar_lea.vmem %s6, %s619
        %p621 = pneg %p219
        %p622 = pneg %p216
        %s623 = sand.u32 %s30, 1
        %s624 = scalar_lea.sflag [#allocation6], %s623
        %s625 = sand.u32 %s232, 1
        %s626 = smul.addr %s625, 128
        %s627 = scalar_lea.vmem [#allocation5], %s626
        %p628 = pneg %p245
        %p629 = pneg %p242
        %p630 = scmp.lt.s32.totalorder %s35, 1
        %s631 = scalar_select %p630, %s35, 1
        %s632 = smul.addr %s631, 2
        %s633 = scalar_lea.vmem %s8, %s632
        %p634 = pneg %p271
        %p635 = pneg %p268
        %s636 = sand.u32 %s30, 1
        %s637 = scalar_lea.sflag [#allocation6], %s636
        %s638 = sand.u32 %s284, 1
        %s639 = smul.addr %s638, 128
        %s640 = scalar_lea.vmem [#allocation7], %s639
        %p641 = pneg %p297
        %p642 = pneg %p294
        %p643 = scmp.lt.s32.totalorder %s35, 1
        %s644 = scalar_select %p643, %s35, 1
        %s645 = scalar_lea.vmem %s10, %s644
        %p646 = pneg %p323
        %p647 = pneg %p320
        %p648 = scmp.lt.s32.totalorder %s35, 1
        %s649 = scalar_select %p648, %s35, 1
        %s650 = scalar_lea.vmem %s11, %s649
        %p651 = pneg %p349
        %p652 = pneg %p346
        %p653 = scmp.lt.s32.totalorder %s35, 1
        %s654 = scalar_select %p653, %s35, 1
        %s655 = scalar_lea.vmem %s12, %s654
        %p656 = pneg %p375
        %p657 = pneg %p372
        %p658 = pneg %p401
        %p659 = pneg %p398
        %p660 = scmp.lt.s32.totalorder %s34, 1
        %s661 = scalar_select %p660, %s34, 1
        %s662 = smul.addr %s661, 8
        %s663 = scalar_lea.vmem %s13, %s662
        %p664 = scmp.lt.s32.totalorder %s34, 1
        %s665 = scalar_select %p664, %s34, 1
        %s666 = smul.addr %s665, 8
        %s667 = scalar_lea.vmem %s0, %s666
        %p668 = scmp.lt.s32.totalorder %s35, 1
        %s669 = scalar_select %p668, %s35, 1
        %s670 = smul.addr %s669, 48
        %s671 = smul.addr %s670, 4
        %s672 = scalar_lea.vmem %s1, %s671
        %p673 = scmp.lt.s32.totalorder %s35, 1
        %s674 = scalar_select %p673, %s35, 1
        %s675 = smul.addr %s674, 3
        %s676 = scalar_lea.vmem %s2, %s675
        %p677 = scmp.lt.s32.totalorder %s35, 1
        %s678 = scalar_select %p677, %s35, 1
        %s679 = scalar_lea.vmem %s4, %s678
        %p680 = scmp.lt.s32.totalorder %s35, 1
        %s681 = scalar_select %p680, %s35, 1
        %s682 = scalar_lea.vmem %s5, %s681
        %p683 = scmp.lt.s32.totalorder %s35, 1
        %s684 = scalar_select %p683, %s35, 1
        %s685 = scalar_lea.vmem %s6, %s684
        %p686 = scmp.lt.s32.totalorder %s35, 1
        %s687 = scalar_select %p686, %s35, 1
        %s688 = smul.addr %s687, 2
        %s689 = scalar_lea.vmem %s8, %s688
        %p690 = scmp.lt.s32.totalorder %s35, 1
        %s691 = scalar_select %p690, %s35, 1
        %s692 = scalar_lea.vmem %s10, %s691
        %p693 = scmp.lt.s32.totalorder %s35, 1
        %s694 = scalar_select %p693, %s35, 1
        %s695 = scalar_lea.vmem %s11, %s694
        %p696 = scmp.lt.s32.totalorder %s35, 1
        %s697 = scalar_select %p696, %s35, 1
        %s698 = scalar_lea.vmem %s12, %s697
        %p699 = scmp.lt.s32.totalorder %s34, 1
        %s700 = scalar_select %p699, %s34, 1
        %s701 = smul.addr %s700, 8
        %s702 = scalar_lea.vmem %s13, %s701
        %p704 = scmp.eq.s32.totalorder %s35, 0
        // Predicated region
        $region85: #{transformer_forward.2} parent=71 // pred_check
          %p705 = pneg %p704
        $region86: #{transformer_forward.2} parent=71 // pred_check_branch
          %707 = sbr.rel (%p705) target = $region88
        $region87: #{transformer_forward.2} parent=71 // pred_region
          %v708 = vld [vmem:[%s667] sm:$0xff]
          %709 = vst [vmem:[#allocation2] sm:$0xff] %v708
        $region88: #{transformer_forward.2} parent=71 // pred_fallthru
          _
        %v710 = vld [vmem:[#allocation2] sm:$0xff]
        %v711 = vld [vmem:[%s672] sm:$0xff]
        %v712 = vld [vmem:[%s672 + $0x8] sm:$0xf]
        %v713 = vld [vmem:[%s672 + $0xc] sm:$0xff]
        %v714 = vld [vmem:[%s672 + $0x14] sm:$0xf]
        %v715 = vld [vmem:[%s672 + $0x18] sm:$0xff]
        %v716 = vld [vmem:[%s672 + $0x20] sm:$0xf]
        %v717 = vld [vmem:[%s672 + $0x24] sm:$0xff]
        %v718 = vld [vmem:[%s672 + $0x2c] sm:$0xf]
        %v719 = vld [vmem:[%s672 + $0x30] sm:$0xff]
        %v720 = vld [vmem:[%s672 + $0x38] sm:$0xf]
        %v721 = vld [vmem:[%s672 + $0x3c] sm:$0xff]
        %v722 = vld [vmem:[%s672 + $0x44] sm:$0xf]
        %v723 = vld [vmem:[%s672 + $0x48] sm:$0xff]
        %v724 = vld [vmem:[%s672 + $0x50] sm:$0xf]
        %v725 = vld [vmem:[%s672 + $0x54] sm:$0xff]
        %v726 = vld [vmem:[%s672 + $0x5c] sm:$0xf]
        %v727 = vld [vmem:[%s672 + $0x60] sm:$0xff]
        %v728 = vld [vmem:[%s672 + $0x68] sm:$0xf]
        %v729 = vld [vmem:[%s672 + $0x6c] sm:$0xff]
        %v730 = vld [vmem:[%s672 + $0x74] sm:$0xf]
        %v731 = vld [vmem:[%s672 + $0x78] sm:$0xff]
        %v732 = vld [vmem:[%s672 + $0x80] sm:$0xf]
        %v733 = vld [vmem:[%s672 + $0x84] sm:$0xff]
        %v734 = vld [vmem:[%s672 + $0x8c] sm:$0xf]
        %v735 = vld [vmem:[%s672 + $0x90] sm:$0xff]
        %v736 = vld [vmem:[%s672 + $0x98] sm:$0xf]
        %v737 = vld [vmem:[%s672 + $0x9c] sm:$0xff]
        %v738 = vld [vmem:[%s672 + $0xa4] sm:$0xf]
        %v739 = vld [vmem:[%s672 + $0xa8] sm:$0xff]
        %v740 = vld [vmem:[%s672 + $0xb0] sm:$0xf]
        %v741 = vld [vmem:[%s672 + $0xb4] sm:$0xff]
        %v742 = vld [vmem:[%s672 + $0xbc] sm:$0xf]
        %v743 = vld [vmem:[%s676] sm:$0x7]
        %v744 = vld [vmem:[%s559] sm:$0xf]
        %v745 = vld [vmem:[%s559 + $0x4] sm:$0xf]
        %v746 = vld [vmem:[%s559 + $0x8] sm:$0xf]
        %v747 = vld [vmem:[%s559 + $0xc] sm:$0xf]
        %v748 = vld [vmem:[%s559 + $0x10] sm:$0xf]
        %v749 = vld [vmem:[%s559 + $0x14] sm:$0xf]
        %v750 = vld [vmem:[%s559 + $0x18] sm:$0xf]
        %v751 = vld [vmem:[%s559 + $0x1c] sm:$0xf]
        %v752 = vld [vmem:[%s559 + $0x20] sm:$0xf]
        %v753 = vld [vmem:[%s559 + $0x24] sm:$0xf]
        %v754 = vld [vmem:[%s559 + $0x28] sm:$0xf]
        %v755 = vld [vmem:[%s559 + $0x2c] sm:$0xf]
        %v756 = vld [vmem:[%s559 + $0x30] sm:$0xf]
        %v757 = vld [vmem:[%s559 + $0x34] sm:$0xf]
        %v758 = vld [vmem:[%s559 + $0x38] sm:$0xf]
        %v759 = vld [vmem:[%s559 + $0x3c] sm:$0xf]
        %v760 = vld [vmem:[%s679] sm:$0x1]
        %v761 = vpack.c.bf16 %v710, %v710
        %v763 = vlaneseq
        %v764 = vshrl.u32 %v763, 7
        %v765 = vsub.s32 0, %v764
        %v766 = vrot.slane %v743, %v765
        %v767 = vlaneseq
        %v768 = vshrl.u32 %v767, 7
        %v769 = vsub.s32 1, %v768
        %v770 = vrot.slane %v743, %v769
        %v771 = vlaneseq
        %v772 = vshrl.u32 %v771, 7
        %v773 = vsub.s32 2, %v772
        %v774 = vrot.slane %v743, %v773
        %v810 = vunpack.c.l.b16 %v711
        %v811 = vunpack.c.h.b16 %v711
        %v812 = vunpack.c.l.b16 %v712
        %v813 = vunpack.c.l.b16 %v713
        %v814 = vunpack.c.h.b16 %v713
        %v815 = vunpack.c.l.b16 %v714
        %v816 = vunpack.c.l.b16 %v715
        %v817 = vunpack.c.h.b16 %v715
        %v818 = vunpack.c.l.b16 %v716
        %v819 = vunpack.c.l.b16 %v717
        %v820 = vunpack.c.h.b16 %v717
        %v821 = vunpack.c.l.b16 %v718
        %v822 = vunpack.c.l.b16 %v719
        %v823 = vunpack.c.h.b16 %v719
        %v824 = vunpack.c.l.b16 %v720
        %v825 = vunpack.c.l.b16 %v721
        %v826 = vunpack.c.h.b16 %v721
        %v827 = vunpack.c.l.b16 %v722
        %v828 = vunpack.c.l.b16 %v723
        %v829 = vunpack.c.h.b16 %v723
        %v830 = vunpack.c.l.b16 %v724
        %v831 = vunpack.c.l.b16 %v725
        %v832 = vunpack.c.h.b16 %v725
        %v833 = vunpack.c.l.b16 %v726
        %v834 = vunpack.c.l.b16 %v727
        %v835 = vunpack.c.h.b16 %v727
        %v836 = vunpack.c.l.b16 %v728
        %v837 = vunpack.c.l.b16 %v729
        %v838 = vunpack.c.h.b16 %v729
        %v839 = vunpack.c.l.b16 %v730
        %v840 = vunpack.c.l.b16 %v731
        %v841 = vunpack.c.h.b16 %v731
        %v842 = vunpack.c.l.b16 %v732
        %v843 = vunpack.c.l.b16 %v733
        %v844 = vunpack.c.h.b16 %v733
        %v845 = vunpack.c.l.b16 %v734
        %v846 = vunpack.c.l.b16 %v735
        %v847 = vunpack.c.h.b16 %v735
        %v848 = vunpack.c.l.b16 %v736
        %v849 = vunpack.c.l.b16 %v737
        %v850 = vunpack.c.h.b16 %v737
        %v851 = vunpack.c.l.b16 %v738
        %v852 = vunpack.c.l.b16 %v739
        %v853 = vunpack.c.h.b16 %v739
        %v854 = vunpack.c.l.b16 %v740
        %v855 = vunpack.c.l.b16 %v741
        %v856 = vunpack.c.h.b16 %v741
        %v857 = vunpack.c.l.b16 %v742
        %v858 = vpack.c.b16 %v813, %v810
        %v859 = vpack.c.b16 %v814, %v811
        %v860 = vpack.c.b16 %v815, %v812
        %v861 = vpack.c.b16 %v819, %v816
        %v862 = vpack.c.b16 %v820, %v817
        %v863 = vpack.c.b16 %v821, %v818
        %v864 = vpack.c.b16 %v825, %v822
        %v865 = vpack.c.b16 %v826, %v823
        %v866 = vpack.c.b16 %v827, %v824
        %v867 = vpack.c.b16 %v831, %v828
        %v868 = vpack.c.b16 %v832, %v829
        %v869 = vpack.c.b16 %v833, %v830
        %v870 = vpack.c.b16 %v837, %v834
        %v871 = vpack.c.b16 %v838, %v835
        %v872 = vpack.c.b16 %v839, %v836
        %v873 = vpack.c.b16 %v843, %v840
        %v874 = vpack.c.b16 %v844, %v841
        %v875 = vpack.c.b16 %v845, %v842
        %v876 = vpack.c.b16 %v849, %v846
        %v877 = vpack.c.b16 %v850, %v847
        %v878 = vpack.c.b16 %v851, %v848
        %v879 = vpack.c.b16 %v855, %v852
        %v880 = vpack.c.b16 %v856, %v853
        %v881 = vpack.c.b16 %v857, %v854
        %906 = vmatprep.subr.bf16.mxu0 %v859
        %907 = vmatpush1.bf16.msra.mxu0 %v858
        %908 = vmatprep.subr.bf16.mxu0 %v862
        %909 = vmatpush1.bf16.msra.mxu0 %v861
        %910 = vmatprep.subr.bf16.mxu0 %v865
        %911 = vmatpush1.bf16.msra.mxu0 %v864
        %912 = vmatprep.subr.bf16.mxu0 %v868
        %913 = vmatpush1.bf16.msra.mxu0 %v867
        %914 = vmatprep.subr.bf16.mxu0 %v871
        %915 = vmatpush1.bf16.msra.mxu0 %v870
        %916 = vmatprep.subr.bf16.mxu0 %v874
        %917 = vmatpush1.bf16.msra.mxu0 %v873
        %918 = vmatprep.subr.bf16.mxu0 %v877
        %919 = vmatpush1.bf16.msra.mxu0 %v876
        %920 = vmatprep.subr.bf16.mxu0 %v880
        %921 = vmatpush1.bf16.msra.mxu0 %v879
        %922 = vmatprep.subr.bf16.mxu0 0
        %923 = vmatpush1.bf16.msra.mxu0 0
        %924 = vmatprep.subr.bf16.mxu0 0
        %925 = vmatpush1.bf16.msra.mxu0 0
        %926 = vmatprep.subr.bf16.mxu0 0
        %927 = vmatpush1.bf16.msra.mxu0 0
        %928 = vmatprep.subr.bf16.mxu0 0
        %929 = vmatpush1.bf16.msra.mxu0 0
        %930 = vmatprep.subr.bf16.mxu0 0
        %931 = vmatpush1.bf16.msra.mxu0 0
        %932 = vmatprep.subr.bf16.mxu0 0
        %933 = vmatpush1.bf16.msra.mxu0 0
        %934 = vmatprep.subr.bf16.mxu0 0
        %935 = vmatpush1.bf16.msra.mxu0 0
        %936 = vmatprep.subr.bf16.mxu0 0
        %937 = vmatpush1.bf16.msra.mxu0 0
        %938 = vmatprep.mubr.bf16.mxu0 0
        %939 = vmatmul.mubr.bf16.gmra.mrb[0].mxu0 %v761
        %v940 = vpop.f32.mrb[0].mxu0
        %v941 = vadd.f32 %v766, %v940
        %v942 = vpop.f32.mrb[0].mxu0
        %v943 = vadd.f32 %v770, %v942
        %v944 = vpop.f32.mrb[0].mxu0
        %v945 = vpop.f32.mrb[0].mxu0
        %946 = vdwg.mxu0
        %947 = vmatprep.subr.bf16.mxu0 0
        %948 = vmatpush1.bf16.msra.mxu0 %v860
        %949 = vmatprep.subr.bf16.mxu0 0
        %950 = vmatpush1.bf16.msra.mxu0 %v863
        %951 = vmatprep.subr.bf16.mxu0 0
        %952 = vmatpush1.bf16.msra.mxu0 %v866
        %953 = vmatprep.subr.bf16.mxu0 0
        %954 = vmatpush1.bf16.msra.mxu0 %v869
        %955 = vmatprep.subr.bf16.mxu0 0
        %956 = vmatpush1.bf16.msra.mxu0 %v872
        %957 = vmatprep.subr.bf16.mxu0 0
        %958 = vmatpush1.bf16.msra.mxu0 %v875
        %959 = vmatprep.subr.bf16.mxu0 0
        %960 = vmatpush1.bf16.msra.mxu0 %v878
        %961 = vmatprep.subr.bf16.mxu0 0
        %962 = vmatpush1.bf16.msra.mxu0 %v881
        %963 = vmatprep.subr.bf16.mxu0 0
        %964 = vmatpush1.bf16.msra.mxu0 0
        %965 = vmatprep.subr.bf16.mxu0 0
        %966 = vmatpush1.bf16.msra.mxu0 0
        %967 = vmatprep.subr.bf16.mxu0 0
        %968 = vmatpush1.bf16.msra.mxu0 0
        %969 = vmatprep.subr.bf16.mxu0 0
        %970 = vmatpush1.bf16.msra.mxu0 0
        %971 = vmatprep.subr.bf16.mxu0 0
        %972 = vmatpush1.bf16.msra.mxu0 0
        %973 = vmatprep.subr.bf16.mxu0 0
        %974 = vmatpush1.bf16.msra.mxu0 0
        %975 = vmatprep.subr.bf16.mxu0 0
        %976 = vmatpush1.bf16.msra.mxu0 0
        %977 = vmatprep.subr.bf16.mxu0 0
        %978 = vmatpush1.bf16.msra.mxu0 0
        %979 = vmatprep.mubr.bf16.mxu0 0
        %980 = vmatmul.mubr.bf16.gmra.mrb[0].mxu0 %v761
        %v981 = vpop.f32.mrb[0].mxu0
        %v982 = vadd.f32 %v774, %v981
        %v983 = vpop.f32.mrb[0].mxu0
        %v984 = vpop.f32.mrb[0].mxu0
        %v985 = vpop.f32.mrb[0].mxu0
        %986 = vdwg.mxu0
        %987 = vxpose.xlu0.b32.start [1/16] %v941, 128
        %988 = vxpose.xlu0.b32.cont [2/16] 0.0, 128
        %989 = vxpose.xlu0.b32.cont [3/16] 0.0, 128
        %990 = vxpose.xlu0.b32.cont [4/16] 0.0, 128
        %991 = vxpose.xlu0.b32.cont [5/16] 0.0, 128
        %992 = vxpose.xlu0.b32.cont [6/16] 0.0, 128
        %993 = vxpose.xlu0.b32.cont [7/16] 0.0, 128
        %994 = vxpose.xlu0.b32.cont [8/16] 0.0, 128
        %995 = vxpose.xlu0.b32.cont [9/16] 0.0, 128
        %996 = vxpose.xlu0.b32.cont [10/16] 0.0, 128
        %997 = vxpose.xlu0.b32.cont [11/16] 0.0, 128
        %998 = vxpose.xlu0.b32.cont [12/16] 0.0, 128
        %999 = vxpose.xlu0.b32.cont [13/16] 0.0, 128
        %1000 = vxpose.xlu0.b32.cont [14/16] 0.0, 128
        %1001 = vxpose.xlu0.b32.cont [15/16] 0.0, 128
        %1002 = vxpose.xlu0.b32.end [16/16] 0.0, 128
        %v1003 = vpop.trf.xlu0
        %v1004 = vpop.trf.xlu0
        %v1005 = vpop.trf.xlu0
        %v1006 = vpop.trf.xlu0
        %v1007 = vpop.trf.xlu0
        %v1008 = vpop.trf.xlu0
        %v1009 = vpop.trf.xlu0
        %v1010 = vpop.trf.xlu0
        %v1011 = vpop.trf.xlu0
        %v1012 = vpop.trf.xlu0
        %v1013 = vpop.trf.xlu0
        %v1014 = vpop.trf.xlu0
        %v1015 = vpop.trf.xlu0
        %v1016 = vpop.trf.xlu0
        %v1017 = vpop.trf.xlu0
        %v1018 = vpop.trf.xlu0
        %1019 = vxpose.xlu0.b32.start [1/16] %v943, 128
        %1020 = vxpose.xlu0.b32.cont [2/16] 0.0, 128
        %1021 = vxpose.xlu0.b32.cont [3/16] 0.0, 128
        %1022 = vxpose.xlu0.b32.cont [4/16] 0.0, 128
        %1023 = vxpose.xlu0.b32.cont [5/16] 0.0, 128
        %1024 = vxpose.xlu0.b32.cont [6/16] 0.0, 128
        %1025 = vxpose.xlu0.b32.cont [7/16] 0.0, 128
        %1026 = vxpose.xlu0.b32.cont [8/16] 0.0, 128
        %1027 = vxpose.xlu0.b32.cont [9/16] 0.0, 128
        %1028 = vxpose.xlu0.b32.cont [10/16] 0.0, 128
        %1029 = vxpose.xlu0.b32.cont [11/16] 0.0, 128
        %1030 = vxpose.xlu0.b32.cont [12/16] 0.0, 128
        %1031 = vxpose.xlu0.b32.cont [13/16] 0.0, 128
        %1032 = vxpose.xlu0.b32.cont [14/16] 0.0, 128
        %1033 = vxpose.xlu0.b32.cont [15/16] 0.0, 128
        %1034 = vxpose.xlu0.b32.end [16/16] 0.0, 128
        %v1035 = vpop.trf.xlu0
        %v1036 = vpop.trf.xlu0
        %v1037 = vpop.trf.xlu0
        %v1038 = vpop.trf.xlu0
        %v1039 = vpop.trf.xlu0
        %v1040 = vpop.trf.xlu0
        %v1041 = vpop.trf.xlu0
        %v1042 = vpop.trf.xlu0
        %v1043 = vpop.trf.xlu0
        %v1044 = vpop.trf.xlu0
        %v1045 = vpop.trf.xlu0
        %v1046 = vpop.trf.xlu0
        %v1047 = vpop.trf.xlu0
        %v1048 = vpop.trf.xlu0
        %v1049 = vpop.trf.xlu0
        %v1050 = vpop.trf.xlu0
        %1051 = vxpose.xlu0.b32.start [1/16] %v982, 128
        %1052 = vxpose.xlu0.b32.cont [2/16] 0.0, 128
        %1053 = vxpose.xlu0.b32.cont [3/16] 0.0, 128
        %1054 = vxpose.xlu0.b32.cont [4/16] 0.0, 128
        %1055 = vxpose.xlu0.b32.cont [5/16] 0.0, 128
        %1056 = vxpose.xlu0.b32.cont [6/16] 0.0, 128
        %1057 = vxpose.xlu0.b32.cont [7/16] 0.0, 128
        %1058 = vxpose.xlu0.b32.cont [8/16] 0.0, 128
        %1059 = vxpose.xlu0.b32.cont [9/16] 0.0, 128
        %1060 = vxpose.xlu0.b32.cont [10/16] 0.0, 128
        %1061 = vxpose.xlu0.b32.cont [11/16] 0.0, 128
        %1062 = vxpose.xlu0.b32.cont [12/16] 0.0, 128
        %1063 = vxpose.xlu0.b32.cont [13/16] 0.0, 128
        %1064 = vxpose.xlu0.b32.cont [14/16] 0.0, 128
        %1065 = vxpose.xlu0.b32.cont [15/16] 0.0, 128
        %1066 = vxpose.xlu0.b32.end [16/16] 0.0, 128
        %v1067 = vpop.trf.xlu0
        %v1068 = vpop.trf.xlu0
        %v1069 = vpop.trf.xlu0
        %v1070 = vpop.trf.xlu0
        %v1071 = vpop.trf.xlu0
        %v1072 = vpop.trf.xlu0
        %v1073 = vpop.trf.xlu0
        %v1074 = vpop.trf.xlu0
        %v1075 = vpop.trf.xlu0
        %v1076 = vpop.trf.xlu0
        %v1077 = vpop.trf.xlu0
        %v1078 = vpop.trf.xlu0
        %v1079 = vpop.trf.xlu0
        %v1080 = vpop.trf.xlu0
        %v1081 = vpop.trf.xlu0
        %v1082 = vpop.trf.xlu0
        %1083 = vxpose.xlu0.b32.start [1/16] %v1003, 128
        %1084 = vxpose.xlu0.b32.cont [2/16] %v1004, 128
        %1085 = vxpose.xlu0.b32.cont [3/16] %v1005, 128
        %1086 = vxpose.xlu0.b32.cont [4/16] %v1006, 128
        %1087 = vxpose.xlu0.b32.cont [5/16] 0.0, 128
        %1088 = vxpose.xlu0.b32.cont [6/16] 0.0, 128
        %1089 = vxpose.xlu0.b32.cont [7/16] 0.0, 128
        %1090 = vxpose.xlu0.b32.cont [8/16] 0.0, 128
        %1091 = vxpose.xlu0.b32.cont [9/16] 0.0, 128
        %1092 = vxpose.xlu0.b32.cont [10/16] 0.0, 128
        %1093 = vxpose.xlu0.b32.cont [11/16] 0.0, 128
        %1094 = vxpose.xlu0.b32.cont [12/16] 0.0, 128
        %1095 = vxpose.xlu0.b32.cont [13/16] 0.0, 128
        %1096 = vxpose.xlu0.b32.cont [14/16] 0.0, 128
        %1097 = vxpose.xlu0.b32.cont [15/16] 0.0, 128
        %1098 = vxpose.xlu0.b32.end [16/16] 0.0, 128
        %v1099 = vpop.trf.xlu0
        %v1100 = vpop.trf.xlu0
        %v1101 = vpop.trf.xlu0
        %v1102 = vpop.trf.xlu0
        %v1103 = vpop.trf.xlu0
        %v1104 = vpop.trf.xlu0
        %v1105 = vpop.trf.xlu0
        %v1106 = vpop.trf.xlu0
        %v1107 = vpop.trf.xlu0
        %v1108 = vpop.trf.xlu0
        %v1109 = vpop.trf.xlu0
        %v1110 = vpop.trf.xlu0
        %v1111 = vpop.trf.xlu0
        %v1112 = vpop.trf.xlu0
        %v1113 = vpop.trf.xlu0
        %v1114 = vpop.trf.xlu0
        %1115 = vxpose.xlu0.b32.start [1/16] %v1007, 128
        %1116 = vxpose.xlu0.b32.cont [2/16] %v1008, 128
        %1117 = vxpose.xlu0.b32.cont [3/16] %v1009, 128
        %1118 = vxpose.xlu0.b32.cont [4/16] %v1010, 128
        %1119 = vxpose.xlu0.b32.cont [5/16] 0.0, 128
        %1120 = vxpose.xlu0.b32.cont [6/16] 0.0, 128
        %1121 = vxpose.xlu0.b32.cont [7/16] 0.0, 128
        %1122 = vxpose.xlu0.b32.cont [8/16] 0.0, 128
        %1123 = vxpose.xlu0.b32.cont [9/16] 0.0, 128
        %1124 = vxpose.xlu0.b32.cont [10/16] 0.0, 128
        %1125 = vxpose.xlu0.b32.cont [11/16] 0.0, 128
        %1126 = vxpose.xlu0.b32.cont [12/16] 0.0, 128
        %1127 = vxpose.xlu0.b32.cont [13/16] 0.0, 128
        %1128 = vxpose.xlu0.b32.cont [14/16] 0.0, 128
        %1129 = vxpose.xlu0.b32.cont [15/16] 0.0, 128
        %1130 = vxpose.xlu0.b32.end [16/16] 0.0, 128
        %v1131 = vpop.trf.xlu0
        %v1132 = vpop.trf.xlu0
        %v1133 = vpop.trf.xlu0
        %v1134 = vpop.trf.xlu0
        %v1135 = vpop.trf.xlu0
        %v1136 = vpop.trf.xlu0
        %v1137 = vpop.trf.xlu0
        %v1138 = vpop.trf.xlu0
        %v1139 = vpop.trf.xlu0
        %v1140 = vpop.trf.xlu0
        %v1141 = vpop.trf.xlu0
        %v1142 = vpop.trf.xlu0
        %v1143 = vpop.trf.xlu0
        %v1144 = vpop.trf.xlu0
        %v1145 = vpop.trf.xlu0
        %v1146 = vpop.trf.xlu0
        %1147 = vxpose.xlu0.b32.start [1/16] %v1011, 128
        %1148 = vxpose.xlu0.b32.cont [2/16] %v1012, 128
        %1149 = vxpose.xlu0.b32.cont [3/16] %v1013, 128
        %1150 = vxpose.xlu0.b32.cont [4/16] %v1014, 128
        %1151 = vxpose.xlu0.b32.cont [5/16] 0.0, 128
        %1152 = vxpose.xlu0.b32.cont [6/16] 0.0, 128
        %1153 = vxpose.xlu0.b32.cont [7/16] 0.0, 128
        %1154 = vxpose.xlu0.b32.cont [8/16] 0.0, 128
        %1155 = vxpose.xlu0.b32.cont [9/16] 0.0, 128
        %1156 = vxpose.xlu0.b32.cont [10/16] 0.0, 128
        %1157 = vxpose.xlu0.b32.cont [11/16] 0.0, 128
        %1158 = vxpose.xlu0.b32.cont [12/16] 0.0, 128
        %1159 = vxpose.xlu0.b32.cont [13/16] 0.0, 128
        %1160 = vxpose.xlu0.b32.cont [14/16] 0.0, 128
        %1161 = vxpose.xlu0.b32.cont [15/16] 0.0, 128
        %1162 = vxpose.xlu0.b32.end [16/16] 0.0, 128
        %v1163 = vpop.trf.xlu0
        %v1164 = vpop.trf.xlu0
        %v1165 = vpop.trf.xlu0
        %v1166 = vpop.trf.xlu0
        %v1167 = vpop.trf.xlu0
        %v1168 = vpop.trf.xlu0
        %v1169 = vpop.trf.xlu0
        %v1170 = vpop.trf.xlu0
        %v1171 = vpop.trf.xlu0
        %v1172 = vpop.trf.xlu0
        %v1173 = vpop.trf.xlu0
        %v1174 = vpop.trf.xlu0
        %v1175 = vpop.trf.xlu0
        %v1176 = vpop.trf.xlu0
        %v1177 = vpop.trf.xlu0
        %v1178 = vpop.trf.xlu0
        %1179 = vxpose.xlu0.b32.start [1/16] %v1015, 128
        %1180 = vxpose.xlu0.b32.cont [2/16] %v1016, 128
        %1181 = vxpose.xlu0.b32.cont [3/16] %v1017, 128
        %1182 = vxpose.xlu0.b32.cont [4/16] %v1018, 128
        %1183 = vxpose.xlu0.b32.cont [5/16] 0.0, 128
        %1184 = vxpose.xlu0.b32.cont [6/16] 0.0, 128
        %1185 = vxpose.xlu0.b32.cont [7/16] 0.0, 128
        %1186 = vxpose.xlu0.b32.cont [8/16] 0.0, 128
        %1187 = vxpose.xlu0.b32.cont [9/16] 0.0, 128
        %1188 = vxpose.xlu0.b32.cont [10/16] 0.0, 128
        %1189 = vxpose.xlu0.b32.cont [11/16] 0.0, 128
        %1190 = vxpose.xlu0.b32.cont [12/16] 0.0, 128
        %1191 = vxpose.xlu0.b32.cont [13/16] 0.0, 128
        %1192 = vxpose.xlu0.b32.cont [14/16] 0.0, 128
        %1193 = vxpose.xlu0.b32.cont [15/16] 0.0, 128
        %1194 = vxpose.xlu0.b32.end [16/16] 0.0, 128
        %v1195 = vpop.trf.xlu0
        %v1196 = vpop.trf.xlu0
        %v1197 = vpop.trf.xlu0
        %v1198 = vpop.trf.xlu0
        %v1199 = vpop.trf.xlu0
        %v1200 = vpop.trf.xlu0
        %v1201 = vpop.trf.xlu0
        %v1202 = vpop.trf.xlu0
        %v1203 = vpop.trf.xlu0
        %v1204 = vpop.trf.xlu0
        %v1205 = vpop.trf.xlu0
        %v1206 = vpop.trf.xlu0
        %v1207 = vpop.trf.xlu0
        %v1208 = vpop.trf.xlu0
        %v1209 = vpop.trf.xlu0
        %v1210 = vpop.trf.xlu0
        %v1211 = vpack.c.bf16 %v1099, %v1099
        %v1212 = vpack.c.bf16 %v1131, %v1131
        %v1213 = vpack.c.bf16 %v1163, %v1163
        %v1214 = vpack.c.bf16 %v1195, %v1195
        %v1215 = vpack.c.bf16 %v1036, %v1035
        %v1216 = vpack.c.bf16 %v1038, %v1037
        %v1217 = vpack.c.bf16 %v1040, %v1039
        %v1218 = vpack.c.bf16 %v1042, %v1041
        %v1219 = vpack.c.bf16 %v1044, %v1043
        %v1220 = vpack.c.bf16 %v1046, %v1045
        %v1221 = vpack.c.bf16 %v1048, %v1047
        %v1222 = vpack.c.bf16 %v1050, %v1049
        %v1223 = vpack.c.bf16 %v1068, %v1067
        %v1224 = vpack.c.bf16 %v1070, %v1069
        %v1225 = vpack.c.bf16 %v1072, %v1071
        %v1226 = vpack.c.bf16 %v1074, %v1073
        %v1227 = vpack.c.bf16 %v1076, %v1075
        %v1228 = vpack.c.bf16 %v1078, %v1077
        %v1229 = vpack.c.bf16 %v1080, %v1079
        %v1230 = vpack.c.bf16 %v1082, %v1081
        %vm1231 = vcmask 261120
        %v1233 = vsel %vm1231, %v1211, 0
        %1235 = vmatprep.subr.bf16.mxu0 0
        %1236 = vmatpush1.bf16.msra.mxu0 %v1215
        %1237 = vmatprep.subr.bf16.mxu0 0
        %1238 = vmatpush1.bf16.msra.mxu0 %v1216
        %1239 = vmatprep.subr.bf16.mxu0 0
        %1240 = vmatpush1.bf16.msra.mxu0 0
        %1241 = vmatprep.subr.bf16.mxu0 0
        %1242 = vmatpush1.bf16.msra.mxu0 0
        %1243 = vmatprep.subr.bf16.mxu0 0
        %1244 = vmatpush1.bf16.msra.mxu0 0
        %1245 = vmatprep.subr.bf16.mxu0 0
        %1246 = vmatpush1.bf16.msra.mxu0 0
        %1247 = vmatprep.subr.bf16.mxu0 0
        %1248 = vmatpush1.bf16.msra.mxu0 0
        %1249 = vmatprep.subr.bf16.mxu0 0
        %1250 = vmatpush1.bf16.msra.mxu0 0
        %1251 = vmatprep.subr.bf16.mxu0 0
        %1252 = vmatpush1.bf16.msra.mxu0 0
        %1253 = vmatprep.subr.bf16.mxu0 0
        %1254 = vmatpush1.bf16.msra.mxu0 0
        %1255 = vmatprep.subr.bf16.mxu0 0
        %1256 = vmatpush1.bf16.msra.mxu0 0
        %1257 = vmatprep.subr.bf16.mxu0 0
        %1258 = vmatpush1.bf16.msra.mxu0 0
        %1259 = vmatprep.subr.bf16.mxu0 0
        %1260 = vmatpush1.bf16.msra.mxu0 0
        %1261 = vmatprep.subr.bf16.mxu0 0
        %1262 = vmatpush1.bf16.msra.mxu0 0
        %1263 = vmatprep.subr.bf16.mxu0 0
        %1264 = vmatpush1.bf16.msra.mxu0 0
        %1265 = vmatprep.subr.bf16.mxu0 0
        %1266 = vmatpush1.bf16.msra.mxu0 0
        %1267 = vmatprep.mubr.bf16.mxu0 0
        %1268 = vmatmul.mubr.bf16.gmra.mrb[0].mxu0 %v1233
        %v1269 = vpop.f32.mrb[0].mxu0
        %v1270 = vadd.f32 0.0, %v1269
        %v1271 = vpop.f32.mrb[0].mxu0
        %v1272 = vpop.f32.mrb[0].mxu0
        %v1273 = vpop.f32.mrb[0].mxu0
        %1274 = vdwg.mxu0
        %v1276 = vsel %vm1231, %v1212, 0
        %1278 = vmatprep.subr.bf16.mxu0 0
        %1279 = vmatpush1.bf16.msra.mxu0 %v1217
        %1280 = vmatprep.subr.bf16.mxu0 0
        %1281 = vmatpush1.bf16.msra.mxu0 %v1218
        %1282 = vmatprep.subr.bf16.mxu0 0
        %1283 = vmatpush1.bf16.msra.mxu0 0
        %1284 = vmatprep.subr.bf16.mxu0 0
        %1285 = vmatpush1.bf16.msra.mxu0 0
        %1286 = vmatprep.subr.bf16.mxu0 0
        %1287 = vmatpush1.bf16.msra.mxu0 0
        %1288 = vmatprep.subr.bf16.mxu0 0
        %1289 = vmatpush1.bf16.msra.mxu0 0
        %1290 = vmatprep.subr.bf16.mxu0 0
        %1291 = vmatpush1.bf16.msra.mxu0 0
        %1292 = vmatprep.subr.bf16.mxu0 0
        %1293 = vmatpush1.bf16.msra.mxu0 0
        %1294 = vmatprep.subr.bf16.mxu0 0
        %1295 = vmatpush1.bf16.msra.mxu0 0
        %1296 = vmatprep.subr.bf16.mxu0 0
        %1297 = vmatpush1.bf16.msra.mxu0 0
        %1298 = vmatprep.subr.bf16.mxu0 0
        %1299 = vmatpush1.bf16.msra.mxu0 0
        %1300 = vmatprep.subr.bf16.mxu0 0
        %1301 = vmatpush1.bf16.msra.mxu0 0
        %1302 = vmatprep.subr.bf16.mxu0 0
        %1303 = vmatpush1.bf16.msra.mxu0 0
        %1304 = vmatprep.subr.bf16.mxu0 0
        %1305 = vmatpush1.bf16.msra.mxu0 0
        %1306 = vmatprep.subr.bf16.mxu0 0
        %1307 = vmatpush1.bf16.msra.mxu0 0
        %1308 = vmatprep.subr.bf16.mxu0 0
        %1309 = vmatpush1.bf16.msra.mxu0 0
        %1310 = vmatprep.mubr.bf16.mxu0 0
        %1311 = vmatmul.mubr.bf16.gmra.mrb[0].mxu0 %v1276
        %v1312 = vpop.f32.mrb[0].mxu0
        %v1313 = vadd.f32 0.0, %v1312
        %v1314 = vpop.f32.mrb[0].mxu0
        %v1315 = vpop.f32.mrb[0].mxu0
        %v1316 = vpop.f32.mrb[0].mxu0
        %1317 = vdwg.mxu0
        %v1319 = vsel %vm1231, %v1213, 0
        %1321 = vmatprep.subr.bf16.mxu0 0
        %1322 = vmatpush1.bf16.msra.mxu0 %v1219
        %1323 = vmatprep.subr.bf16.mxu0 0
        %1324 = vmatpush1.bf16.msra.mxu0 %v1220
        %1325 = vmatprep.subr.bf16.mxu0 0
        %1326 = vmatpush1.bf16.msra.mxu0 0
        %1327 = vmatprep.subr.bf16.mxu0 0
        %1328 = vmatpush1.bf16.msra.mxu0 0
        %1329 = vmatprep.subr.bf16.mxu0 0
        %1330 = vmatpush1.bf16.msra.mxu0 0
        %1331 = vmatprep.subr.bf16.mxu0 0
        %1332 = vmatpush1.bf16.msra.mxu0 0
        %1333 = vmatprep.subr.bf16.mxu0 0
        %1334 = vmatpush1.bf16.msra.mxu0 0
        %1335 = vmatprep.subr.bf16.mxu0 0
        %1336 = vmatpush1.bf16.msra.mxu0 0
        %1337 = vmatprep.subr.bf16.mxu0 0
        %1338 = vmatpush1.bf16.msra.mxu0 0
        %1339 = vmatprep.subr.bf16.mxu0 0
        %1340 = vmatpush1.bf16.msra.mxu0 0
        %1341 = vmatprep.subr.bf16.mxu0 0
        %1342 = vmatpush1.bf16.msra.mxu0 0
        %1343 = vmatprep.subr.bf16.mxu0 0
        %1344 = vmatpush1.bf16.msra.mxu0 0
        %1345 = vmatprep.subr.bf16.mxu0 0
        %1346 = vmatpush1.bf16.msra.mxu0 0
        %1347 = vmatprep.subr.bf16.mxu0 0
        %1348 = vmatpush1.bf16.msra.mxu0 0
        %1349 = vmatprep.subr.bf16.mxu0 0
        %1350 = vmatpush1.bf16.msra.mxu0 0
        %1351 = vmatprep.subr.bf16.mxu0 0
        %1352 = vmatpush1.bf16.msra.mxu0 0
        %1353 = vmatprep.mubr.bf16.mxu0 0
        %1354 = vmatmul.mubr.bf16.gmra.mrb[0].mxu0 %v1319
        %v1355 = vpop.f32.mrb[0].mxu0
        %v1356 = vadd.f32 0.0, %v1355
        %v1357 = vpop.f32.mrb[0].mxu0
        %v1358 = vpop.f32.mrb[0].mxu0
        %v1359 = vpop.f32.mrb[0].mxu0
        %1360 = vdwg.mxu0
        %v1362 = vsel %vm1231, %v1214, 0
        %1364 = vmatprep.subr.bf16.mxu0 0
        %1365 = vmatpush1.bf16.msra.mxu0 %v1221
        %1366 = vmatprep.subr.bf16.mxu0 0
        %1367 = vmatpush1.bf16.msra.mxu0 %v1222
        %1368 = vmatprep.subr.bf16.mxu0 0
        %1369 = vmatpush1.bf16.msra.mxu0 0
        %1370 = vmatprep.subr.bf16.mxu0 0
        %1371 = vmatpush1.bf16.msra.mxu0 0
        %1372 = vmatprep.subr.bf16.mxu0 0
        %1373 = vmatpush1.bf16.msra.mxu0 0
        %1374 = vmatprep.subr.bf16.mxu0 0
        %1375 = vmatpush1.bf16.msra.mxu0 0
        %1376 = vmatprep.subr.bf16.mxu0 0
        %1377 = vmatpush1.bf16.msra.mxu0 0
        %1378 = vmatprep.subr.bf16.mxu0 0
        %1379 = vmatpush1.bf16.msra.mxu0 0
        %1380 = vmatprep.subr.bf16.mxu0 0
        %1381 = vmatpush1.bf16.msra.mxu0 0
        %1382 = vmatprep.subr.bf16.mxu0 0
        %1383 = vmatpush1.bf16.msra.mxu0 0
        %1384 = vmatprep.subr.bf16.mxu0 0
        %1385 = vmatpush1.bf16.msra.mxu0 0
        %1386 = vmatprep.subr.bf16.mxu0 0
        %1387 = vmatpush1.bf16.msra.mxu0 0
        %1388 = vmatprep.subr.bf16.mxu0 0
        %1389 = vmatpush1.bf16.msra.mxu0 0
        %1390 = vmatprep.subr.bf16.mxu0 0
        %1391 = vmatpush1.bf16.msra.mxu0 0
        %1392 = vmatprep.subr.bf16.mxu0 0
        %1393 = vmatpush1.bf16.msra.mxu0 0
        %1394 = vmatprep.subr.bf16.mxu0 0
        %1395 = vmatpush1.bf16.msra.mxu0 0
        %1396 = vmatprep.mubr.bf16.mxu0 0
        %1397 = vmatmul.mubr.bf16.gmra.mrb[0].mxu0 %v1362
        %v1398 = vpop.f32.mrb[0].mxu0
        %v1399 = vadd.f32 0.0, %v1398
        %v1400 = vpop.f32.mrb[0].mxu0
        %v1401 = vpop.f32.mrb[0].mxu0
        %v1402 = vpop.f32.mrb[0].mxu0
        %1403 = vdwg.mxu0
        %v1404 = vmul.f32 %v1270, 0.17677669
        %v1405 = vmul.f32 %v1313, 0.17677669
        %v1406 = vmul.f32 %v1356, 0.17677669
        %v1407 = vmul.f32 %v1399, 0.17677669
        %vm1408 = vcmask 64512
        %v1409 = vsel %vm1408, %v1404, -inf
        %1410 = vmax.xlane.f32.xlu0 %v1409
        %v1411 = vpop.xlane.xlu0 %1410
        %v1412 = vsel %vm1408, %v1405, -inf
        %1413 = vmax.xlane.f32.xlu0 %v1412
        %v1414 = vpop.xlane.xlu0 %1413
        %v1415 = vsel %vm1408, %v1406, -inf
        %1416 = vmax.xlane.f32.xlu0 %v1415
        %v1417 = vpop.xlane.xlu0 %1416
        %v1418 = vsel %vm1408, %v1407, -inf
        %1419 = vmax.xlane.f32.xlu0 %v1418
        %v1420 = vpop.xlane.xlu0 %1419
        %v1421 = vsub.f32 %v1404, %v1411
        %v1422 = vsub.f32 %v1405, %v1414
        %v1423 = vsub.f32 %v1406, %v1417
        %v1424 = vsub.f32 %v1407, %v1420
        %v1425 = vmul.f32 %v1421, 1.442695
        %v1426 = vpow.pop %v1425
        %v1427 = vmul.f32 %v1422, 1.442695
        %v1428 = vpow.pop %v1427
        %v1429 = vmul.f32 %v1423, 1.442695
        %v1430 = vpow.pop %v1429
        %v1431 = vmul.f32 %v1424, 1.442695
        %v1432 = vpow.pop %v1431
        %v1433 = vsel %vm1408, %v1426, 0.0
        %1434 = vadd.xlane.f32.xlu0 %v1433
        %v1435 = vpop.xlane.xlu0 %1434
        %v1436 = vsel %vm1408, %v1428, 0.0
        %1437 = vadd.xlane.f32.xlu0 %v1436
        %v1438 = vpop.xlane.xlu0 %1437
        %v1439 = vsel %vm1408, %v1430, 0.0
        %1440 = vadd.xlane.f32.xlu0 %v1439
        %v1441 = vpop.xlane.xlu0 %1440
        %v1442 = vsel %vm1408, %v1432, 0.0
        %1443 = vadd.xlane.f32.xlu0 %v1442
        %v1444 = vpop.xlane.xlu0 %1443
        %v1445 = vrcp.pop %v1435
        %v1446 = vrcp.pop %v1438
        %v1447 = vrcp.pop %v1441
        %v1448 = vrcp.pop %v1444
        %v1449 = vmul.f32 %v1426, %v1445
        %v1450 = vmul.f32 %v1428, %v1446
        %v1451 = vmul.f32 %v1430, %v1447
        %v1452 = vmul.f32 %v1432, %v1448
        %v1453 = vpack.c.bf16 %v1449, %v1449
        %v1454 = vpack.c.bf16 %v1450, %v1450
        %v1455 = vpack.c.bf16 %v1451, %v1451
        %v1456 = vpack.c.bf16 %v1452, %v1452
        %v1458 = vsel %vm1408, %v1223, 0
        %v1461 = vsel %vm1408, %v1224, 0
        %v1464 = vsel %vm1408, %v1453, 0
        %1466 = vmatprep.subr.bf16.mxu0 0
        %1467 = vmatpush1.bf16.xpose.msra.mxu0 %v1464
        %1468 = vmatprep.subr.bf16.mxu0 0
        %1469 = vmatpush1.bf16.xpose.msra.mxu0 0
        %1470 = vmatprep.subr.bf16.mxu0 0
        %1471 = vmatpush1.bf16.xpose.msra.mxu0 0
        %1472 = vmatprep.subr.bf16.mxu0 0
        %1473 = vmatpush1.bf16.xpose.msra.mxu0 0
        %1474 = vmatprep.subr.bf16.mxu0 0
        %1475 = vmatpush1.bf16.xpose.msra.mxu0 0
        %1476 = vmatprep.subr.bf16.mxu0 0
        %1477 = vmatpush1.bf16.xpose.msra.mxu0 0
        %1478 = vmatprep.subr.bf16.mxu0 0
        %1479 = vmatpush1.bf16.xpose.msra.mxu0 0
        %1480 = vmatprep.subr.bf16.mxu0 0
        %1481 = vmatpush1.bf16.xpose.msra.mxu0 0
        %1482 = vmatprep.subr.bf16.mxu0 0
        %1483 = vmatpush1.bf16.xpose.msra.mxu0 0
        %1484 = vmatprep.subr.bf16.mxu0 0
        %1485 = vmatpush1.bf16.xpose.msra.mxu0 0
        %1486 = vmatprep.subr.bf16.mxu0 0
        %1487 = vmatpush1.bf16.xpose.msra.mxu0 0
        %1488 = vmatprep.subr.bf16.mxu0 0
        %1489 = vmatpush1.bf16.xpose.msra.mxu0 0
        %1490 = vmatprep.subr.bf16.mxu0 0
        %1491 = vmatpush1.bf16.xpose.msra.mxu0 0
        %1492 = vmatprep.subr.bf16.mxu0 0
        %1493 = vmatpush1.bf16.xpose.msra.mxu0 0
        %1494 = vmatprep.subr.bf16.mxu0 0
        %1495 = vmatpush1.bf16.xpose.msra.mxu0 0
        %1496 = vmatprep.subr.bf16.mxu0 0
        %1497 = vmatpush1.bf16.xpose.msra.mxu0 0
        %1498 = vmatprep.mubr.bf16.mxu0 0
        %1499 = vmatmul.mubr.bf16.gmra.mrb[0].mxu0 %v1458
        %v1500 = vpop.f32.mrb[0].mxu0
        %v1501 = vadd.f32 0.0, %v1500
        %v1502 = vpop.f32.mrb[0].mxu0
        %v1503 = vpop.f32.mrb[0].mxu0
        %v1504 = vadd.f32 0.0, %v1503
        %v1505 = vpop.f32.mrb[0].mxu0
        %1506 = vmatprep.mubr.bf16.mxu0 0
        %1507 = vmatmul.mubr.bf16.gmra.mrb[0].mxu0 %v1461
        %v1508 = vpop.f32.mrb[0].mxu0
        %v1509 = vadd.f32 0.0, %v1508
        %v1510 = vpop.f32.mrb[0].mxu0
        %v1511 = vpop.f32.mrb[0].mxu0
        %v1512 = vadd.f32 0.0, %v1511
        %v1513 = vpop.f32.mrb[0].mxu0
        %1514 = vdwg.mxu0
        %v1516 = vsel %vm1408, %v1225, 0
        %v1519 = vsel %vm1408, %v1226, 0
        %v1522 = vsel %vm1408, %v1454, 0
        %1524 = vmatprep.subr.bf16.mxu0 0
        %1525 = vmatpush1.bf16.xpose.msra.mxu0 %v1522
        %1526 = vmatprep.subr.bf16.mxu0 0
        %1527 = vmatpush1.bf16.xpose.msra.mxu0 0
        %1528 = vmatprep.subr.bf16.mxu0 0
        %1529 = vmatpush1.bf16.xpose.msra.mxu0 0
        %1530 = vmatprep.subr.bf16.mxu0 0
        %1531 = vmatpush1.bf16.xpose.msra.mxu0 0
        %1532 = vmatprep.subr.bf16.mxu0 0
        %1533 = vmatpush1.bf16.xpose.msra.mxu0 0
        %1534 = vmatprep.subr.bf16.mxu0 0
        %1535 = vmatpush1.bf16.xpose.msra.mxu0 0
        %1536 = vmatprep.subr.bf16.mxu0 0
        %1537 = vmatpush1.bf16.xpose.msra.mxu0 0
        %1538 = vmatprep.subr.bf16.mxu0 0
        %1539 = vmatpush1.bf16.xpose.msra.mxu0 0
        %1540 = vmatprep.subr.bf16.mxu0 0
        %1541 = vmatpush1.bf16.xpose.msra.mxu0 0
        %1542 = vmatprep.subr.bf16.mxu0 0
        %1543 = vmatpush1.bf16.xpose.msra.mxu0 0
        %1544 = vmatprep.subr.bf16.mxu0 0
        %1545 = vmatpush1.bf16.xpose.msra.mxu0 0
        %1546 = vmatprep.subr.bf16.mxu0 0
        %1547 = vmatpush1.bf16.xpose.msra.mxu0 0
        %1548 = vmatprep.subr.bf16.mxu0 0
        %1549 = vmatpush1.bf16.xpose.msra.mxu0 0
        %1550 = vmatprep.subr.bf16.mxu0 0
        %1551 = vmatpush1.bf16.xpose.msra.mxu0 0
        %1552 = vmatprep.subr.bf16.mxu0 0
        %1553 = vmatpush1.bf16.xpose.msra.mxu0 0
        %1554 = vmatprep.subr.bf16.mxu0 0
        %1555 = vmatpush1.bf16.xpose.msra.mxu0 0
        %1556 = vmatprep.mubr.bf16.mxu0 0
        %1557 = vmatmul.mubr.bf16.gmra.mrb[0].mxu0 %v1516
        %v1558 = vpop.f32.mrb[0].mxu0
        %v1559 = vadd.f32 0.0, %v1558
        %v1560 = vpop.f32.mrb[0].mxu0
        %v1561 = vpop.f32.mrb[0].mxu0
        %v1562 = vadd.f32 0.0, %v1561
        %v1563 = vpop.f32.mrb[0].mxu0
        %1564 = vmatprep.mubr.bf16.mxu0 0
        %1565 = vmatmul.mubr.bf16.gmra.mrb[0].mxu0 %v1519
        %v1566 = vpop.f32.mrb[0].mxu0
        %v1567 = vadd.f32 0.0, %v1566
        %v1568 = vpop.f32.mrb[0].mxu0
        %v1569 = vpop.f32.mrb[0].mxu0
        %v1570 = vadd.f32 0.0, %v1569
        %v1571 = vpop.f32.mrb[0].mxu0
        %1572 = vdwg.mxu0
        %v1574 = vsel %vm1408, %v1227, 0
        %v1577 = vsel %vm1408, %v1228, 0
        %v1580 = vsel %vm1408, %v1455, 0
        %1582 = vmatprep.subr.bf16.mxu0 0
        %1583 = vmatpush1.bf16.xpose.msra.mxu0 %v1580
        %1584 = vmatprep.subr.bf16.mxu0 0
        %1585 = vmatpush1.bf16.xpose.msra.mxu0 0
        %1586 = vmatprep.subr.bf16.mxu0 0
        %1587 = vmatpush1.bf16.xpose.msra.mxu0 0
        %1588 = vmatprep.subr.bf16.mxu0 0
        %1589 = vmatpush1.bf16.xpose.msra.mxu0 0
        %1590 = vmatprep.subr.bf16.mxu0 0
        %1591 = vmatpush1.bf16.xpose.msra.mxu0 0
        %1592 = vmatprep.subr.bf16.mxu0 0
        %1593 = vmatpush1.bf16.xpose.msra.mxu0 0
        %1594 = vmatprep.subr.bf16.mxu0 0
        %1595 = vmatpush1.bf16.xpose.msra.mxu0 0
        %1596 = vmatprep.subr.bf16.mxu0 0
        %1597 = vmatpush1.bf16.xpose.msra.mxu0 0
        %1598 = vmatprep.subr.bf16.mxu0 0
        %1599 = vmatpush1.bf16.xpose.msra.mxu0 0
        %1600 = vmatprep.subr.bf16.mxu0 0
        %1601 = vmatpush1.bf16.xpose.msra.mxu0 0
        %1602 = vmatprep.subr.bf16.mxu0 0
        %1603 = vmatpush1.bf16.xpose.msra.mxu0 0
        %1604 = vmatprep.subr.bf16.mxu0 0
        %1605 = vmatpush1.bf16.xpose.msra.mxu0 0
        %1606 = vmatprep.subr.bf16.mxu0 0
        %1607 = vmatpush1.bf16.xpose.msra.mxu0 0
        %1608 = vmatprep.subr.bf16.mxu0 0
        %1609 = vmatpush1.bf16.xpose.msra.mxu0 0
        %1610 = vmatprep.subr.bf16.mxu0 0
        %1611 = vmatpush1.bf16.xpose.msra.mxu0 0
        %1612 = vmatprep.subr.bf16.mxu0 0
        %1613 = vmatpush1.bf16.xpose.msra.mxu0 0
        %1614 = vmatprep.mubr.bf16.mxu0 0
        %1615 = vmatmul.mubr.bf16.gmra.mrb[0].mxu0 %v1574
        %v1616 = vpop.f32.mrb[0].mxu0
        %v1617 = vadd.f32 0.0, %v1616
        %v1618 = vpop.f32.mrb[0].mxu0
        %v1619 = vpop.f32.mrb[0].mxu0
        %v1620 = vadd.f32 0.0, %v1619
        %v1621 = vpop.f32.mrb[0].mxu0
        %1622 = vmatprep.mubr.bf16.mxu0 0
        %1623 = vmatmul.mubr.bf16.gmra.mrb[0].mxu0 %v1577
        %v1624 = vpop.f32.mrb[0].mxu0
        %v1625 = vadd.f32 0.0, %v1624
        %v1626 = vpop.f32.mrb[0].mxu0
        %v1627 = vpop.f32.mrb[0].mxu0
        %v1628 = vadd.f32 0.0, %v1627
        %v1629 = vpop.f32.mrb[0].mxu0
        %1630 = vdwg.mxu0
        %v1632 = vsel %vm1408, %v1229, 0
        %v1635 = vsel %vm1408, %v1230, 0
        %v1638 = vsel %vm1408, %v1456, 0
        %1640 = vmatprep.subr.bf16.mxu0 0
        %1641 = vmatpush1.bf16.xpose.msra.mxu0 %v1638
        %1642 = vmatprep.subr.bf16.mxu0 0
        %1643 = vmatpush1.bf16.xpose.msra.mxu0 0
        %1644 = vmatprep.subr.bf16.mxu0 0
        %1645 = vmatpush1.bf16.xpose.msra.mxu0 0
        %1646 = vmatprep.subr.bf16.mxu0 0
        %1647 = vmatpush1.bf16.xpose.msra.mxu0 0
        %1648 = vmatprep.subr.bf16.mxu0 0
        %1649 = vmatpush1.bf16.xpose.msra.mxu0 0
        %1650 = vmatprep.subr.bf16.mxu0 0
        %1651 = vmatpush1.bf16.xpose.msra.mxu0 0
        %1652 = vmatprep.subr.bf16.mxu0 0
        %1653 = vmatpush1.bf16.xpose.msra.mxu0 0
        %1654 = vmatprep.subr.bf16.mxu0 0
        %1655 = vmatpush1.bf16.xpose.msra.mxu0 0
        %1656 = vmatprep.subr.bf16.mxu0 0
        %1657 = vmatpush1.bf16.xpose.msra.mxu0 0
        %1658 = vmatprep.subr.bf16.mxu0 0
        %1659 = vmatpush1.bf16.xpose.msra.mxu0 0
        %1660 = vmatprep.subr.bf16.mxu0 0
        %1661 = vmatpush1.bf16.xpose.msra.mxu0 0
        %1662 = vmatprep.subr.bf16.mxu0 0
        %1663 = vmatpush1.bf16.xpose.msra.mxu0 0
        %1664 = vmatprep.subr.bf16.mxu0 0
        %1665 = vmatpush1.bf16.xpose.msra.mxu0 0
        %1666 = vmatprep.subr.bf16.mxu0 0
        %1667 = vmatpush1.bf16.xpose.msra.mxu0 0
        %1668 = vmatprep.subr.bf16.mxu0 0
        %1669 = vmatpush1.bf16.xpose.msra.mxu0 0
        %1670 = vmatprep.subr.bf16.mxu0 0
        %1671 = vmatpush1.bf16.xpose.msra.mxu0 0
        %1672 = vmatprep.mubr.bf16.mxu0 0
        %1673 = vmatmul.mubr.bf16.gmra.mrb[0].mxu0 %v1632
        %v1674 = vpop.f32.mrb[0].mxu0
        %v1675 = vadd.f32 0.0, %v1674
        %v1676 = vpop.f32.mrb[0].mxu0
        %v1677 = vpop.f32.mrb[0].mxu0
        %v1678 = vadd.f32 0.0, %v1677
        %v1679 = vpop.f32.mrb[0].mxu0
        %1680 = vmatprep.mubr.bf16.mxu0 0
        %1681 = vmatmul.mubr.bf16.gmra.mrb[0].mxu0 %v1635
        %v1682 = vpop.f32.mrb[0].mxu0
        %v1683 = vadd.f32 0.0, %v1682
        %v1684 = vpop.f32.mrb[0].mxu0
        %v1685 = vpop.f32.mrb[0].mxu0
        %v1686 = vadd.f32 0.0, %v1685
        %v1687 = vpop.f32.mrb[0].mxu0
        %1688 = vdwg.mxu0
        %1689 = vxpose.xlu0.b32.start [1/16] %v1501, 128
        %1690 = vxpose.xlu0.b32.cont [2/16] %v1504, 128
        %1691 = vxpose.xlu0.b32.cont [3/16] %v1509, 128
        %1692 = vxpose.xlu0.b32.cont [4/16] %v1512, 128
        %1693 = vxpose.xlu0.b32.cont [5/16] %v1559, 128
        %1694 = vxpose.xlu0.b32.cont [6/16] %v1562, 128
        %1695 = vxpose.xlu0.b32.cont [7/16] %v1567, 128
        %1696 = vxpose.xlu0.b32.cont [8/16] %v1570, 128
        %1697 = vxpose.xlu0.b32.cont [9/16] %v1617, 128
        %1698 = vxpose.xlu0.b32.cont [10/16] %v1620, 128
        %1699 = vxpose.xlu0.b32.cont [11/16] %v1625, 128
        %1700 = vxpose.xlu0.b32.cont [12/16] %v1628, 128
        %1701 = vxpose.xlu0.b32.cont [13/16] %v1675, 128
        %1702 = vxpose.xlu0.b32.cont [14/16] %v1678, 128
        %1703 = vxpose.xlu0.b32.cont [15/16] %v1683, 128
        %1704 = vxpose.xlu0.b32.end [16/16] %v1686, 128
        %v1705 = vpop.trf.xlu0
        %v1706 = vpop.trf.xlu0
        %v1707 = vpop.trf.xlu0
        %v1708 = vpop.trf.xlu0
        %v1709 = vpop.trf.xlu0
        %v1710 = vpop.trf.xlu0
        %v1711 = vpop.trf.xlu0
        %v1712 = vpop.trf.xlu0
        %v1713 = vpop.trf.xlu0
        %v1714 = vpop.trf.xlu0
        %v1715 = vpop.trf.xlu0
        %v1716 = vpop.trf.xlu0
        %v1717 = vpop.trf.xlu0
        %v1718 = vpop.trf.xlu0
        %v1719 = vpop.trf.xlu0
        %v1720 = vpop.trf.xlu0
        %v1721 = vpack.c.bf16 %v1705, %v1705
        %v1723 = vlaneseq
        %v1724 = vshrl.u32 %v1723, 7
        %v1725 = vsub.s32 0, %v1724
        %v1726 = vrot.slane %v760, %v1725
        %v1744 = vunpack.c.l.b16 %v744
        %v1745 = vunpack.c.l.b16 %v745
        %v1746 = vunpack.c.l.b16 %v746
        %v1747 = vunpack.c.l.b16 %v747
        %v1748 = vunpack.c.l.b16 %v748
        %v1749 = vunpack.c.l.b16 %v749
        %v1750 = vunpack.c.l.b16 %v750
        %v1751 = vunpack.c.l.b16 %v751
        %v1752 = vunpack.c.l.b16 %v752
        %v1753 = vunpack.c.l.b16 %v753
        %v1754 = vunpack.c.l.b16 %v754
        %v1755 = vunpack.c.l.b16 %v755
        %v1756 = vunpack.c.l.b16 %v756
        %v1757 = vunpack.c.l.b16 %v757
        %v1758 = vunpack.c.l.b16 %v758
        %v1759 = vunpack.c.l.b16 %v759
        %v1760 = vpack.c.b16 %v1745, %v1744
        %v1761 = vpack.c.b16 %v1747, %v1746
        %v1762 = vpack.c.b16 %v1749, %v1748
        %v1763 = vpack.c.b16 %v1751, %v1750
        %v1764 = vpack.c.b16 %v1753, %v1752
        %v1765 = vpack.c.b16 %v1755, %v1754
        %v1766 = vpack.c.b16 %v1757, %v1756
        %v1767 = vpack.c.b16 %v1759, %v1758
        %1776 = vmatprep.subr.bf16.mxu0 0
        %1777 = vmatpush1.bf16.msra.mxu0 %v1760
        %1778 = vmatprep.subr.bf16.mxu0 0
        %1779 = vmatpush1.bf16.msra.mxu0 %v1761
        %1780 = vmatprep.subr.bf16.mxu0 0
        %1781 = vmatpush1.bf16.msra.mxu0 %v1762
        %1782 = vmatprep.subr.bf16.mxu0 0
        %1783 = vmatpush1.bf16.msra.mxu0 %v1763
        %1784 = vmatprep.subr.bf16.mxu0 0
        %1785 = vmatpush1.bf16.msra.mxu0 %v1764
        %1786 = vmatprep.subr.bf16.mxu0 0
        %1787 = vmatpush1.bf16.msra.mxu0 %v1765
        %1788 = vmatprep.subr.bf16.mxu0 0
        %1789 = vmatpush1.bf16.msra.mxu0 %v1766
        %1790 = vmatprep.subr.bf16.mxu0 0
        %1791 = vmatpush1.bf16.msra.mxu0 %v1767
        %1792 = vmatprep.subr.bf16.mxu0 0
        %1793 = vmatpush1.bf16.msra.mxu0 0
        %1794 = vmatprep.subr.bf16.mxu0 0
        %1795 = vmatpush1.bf16.msra.mxu0 0
        %1796 = vmatprep.subr.bf16.mxu0 0
        %1797 = vmatpush1.bf16.msra.mxu0 0
        %1798 = vmatprep.subr.bf16.mxu0 0
        %1799 = vmatpush1.bf16.msra.mxu0 0
        %1800 = vmatprep.subr.bf16.mxu0 0
        %1801 = vmatpush1.bf16.msra.mxu0 0
        %1802 = vmatprep.subr.bf16.mxu0 0
        %1803 = vmatpush1.bf16.msra.mxu0 0
        %1804 = vmatprep.subr.bf16.mxu0 0
        %1805 = vmatpush1.bf16.msra.mxu0 0
        %1806 = vmatprep.subr.bf16.mxu0 0
        %1807 = vmatpush1.bf16.msra.mxu0 0
        %1808 = vmatprep.mubr.bf16.mxu0 0
        %1809 = vmatmul.mubr.bf16.gmra.mrb[0].mxu0 %v1721
        %v1810 = vpop.f32.mrb[0].mxu0
        %v1811 = vadd.f32 %v1726, %v1810
        %v1812 = vpop.f32.mrb[0].mxu0
        %v1813 = vpop.f32.mrb[0].mxu0
        %v1814 = vpop.f32.mrb[0].mxu0
        %1815 = vdwg.mxu0
        %v1816 = vadd.f32 %v710, %v1811
        %v1817 = vld [vmem:[%s682] sm:$0x1]
        %v1818 = vld [vmem:[%s685] sm:$0x1]
        %1819 = vadd.xlane.f32.xlu0 %v1816
        %v1820 = vpop.xlane.xlu0 %1819
        %v1821 = vrcp.pop 128.0
        %v1822 = vmul.f32 %v1820, %v1821
        %v1823 = vsub.f32 %v1816, %v1822
        %v1824 = vmul.f32 %v1823, %v1823
        %1825 = vadd.xlane.f32.xlu0 %v1824
        %v1826 = vpop.xlane.xlu0 %1825
        %v1827 = vmul.f32 %v1826, %v1821
        %v1828 = vadd.f32 %v1827, 1e-05
        %v1829 = vrsqrt.pop %v1828
        %v1830 = vmul.f32 %v1823, %v1829
        %v1832 = vlaneseq
        %v1833 = vshrl.u32 %v1832, 7
        %v1834 = vsub.s32 0, %v1833
        %v1835 = vrot.slane %v1817, %v1834
        %v1837 = vmul.f32 %v1830, %v1835
        %v1839 = vlaneseq
        %v1840 = vshrl.u32 %v1839, 7
        %v1841 = vsub.s32 0, %v1840
        %v1842 = vrot.slane %v1818, %v1841
        %v1844 = vadd.f32 %v1837, %v1842
        %v1845 = vld [vmem:[%s568] sm:$0xff]
        %v1846 = vld [vmem:[%s568 + $0x8] sm:$0xff]
        %v1847 = vld [vmem:[%s568 + $0x10] sm:$0xff]
        %v1848 = vld [vmem:[%s568 + $0x18] sm:$0xff]
        %v1849 = vld [vmem:[%s568 + $0x20] sm:$0xff]
        %v1850 = vld [vmem:[%s568 + $0x28] sm:$0xff]
        %v1851 = vld [vmem:[%s568 + $0x30] sm:$0xff]
        %v1852 = vld [vmem:[%s568 + $0x38] sm:$0xff]
        %v1853 = vld [vmem:[%s568 + $0x40] sm:$0xff]
        %v1854 = vld [vmem:[%s568 + $0x48] sm:$0xff]
        %v1855 = vld [vmem:[%s568 + $0x50] sm:$0xff]
        %v1856 = vld [vmem:[%s568 + $0x58] sm:$0xff]
        %v1857 = vld [vmem:[%s568 + $0x60] sm:$0xff]
        %v1858 = vld [vmem:[%s568 + $0x68] sm:$0xff]
        %v1859 = vld [vmem:[%s568 + $0x70] sm:$0xff]
        %v1860 = vld [vmem:[%s568 + $0x78] sm:$0xff]
        %v1861 = vld [vmem:[%s689] sm:$0x3]
        %v1862 = vld [vmem:[%s577] sm:$0xf]
        %v1863 = vld [vmem:[%s577 + $0x4] sm:$0xf]
        %v1864 = vld [vmem:[%s577 + $0x8] sm:$0xf]
        %v1865 = vld [vmem:[%s577 + $0xc] sm:$0xf]
        %v1866 = vld [vmem:[%s577 + $0x10] sm:$0xf]
        %v1867 = vld [vmem:[%s577 + $0x14] sm:$0xf]
        %v1868 = vld [vmem:[%s577 + $0x18] sm:$0xf]
        %v1869 = vld [vmem:[%s577 + $0x1c] sm:$0xf]
        %v1870 = vld [vmem:[%s577 + $0x20] sm:$0xf]
        %v1871 = vld [vmem:[%s577 + $0x24] sm:$0xf]
        %v1872 = vld [vmem:[%s577 + $0x28] sm:$0xf]
        %v1873 = vld [vmem:[%s577 + $0x2c] sm:$0xf]
        %v1874 = vld [vmem:[%s577 + $0x30] sm:$0xf]
        %v1875 = vld [vmem:[%s577 + $0x34] sm:$0xf]
        %v1876 = vld [vmem:[%s577 + $0x38] sm:$0xf]
        %v1877 = vld [vmem:[%s577 + $0x3c] sm:$0xf]
        %v1878 = vld [vmem:[%s577 + $0x40] sm:$0xf]
        %v1879 = vld [vmem:[%s577 + $0x44] sm:$0xf]
        %v1880 = vld [vmem:[%s577 + $0x48] sm:$0xf]
        %v1881 = vld [vmem:[%s577 + $0x4c] sm:$0xf]
        %v1882 = vld [vmem:[%s577 + $0x50] sm:$0xf]
        %v1883 = vld [vmem:[%s577 + $0x54] sm:$0xf]
        %v1884 = vld [vmem:[%s577 + $0x58] sm:$0xf]
        %v1885 = vld [vmem:[%s577 + $0x5c] sm:$0xf]
        %v1886 = vld [vmem:[%s577 + $0x60] sm:$0xf]
        %v1887 = vld [vmem:[%s577 + $0x64] sm:$0xf]
        %v1888 = vld [vmem:[%s577 + $0x68] sm:$0xf]
        %v1889 = vld [vmem:[%s577 + $0x6c] sm:$0xf]
        %v1890 = vld [vmem:[%s577 + $0x70] sm:$0xf]
        %v1891 = vld [vmem:[%s577 + $0x74] sm:$0xf]
        %v1892 = vld [vmem:[%s577 + $0x78] sm:$0xf]
        %v1893 = vld [vmem:[%s577 + $0x7c] sm:$0xf]
        %v1894 = vld [vmem:[%s692] sm:$0x1]
        %v1895 = vpack.c.bf16 %v1844, %v1844
        %v1897 = vlaneseq
        %v1898 = vshrl.u32 %v1897, 7
        %v1899 = vsub.s32 0, %v1898
        %v1900 = vrot.slane %v1861, %v1899
        %v1901 = vlaneseq
        %v1902 = vshrl.u32 %v1901, 7
        %v1903 = vsub.s32 1, %v1902
        %v1904 = vrot.slane %v1861, %v1903
        %v1923 = vunpack.c.l.b16 %v1845
        %v1924 = vunpack.c.h.b16 %v1845
        %v1925 = vunpack.c.l.b16 %v1846
        %v1926 = vunpack.c.h.b16 %v1846
        %v1927 = vunpack.c.l.b16 %v1847
        %v1928 = vunpack.c.h.b16 %v1847
        %v1929 = vunpack.c.l.b16 %v1848
        %v1930 = vunpack.c.h.b16 %v1848
        %v1931 = vunpack.c.l.b16 %v1849
        %v1932 = vunpack.c.h.b16 %v1849
        %v1933 = vunpack.c.l.b16 %v1850
        %v1934 = vunpack.c.h.b16 %v1850
        %v1935 = vunpack.c.l.b16 %v1851
        %v1936 = vunpack.c.h.b16 %v1851
        %v1937 = vunpack.c.l.b16 %v1852
        %v1938 = vunpack.c.h.b16 %v1852
        %v1939 = vunpack.c.l.b16 %v1853
        %v1940 = vunpack.c.h.b16 %v1853
        %v1941 = vunpack.c.l.b16 %v1854
        %v1942 = vunpack.c.h.b16 %v1854
        %v1943 = vunpack.c.l.b16 %v1855
        %v1944 = vunpack.c.h.b16 %v1855
        %v1945 = vunpack.c.l.b16 %v1856
        %v1946 = vunpack.c.h.b16 %v1856
        %v1947 = vunpack.c.l.b16 %v1857
        %v1948 = vunpack.c.h.b16 %v1857
        %v1949 = vunpack.c.l.b16 %v1858
        %v1950 = vunpack.c.h.b16 %v1858
        %v1951 = vunpack.c.l.b16 %v1859
        %v1952 = vunpack.c.h.b16 %v1859
        %v1953 = vunpack.c.l.b16 %v1860
        %v1954 = vunpack.c.h.b16 %v1860
        %v1955 = vpack.c.b16 %v1925, %v1923
        %v1956 = vpack.c.b16 %v1926, %v1924
        %v1957 = vpack.c.b16 %v1929, %v1927
        %v1958 = vpack.c.b16 %v1930, %v1928
        %v1959 = vpack.c.b16 %v1933, %v1931
        %v1960 = vpack.c.b16 %v1934, %v1932
        %v1961 = vpack.c.b16 %v1937, %v1935
        %v1962 = vpack.c.b16 %v1938, %v1936
        %v1963 = vpack.c.b16 %v1941, %v1939
        %v1964 = vpack.c.b16 %v1942, %v1940
        %v1965 = vpack.c.b16 %v1945, %v1943
        %v1966 = vpack.c.b16 %v1946, %v1944
        %v1967 = vpack.c.b16 %v1949, %v1947
        %v1968 = vpack.c.b16 %v1950, %v1948
        %v1969 = vpack.c.b16 %v1953, %v1951
        %v1970 = vpack.c.b16 %v1954, %v1952
        %1987 = vmatprep.subr.bf16.mxu0 %v1956
        %1988 = vmatpush1.bf16.msra.mxu0 %v1955
        %1989 = vmatprep.subr.bf16.mxu0 %v1958
        %1990 = vmatpush1.bf16.msra.mxu0 %v1957
        %1991 = vmatprep.subr.bf16.mxu0 %v1960
        %1992 = vmatpush1.bf16.msra.mxu0 %v1959
        %1993 = vmatprep.subr.bf16.mxu0 %v1962
        %1994 = vmatpush1.bf16.msra.mxu0 %v1961
        %1995 = vmatprep.subr.bf16.mxu0 %v1964
        %1996 = vmatpush1.bf16.msra.mxu0 %v1963
        %1997 = vmatprep.subr.bf16.mxu0 %v1966
        %1998 = vmatpush1.bf16.msra.mxu0 %v1965
        %1999 = vmatprep.subr.bf16.mxu0 %v1968
        %2000 = vmatpush1.bf16.msra.mxu0 %v1967
        %2001 = vmatprep.subr.bf16.mxu0 %v1970
        %2002 = vmatpush1.bf16.msra.mxu0 %v1969
        %2003 = vmatprep.subr.bf16.mxu0 0
        %2004 = vmatpush1.bf16.msra.mxu0 0
        %2005 = vmatprep.subr.bf16.mxu0 0
        %2006 = vmatpush1.bf16.msra.mxu0 0
        %2007 = vmatprep.subr.bf16.mxu0 0
        %2008 = vmatpush1.bf16.msra.mxu0 0
        %2009 = vmatprep.subr.bf16.mxu0 0
        %2010 = vmatpush1.bf16.msra.mxu0 0
        %2011 = vmatprep.subr.bf16.mxu0 0
        %2012 = vmatpush1.bf16.msra.mxu0 0
        %2013 = vmatprep.subr.bf16.mxu0 0
        %2014 = vmatpush1.bf16.msra.mxu0 0
        %2015 = vmatprep.subr.bf16.mxu0 0
        %2016 = vmatpush1.bf16.msra.mxu0 0
        %2017 = vmatprep.subr.bf16.mxu0 0
        %2018 = vmatpush1.bf16.msra.mxu0 0
        %2019 = vmatprep.mubr.bf16.mxu0 0
        %2020 = vmatmul.mubr.bf16.gmra.mrb[0].mxu0 %v1895
        %v2021 = vpop.f32.mrb[0].mxu0
        %v2022 = vadd.f32 %v1900, %v2021
        %v2023 = vpop.f32.mrb[0].mxu0
        %v2024 = vadd.f32 %v1904, %v2023
        %v2025 = vpop.f32.mrb[0].mxu0
        %v2026 = vpop.f32.mrb[0].mxu0
        %2027 = vdwg.mxu0
        %v2028 = vmax.f32 %v2022, 0.0
        %v2029 = vmax.f32 %v2024, 0.0
        %v2030 = vpack.c.bf16 %v2028, %v2028
        %v2031 = vpack.c.bf16 %v2029, %v2029
        %v2033 = vlaneseq
        %v2034 = vshrl.u32 %v2033, 7
        %v2035 = vsub.s32 0, %v2034
        %v2036 = vrot.slane %v1894, %v2035
        %v2070 = vunpack.c.l.b16 %v1862
        %v2071 = vunpack.c.l.b16 %v1863
        %v2072 = vunpack.c.l.b16 %v1864
        %v2073 = vunpack.c.l.b16 %v1865
        %v2074 = vunpack.c.l.b16 %v1866
        %v2075 = vunpack.c.l.b16 %v1867
        %v2076 = vunpack.c.l.b16 %v1868
        %v2077 = vunpack.c.l.b16 %v1869
        %v2078 = vunpack.c.l.b16 %v1870
        %v2079 = vunpack.c.l.b16 %v1871
        %v2080 = vunpack.c.l.b16 %v1872
        %v2081 = vunpack.c.l.b16 %v1873
        %v2082 = vunpack.c.l.b16 %v1874
        %v2083 = vunpack.c.l.b16 %v1875
        %v2084 = vunpack.c.l.b16 %v1876
        %v2085 = vunpack.c.l.b16 %v1877
        %v2086 = vunpack.c.l.b16 %v1878
        %v2087 = vunpack.c.l.b16 %v1879
        %v2088 = vunpack.c.l.b16 %v1880
        %v2089 = vunpack.c.l.b16 %v1881
        %v2090 = vunpack.c.l.b16 %v1882
        %v2091 = vunpack.c.l.b16 %v1883
        %v2092 = vunpack.c.l.b16 %v1884
        %v2093 = vunpack.c.l.b16 %v1885
        %v2094 = vunpack.c.l.b16 %v1886
        %v2095 = vunpack.c.l.b16 %v1887
        %v2096 = vunpack.c.l.b16 %v1888
        %v2097 = vunpack.c.l.b16 %v1889
        %v2098 = vunpack.c.l.b16 %v1890
        %v2099 = vunpack.c.l.b16 %v1891
        %v2100 = vunpack.c.l.b16 %v1892
        %v2101 = vunpack.c.l.b16 %v1893
        %v2102 = vpack.c.b16 %v2071, %v2070
        %v2103 = vpack.c.b16 %v2073, %v2072
        %v2104 = vpack.c.b16 %v2075, %v2074
        %v2105 = vpack.c.b16 %v2077, %v2076
        %v2106 = vpack.c.b16 %v2079, %v2078
        %v2107 = vpack.c.b16 %v2081, %v2080
        %v2108 = vpack.c.b16 %v2083, %v2082
        %v2109 = vpack.c.b16 %v2085, %v2084
        %v2110 = vpack.c.b16 %v2087, %v2086
        %v2111 = vpack.c.b16 %v2089, %v2088
        %v2112 = vpack.c.b16 %v2091, %v2090
        %v2113 = vpack.c.b16 %v2093, %v2092
        %v2114 = vpack.c.b16 %v2095, %v2094
        %v2115 = vpack.c.b16 %v2097, %v2096
        %v2116 = vpack.c.b16 %v2099, %v2098
        %v2117 = vpack.c.b16 %v2101, %v2100
        %2134 = vmatprep.subr.bf16.mxu0 0
        %2135 = vmatpush1.bf16.msra.mxu0 %v2102
        %2136 = vmatprep.subr.bf16.mxu0 0
        %2137 = vmatpush1.bf16.msra.mxu0 %v2103
        %2138 = vmatprep.subr.bf16.mxu0 0
        %2139 = vmatpush1.bf16.msra.mxu0 %v2104
        %2140 = vmatprep.subr.bf16.mxu0 0
        %2141 = vmatpush1.bf16.msra.mxu0 %v2105
        %2142 = vmatprep.subr.bf16.mxu0 0
        %2143 = vmatpush1.bf16.msra.mxu0 %v2106
        %2144 = vmatprep.subr.bf16.mxu0 0
        %2145 = vmatpush1.bf16.msra.mxu0 %v2107
        %2146 = vmatprep.subr.bf16.mxu0 0
        %2147 = vmatpush1.bf16.msra.mxu0 %v2108
        %2148 = vmatprep.subr.bf16.mxu0 0
        %2149 = vmatpush1.bf16.msra.mxu0 %v2109
        %2150 = vmatprep.subr.bf16.mxu0 0
        %2151 = vmatpush1.bf16.msra.mxu0 %v2110
        %2152 = vmatprep.subr.bf16.mxu0 0
        %2153 = vmatpush1.bf16.msra.mxu0 %v2111
        %2154 = vmatprep.subr.bf16.mxu0 0
        %2155 = vmatpush1.bf16.msra.mxu0 %v2112
        %2156 = vmatprep.subr.bf16.mxu0 0
        %2157 = vmatpush1.bf16.msra.mxu0 %v2113
        %2158 = vmatprep.subr.bf16.mxu0 0
        %2159 = vmatpush1.bf16.msra.mxu0 %v2114
        %2160 = vmatprep.subr.bf16.mxu0 0
        %2161 = vmatpush1.bf16.msra.mxu0 %v2115
        %2162 = vmatprep.subr.bf16.mxu0 0
        %2163 = vmatpush1.bf16.msra.mxu0 %v2116
        %2164 = vmatprep.subr.bf16.mxu0 0
        %2165 = vmatpush1.bf16.msra.mxu0 %v2117
        %2166 = vmatprep.mubr.bf16.mxu0 %v2031
        %2167 = vmatmul.mubr.bf16.gmra.mrb[0].mxu0 %v2030
        %v2168 = vpop.f32.mrb[0].mxu0
        %v2169 = vadd.f32 %v2036, %v2168
        %v2170 = vpop.f32.mrb[0].mxu0
        %v2171 = vpop.f32.mrb[0].mxu0
        %v2172 = vpop.f32.mrb[0].mxu0
        %2173 = vdwg.mxu0
        %v2174 = vadd.f32 %v1844, %v2169
        %v2175 = vld [vmem:[%s695] sm:$0x1]
        %v2176 = vld [vmem:[%s698] sm:$0x1]
        %2177 = vadd.xlane.f32.xlu0 %v2174
        %v2178 = vpop.xlane.xlu0 %2177
        %v2179 = vmul.f32 %v2178, %v1821
        %v2180 = vsub.f32 %v2174, %v2179
        %v2181 = vmul.f32 %v2180, %v2180
        %2182 = vadd.xlane.f32.xlu0 %v2181
        %v2183 = vpop.xlane.xlu0 %2182
        %v2184 = vmul.f32 %v2183, %v1821
        %v2185 = vadd.f32 %v2184, 1e-05
        %v2186 = vrsqrt.pop %v2185
        %v2187 = vmul.f32 %v2180, %v2186
        %v2189 = vlaneseq
        %v2190 = vshrl.u32 %v2189, 7
        %v2191 = vsub.s32 0, %v2190
        %v2192 = vrot.slane %v2175, %v2191
        %v2194 = vmul.f32 %v2187, %v2192
        %v2196 = vlaneseq
        %v2197 = vshrl.u32 %v2196, 7
        %v2198 = vsub.s32 0, %v2197
        %v2199 = vrot.slane %v2176, %v2198
        %v2201 = vadd.f32 %v2194, %v2199
        %2202 = vst [vmem:[#allocation2] sm:$0xff] %v2201
        %p2203 = scmp.eq.s32.totalorder %s35, 1
        // Predicated region
        $region89: #{transformer_forward.2} parent=71 // pred_check
          %p2204 = pneg %p2203
        $region90: #{transformer_forward.2} parent=71 // pred_check_branch
          %2206 = sbr.rel (%p2204) target = $region92
        $region91: #{transformer_forward.2} parent=71 // pred_region
          %2207 = vst [vmem:[%s702] sm:$0xff] %v2201
        $region92: #{transformer_forward.2} parent=71 // pred_fallthru
          _
        %p2208 = scmp.lt.s32.totalorder %s34, 1
        %s2209 = scalar_select %p2208, %s34, 1
        %s2210 = smul.addr %s2209, 8
        %s2211 = scalar_lea.vmem %s13, %s2210
        // Predicated region
        $region93: #{transformer_forward.2} parent=71 // pred_check
          %p2212 = pneg %p398
        $region94: #{transformer_forward.2} parent=71 // pred_check_branch
          %2214 = sbr.rel (%p2212) target = $region96
        $region95: #{transformer_forward.2} parent=71 // pred_region
          _
        $region96: #{transformer_forward.2} parent=71 // pred_fallthru
          _
      $region72: #{transformer_forward.2} parent=5 // pred_fallthru
        _
      %p2215 = scmp.le.s32.totalorder 2, %s25
      // Predicated region
      $region97: #{transformer_forward.2} parent=5 // pred_check
        %p2216 = pneg %p2215
      $region98: #{transformer_forward.2} parent=5 // pred_check_branch
        %2218 = sbr.rel (%p2216) target = $region100
      $region99: #{transformer_forward.2} parent=5 // pred_region
        %s2219 = ssub.s32 %s25, 2
        // Predicated region
        $region101: #{transformer_forward.2} parent=99 // pred_check
          %p2220 = pneg %p404
        $region102: #{transformer_forward.2} parent=99 // pred_check_branch
          %2222 = sbr.rel (%p2220) target = $region104
        $region103: #{transformer_forward.2} parent=99 // pred_region
          %p2223 = scmp.lt.s32.totalorder %s36, 1
          %s2224 = scalar_select %p2223, %s36, 1
          %s2225 = smul.addr %s2224, 8
          %s2226 = scalar_lea.vmem %s13, %s2225
        $region104: #{transformer_forward.2} parent=99 // pred_fallthru
          _
      $region100: #{transformer_forward.2} parent=5 // pred_fallthru
        _
    $region6: #{transformer_forward.2} parent=1 // loop_footer
      %s29 = sadd.s32 1, %s25
    $region7: #{transformer_forward.2} parent=1 // loop_footer_branch
      %24 = sbr.rel target = $region3
    $region8: #{transformer_forward.2} parent=1 // loop_exit
      _
    %2227 = vsyncpa [#allocation4], 1
    %s2228 = scalar_lea.sflag [#allocation4], 1
    %2229 = vsyncpa %s2228, 1
    %2230 = vsyncpa [#allocation6], 1
    %s2231 = scalar_lea.sflag [#allocation6], 1
    %2232 = vsyncpa %s2231, 1

// kernel: transformer_forward.3
$region0: #{transformer_forward.3}
  #allocation0 [shape = 'u32[]', space=smem, size = 0x4, offset = 0x4, fixed_abs, tag = 'smem constant byte address 0x4 - core index']
  #allocation1 [shape = 'u32[144,128]{1,0:T(1,128)}', space=vmem, size = 0x12000, scoped, tag = 'internal scratch']
  #allocation2 [shape = 'f32[8,128]{1,0:T(8,128)}', space=vmem, size = 0x1000, scoped, tag = 'scratch operand']
  %s0 = inlined_call_operand.vmem [shape: f32[2,8,128], index: 0, kind: input, shape index: {}]
  %s1 = inlined_call_operand.vmem [shape: f32[2,8,128], index: 1, kind: input, shape index: {}]
  %s2 = inlined_call_operand.vmem [shape: bf16[2,128,384], index: 2, kind: input, shape index: {}]
  %s3 = inlined_call_operand.vmem [shape: f32[2,1,384], index: 3, kind: input, shape index: {}]
  %s4 = inlined_call_operand.hbm [shape: bf16[2,128,128], index: 4, kind: input, shape index: {}]
  %s5 = inlined_call_operand.vmem [shape: f32[2,1,128], index: 5, kind: input, shape index: {}]
  %s6 = inlined_call_operand.vmem [shape: f32[2,1,128], index: 6, kind: input, shape index: {}]
  %s7 = inlined_call_operand.vmem [shape: f32[2,1,128], index: 7, kind: input, shape index: {}]
  %s8 = inlined_call_operand.hbm [shape: bf16[2,128,128], index: 8, kind: input, shape index: {}]
  %s9 = inlined_call_operand.vmem [shape: f32[2,1,128], index: 9, kind: input, shape index: {}]
  %s10 = inlined_call_operand.vmem [shape: bf16[2,128,256], index: 10, kind: input, shape index: {}]
  %s11 = inlined_call_operand.vmem [shape: f32[2,1,256], index: 11, kind: input, shape index: {}]
  %s12 = inlined_call_operand.hbm [shape: bf16[2,128,128], index: 12, kind: input, shape index: {}]
  %s13 = inlined_call_operand.vmem [shape: f32[2,1,128], index: 13, kind: input, shape index: {}]
  %s14 = inlined_call_operand.vmem [shape: f32[2,1,128], index: 14, kind: input, shape index: {}]
  %s15 = inlined_call_operand.vmem [shape: f32[2,1,128], index: 15, kind: input, shape index: {}]
  %s16 = inlined_call_operand.vmem [shape: bf16[2,128,256], index: 16, kind: input, shape index: {}]
  %s17 = inlined_call_operand.vmem [shape: f32[2,1,256], index: 17, kind: input, shape index: {}]
  %s18 = inlined_call_operand.vmem [shape: bf16[2,256,128], index: 18, kind: input, shape index: {}]
  %s19 = inlined_call_operand.vmem [shape: f32[2,1,128], index: 19, kind: input, shape index: {}]
  %s20 = inlined_call_operand.vmem [shape: f32[2,1,128], index: 20, kind: input, shape index: {}]
  %s21 = inlined_call_operand.vmem [shape: f32[2,1,128], index: 21, kind: input, shape index: {}]
  %s22 = inlined_call_operand.hbm [shape: f32[2,8,128], index: 22, kind: output, shape index: {}]
  %s23 = sld [smem:[#allocation0]]
  $region141: #{transformer_forward.3} parent=0
    _
  %s25 = ssub.s32 1, %s23
  %s26 = scalar_select 0, %s25, %s23
  $region1: #{transformer_forward.3} parent=0
    #allocation3 [shape = 'u8[65536]{0}', space=vmem, size = 0x10000, scoped, tag = 'input window, operand 4']
    #allocation4 [shape = 's32[2]{0}', space=sflag, size = 0x8, scoped, tag = 'scoped memory for transformer_forward.3']
    #allocation5 [shape = 's32[2]{0}', space=sflag, size = 0x8, scoped, tag = 'scoped memory for transformer_forward.3']
    #allocation6 [shape = 'u8[65536]{0}', space=vmem, size = 0x10000, scoped, tag = 'input window, operand 8']
    #allocation7 [shape = 's32[2]{0}', space=sflag, size = 0x8, scoped, tag = 'scoped memory for transformer_forward.3']
    #allocation8 [shape = 'u8[65536]{0}', space=vmem, size = 0x10000, scoped, tag = 'input window, operand 12']
    #allocation9 [shape = 'u8[8192]{0}', space=vmem, size = 0x2000, scoped, tag = 'output window, operand 0']
    %27 = vsyncpa [#allocation4], 0
    %s28 = scalar_lea.sflag [#allocation4], 1
    %29 = vsyncpa %s28, 0
    %30 = vsyncpa [#allocation7], 0
    %s31 = scalar_lea.sflag [#allocation7], 1
    %32 = vsyncpa %s31, 0
    %33 = vsyncpa [#allocation5], 0
    %s34 = scalar_lea.sflag [#allocation5], 1
    %35 = vsyncpa %s34, 0
    loop: start=0, step=1, limit=6
    $region2: #{transformer_forward.3} parent=1 // loop_pre_header
      _
    $region3: #{transformer_forward.3} parent=1 // loop_header
      %s37 = sphi 0, %s41
      %p38 = scmp.ge.s32.totalorder %s37, 6
      %s44 = sphi 0, %s56
      %s45 = sphi 0, %s52
      %s46 = sphi 0, %s44
      %s47 = sphi 0, %s45
      %s48 = sphi 0, %s46
      %s49 = sphi 0, %s47
      %s59 = sphi 0, %s61
      %s62 = sphi 0, %s59
      %s63 = sphi 0, %s62
      %s79 = sphi 0, %s63
      %s85 = sphi 0, %s87
      %s88 = sphi 0, %s85
      %s89 = sphi 0, %s88
      %s105 = sphi 0, %s89
      %s111 = sphi 0, %s113
      %s114 = sphi 0, %s111
      %s115 = sphi 0, %s114
      %s131 = sphi 0, %s115
      %s137 = sphi 0, %s139
      %s140 = sphi 0, %s137
      %s141 = sphi 0, %s140
      %s157 = sphi 0, %s141
      %s163 = sphi 0, %s165
      %s166 = sphi 0, %s163
      %s167 = sphi 0, %s166
      %s183 = sphi 0, %s167
      %s189 = sphi 0, %s191
      %s192 = sphi 0, %s189
      %s193 = sphi 0, %s192
      %s209 = sphi 0, %s193
      %s215 = sphi 0, %s217
      %s218 = sphi 0, %s215
      %s219 = sphi 0, %s218
      %s235 = sphi 0, %s219
      %s241 = sphi 0, %s243
      %s244 = sphi 0, %s241
      %s245 = sphi 0, %s244
      %s261 = sphi 0, %s245
      %s267 = sphi 0, %s269
      %s270 = sphi 0, %s267
      %s271 = sphi 0, %s270
      %s287 = sphi 0, %s271
      %s293 = sphi 0, %s295
      %s296 = sphi 0, %s293
      %s297 = sphi 0, %s296
      %s313 = sphi 0, %s297
      %s319 = sphi 0, %s321
      %s322 = sphi 0, %s319
      %s323 = sphi 0, %s322
      %s339 = sphi 0, %s323
      %s345 = sphi 0, %s347
      %s348 = sphi 0, %s345
      %s349 = sphi 0, %s348
      %s365 = sphi 0, %s349
      %s371 = sphi 0, %s373
      %s374 = sphi 0, %s371
      %s375 = sphi 0, %s374
      %s391 = sphi 0, %s375
      %s397 = sphi 0, %s399
      %s400 = sphi 0, %s397
      %s401 = sphi 0, %s400
      %s417 = sphi 0, %s401
      %s423 = sphi 0, %s425
      %s426 = sphi 0, %s423
      %s427 = sphi 0, %s426
      %s443 = sphi 0, %s427
      %s449 = sphi 0, %s451
      %s452 = sphi 0, %s449
      %s453 = sphi 0, %s452
      %s469 = sphi 0, %s453
      %s475 = sphi 0, %s477
      %s478 = sphi 0, %s475
      %s479 = sphi 0, %s478
      %s495 = sphi 0, %s479
      %s501 = sphi 0, %s503
      %s504 = sphi 0, %s501
      %s505 = sphi 0, %s504
      %s521 = sphi 0, %s505
      %s527 = sphi 0, %s529
      %s530 = sphi 0, %s527
      %s531 = sphi 0, %s530
      %s547 = sphi 0, %s531
      %s553 = sphi 0, %s555
      %s556 = sphi 0, %s553
      %s557 = sphi 0, %s556
      %s573 = sphi 0, %s557
      %s579 = sphi 0, %s581
      %s582 = sphi 0, %s579
      %s583 = sphi 0, %s582
      %s599 = sphi 0, %s583
      %s605 = sphi 0, %s607
      %s608 = sphi 0, %s605
      %s609 = sphi 0, %s608
      %s625 = sphi 0, %s609
      %s631 = sphi 0, %s633
      %s634 = sphi 0, %s631
      %s635 = sphi 0, %s634
      %s651 = sphi 0, %s635
    $region4: #{transformer_forward.3} parent=1 // loop_header_branch
      %40 = sbr.rel (%p38) target = $region8
    $region5: #{transformer_forward.3} parent=1 // loop_body
      %s42 = ssub.s32 %s37, 1
      %s43 = ssub.s32 %s37, 2
      %s50 = sadd.s32 1, %s45
      %p51 = scmp.ge.s32.totalorder %s50, 2
      %s52 = scalar_select %p51, 0, %s50
      %s53 = sadd.s32 1, %s44
      %s54 = scalar_select %p51, %s53, %s44
      %p55 = scmp.ge.s32.totalorder %s54, 2
      %s56 = scalar_select %p55, 0, %s54
      %s57 = ssub.s32 %s44, %s56
      %p58 = scmp.eq.s32.totalorder %s57, 0
      %s60 = sadd.s32 %s59, 1
      %s61 = scalar_select %p58, %s59, %s60
      %p64 = pneg %p58
      %p65 = scmp.eq.s32.totalorder %s37, 3
      %p66 = por %p64, %p65
      %p67 = scmp.ne.s32.totalorder %s59, %s62
      %p68 = scmp.eq.s32.totalorder %s37, 0
      %p69 = por %p67, %p68
      %p70 = scmp.ne.s32.totalorder %s59, %s62
      %p71 = scmp.eq.s32.totalorder %s42, 3
      %p72 = por %p70, %p71
      %p73 = scmp.ne.s32.totalorder %s62, %s63
      %p74 = scmp.eq.s32.totalorder %s42, 0
      %p75 = por %p73, %p74
      %p76 = scmp.ne.s32.totalorder %s62, %s63
      %p77 = scmp.eq.s32.totalorder %s43, 3
      %p78 = por %p76, %p77
      %p80 = scmp.ne.s32.totalorder %s63, %s79
      %p81 = scmp.eq.s32.totalorder %s43, 0
      %p82 = por %p80, %p81
      %s83 = ssub.s32 %s44, %s56
      %p84 = scmp.eq.s32.totalorder %s83, 0
      %s86 = sadd.s32 %s85, 1
      %s87 = scalar_select %p84, %s85, %s86
      %p90 = pneg %p84
      %p91 = scmp.eq.s32.totalorder %s37, 3
      %p92 = por %p90, %p91
      %p93 = scmp.ne.s32.totalorder %s85, %s88
      %p94 = scmp.eq.s32.totalorder %s37, 0
      %p95 = por %p93, %p94
      %p96 = scmp.ne.s32.totalorder %s85, %s88
      %p97 = scmp.eq.s32.totalorder %s42, 3
      %p98 = por %p96, %p97
      %p99 = scmp.ne.s32.totalorder %s88, %s89
      %p100 = scmp.eq.s32.totalorder %s42, 0
      %p101 = por %p99, %p100
      %p102 = scmp.ne.s32.totalorder %s88, %s89
      %p103 = scmp.eq.s32.totalorder %s43, 3
      %p104 = por %p102, %p103
      %p106 = scmp.ne.s32.totalorder %s89, %s105
      %p107 = scmp.eq.s32.totalorder %s43, 0
      %p108 = por %p106, %p107
      %s109 = ssub.s32 %s45, %s52
      %p110 = scmp.eq.s32.totalorder %s109, 0
      %s112 = sadd.s32 %s111, 1
      %s113 = scalar_select %p110, %s111, %s112
      %p116 = pneg %p110
      %p117 = scmp.eq.s32.totalorder %s37, 3
      %p118 = por %p116, %p117
      %p119 = scmp.ne.s32.totalorder %s111, %s114
      %p120 = scmp.eq.s32.totalorder %s37, 0
      %p121 = por %p119, %p120
      %p122 = scmp.ne.s32.totalorder %s111, %s114
      %p123 = scmp.eq.s32.totalorder %s42, 3
      %p124 = por %p122, %p123
      %p125 = scmp.ne.s32.totalorder %s114, %s115
      %p126 = scmp.eq.s32.totalorder %s42, 0
      %p127 = por %p125, %p126
      %p128 = scmp.ne.s32.totalorder %s114, %s115
      %p129 = scmp.eq.s32.totalorder %s43, 3
      %p130 = por %p128, %p129
      %p132 = scmp.ne.s32.totalorder %s115, %s131
      %p133 = scmp.eq.s32.totalorder %s43, 0
      %p134 = por %p132, %p133
      %s135 = ssub.s32 %s45, %s52
      %p136 = scmp.eq.s32.totalorder %s135, 0
      %s138 = sadd.s32 %s137, 1
      %s139 = scalar_select %p136, %s137, %s138
      %p142 = pneg %p136
      %p143 = scmp.eq.s32.totalorder %s37, 3
      %p144 = por %p142, %p143
      %p145 = scmp.ne.s32.totalorder %s137, %s140
      %p146 = scmp.eq.s32.totalorder %s37, 0
      %p147 = por %p145, %p146
      %p148 = scmp.ne.s32.totalorder %s137, %s140
      %p149 = scmp.eq.s32.totalorder %s42, 3
      %p150 = por %p148, %p149
      %p151 = scmp.ne.s32.totalorder %s140, %s141
      %p152 = scmp.eq.s32.totalorder %s42, 0
      %p153 = por %p151, %p152
      %p154 = scmp.ne.s32.totalorder %s140, %s141
      %p155 = scmp.eq.s32.totalorder %s43, 3
      %p156 = por %p154, %p155
      %p158 = scmp.ne.s32.totalorder %s141, %s157
      %p159 = scmp.eq.s32.totalorder %s43, 0
      %p160 = por %p158, %p159
      %s161 = ssub.s32 %s45, %s52
      %p162 = scmp.eq.s32.totalorder %s161, 0
      %s164 = sadd.s32 %s163, 1
      %s165 = scalar_select %p162, %s163, %s164
      %p168 = pneg %p162
      %p169 = scmp.eq.s32.totalorder %s37, 3
      %p170 = por %p168, %p169
      %p171 = scmp.ne.s32.totalorder %s163, %s166
      %p172 = scmp.eq.s32.totalorder %s37, 0
      %p173 = por %p171, %p172
      %p174 = scmp.ne.s32.totalorder %s163, %s166
      %p175 = scmp.eq.s32.totalorder %s42, 3
      %p176 = por %p174, %p175
      %p177 = scmp.ne.s32.totalorder %s166, %s167
      %p178 = scmp.eq.s32.totalorder %s42, 0
      %p179 = por %p177, %p178
      %p180 = scmp.ne.s32.totalorder %s166, %s167
      %p181 = scmp.eq.s32.totalorder %s43, 3
      %p182 = por %p180, %p181
      %p184 = scmp.ne.s32.totalorder %s167, %s183
      %p185 = scmp.eq.s32.totalorder %s43, 0
      %p186 = por %p184, %p185
      %s187 = ssub.s32 %s45, %s52
      %p188 = scmp.eq.s32.totalorder %s187, 0
      %s190 = sadd.s32 %s189, 1
      %s191 = scalar_select %p188, %s189, %s190
      %p194 = pneg %p188
      %p195 = scmp.eq.s32.totalorder %s37, 3
      %p196 = por %p194, %p195
      %p197 = scmp.ne.s32.totalorder %s189, %s192
      %p198 = scmp.eq.s32.totalorder %s37, 0
      %p199 = por %p197, %p198
      %p200 = scmp.ne.s32.totalorder %s189, %s192
      %p201 = scmp.eq.s32.totalorder %s42, 3
      %p202 = por %p200, %p201
      %p203 = scmp.ne.s32.totalorder %s192, %s193
      %p204 = scmp.eq.s32.totalorder %s42, 0
      %p205 = por %p203, %p204
      %p206 = scmp.ne.s32.totalorder %s192, %s193
      %p207 = scmp.eq.s32.totalorder %s43, 3
      %p208 = por %p206, %p207
      %p210 = scmp.ne.s32.totalorder %s193, %s209
      %p211 = scmp.eq.s32.totalorder %s43, 0
      %p212 = por %p210, %p211
      %s213 = ssub.s32 %s45, %s52
      %p214 = scmp.eq.s32.totalorder %s213, 0
      %s216 = sadd.s32 %s215, 1
      %s217 = scalar_select %p214, %s215, %s216
      %p220 = pneg %p214
      %p221 = scmp.eq.s32.totalorder %s37, 3
      %p222 = por %p220, %p221
      %p223 = scmp.ne.s32.totalorder %s215, %s218
      %p224 = scmp.eq.s32.totalorder %s37, 0
      %p225 = por %p223, %p224
      %p226 = scmp.ne.s32.totalorder %s215, %s218
      %p227 = scmp.eq.s32.totalorder %s42, 3
      %p228 = por %p226, %p227
      %p229 = scmp.ne.s32.totalorder %s218, %s219
      %p230 = scmp.eq.s32.totalorder %s42, 0
      %p231 = por %p229, %p230
      %p232 = scmp.ne.s32.totalorder %s218, %s219
      %p233 = scmp.eq.s32.totalorder %s43, 3
      %p234 = por %p232, %p233
      %p236 = scmp.ne.s32.totalorder %s219, %s235
      %p237 = scmp.eq.s32.totalorder %s43, 0
      %p238 = por %p236, %p237
      %s239 = ssub.s32 %s45, %s52
      %p240 = scmp.eq.s32.totalorder %s239, 0
      %s242 = sadd.s32 %s241, 1
      %s243 = scalar_select %p240, %s241, %s242
      %p246 = pneg %p240
      %p247 = scmp.eq.s32.totalorder %s37, 3
      %p248 = por %p246, %p247
      %p249 = scmp.ne.s32.totalorder %s241, %s244
      %p250 = scmp.eq.s32.totalorder %s37, 0
      %p251 = por %p249, %p250
      %p252 = scmp.ne.s32.totalorder %s241, %s244
      %p253 = scmp.eq.s32.totalorder %s42, 3
      %p254 = por %p252, %p253
      %p255 = scmp.ne.s32.totalorder %s244, %s245
      %p256 = scmp.eq.s32.totalorder %s42, 0
      %p257 = por %p255, %p256
      %p258 = scmp.ne.s32.totalorder %s244, %s245
      %p259 = scmp.eq.s32.totalorder %s43, 3
      %p260 = por %p258, %p259
      %p262 = scmp.ne.s32.totalorder %s245, %s261
      %p263 = scmp.eq.s32.totalorder %s43, 0
      %p264 = por %p262, %p263
      %s265 = ssub.s32 %s45, %s52
      %p266 = scmp.eq.s32.totalorder %s265, 0
      %s268 = sadd.s32 %s267, 1
      %s269 = scalar_select %p266, %s267, %s268
      %p272 = pneg %p266
      %p273 = scmp.eq.s32.totalorder %s37, 3
      %p274 = por %p272, %p273
      %p275 = scmp.ne.s32.totalorder %s267, %s270
      %p276 = scmp.eq.s32.totalorder %s37, 0
      %p277 = por %p275, %p276
      %p278 = scmp.ne.s32.totalorder %s267, %s270
      %p279 = scmp.eq.s32.totalorder %s42, 3
      %p280 = por %p278, %p279
      %p281 = scmp.ne.s32.totalorder %s270, %s271
      %p282 = scmp.eq.s32.totalorder %s42, 0
      %p283 = por %p281, %p282
      %p284 = scmp.ne.s32.totalorder %s270, %s271
      %p285 = scmp.eq.s32.totalorder %s43, 3
      %p286 = por %p284, %p285
      %p288 = scmp.ne.s32.totalorder %s271, %s287
      %p289 = scmp.eq.s32.totalorder %s43, 0
      %p290 = por %p288, %p289
      %s291 = ssub.s32 %s45, %s52
      %p292 = scmp.eq.s32.totalorder %s291, 0
      %s294 = sadd.s32 %s293, 1
      %s295 = scalar_select %p292, %s293, %s294
      %p298 = pneg %p292
      %p299 = scmp.eq.s32.totalorder %s37, 3
      %p300 = por %p298, %p299
      %p301 = scmp.ne.s32.totalorder %s293, %s296
      %p302 = scmp.eq.s32.totalorder %s37, 0
      %p303 = por %p301, %p302
      %p304 = scmp.ne.s32.totalorder %s293, %s296
      %p305 = scmp.eq.s32.totalorder %s42, 3
      %p306 = por %p304, %p305
      %p307 = scmp.ne.s32.totalorder %s296, %s297
      %p308 = scmp.eq.s32.totalorder %s42, 0
      %p309 = por %p307, %p308
      %p310 = scmp.ne.s32.totalorder %s296, %s297
      %p311 = scmp.eq.s32.totalorder %s43, 3
      %p312 = por %p310, %p311
      %p314 = scmp.ne.s32.totalorder %s297, %s313
      %p315 = scmp.eq.s32.totalorder %s43, 0
      %p316 = por %p314, %p315
      %s317 = ssub.s32 %s45, %s52
      %p318 = scmp.eq.s32.totalorder %s317, 0
      %s320 = sadd.s32 %s319, 1
      %s321 = scalar_select %p318, %s319, %s320
      %p324 = pneg %p318
      %p325 = scmp.eq.s32.totalorder %s37, 3
      %p326 = por %p324, %p325
      %p327 = scmp.ne.s32.totalorder %s319, %s322
      %p328 = scmp.eq.s32.totalorder %s37, 0
      %p329 = por %p327, %p328
      %p330 = scmp.ne.s32.totalorder %s319, %s322
      %p331 = scmp.eq.s32.totalorder %s42, 3
      %p332 = por %p330, %p331
      %p333 = scmp.ne.s32.totalorder %s322, %s323
      %p334 = scmp.eq.s32.totalorder %s42, 0
      %p335 = por %p333, %p334
      %p336 = scmp.ne.s32.totalorder %s322, %s323
      %p337 = scmp.eq.s32.totalorder %s43, 3
      %p338 = por %p336, %p337
      %p340 = scmp.ne.s32.totalorder %s323, %s339
      %p341 = scmp.eq.s32.totalorder %s43, 0
      %p342 = por %p340, %p341
      %s343 = ssub.s32 %s45, %s52
      %p344 = scmp.eq.s32.totalorder %s343, 0
      %s346 = sadd.s32 %s345, 1
      %s347 = scalar_select %p344, %s345, %s346
      %p350 = pneg %p344
      %p351 = scmp.eq.s32.totalorder %s37, 3
      %p352 = por %p350, %p351
      %p353 = scmp.ne.s32.totalorder %s345, %s348
      %p354 = scmp.eq.s32.totalorder %s37, 0
      %p355 = por %p353, %p354
      %p356 = scmp.ne.s32.totalorder %s345, %s348
      %p357 = scmp.eq.s32.totalorder %s42, 3
      %p358 = por %p356, %p357
      %p359 = scmp.ne.s32.totalorder %s348, %s349
      %p360 = scmp.eq.s32.totalorder %s42, 0
      %p361 = por %p359, %p360
      %p362 = scmp.ne.s32.totalorder %s348, %s349
      %p363 = scmp.eq.s32.totalorder %s43, 3
      %p364 = por %p362, %p363
      %p366 = scmp.ne.s32.totalorder %s349, %s365
      %p367 = scmp.eq.s32.totalorder %s43, 0
      %p368 = por %p366, %p367
      %s369 = ssub.s32 %s45, %s52
      %p370 = scmp.eq.s32.totalorder %s369, 0
      %s372 = sadd.s32 %s371, 1
      %s373 = scalar_select %p370, %s371, %s372
      %p376 = pneg %p370
      %p377 = scmp.eq.s32.totalorder %s37, 3
      %p378 = por %p376, %p377
      %p379 = scmp.ne.s32.totalorder %s371, %s374
      %p380 = scmp.eq.s32.totalorder %s37, 0
      %p381 = por %p379, %p380
      %p382 = scmp.ne.s32.totalorder %s371, %s374
      %p383 = scmp.eq.s32.totalorder %s42, 3
      %p384 = por %p382, %p383
      %p385 = scmp.ne.s32.totalorder %s374, %s375
      %p386 = scmp.eq.s32.totalorder %s42, 0
      %p387 = por %p385, %p386
      %p388 = scmp.ne.s32.totalorder %s374, %s375
      %p389 = scmp.eq.s32.totalorder %s43, 3
      %p390 = por %p388, %p389
      %p392 = scmp.ne.s32.totalorder %s375, %s391
      %p393 = scmp.eq.s32.totalorder %s43, 0
      %p394 = por %p392, %p393
      %s395 = ssub.s32 %s45, %s52
      %p396 = scmp.eq.s32.totalorder %s395, 0
      %s398 = sadd.s32 %s397, 1
      %s399 = scalar_select %p396, %s397, %s398
      %p402 = pneg %p396
      %p403 = scmp.eq.s32.totalorder %s37, 3
      %p404 = por %p402, %p403
      %p405 = scmp.ne.s32.totalorder %s397, %s400
      %p406 = scmp.eq.s32.totalorder %s37, 0
      %p407 = por %p405, %p406
      %p408 = scmp.ne.s32.totalorder %s397, %s400
      %p409 = scmp.eq.s32.totalorder %s42, 3
      %p410 = por %p408, %p409
      %p411 = scmp.ne.s32.totalorder %s400, %s401
      %p412 = scmp.eq.s32.totalorder %s42, 0
      %p413 = por %p411, %p412
      %p414 = scmp.ne.s32.totalorder %s400, %s401
      %p415 = scmp.eq.s32.totalorder %s43, 3
      %p416 = por %p414, %p415
      %p418 = scmp.ne.s32.totalorder %s401, %s417
      %p419 = scmp.eq.s32.totalorder %s43, 0
      %p420 = por %p418, %p419
      %s421 = ssub.s32 %s45, %s52
      %p422 = scmp.eq.s32.totalorder %s421, 0
      %s424 = sadd.s32 %s423, 1
      %s425 = scalar_select %p422, %s423, %s424
      %p428 = pneg %p422
      %p429 = scmp.eq.s32.totalorder %s37, 3
      %p430 = por %p428, %p429
      %p431 = scmp.ne.s32.totalorder %s423, %s426
      %p432 = scmp.eq.s32.totalorder %s37, 0
      %p433 = por %p431, %p432
      %p434 = scmp.ne.s32.totalorder %s423, %s426
      %p435 = scmp.eq.s32.totalorder %s42, 3
      %p436 = por %p434, %p435
      %p437 = scmp.ne.s32.totalorder %s426, %s427
      %p438 = scmp.eq.s32.totalorder %s42, 0
      %p439 = por %p437, %p438
      %p440 = scmp.ne.s32.totalorder %s426, %s427
      %p441 = scmp.eq.s32.totalorder %s43, 3
      %p442 = por %p440, %p441
      %p444 = scmp.ne.s32.totalorder %s427, %s443
      %p445 = scmp.eq.s32.totalorder %s43, 0
      %p446 = por %p444, %p445
      %s447 = ssub.s32 %s45, %s52
      %p448 = scmp.eq.s32.totalorder %s447, 0
      %s450 = sadd.s32 %s449, 1
      %s451 = scalar_select %p448, %s449, %s450
      %p454 = pneg %p448
      %p455 = scmp.eq.s32.totalorder %s37, 3
      %p456 = por %p454, %p455
      %p457 = scmp.ne.s32.totalorder %s449, %s452
      %p458 = scmp.eq.s32.totalorder %s37, 0
      %p459 = por %p457, %p458
      %p460 = scmp.ne.s32.totalorder %s449, %s452
      %p461 = scmp.eq.s32.totalorder %s42, 3
      %p462 = por %p460, %p461
      %p463 = scmp.ne.s32.totalorder %s452, %s453
      %p464 = scmp.eq.s32.totalorder %s42, 0
      %p465 = por %p463, %p464
      %p466 = scmp.ne.s32.totalorder %s452, %s453
      %p467 = scmp.eq.s32.totalorder %s43, 3
      %p468 = por %p466, %p467
      %p470 = scmp.ne.s32.totalorder %s453, %s469
      %p471 = scmp.eq.s32.totalorder %s43, 0
      %p472 = por %p470, %p471
      %s473 = ssub.s32 %s45, %s52
      %p474 = scmp.eq.s32.totalorder %s473, 0
      %s476 = sadd.s32 %s475, 1
      %s477 = scalar_select %p474, %s475, %s476
      %p480 = pneg %p474
      %p481 = scmp.eq.s32.totalorder %s37, 3
      %p482 = por %p480, %p481
      %p483 = scmp.ne.s32.totalorder %s475, %s478
      %p484 = scmp.eq.s32.totalorder %s37, 0
      %p485 = por %p483, %p484
      %p486 = scmp.ne.s32.totalorder %s475, %s478
      %p487 = scmp.eq.s32.totalorder %s42, 3
      %p488 = por %p486, %p487
      %p489 = scmp.ne.s32.totalorder %s478, %s479
      %p490 = scmp.eq.s32.totalorder %s42, 0
      %p491 = por %p489, %p490
      %p492 = scmp.ne.s32.totalorder %s478, %s479
      %p493 = scmp.eq.s32.totalorder %s43, 3
      %p494 = por %p492, %p493
      %p496 = scmp.ne.s32.totalorder %s479, %s495
      %p497 = scmp.eq.s32.totalorder %s43, 0
      %p498 = por %p496, %p497
      %s499 = ssub.s32 %s45, %s52
      %p500 = scmp.eq.s32.totalorder %s499, 0
      %s502 = sadd.s32 %s501, 1
      %s503 = scalar_select %p500, %s501, %s502
      %p506 = pneg %p500
      %p507 = scmp.eq.s32.totalorder %s37, 3
      %p508 = por %p506, %p507
      %p509 = scmp.ne.s32.totalorder %s501, %s504
      %p510 = scmp.eq.s32.totalorder %s37, 0
      %p511 = por %p509, %p510
      %p512 = scmp.ne.s32.totalorder %s501, %s504
      %p513 = scmp.eq.s32.totalorder %s42, 3
      %p514 = por %p512, %p513
      %p515 = scmp.ne.s32.totalorder %s504, %s505
      %p516 = scmp.eq.s32.totalorder %s42, 0
      %p517 = por %p515, %p516
      %p518 = scmp.ne.s32.totalorder %s504, %s505
      %p519 = scmp.eq.s32.totalorder %s43, 3
      %p520 = por %p518, %p519
      %p522 = scmp.ne.s32.totalorder %s505, %s521
      %p523 = scmp.eq.s32.totalorder %s43, 0
      %p524 = por %p522, %p523
      %s525 = ssub.s32 %s45, %s52
      %p526 = scmp.eq.s32.totalorder %s525, 0
      %s528 = sadd.s32 %s527, 1
      %s529 = scalar_select %p526, %s527, %s528
      %p532 = pneg %p526
      %p533 = scmp.eq.s32.totalorder %s37, 3
      %p534 = por %p532, %p533
      %p535 = scmp.ne.s32.totalorder %s527, %s530
      %p536 = scmp.eq.s32.totalorder %s37, 0
      %p537 = por %p535, %p536
      %p538 = scmp.ne.s32.totalorder %s527, %s530
      %p539 = scmp.eq.s32.totalorder %s42, 3
      %p540 = por %p538, %p539
      %p541 = scmp.ne.s32.totalorder %s530, %s531
      %p542 = scmp.eq.s32.totalorder %s42, 0
      %p543 = por %p541, %p542
      %p544 = scmp.ne.s32.totalorder %s530, %s531
      %p545 = scmp.eq.s32.totalorder %s43, 3
      %p546 = por %p544, %p545
      %p548 = scmp.ne.s32.totalorder %s531, %s547
      %p549 = scmp.eq.s32.totalorder %s43, 0
      %p550 = por %p548, %p549
      %s551 = ssub.s32 %s45, %s52
      %p552 = scmp.eq.s32.totalorder %s551, 0
      %s554 = sadd.s32 %s553, 1
      %s555 = scalar_select %p552, %s553, %s554
      %p558 = pneg %p552
      %p559 = scmp.eq.s32.totalorder %s37, 3
      %p560 = por %p558, %p559
      %p561 = scmp.ne.s32.totalorder %s553, %s556
      %p562 = scmp.eq.s32.totalorder %s37, 0
      %p563 = por %p561, %p562
      %p564 = scmp.ne.s32.totalorder %s553, %s556
      %p565 = scmp.eq.s32.totalorder %s42, 3
      %p566 = por %p564, %p565
      %p567 = scmp.ne.s32.totalorder %s556, %s557
      %p568 = scmp.eq.s32.totalorder %s42, 0
      %p569 = por %p567, %p568
      %p570 = scmp.ne.s32.totalorder %s556, %s557
      %p571 = scmp.eq.s32.totalorder %s43, 3
      %p572 = por %p570, %p571
      %p574 = scmp.ne.s32.totalorder %s557, %s573
      %p575 = scmp.eq.s32.totalorder %s43, 0
      %p576 = por %p574, %p575
      %s577 = ssub.s32 %s45, %s52
      %p578 = scmp.eq.s32.totalorder %s577, 0
      %s580 = sadd.s32 %s579, 1
      %s581 = scalar_select %p578, %s579, %s580
      %p584 = pneg %p578
      %p585 = scmp.eq.s32.totalorder %s37, 3
      %p586 = por %p584, %p585
      %p587 = scmp.ne.s32.totalorder %s579, %s582
      %p588 = scmp.eq.s32.totalorder %s37, 0
      %p589 = por %p587, %p588
      %p590 = scmp.ne.s32.totalorder %s579, %s582
      %p591 = scmp.eq.s32.totalorder %s42, 3
      %p592 = por %p590, %p591
      %p593 = scmp.ne.s32.totalorder %s582, %s583
      %p594 = scmp.eq.s32.totalorder %s42, 0
      %p595 = por %p593, %p594
      %p596 = scmp.ne.s32.totalorder %s582, %s583
      %p597 = scmp.eq.s32.totalorder %s43, 3
      %p598 = por %p596, %p597
      %p600 = scmp.ne.s32.totalorder %s583, %s599
      %p601 = scmp.eq.s32.totalorder %s43, 0
      %p602 = por %p600, %p601
      %s603 = ssub.s32 %s45, %s52
      %p604 = scmp.eq.s32.totalorder %s603, 0
      %s606 = sadd.s32 %s605, 1
      %s607 = scalar_select %p604, %s605, %s606
      %p610 = pneg %p604
      %p611 = scmp.eq.s32.totalorder %s37, 3
      %p612 = por %p610, %p611
      %p613 = scmp.ne.s32.totalorder %s605, %s608
      %p614 = scmp.eq.s32.totalorder %s37, 0
      %p615 = por %p613, %p614
      %p616 = scmp.ne.s32.totalorder %s605, %s608
      %p617 = scmp.eq.s32.totalorder %s42, 3
      %p618 = por %p616, %p617
      %p619 = scmp.ne.s32.totalorder %s608, %s609
      %p620 = scmp.eq.s32.totalorder %s42, 0
      %p621 = por %p619, %p620
      %p622 = scmp.ne.s32.totalorder %s608, %s609
      %p623 = scmp.eq.s32.totalorder %s43, 3
      %p624 = por %p622, %p623
      %p626 = scmp.ne.s32.totalorder %s609, %s625
      %p627 = scmp.eq.s32.totalorder %s43, 0
      %p628 = por %p626, %p627
      %s629 = ssub.s32 %s44, %s56
      %p630 = scmp.eq.s32.totalorder %s629, 0
      %s632 = sadd.s32 %s631, 1
      %s633 = scalar_select %p630, %s631, %s632
      %p636 = pneg %p630
      %p637 = scmp.eq.s32.totalorder %s37, 3
      %p638 = por %p636, %p637
      %p639 = scmp.ne.s32.totalorder %s631, %s634
      %p640 = scmp.eq.s32.totalorder %s37, 0
      %p641 = por %p639, %p640
      %p642 = scmp.ne.s32.totalorder %s631, %s634
      %p643 = scmp.eq.s32.totalorder %s42, 3
      %p644 = por %p642, %p643
      %p645 = scmp.ne.s32.totalorder %s634, %s635
      %p646 = scmp.eq.s32.totalorder %s42, 0
      %p647 = por %p645, %p646
      %p648 = scmp.ne.s32.totalorder %s634, %s635
      %p649 = scmp.eq.s32.totalorder %s43, 3
      %p650 = por %p648, %p649
      %p652 = scmp.ne.s32.totalorder %s635, %s651
      %p653 = scmp.eq.s32.totalorder %s43, 0
      %p654 = por %p652, %p653
      %p655 = scmp.le.s32.totalorder 1, %s37
      %p656 = scmp.lt.s32.totalorder %s37, 5
      %p657 = pnand %p655, %p656
      %p658 = pneg %p657
      // Predicated region
      $region9: #{transformer_forward.3} parent=5 // pred_check
        _
      $region10: #{transformer_forward.3} parent=5 // pred_check_branch
        %660 = sbr.rel (%p657) target = $region12
      $region11: #{transformer_forward.3} parent=5 // pred_region
        %s661 = ssub.s32 %s37, 1
      $region12: #{transformer_forward.3} parent=5 // pred_fallthru
        _
      %p662 = scmp.lt.s32.totalorder %s37, 4
      // Predicated region
      $region13: #{transformer_forward.3} parent=5 // pred_check
        %p663 = pneg %p662
      $region14: #{transformer_forward.3} parent=5 // pred_check_branch
        %665 = sbr.rel (%p663) target = $region16
      $region15: #{transformer_forward.3} parent=5 // pred_region
        // Predicated region
        $region17: #{transformer_forward.3} parent=15 // pred_check
          %p666 = pneg %p69
        $region18: #{transformer_forward.3} parent=15 // pred_check_branch
          %668 = sbr.rel (%p666) target = $region20
        $region19: #{transformer_forward.3} parent=15 // pred_region
          %p669 = scmp.lt.s32.totalorder %s44, 1
          %s670 = scalar_select %p669, %s44, 1
          %s671 = smul.addr %s670, 8
          %s672 = scalar_lea.vmem %s0, %s671
        $region20: #{transformer_forward.3} parent=15 // pred_fallthru
          _
        // Predicated region
        $region21: #{transformer_forward.3} parent=15 // pred_check
          %p673 = pneg %p95
        $region22: #{transformer_forward.3} parent=15 // pred_check_branch
          %675 = sbr.rel (%p673) target = $region24
        $region23: #{transformer_forward.3} parent=15 // pred_region
          %p676 = scmp.lt.s32.totalorder %s44, 1
          %s677 = scalar_select %p676, %s44, 1
          %s678 = smul.addr %s677, 8
          %s679 = scalar_lea.vmem %s1, %s678
        $region24: #{transformer_forward.3} parent=15 // pred_fallthru
          _
        // Predicated region
        $region25: #{transformer_forward.3} parent=15 // pred_check
          %p680 = pneg %p121
        $region26: #{transformer_forward.3} parent=15 // pred_check_branch
          %682 = sbr.rel (%p680) target = $region28
        $region27: #{transformer_forward.3} parent=15 // pred_region
          %p683 = scmp.lt.s32.totalorder %s45, 1
          %s684 = scalar_select %p683, %s45, 1
          %s685 = smul.addr %s684, 48
          %s686 = smul.addr %s685, 4
          %s687 = scalar_lea.vmem %s2, %s686
        $region28: #{transformer_forward.3} parent=15 // pred_fallthru
          _
        // Predicated region
        $region29: #{transformer_forward.3} parent=15 // pred_check
          %p688 = pneg %p147
        $region30: #{transformer_forward.3} parent=15 // pred_check_branch
          %690 = sbr.rel (%p688) target = $region32
        $region31: #{transformer_forward.3} parent=15 // pred_region
          %p691 = scmp.lt.s32.totalorder %s45, 1
          %s692 = scalar_select %p691, %s45, 1
          %s693 = smul.addr %s692, 3
          %s694 = scalar_lea.vmem %s3, %s693
        $region32: #{transformer_forward.3} parent=15 // pred_fallthru
          _
        // Predicated region
        $region33: #{transformer_forward.3} parent=15 // pred_check
          %p695 = pneg %p173
        $region34: #{transformer_forward.3} parent=15 // pred_check_branch
          %697 = sbr.rel (%p695) target = $region36
        $region35: #{transformer_forward.3} parent=15 // pred_region
          %s698 = sand.u32 %s163, 1
          %s699 = scalar_lea.sflag [#allocation4], %s698
          %s700 = sand.u32 %s163, 1
          %s701 = smul.addr %s700, 64
          %s702 = scalar_lea.vmem [#allocation3], %s701
          %s704 = ssub.s32 1024, 1024
          %705 = vsyncadd %s699, %s704
          %s706 = smul.addr %s45, 16
          %s707 = smul.addr %s706, 64
          %s708 = scalar_lea.hbm %s4, %s707
          %s709 = sshll.u32 %s702, 4
          %s710 = int_to_ptr.vmem [resolvable:$true] %s709
          %715 = dma.hbm_to_vmem [thread:$0]  %s708, 1024, %s710, %s699, 64, 64, 4
        $region36: #{transformer_forward.3} parent=15 // pred_fallthru
          _
        // Predicated region
        $region37: #{transformer_forward.3} parent=15 // pred_check
          %p716 = pneg %p199
        $region38: #{transformer_forward.3} parent=15 // pred_check_branch
          %718 = sbr.rel (%p716) target = $region40
        $region39: #{transformer_forward.3} parent=15 // pred_region
          %p719 = scmp.lt.s32.totalorder %s45, 1
          %s720 = scalar_select %p719, %s45, 1
          %s721 = scalar_lea.vmem %s5, %s720
        $region40: #{transformer_forward.3} parent=15 // pred_fallthru
          _
        // Predicated region
        $region41: #{transformer_forward.3} parent=15 // pred_check
          %p722 = pneg %p225
        $region42: #{transformer_forward.3} parent=15 // pred_check_branch
          %724 = sbr.rel (%p722) target = $region44
        $region43: #{transformer_forward.3} parent=15 // pred_region
          %p725 = scmp.lt.s32.totalorder %s45, 1
          %s726 = scalar_select %p725, %s45, 1
          %s727 = scalar_lea.vmem %s6, %s726
        $region44: #{transformer_forward.3} parent=15 // pred_fallthru
          _
        // Predicated region
        $region45: #{transformer_forward.3} parent=15 // pred_check
          %p728 = pneg %p251
        $region46: #{transformer_forward.3} parent=15 // pred_check_branch
          %730 = sbr.rel (%p728) target = $region48
        $region47: #{transformer_forward.3} parent=15 // pred_region
          %p731 = scmp.lt.s32.totalorder %s45, 1
          %s732 = scalar_select %p731, %s45, 1
          %s733 = scalar_lea.vmem %s7, %s732
        $region48: #{transformer_forward.3} parent=15 // pred_fallthru
          _
        // Predicated region
        $region49: #{transformer_forward.3} parent=15 // pred_check
          %p734 = pneg %p277
        $region50: #{transformer_forward.3} parent=15 // pred_check_branch
          %736 = sbr.rel (%p734) target = $region52
        $region51: #{transformer_forward.3} parent=15 // pred_region
          %s737 = sand.u32 %s37, 1
          %s738 = scalar_lea.sflag [#allocation7], %s737
          %s739 = sand.u32 %s267, 1
          %s740 = smul.addr %s739, 64
          %s741 = scalar_lea.vmem [#allocation6], %s740
          %s743 = ssub.s32 1024, 1024
          %744 = vsyncadd %s738, %s743
          %s745 = smul.addr %s45, 16
          %s746 = smul.addr %s745, 64
          %s747 = scalar_lea.hbm %s8, %s746
          %s748 = sshll.u32 %s741, 4
          %s749 = int_to_ptr.vmem [resolvable:$true] %s748
          %754 = dma.hbm_to_vmem [thread:$0]  %s747, 1024, %s749, %s738, 64, 64, 4
        $region52: #{transformer_forward.3} parent=15 // pred_fallthru
          _
        // Predicated region
        $region53: #{transformer_forward.3} parent=15 // pred_check
          %p755 = pneg %p303
        $region54: #{transformer_forward.3} parent=15 // pred_check_branch
          %757 = sbr.rel (%p755) target = $region56
        $region55: #{transformer_forward.3} parent=15 // pred_region
          %p758 = scmp.lt.s32.totalorder %s45, 1
          %s759 = scalar_select %p758, %s45, 1
          %s760 = scalar_lea.vmem %s9, %s759
        $region56: #{transformer_forward.3} parent=15 // pred_fallthru
          _
        // Predicated region
        $region57: #{transformer_forward.3} parent=15 // pred_check
          %p761 = pneg %p329
        $region58: #{transformer_forward.3} parent=15 // pred_check_branch
          %763 = sbr.rel (%p761) target = $region60
        $region59: #{transformer_forward.3} parent=15 // pred_region
          %p764 = scmp.lt.s32.totalorder %s45, 1
          %s765 = scalar_select %p764, %s45, 1
          %s766 = smul.addr %s765, 32
          %s767 = smul.addr %s766, 4
          %s768 = scalar_lea.vmem %s10, %s767
        $region60: #{transformer_forward.3} parent=15 // pred_fallthru
          _
        // Predicated region
        $region61: #{transformer_forward.3} parent=15 // pred_check
          %p769 = pneg %p355
        $region62: #{transformer_forward.3} parent=15 // pred_check_branch
          %771 = sbr.rel (%p769) target = $region64
        $region63: #{transformer_forward.3} parent=15 // pred_region
          %p772 = scmp.lt.s32.totalorder %s45, 1
          %s773 = scalar_select %p772, %s45, 1
          %s774 = smul.addr %s773, 2
          %s775 = scalar_lea.vmem %s11, %s774
        $region64: #{transformer_forward.3} parent=15 // pred_fallthru
          _
        // Predicated region
        $region65: #{transformer_forward.3} parent=15 // pred_check
          %p776 = pneg %p381
        $region66: #{transformer_forward.3} parent=15 // pred_check_branch
          %778 = sbr.rel (%p776) target = $region68
        $region67: #{transformer_forward.3} parent=15 // pred_region
          %s779 = sand.u32 %s37, 1
          %s780 = scalar_lea.sflag [#allocation7], %s779
          %s781 = sand.u32 %s371, 1
          %s782 = smul.addr %s781, 64
          %s783 = scalar_lea.vmem [#allocation8], %s782
          %s785 = ssub.s32 1024, 1024
          %786 = vsyncadd %s780, %s785
          %s787 = smul.addr %s45, 16
          %s788 = smul.addr %s787, 64
          %s789 = scalar_lea.hbm %s12, %s788
          %s790 = sshll.u32 %s783, 4
          %s791 = int_to_ptr.vmem [resolvable:$true] %s790
          %796 = dma.hbm_to_vmem [thread:$0]  %s789, 1024, %s791, %s780, 64, 64, 4
        $region68: #{transformer_forward.3} parent=15 // pred_fallthru
          _
        // Predicated region
        $region69: #{transformer_forward.3} parent=15 // pred_check
          %p797 = pneg %p407
        $region70: #{transformer_forward.3} parent=15 // pred_check_branch
          %799 = sbr.rel (%p797) target = $region72
        $region71: #{transformer_forward.3} parent=15 // pred_region
          %p800 = scmp.lt.s32.totalorder %s45, 1
          %s801 = scalar_select %p800, %s45, 1
          %s802 = scalar_lea.vmem %s13, %s801
        $region72: #{transformer_forward.3} parent=15 // pred_fallthru
          _
        // Predicated region
        $region73: #{transformer_forward.3} parent=15 // pred_check
          %p803 = pneg %p433
        $region74: #{transformer_forward.3} parent=15 // pred_check_branch
          %805 = sbr.rel (%p803) target = $region76
        $region75: #{transformer_forward.3} parent=15 // pred_region
          %p806 = scmp.lt.s32.totalorder %s45, 1
          %s807 = scalar_select %p806, %s45, 1
          %s808 = scalar_lea.vmem %s14, %s807
        $region76: #{transformer_forward.3} parent=15 // pred_fallthru
          _
        // Predicated region
        $region77: #{transformer_forward.3} parent=15 // pred_check
          %p809 = pneg %p459
        $region78: #{transformer_forward.3} parent=15 // pred_check_branch
          %811 = sbr.rel (%p809) target = $region80
        $region79: #{transformer_forward.3} parent=15 // pred_region
          %p812 = scmp.lt.s32.totalorder %s45, 1
          %s813 = scalar_select %p812, %s45, 1
          %s814 = scalar_lea.vmem %s15, %s813
        $region80: #{transformer_forward.3} parent=15 // pred_fallthru
          _
        // Predicated region
        $region81: #{transformer_forward.3} parent=15 // pred_check
          %p815 = pneg %p485
        $region82: #{transformer_forward.3} parent=15 // pred_check_branch
          %817 = sbr.rel (%p815) target = $region84
        $region83: #{transformer_forward.3} parent=15 // pred_region
          %p818 = scmp.lt.s32.totalorder %s45, 1
          %s819 = scalar_select %p818, %s45, 1
          %s820 = smul.addr %s819, 32
          %s821 = smul.addr %s820, 4
          %s822 = scalar_lea.vmem %s16, %s821
        $region84: #{transformer_forward.3} parent=15 // pred_fallthru
          _
        // Predicated region
        $region85: #{transformer_forward.3} parent=15 // pred_check
          %p823 = pneg %p511
        $region86: #{transformer_forward.3} parent=15 // pred_check_branch
          %825 = sbr.rel (%p823) target = $region88
        $region87: #{transformer_forward.3} parent=15 // pred_region
          %p826 = scmp.lt.s32.totalorder %s45, 1
          %s827 = scalar_select %p826, %s45, 1
          %s828 = smul.addr %s827, 2
          %s829 = scalar_lea.vmem %s17, %s828
        $region88: #{transformer_forward.3} parent=15 // pred_fallthru
          _
        // Predicated region
        $region89: #{transformer_forward.3} parent=15 // pred_check
          %p830 = pneg %p537
        $region90: #{transformer_forward.3} parent=15 // pred_check_branch
          %832 = sbr.rel (%p830) target = $region92
        $region91: #{transformer_forward.3} parent=15 // pred_region
          %p833 = scmp.lt.s32.totalorder %s45, 1
          %s834 = scalar_select %p833, %s45, 1
          %s835 = smul.addr %s834, 32
          %s836 = smul.addr %s835, 4
          %s837 = scalar_lea.vmem %s18, %s836
        $region92: #{transformer_forward.3} parent=15 // pred_fallthru
          _
        // Predicated region
        $region93: #{transformer_forward.3} parent=15 // pred_check
          %p838 = pneg %p563
        $region94: #{transformer_forward.3} parent=15 // pred_check_branch
          %840 = sbr.rel (%p838) target = $region96
        $region95: #{transformer_forward.3} parent=15 // pred_region
          %p841 = scmp.lt.s32.totalorder %s45, 1
          %s842 = scalar_select %p841, %s45, 1
          %s843 = scalar_lea.vmem %s19, %s842
        $region96: #{transformer_forward.3} parent=15 // pred_fallthru
          _
        // Predicated region
        $region97: #{transformer_forward.3} parent=15 // pred_check
          %p844 = pneg %p589
        $region98: #{transformer_forward.3} parent=15 // pred_check_branch
          %846 = sbr.rel (%p844) target = $region100
        $region99: #{transformer_forward.3} parent=15 // pred_region
          %p847 = scmp.lt.s32.totalorder %s45, 1
          %s848 = scalar_select %p847, %s45, 1
          %s849 = scalar_lea.vmem %s20, %s848
        $region100: #{transformer_forward.3} parent=15 // pred_fallthru
          _
        // Predicated region
        $region101: #{transformer_forward.3} parent=15 // pred_check
          %p850 = pneg %p615
        $region102: #{transformer_forward.3} parent=15 // pred_check_branch
          %852 = sbr.rel (%p850) target = $region104
        $region103: #{transformer_forward.3} parent=15 // pred_region
          %p853 = scmp.lt.s32.totalorder %s45, 1
          %s854 = scalar_select %p853, %s45, 1
          %s855 = scalar_lea.vmem %s21, %s854
        $region104: #{transformer_forward.3} parent=15 // pred_fallthru
          _
      $region16: #{transformer_forward.3} parent=5 // pred_fallthru
        _
      %p856 = scmp.le.s32.totalorder 1, %s37
      %p857 = scmp.lt.s32.totalorder %s37, 5
      %p858 = pnand %p856, %p857
      %p859 = pneg %p858
      // Predicated region
      $region105: #{transformer_forward.3} parent=5 // pred_check
        _
      $region106: #{transformer_forward.3} parent=5 // pred_check_branch
        %861 = sbr.rel (%p858) target = $region108
      $region107: #{transformer_forward.3} parent=5 // pred_region
        %s862 = ssub.s32 %s37, 1
        %s863 = sand.u32 %s166, 1
        %s864 = scalar_lea.sflag [#allocation4], %s863
        %s865 = sand.u32 %s166, 1
        %s866 = smul.addr %s865, 64
        %s867 = scalar_lea.vmem [#allocation3], %s866
        // Predicated region
        $region109: #{transformer_forward.3} parent=107 // pred_check
          %p868 = pneg %p179
        $region110: #{transformer_forward.3} parent=107 // pred_check_branch
          %870 = sbr.rel (%p868) target = $region112
        $region111: #{transformer_forward.3} parent=107 // pred_region
          %871 = dma.done %s864, 1024
        $region112: #{transformer_forward.3} parent=107 // pred_fallthru
          _
        %s872 = sand.u32 %s42, 1
        %s873 = scalar_lea.sflag [#allocation7], %s872
        %s874 = sand.u32 %s270, 1
        %s875 = smul.addr %s874, 64
        %s876 = scalar_lea.vmem [#allocation6], %s875
        // Predicated region
        $region113: #{transformer_forward.3} parent=107 // pred_check
          %p877 = pneg %p283
        $region114: #{transformer_forward.3} parent=107 // pred_check_branch
          %879 = sbr.rel (%p877) target = $region116
        $region115: #{transformer_forward.3} parent=107 // pred_region
          %880 = dma.done %s873, 1024
        $region116: #{transformer_forward.3} parent=107 // pred_fallthru
          _
        %s881 = sand.u32 %s42, 1
        %s882 = scalar_lea.sflag [#allocation7], %s881
        %s883 = sand.u32 %s374, 1
        %s884 = smul.addr %s883, 64
        %s885 = scalar_lea.vmem [#allocation8], %s884
        // Predicated region
        $region117: #{transformer_forward.3} parent=107 // pred_check
          %p886 = pneg %p387
        $region118: #{transformer_forward.3} parent=107 // pred_check_branch
          %888 = sbr.rel (%p886) target = $region120
        $region119: #{transformer_forward.3} parent=107 // pred_region
          %889 = dma.done %s882, 1024
        $region120: #{transformer_forward.3} parent=107 // pred_fallthru
          _
        %p890 = scmp.lt.s32.totalorder %s46, 1
        %s891 = scalar_select %p890, %s46, 1
        %s892 = smul.addr %s891, 8
        %s893 = scalar_lea.vmem %s0, %s892
        %p894 = pneg %p75
        %p895 = pneg %p72
        %p896 = scmp.lt.s32.totalorder %s46, 1
        %s897 = scalar_select %p896, %s46, 1
        %s898 = smul.addr %s897, 8
        %s899 = scalar_lea.vmem %s1, %s898
        %p900 = pneg %p101
        %p901 = pneg %p98
        %p902 = scmp.lt.s32.totalorder %s47, 1
        %s903 = scalar_select %p902, %s47, 1
        %s904 = smul.addr %s903, 48
        %s905 = smul.addr %s904, 4
        %s906 = scalar_lea.vmem %s2, %s905
        %p907 = pneg %p127
        %p908 = pneg %p124
        %p909 = scmp.lt.s32.totalorder %s47, 1
        %s910 = scalar_select %p909, %s47, 1
        %s911 = smul.addr %s910, 3
        %s912 = scalar_lea.vmem %s3, %s911
        %p913 = pneg %p153
        %p914 = pneg %p150
        %s915 = sand.u32 %s166, 1
        %s916 = scalar_lea.sflag [#allocation4], %s915
        %s917 = sand.u32 %s166, 1
        %s918 = smul.addr %s917, 64
        %s919 = scalar_lea.vmem [#allocation3], %s918
        %p920 = pneg %p179
        %p921 = pneg %p176
        %p922 = scmp.lt.s32.totalorder %s47, 1
        %s923 = scalar_select %p922, %s47, 1
        %s924 = scalar_lea.vmem %s5, %s923
        %p925 = pneg %p205
        %p926 = pneg %p202
        %p927 = scmp.lt.s32.totalorder %s47, 1
        %s928 = scalar_select %p927, %s47, 1
        %s929 = scalar_lea.vmem %s6, %s928
        %p930 = pneg %p231
        %p931 = pneg %p228
        %p932 = scmp.lt.s32.totalorder %s47, 1
        %s933 = scalar_select %p932, %s47, 1
        %s934 = scalar_lea.vmem %s7, %s933
        %p935 = pneg %p257
        %p936 = pneg %p254
        %s937 = sand.u32 %s42, 1
        %s938 = scalar_lea.sflag [#allocation7], %s937
        %s939 = sand.u32 %s270, 1
        %s940 = smul.addr %s939, 64
        %s941 = scalar_lea.vmem [#allocation6], %s940
        %p942 = pneg %p283
        %p943 = pneg %p280
        %p944 = scmp.lt.s32.totalorder %s47, 1
        %s945 = scalar_select %p944, %s47, 1
        %s946 = scalar_lea.vmem %s9, %s945
        %p947 = pneg %p309
        %p948 = pneg %p306
        %p949 = scmp.lt.s32.totalorder %s47, 1
        %s950 = scalar_select %p949, %s47, 1
        %s951 = smul.addr %s950, 32
        %s952 = smul.addr %s951, 4
        %s953 = scalar_lea.vmem %s10, %s952
        %p954 = pneg %p335
        %p955 = pneg %p332
        %p956 = scmp.lt.s32.totalorder %s47, 1
        %s957 = scalar_select %p956, %s47, 1
        %s958 = smul.addr %s957, 2
        %s959 = scalar_lea.vmem %s11, %s958
        %p960 = pneg %p361
        %p961 = pneg %p358
        %s962 = sand.u32 %s42, 1
        %s963 = scalar_lea.sflag [#allocation7], %s962
        %s964 = sand.u32 %s374, 1
        %s965 = smul.addr %s964, 64
        %s966 = scalar_lea.vmem [#allocation8], %s965
        %p967 = pneg %p387
        %p968 = pneg %p384
        %p969 = scmp.lt.s32.totalorder %s47, 1
        %s970 = scalar_select %p969, %s47, 1
        %s971 = scalar_lea.vmem %s13, %s970
        %p972 = pneg %p413
        %p973 = pneg %p410
        %p974 = scmp.lt.s32.totalorder %s47, 1
        %s975 = scalar_select %p974, %s47, 1
        %s976 = scalar_lea.vmem %s14, %s975
        %p977 = pneg %p439
        %p978 = pneg %p436
        %p979 = scmp.lt.s32.totalorder %s47, 1
        %s980 = scalar_select %p979, %s47, 1
        %s981 = scalar_lea.vmem %s15, %s980
        %p982 = pneg %p465
        %p983 = pneg %p462
        %p984 = scmp.lt.s32.totalorder %s47, 1
        %s985 = scalar_select %p984, %s47, 1
        %s986 = smul.addr %s985, 32
        %s987 = smul.addr %s986, 4
        %s988 = scalar_lea.vmem %s16, %s987
        %p989 = pneg %p491
        %p990 = pneg %p488
        %p991 = scmp.lt.s32.totalorder %s47, 1
        %s992 = scalar_select %p991, %s47, 1
        %s993 = smul.addr %s992, 2
        %s994 = scalar_lea.vmem %s17, %s993
        %p995 = pneg %p517
        %p996 = pneg %p514
        %p997 = scmp.lt.s32.totalorder %s47, 1
        %s998 = scalar_select %p997, %s47, 1
        %s999 = smul.addr %s998, 32
        %s1000 = smul.addr %s999, 4
        %s1001 = scalar_lea.vmem %s18, %s1000
        %p1002 = pneg %p543
        %p1003 = pneg %p540
        %p1004 = scmp.lt.s32.totalorder %s47, 1
        %s1005 = scalar_select %p1004, %s47, 1
        %s1006 = scalar_lea.vmem %s19, %s1005
        %p1007 = pneg %p569
        %p1008 = pneg %p566
        %p1009 = scmp.lt.s32.totalorder %s47, 1
        %s1010 = scalar_select %p1009, %s47, 1
        %s1011 = scalar_lea.vmem %s20, %s1010
        %p1012 = pneg %p595
        %p1013 = pneg %p592
        %p1014 = scmp.lt.s32.totalorder %s47, 1
        %s1015 = scalar_select %p1014, %s47, 1
        %s1016 = scalar_lea.vmem %s21, %s1015
        %p1017 = pneg %p621
        %p1018 = pneg %p618
        %p1019 = pneg %p647
        %p1020 = pneg %p644
        %s1021 = sand.u32 %s634, 1
        %s1022 = scalar_lea.sflag [#allocation5], %s1021
        %s1023 = sand.u32 %s634, 1
        %s1024 = smul.addr %s1023, 8
        %s1025 = scalar_lea.vmem [#allocation9], %s1024
        %p1026 = scmp.lt.s32.totalorder %s46, 1
        %s1027 = scalar_select %p1026, %s46, 1
        %s1028 = smul.addr %s1027, 8
        %s1029 = scalar_lea.vmem %s0, %s1028
        %p1030 = scmp.lt.s32.totalorder %s46, 1
        %s1031 = scalar_select %p1030, %s46, 1
        %s1032 = smul.addr %s1031, 8
        %s1033 = scalar_lea.vmem %s1, %s1032
        %p1034 = scmp.lt.s32.totalorder %s47, 1
        %s1035 = scalar_select %p1034, %s47, 1
        %s1036 = smul.addr %s1035, 48
        %s1037 = smul.addr %s1036, 4
        %s1038 = scalar_lea.vmem %s2, %s1037
        %p1039 = scmp.lt.s32.totalorder %s47, 1
        %s1040 = scalar_select %p1039, %s47, 1
        %s1041 = smul.addr %s1040, 3
        %s1042 = scalar_lea.vmem %s3, %s1041
        %p1043 = scmp.lt.s32.totalorder %s47, 1
        %s1044 = scalar_select %p1043, %s47, 1
        %s1045 = scalar_lea.vmem %s5, %s1044
        %p1046 = scmp.lt.s32.totalorder %s47, 1
        %s1047 = scalar_select %p1046, %s47, 1
        %s1048 = scalar_lea.vmem %s6, %s1047
        %p1049 = scmp.lt.s32.totalorder %s47, 1
        %s1050 = scalar_select %p1049, %s47, 1
        %s1051 = scalar_lea.vmem %s7, %s1050
        %p1052 = scmp.lt.s32.totalorder %s47, 1
        %s1053 = scalar_select %p1052, %s47, 1
        %s1054 = scalar_lea.vmem %s9, %s1053
        %p1055 = scmp.lt.s32.totalorder %s47, 1
        %s1056 = scalar_select %p1055, %s47, 1
        %s1057 = smul.addr %s1056, 32
        %s1058 = smul.addr %s1057, 4
        %s1059 = scalar_lea.vmem %s10, %s1058
        %p1060 = scmp.lt.s32.totalorder %s47, 1
        %s1061 = scalar_select %p1060, %s47, 1
        %s1062 = smul.addr %s1061, 2
        %s1063 = scalar_lea.vmem %s11, %s1062
        %p1064 = scmp.lt.s32.totalorder %s47, 1
        %s1065 = scalar_select %p1064, %s47, 1
        %s1066 = scalar_lea.vmem %s13, %s1065
        %p1067 = scmp.lt.s32.totalorder %s47, 1
        %s1068 = scalar_select %p1067, %s47, 1
        %s1069 = scalar_lea.vmem %s14, %s1068
        %p1070 = scmp.lt.s32.totalorder %s47, 1
        %s1071 = scalar_select %p1070, %s47, 1
        %s1072 = scalar_lea.vmem %s15, %s1071
        %p1073 = scmp.lt.s32.totalorder %s47, 1
        %s1074 = scalar_select %p1073, %s47, 1
        %s1075 = smul.addr %s1074, 32
        %s1076 = smul.addr %s1075, 4
        %s1077 = scalar_lea.vmem %s16, %s1076
        %p1078 = scmp.lt.s32.totalorder %s47, 1
        %s1079 = scalar_select %p1078, %s47, 1
        %s1080 = smul.addr %s1079, 2
        %s1081 = scalar_lea.vmem %s17, %s1080
        %p1082 = scmp.lt.s32.totalorder %s47, 1
        %s1083 = scalar_select %p1082, %s47, 1
        %s1084 = smul.addr %s1083, 32
        %s1085 = smul.addr %s1084, 4
        %s1086 = scalar_lea.vmem %s18, %s1085
        %p1087 = scmp.lt.s32.totalorder %s47, 1
        %s1088 = scalar_select %p1087, %s47, 1
        %s1089 = scalar_lea.vmem %s19, %s1088
        %p1090 = scmp.lt.s32.totalorder %s47, 1
        %s1091 = scalar_select %p1090, %s47, 1
        %s1092 = scalar_lea.vmem %s20, %s1091
        %p1093 = scmp.lt.s32.totalorder %s47, 1
        %s1094 = scalar_select %p1093, %s47, 1
        %s1095 = scalar_lea.vmem %s21, %s1094
        %p1097 = scmp.eq.s32.totalorder %s47, 0
        // Predicated region
        $region121: #{transformer_forward.3} parent=107 // pred_check
          %p1098 = pneg %p1097
        $region122: #{transformer_forward.3} parent=107 // pred_check_branch
          %1100 = sbr.rel (%p1098) target = $region124
        $region123: #{transformer_forward.3} parent=107 // pred_region
          %v1101 = vld [vmem:[%s1029] sm:$0xff]
          %1102 = vst [vmem:[#allocation2] sm:$0xff] %v1101
        $region124: #{transformer_forward.3} parent=107 // pred_fallthru
          _
        %v1103 = vld [vmem:[%s1033] sm:$0xff]
        %v1104 = vpack.c.bf16 %v1103, %v1103
        %v1105 = vld [vmem:[#allocation2] sm:$0xff]
        %v1106 = vld [vmem:[%s1038] sm:$0xff]
        %v1107 = vld [vmem:[%s1038 + $0x8] sm:$0xf]
        %v1108 = vld [vmem:[%s1038 + $0xc] sm:$0xff]
        %v1109 = vld [vmem:[%s1038 + $0x14] sm:$0xf]
        %v1110 = vld [vmem:[%s1038 + $0x18] sm:$0xff]
        %v1111 = vld [vmem:[%s1038 + $0x20] sm:$0xf]
        %v1112 = vld [vmem:[%s1038 + $0x24] sm:$0xff]
        %v1113 = vld [vmem:[%s1038 + $0x2c] sm:$0xf]
        %v1114 = vld [vmem:[%s1038 + $0x30] sm:$0xff]
        %v1115 = vld [vmem:[%s1038 + $0x38] sm:$0xf]
        %v1116 = vld [vmem:[%s1038 + $0x3c] sm:$0xff]
        %v1117 = vld [vmem:[%s1038 + $0x44] sm:$0xf]
        %v1118 = vld [vmem:[%s1038 + $0x48] sm:$0xff]
        %v1119 = vld [vmem:[%s1038 + $0x50] sm:$0xf]
        %v1120 = vld [vmem:[%s1038 + $0x54] sm:$0xff]
        %v1121 = vld [vmem:[%s1038 + $0x5c] sm:$0xf]
        %v1122 = vld [vmem:[%s1038 + $0x60] sm:$0xff]
        %v1123 = vld [vmem:[%s1038 + $0x68] sm:$0xf]
        %v1124 = vld [vmem:[%s1038 + $0x6c] sm:$0xff]
        %v1125 = vld [vmem:[%s1038 + $0x74] sm:$0xf]
        %v1126 = vld [vmem:[%s1038 + $0x78] sm:$0xff]
        %v1127 = vld [vmem:[%s1038 + $0x80] sm:$0xf]
        %v1128 = vld [vmem:[%s1038 + $0x84] sm:$0xff]
        %v1129 = vld [vmem:[%s1038 + $0x8c] sm:$0xf]
        %v1130 = vld [vmem:[%s1038 + $0x90] sm:$0xff]
        %v1131 = vld [vmem:[%s1038 + $0x98] sm:$0xf]
        %v1132 = vld [vmem:[%s1038 + $0x9c] sm:$0xff]
        %v1133 = vld [vmem:[%s1038 + $0xa4] sm:$0xf]
        %v1134 = vld [vmem:[%s1038 + $0xa8] sm:$0xff]
        %v1135 = vld [vmem:[%s1038 + $0xb0] sm:$0xf]
        %v1136 = vld [vmem:[%s1038 + $0xb4] sm:$0xff]
        %v1137 = vld [vmem:[%s1038 + $0xbc] sm:$0xf]
        %v1138 = vld [vmem:[%s1042] sm:$0x7]
        %v1139 = vld [vmem:[%s867] sm:$0xf]
        %v1140 = vld [vmem:[%s867 + $0x4] sm:$0xf]
        %v1141 = vld [vmem:[%s867 + $0x8] sm:$0xf]
        %v1142 = vld [vmem:[%s867 + $0xc] sm:$0xf]
        %v1143 = vld [vmem:[%s867 + $0x10] sm:$0xf]
        %v1144 = vld [vmem:[%s867 + $0x14] sm:$0xf]
        %v1145 = vld [vmem:[%s867 + $0x18] sm:$0xf]
        %v1146 = vld [vmem:[%s867 + $0x1c] sm:$0xf]
        %v1147 = vld [vmem:[%s867 + $0x20] sm:$0xf]
        %v1148 = vld [vmem:[%s867 + $0x24] sm:$0xf]
        %v1149 = vld [vmem:[%s867 + $0x28] sm:$0xf]
        %v1150 = vld [vmem:[%s867 + $0x2c] sm:$0xf]
        %v1151 = vld [vmem:[%s867 + $0x30] sm:$0xf]
        %v1152 = vld [vmem:[%s867 + $0x34] sm:$0xf]
        %v1153 = vld [vmem:[%s867 + $0x38] sm:$0xf]
        %v1154 = vld [vmem:[%s867 + $0x3c] sm:$0xf]
        %v1155 = vld [vmem:[%s1045] sm:$0x1]
        %v1156 = vpack.c.bf16 %v1105, %v1105
        %v1158 = vlaneseq
        %v1159 = vshrl.u32 %v1158, 7
        %v1160 = vsub.s32 0, %v1159
        %v1161 = vrot.slane %v1138, %v1160
        %v1162 = vlaneseq
        %v1163 = vshrl.u32 %v1162, 7
        %v1164 = vsub.s32 1, %v1163
        %v1165 = vrot.slane %v1138, %v1164
        %v1166 = vlaneseq
        %v1167 = vshrl.u32 %v1166, 7
        %v1168 = vsub.s32 2, %v1167
        %v1169 = vrot.slane %v1138, %v1168
        %v1205 = vunpack.c.l.b16 %v1106
        %v1206 = vunpack.c.h.b16 %v1106
        %v1207 = vunpack.c.l.b16 %v1107
        %v1208 = vunpack.c.l.b16 %v1108
        %v1209 = vunpack.c.h.b16 %v1108
        %v1210 = vunpack.c.l.b16 %v1109
        %v1211 = vunpack.c.l.b16 %v1110
        %v1212 = vunpack.c.h.b16 %v1110
        %v1213 = vunpack.c.l.b16 %v1111
        %v1214 = vunpack.c.l.b16 %v1112
        %v1215 = vunpack.c.h.b16 %v1112
        %v1216 = vunpack.c.l.b16 %v1113
        %v1217 = vunpack.c.l.b16 %v1114
        %v1218 = vunpack.c.h.b16 %v1114
        %v1219 = vunpack.c.l.b16 %v1115
        %v1220 = vunpack.c.l.b16 %v1116
        %v1221 = vunpack.c.h.b16 %v1116
        %v1222 = vunpack.c.l.b16 %v1117
        %v1223 = vunpack.c.l.b16 %v1118
        %v1224 = vunpack.c.h.b16 %v1118
        %v1225 = vunpack.c.l.b16 %v1119
        %v1226 = vunpack.c.l.b16 %v1120
        %v1227 = vunpack.c.h.b16 %v1120
        %v1228 = vunpack.c.l.b16 %v1121
        %v1229 = vunpack.c.l.b16 %v1122
        %v1230 = vunpack.c.h.b16 %v1122
        %v1231 = vunpack.c.l.b16 %v1123
        %v1232 = vunpack.c.l.b16 %v1124
        %v1233 = vunpack.c.h.b16 %v1124
        %v1234 = vunpack.c.l.b16 %v1125
        %v1235 = vunpack.c.l.b16 %v1126
        %v1236 = vunpack.c.h.b16 %v1126
        %v1237 = vunpack.c.l.b16 %v1127
        %v1238 = vunpack.c.l.b16 %v1128
        %v1239 = vunpack.c.h.b16 %v1128
        %v1240 = vunpack.c.l.b16 %v1129
        %v1241 = vunpack.c.l.b16 %v1130
        %v1242 = vunpack.c.h.b16 %v1130
        %v1243 = vunpack.c.l.b16 %v1131
        %v1244 = vunpack.c.l.b16 %v1132
        %v1245 = vunpack.c.h.b16 %v1132
        %v1246 = vunpack.c.l.b16 %v1133
        %v1247 = vunpack.c.l.b16 %v1134
        %v1248 = vunpack.c.h.b16 %v1134
        %v1249 = vunpack.c.l.b16 %v1135
        %v1250 = vunpack.c.l.b16 %v1136
        %v1251 = vunpack.c.h.b16 %v1136
        %v1252 = vunpack.c.l.b16 %v1137
        %v1253 = vpack.c.b16 %v1208, %v1205
        %v1254 = vpack.c.b16 %v1209, %v1206
        %v1255 = vpack.c.b16 %v1210, %v1207
        %v1256 = vpack.c.b16 %v1214, %v1211
        %v1257 = vpack.c.b16 %v1215, %v1212
        %v1258 = vpack.c.b16 %v1216, %v1213
        %v1259 = vpack.c.b16 %v1220, %v1217
        %v1260 = vpack.c.b16 %v1221, %v1218
        %v1261 = vpack.c.b16 %v1222, %v1219
        %v1262 = vpack.c.b16 %v1226, %v1223
        %v1263 = vpack.c.b16 %v1227, %v1224
        %v1264 = vpack.c.b16 %v1228, %v1225
        %v1265 = vpack.c.b16 %v1232, %v1229
        %v1266 = vpack.c.b16 %v1233, %v1230
        %v1267 = vpack.c.b16 %v1234, %v1231
        %v1268 = vpack.c.b16 %v1238, %v1235
        %v1269 = vpack.c.b16 %v1239, %v1236
        %v1270 = vpack.c.b16 %v1240, %v1237
        %v1271 = vpack.c.b16 %v1244, %v1241
        %v1272 = vpack.c.b16 %v1245, %v1242
        %v1273 = vpack.c.b16 %v1246, %v1243
        %v1274 = vpack.c.b16 %v1250, %v1247
        %v1275 = vpack.c.b16 %v1251, %v1248
        %v1276 = vpack.c.b16 %v1252, %v1249
        %1301 = vmatprep.subr.bf16.mxu0 %v1254
        %1302 = vmatpush1.bf16.msra.mxu0 %v1253
        %1303 = vmatprep.subr.bf16.mxu0 %v1257
        %1304 = vmatpush1.bf16.msra.mxu0 %v1256
        %1305 = vmatprep.subr.bf16.mxu0 %v1260
        %1306 = vmatpush1.bf16.msra.mxu0 %v1259
        %1307 = vmatprep.subr.bf16.mxu0 %v1263
        %1308 = vmatpush1.bf16.msra.mxu0 %v1262
        %1309 = vmatprep.subr.bf16.mxu0 %v1266
        %1310 = vmatpush1.bf16.msra.mxu0 %v1265
        %1311 = vmatprep.subr.bf16.mxu0 %v1269
        %1312 = vmatpush1.bf16.msra.mxu0 %v1268
        %1313 = vmatprep.subr.bf16.mxu0 %v1272
        %1314 = vmatpush1.bf16.msra.mxu0 %v1271
        %1315 = vmatprep.subr.bf16.mxu0 %v1275
        %1316 = vmatpush1.bf16.msra.mxu0 %v1274
        %1317 = vmatprep.subr.bf16.mxu0 0
        %1318 = vmatpush1.bf16.msra.mxu0 0
        %1319 = vmatprep.subr.bf16.mxu0 0
        %1320 = vmatpush1.bf16.msra.mxu0 0
        %1321 = vmatprep.subr.bf16.mxu0 0
        %1322 = vmatpush1.bf16.msra.mxu0 0
        %1323 = vmatprep.subr.bf16.mxu0 0
        %1324 = vmatpush1.bf16.msra.mxu0 0
        %1325 = vmatprep.subr.bf16.mxu0 0
        %1326 = vmatpush1.bf16.msra.mxu0 0
        %1327 = vmatprep.subr.bf16.mxu0 0
        %1328 = vmatpush1.bf16.msra.mxu0 0
        %1329 = vmatprep.subr.bf16.mxu0 0
        %1330 = vmatpush1.bf16.msra.mxu0 0
        %1331 = vmatprep.subr.bf16.mxu0 0
        %1332 = vmatpush1.bf16.msra.mxu0 0
        %1333 = vmatprep.mubr.bf16.mxu0 0
        %1334 = vmatmul.mubr.bf16.gmra.mrb[0].mxu0 %v1156
        %v1335 = vpop.f32.mrb[0].mxu0
        %v1336 = vadd.f32 %v1161, %v1335
        %v1337 = vpop.f32.mrb[0].mxu0
        %v1338 = vadd.f32 %v1165, %v1337
        %v1339 = vpop.f32.mrb[0].mxu0
        %v1340 = vpop.f32.mrb[0].mxu0
        %1341 = vdwg.mxu0
        %1342 = vmatprep.subr.bf16.mxu0 0
        %1343 = vmatpush1.bf16.msra.mxu0 %v1255
        %1344 = vmatprep.subr.bf16.mxu0 0
        %1345 = vmatpush1.bf16.msra.mxu0 %v1258
        %1346 = vmatprep.subr.bf16.mxu0 0
        %1347 = vmatpush1.bf16.msra.mxu0 %v1261
        %1348 = vmatprep.subr.bf16.mxu0 0
        %1349 = vmatpush1.bf16.msra.mxu0 %v1264
        %1350 = vmatprep.subr.bf16.mxu0 0
        %1351 = vmatpush1.bf16.msra.mxu0 %v1267
        %1352 = vmatprep.subr.bf16.mxu0 0
        %1353 = vmatpush1.bf16.msra.mxu0 %v1270
        %1354 = vmatprep.subr.bf16.mxu0 0
        %1355 = vmatpush1.bf16.msra.mxu0 %v1273
        %1356 = vmatprep.subr.bf16.mxu0 0
        %1357 = vmatpush1.bf16.msra.mxu0 %v1276
        %1358 = vmatprep.subr.bf16.mxu0 0
        %1359 = vmatpush1.bf16.msra.mxu0 0
        %1360 = vmatprep.subr.bf16.mxu0 0
        %1361 = vmatpush1.bf16.msra.mxu0 0
        %1362 = vmatprep.subr.bf16.mxu0 0
        %1363 = vmatpush1.bf16.msra.mxu0 0
        %1364 = vmatprep.subr.bf16.mxu0 0
        %1365 = vmatpush1.bf16.msra.mxu0 0
        %1366 = vmatprep.subr.bf16.mxu0 0
        %1367 = vmatpush1.bf16.msra.mxu0 0
        %1368 = vmatprep.subr.bf16.mxu0 0
        %1369 = vmatpush1.bf16.msra.mxu0 0
        %1370 = vmatprep.subr.bf16.mxu0 0
        %1371 = vmatpush1.bf16.msra.mxu0 0
        %1372 = vmatprep.subr.bf16.mxu0 0
        %1373 = vmatpush1.bf16.msra.mxu0 0
        %1374 = vmatprep.mubr.bf16.mxu0 0
        %1375 = vmatmul.mubr.bf16.gmra.mrb[0].mxu0 %v1156
        %v1376 = vpop.f32.mrb[0].mxu0
        %v1377 = vadd.f32 %v1169, %v1376
        %v1378 = vpop.f32.mrb[0].mxu0
        %v1379 = vpop.f32.mrb[0].mxu0
        %v1380 = vpop.f32.mrb[0].mxu0
        %1381 = vdwg.mxu0
        %1382 = vxpose.xlu0.b32.start [1/16] %v1336, 128
        %1383 = vxpose.xlu0.b32.cont [2/16] 0.0, 128
        %1384 = vxpose.xlu0.b32.cont [3/16] 0.0, 128
        %1385 = vxpose.xlu0.b32.cont [4/16] 0.0, 128
        %1386 = vxpose.xlu0.b32.cont [5/16] 0.0, 128
        %1387 = vxpose.xlu0.b32.cont [6/16] 0.0, 128
        %1388 = vxpose.xlu0.b32.cont [7/16] 0.0, 128
        %1389 = vxpose.xlu0.b32.cont [8/16] 0.0, 128
        %1390 = vxpose.xlu0.b32.cont [9/16] 0.0, 128
        %1391 = vxpose.xlu0.b32.cont [10/16] 0.0, 128
        %1392 = vxpose.xlu0.b32.cont [11/16] 0.0, 128
        %1393 = vxpose.xlu0.b32.cont [12/16] 0.0, 128
        %1394 = vxpose.xlu0.b32.cont [13/16] 0.0, 128
        %1395 = vxpose.xlu0.b32.cont [14/16] 0.0, 128
        %1396 = vxpose.xlu0.b32.cont [15/16] 0.0, 128
        %1397 = vxpose.xlu0.b32.end [16/16] 0.0, 128
        %v1398 = vpop.trf.xlu0
        %v1399 = vpop.trf.xlu0
        %v1400 = vpop.trf.xlu0
        %v1401 = vpop.trf.xlu0
        %v1402 = vpop.trf.xlu0
        %v1403 = vpop.trf.xlu0
        %v1404 = vpop.trf.xlu0
        %v1405 = vpop.trf.xlu0
        %v1406 = vpop.trf.xlu0
        %v1407 = vpop.trf.xlu0
        %v1408 = vpop.trf.xlu0
        %v1409 = vpop.trf.xlu0
        %v1410 = vpop.trf.xlu0
        %v1411 = vpop.trf.xlu0
        %v1412 = vpop.trf.xlu0
        %v1413 = vpop.trf.xlu0
        %1414 = vxpose.xlu0.b32.start [1/16] %v1338, 128
        %1415 = vxpose.xlu0.b32.cont [2/16] 0.0, 128
        %1416 = vxpose.xlu0.b32.cont [3/16] 0.0, 128
        %1417 = vxpose.xlu0.b32.cont [4/16] 0.0, 128
        %1418 = vxpose.xlu0.b32.cont [5/16] 0.0, 128
        %1419 = vxpose.xlu0.b32.cont [6/16] 0.0, 128
        %1420 = vxpose.xlu0.b32.cont [7/16] 0.0, 128
        %1421 = vxpose.xlu0.b32.cont [8/16] 0.0, 128
        %1422 = vxpose.xlu0.b32.cont [9/16] 0.0, 128
        %1423 = vxpose.xlu0.b32.cont [10/16] 0.0, 128
        %1424 = vxpose.xlu0.b32.cont [11/16] 0.0, 128
        %1425 = vxpose.xlu0.b32.cont [12/16] 0.0, 128
        %1426 = vxpose.xlu0.b32.cont [13/16] 0.0, 128
        %1427 = vxpose.xlu0.b32.cont [14/16] 0.0, 128
        %1428 = vxpose.xlu0.b32.cont [15/16] 0.0, 128
        %1429 = vxpose.xlu0.b32.end [16/16] 0.0, 128
        %v1430 = vpop.trf.xlu0
        %v1431 = vpop.trf.xlu0
        %v1432 = vpop.trf.xlu0
        %v1433 = vpop.trf.xlu0
        %v1434 = vpop.trf.xlu0
        %v1435 = vpop.trf.xlu0
        %v1436 = vpop.trf.xlu0
        %v1437 = vpop.trf.xlu0
        %v1438 = vpop.trf.xlu0
        %v1439 = vpop.trf.xlu0
        %v1440 = vpop.trf.xlu0
        %v1441 = vpop.trf.xlu0
        %v1442 = vpop.trf.xlu0
        %v1443 = vpop.trf.xlu0
        %v1444 = vpop.trf.xlu0
        %v1445 = vpop.trf.xlu0
        %1446 = vxpose.xlu0.b32.start [1/16] %v1377, 128
        %1447 = vxpose.xlu0.b32.cont [2/16] 0.0, 128
        %1448 = vxpose.xlu0.b32.cont [3/16] 0.0, 128
        %1449 = vxpose.xlu0.b32.cont [4/16] 0.0, 128
        %1450 = vxpose.xlu0.b32.cont [5/16] 0.0, 128
        %1451 = vxpose.xlu0.b32.cont [6/16] 0.0, 128
        %1452 = vxpose.xlu0.b32.cont [7/16] 0.0, 128
        %1453 = vxpose.xlu0.b32.cont [8/16] 0.0, 128
        %1454 = vxpose.xlu0.b32.cont [9/16] 0.0, 128
        %1455 = vxpose.xlu0.b32.cont [10/16] 0.0, 128
        %1456 = vxpose.xlu0.b32.cont [11/16] 0.0, 128
        %1457 = vxpose.xlu0.b32.cont [12/16] 0.0, 128
        %1458 = vxpose.xlu0.b32.cont [13/16] 0.0, 128
        %1459 = vxpose.xlu0.b32.cont [14/16] 0.0, 128
        %1460 = vxpose.xlu0.b32.cont [15/16] 0.0, 128
        %1461 = vxpose.xlu0.b32.end [16/16] 0.0, 128
        %v1462 = vpop.trf.xlu0
        %v1463 = vpop.trf.xlu0
        %v1464 = vpop.trf.xlu0
        %v1465 = vpop.trf.xlu0
        %v1466 = vpop.trf.xlu0
        %v1467 = vpop.trf.xlu0
        %v1468 = vpop.trf.xlu0
        %v1469 = vpop.trf.xlu0
        %v1470 = vpop.trf.xlu0
        %v1471 = vpop.trf.xlu0
        %v1472 = vpop.trf.xlu0
        %v1473 = vpop.trf.xlu0
        %v1474 = vpop.trf.xlu0
        %v1475 = vpop.trf.xlu0
        %v1476 = vpop.trf.xlu0
        %v1477 = vpop.trf.xlu0
        %1478 = vxpose.xlu0.b32.start [1/16] %v1398, 128
        %1479 = vxpose.xlu0.b32.cont [2/16] %v1399, 128
        %1480 = vxpose.xlu0.b32.cont [3/16] %v1400, 128
        %1481 = vxpose.xlu0.b32.cont [4/16] %v1401, 128
        %1482 = vxpose.xlu0.b32.cont [5/16] 0.0, 128
        %1483 = vxpose.xlu0.b32.cont [6/16] 0.0, 128
        %1484 = vxpose.xlu0.b32.cont [7/16] 0.0, 128
        %1485 = vxpose.xlu0.b32.cont [8/16] 0.0, 128
        %1486 = vxpose.xlu0.b32.cont [9/16] 0.0, 128
        %1487 = vxpose.xlu0.b32.cont [10/16] 0.0, 128
        %1488 = vxpose.xlu0.b32.cont [11/16] 0.0, 128
        %1489 = vxpose.xlu0.b32.cont [12/16] 0.0, 128
        %1490 = vxpose.xlu0.b32.cont [13/16] 0.0, 128
        %1491 = vxpose.xlu0.b32.cont [14/16] 0.0, 128
        %1492 = vxpose.xlu0.b32.cont [15/16] 0.0, 128
        %1493 = vxpose.xlu0.b32.end [16/16] 0.0, 128
        %v1494 = vpop.trf.xlu0
        %v1495 = vpop.trf.xlu0
        %v1496 = vpop.trf.xlu0
        %v1497 = vpop.trf.xlu0
        %v1498 = vpop.trf.xlu0
        %v1499 = vpop.trf.xlu0
        %v1500 = vpop.trf.xlu0
        %v1501 = vpop.trf.xlu0
        %v1502 = vpop.trf.xlu0
        %v1503 = vpop.trf.xlu0
        %v1504 = vpop.trf.xlu0
        %v1505 = vpop.trf.xlu0
        %v1506 = vpop.trf.xlu0
        %v1507 = vpop.trf.xlu0
        %v1508 = vpop.trf.xlu0
        %v1509 = vpop.trf.xlu0
        %1510 = vxpose.xlu0.b32.start [1/16] %v1402, 128
        %1511 = vxpose.xlu0.b32.cont [2/16] %v1403, 128
        %1512 = vxpose.xlu0.b32.cont [3/16] %v1404, 128
        %1513 = vxpose.xlu0.b32.cont [4/16] %v1405, 128
        %1514 = vxpose.xlu0.b32.cont [5/16] 0.0, 128
        %1515 = vxpose.xlu0.b32.cont [6/16] 0.0, 128
        %1516 = vxpose.xlu0.b32.cont [7/16] 0.0, 128
        %1517 = vxpose.xlu0.b32.cont [8/16] 0.0, 128
        %1518 = vxpose.xlu0.b32.cont [9/16] 0.0, 128
        %1519 = vxpose.xlu0.b32.cont [10/16] 0.0, 128
        %1520 = vxpose.xlu0.b32.cont [11/16] 0.0, 128
        %1521 = vxpose.xlu0.b32.cont [12/16] 0.0, 128
        %1522 = vxpose.xlu0.b32.cont [13/16] 0.0, 128
        %1523 = vxpose.xlu0.b32.cont [14/16] 0.0, 128
        %1524 = vxpose.xlu0.b32.cont [15/16] 0.0, 128
        %1525 = vxpose.xlu0.b32.end [16/16] 0.0, 128
        %v1526 = vpop.trf.xlu0
        %v1527 = vpop.trf.xlu0
        %v1528 = vpop.trf.xlu0
        %v1529 = vpop.trf.xlu0
        %v1530 = vpop.trf.xlu0
        %v1531 = vpop.trf.xlu0
        %v1532 = vpop.trf.xlu0
        %v1533 = vpop.trf.xlu0
        %v1534 = vpop.trf.xlu0
        %v1535 = vpop.trf.xlu0
        %v1536 = vpop.trf.xlu0
        %v1537 = vpop.trf.xlu0
        %v1538 = vpop.trf.xlu0
        %v1539 = vpop.trf.xlu0
        %v1540 = vpop.trf.xlu0
        %v1541 = vpop.trf.xlu0
        %1542 = vxpose.xlu0.b32.start [1/16] %v1406, 128
        %1543 = vxpose.xlu0.b32.cont [2/16] %v1407, 128
        %1544 = vxpose.xlu0.b32.cont [3/16] %v1408, 128
        %1545 = vxpose.xlu0.b32.cont [4/16] %v1409, 128
        %1546 = vxpose.xlu0.b32.cont [5/16] 0.0, 128
        %1547 = vxpose.xlu0.b32.cont [6/16] 0.0, 128
        %1548 = vxpose.xlu0.b32.cont [7/16] 0.0, 128
        %1549 = vxpose.xlu0.b32.cont [8/16] 0.0, 128
        %1550 = vxpose.xlu0.b32.cont [9/16] 0.0, 128
        %1551 = vxpose.xlu0.b32.cont [10/16] 0.0, 128
        %1552 = vxpose.xlu0.b32.cont [11/16] 0.0, 128
        %1553 = vxpose.xlu0.b32.cont [12/16] 0.0, 128
        %1554 = vxpose.xlu0.b32.cont [13/16] 0.0, 128
        %1555 = vxpose.xlu0.b32.cont [14/16] 0.0, 128
        %1556 = vxpose.xlu0.b32.cont [15/16] 0.0, 128
        %1557 = vxpose.xlu0.b32.end [16/16] 0.0, 128
        %v1558 = vpop.trf.xlu0
        %v1559 = vpop.trf.xlu0
        %v1560 = vpop.trf.xlu0
        %v1561 = vpop.trf.xlu0
        %v1562 = vpop.trf.xlu0
        %v1563 = vpop.trf.xlu0
        %v1564 = vpop.trf.xlu0
        %v1565 = vpop.trf.xlu0
        %v1566 = vpop.trf.xlu0
        %v1567 = vpop.trf.xlu0
        %v1568 = vpop.trf.xlu0
        %v1569 = vpop.trf.xlu0
        %v1570 = vpop.trf.xlu0
        %v1571 = vpop.trf.xlu0
        %v1572 = vpop.trf.xlu0
        %v1573 = vpop.trf.xlu0
        %1574 = vxpose.xlu0.b32.start [1/16] %v1410, 128
        %1575 = vxpose.xlu0.b32.cont [2/16] %v1411, 128
        %1576 = vxpose.xlu0.b32.cont [3/16] %v1412, 128
        %1577 = vxpose.xlu0.b32.cont [4/16] %v1413, 128
        %1578 = vxpose.xlu0.b32.cont [5/16] 0.0, 128
        %1579 = vxpose.xlu0.b32.cont [6/16] 0.0, 128
        %1580 = vxpose.xlu0.b32.cont [7/16] 0.0, 128
        %1581 = vxpose.xlu0.b32.cont [8/16] 0.0, 128
        %1582 = vxpose.xlu0.b32.cont [9/16] 0.0, 128
        %1583 = vxpose.xlu0.b32.cont [10/16] 0.0, 128
        %1584 = vxpose.xlu0.b32.cont [11/16] 0.0, 128
        %1585 = vxpose.xlu0.b32.cont [12/16] 0.0, 128
        %1586 = vxpose.xlu0.b32.cont [13/16] 0.0, 128
        %1587 = vxpose.xlu0.b32.cont [14/16] 0.0, 128
        %1588 = vxpose.xlu0.b32.cont [15/16] 0.0, 128
        %1589 = vxpose.xlu0.b32.end [16/16] 0.0, 128
        %v1590 = vpop.trf.xlu0
        %v1591 = vpop.trf.xlu0
        %v1592 = vpop.trf.xlu0
        %v1593 = vpop.trf.xlu0
        %v1594 = vpop.trf.xlu0
        %v1595 = vpop.trf.xlu0
        %v1596 = vpop.trf.xlu0
        %v1597 = vpop.trf.xlu0
        %v1598 = vpop.trf.xlu0
        %v1599 = vpop.trf.xlu0
        %v1600 = vpop.trf.xlu0
        %v1601 = vpop.trf.xlu0
        %v1602 = vpop.trf.xlu0
        %v1603 = vpop.trf.xlu0
        %v1604 = vpop.trf.xlu0
        %v1605 = vpop.trf.xlu0
        %v1606 = vpack.c.bf16 %v1494, %v1494
        %v1607 = vpack.c.bf16 %v1526, %v1526
        %v1608 = vpack.c.bf16 %v1558, %v1558
        %v1609 = vpack.c.bf16 %v1590, %v1590
        %v1610 = vpack.c.bf16 %v1431, %v1430
        %v1611 = vpack.c.bf16 %v1433, %v1432
        %v1612 = vpack.c.bf16 %v1435, %v1434
        %v1613 = vpack.c.bf16 %v1437, %v1436
        %v1614 = vpack.c.bf16 %v1439, %v1438
        %v1615 = vpack.c.bf16 %v1441, %v1440
        %v1616 = vpack.c.bf16 %v1443, %v1442
        %v1617 = vpack.c.bf16 %v1445, %v1444
        %v1618 = vpack.c.bf16 %v1463, %v1462
        %v1619 = vpack.c.bf16 %v1465, %v1464
        %v1620 = vpack.c.bf16 %v1467, %v1466
        %v1621 = vpack.c.bf16 %v1469, %v1468
        %v1622 = vpack.c.bf16 %v1471, %v1470
        %v1623 = vpack.c.bf16 %v1473, %v1472
        %v1624 = vpack.c.bf16 %v1475, %v1474
        %v1625 = vpack.c.bf16 %v1477, %v1476
        %vm1626 = vcmask 261120
        %v1628 = vsel %vm1626, %v1606, 0
        %1630 = vmatprep.subr.bf16.mxu0 0
        %1631 = vmatpush1.bf16.msra.mxu0 %v1610
        %1632 = vmatprep.subr.bf16.mxu0 0
        %1633 = vmatpush1.bf16.msra.mxu0 %v1611
        %1634 = vmatprep.subr.bf16.mxu0 0
        %1635 = vmatpush1.bf16.msra.mxu0 0
        %1636 = vmatprep.subr.bf16.mxu0 0
        %1637 = vmatpush1.bf16.msra.mxu0 0
        %1638 = vmatprep.subr.bf16.mxu0 0
        %1639 = vmatpush1.bf16.msra.mxu0 0
        %1640 = vmatprep.subr.bf16.mxu0 0
        %1641 = vmatpush1.bf16.msra.mxu0 0
        %1642 = vmatprep.subr.bf16.mxu0 0
        %1643 = vmatpush1.bf16.msra.mxu0 0
        %1644 = vmatprep.subr.bf16.mxu0 0
        %1645 = vmatpush1.bf16.msra.mxu0 0
        %1646 = vmatprep.subr.bf16.mxu0 0
        %1647 = vmatpush1.bf16.msra.mxu0 0
        %1648 = vmatprep.subr.bf16.mxu0 0
        %1649 = vmatpush1.bf16.msra.mxu0 0
        %1650 = vmatprep.subr.bf16.mxu0 0
        %1651 = vmatpush1.bf16.msra.mxu0 0
        %1652 = vmatprep.subr.bf16.mxu0 0
        %1653 = vmatpush1.bf16.msra.mxu0 0
        %1654 = vmatprep.subr.bf16.mxu0 0
        %1655 = vmatpush1.bf16.msra.mxu0 0
        %1656 = vmatprep.subr.bf16.mxu0 0
        %1657 = vmatpush1.bf16.msra.mxu0 0
        %1658 = vmatprep.subr.bf16.mxu0 0
        %1659 = vmatpush1.bf16.msra.mxu0 0
        %1660 = vmatprep.subr.bf16.mxu0 0
        %1661 = vmatpush1.bf16.msra.mxu0 0
        %1662 = vmatprep.mubr.bf16.mxu0 0
        %1663 = vmatmul.mubr.bf16.gmra.mrb[0].mxu0 %v1628
        %v1664 = vpop.f32.mrb[0].mxu0
        %v1665 = vadd.f32 0.0, %v1664
        %v1666 = vpop.f32.mrb[0].mxu0
        %v1667 = vpop.f32.mrb[0].mxu0
        %v1668 = vpop.f32.mrb[0].mxu0
        %1669 = vdwg.mxu0
        %v1671 = vsel %vm1626, %v1607, 0
        %1673 = vmatprep.subr.bf16.mxu0 0
        %1674 = vmatpush1.bf16.msra.mxu0 %v1612
        %1675 = vmatprep.subr.bf16.mxu0 0
        %1676 = vmatpush1.bf16.msra.mxu0 %v1613
        %1677 = vmatprep.subr.bf16.mxu0 0
        %1678 = vmatpush1.bf16.msra.mxu0 0
        %1679 = vmatprep.subr.bf16.mxu0 0
        %1680 = vmatpush1.bf16.msra.mxu0 0
        %1681 = vmatprep.subr.bf16.mxu0 0
        %1682 = vmatpush1.bf16.msra.mxu0 0
        %1683 = vmatprep.subr.bf16.mxu0 0
        %1684 = vmatpush1.bf16.msra.mxu0 0
        %1685 = vmatprep.subr.bf16.mxu0 0
        %1686 = vmatpush1.bf16.msra.mxu0 0
        %1687 = vmatprep.subr.bf16.mxu0 0
        %1688 = vmatpush1.bf16.msra.mxu0 0
        %1689 = vmatprep.subr.bf16.mxu0 0
        %1690 = vmatpush1.bf16.msra.mxu0 0
        %1691 = vmatprep.subr.bf16.mxu0 0
        %1692 = vmatpush1.bf16.msra.mxu0 0
        %1693 = vmatprep.subr.bf16.mxu0 0
        %1694 = vmatpush1.bf16.msra.mxu0 0
        %1695 = vmatprep.subr.bf16.mxu0 0
        %1696 = vmatpush1.bf16.msra.mxu0 0
        %1697 = vmatprep.subr.bf16.mxu0 0
        %1698 = vmatpush1.bf16.msra.mxu0 0
        %1699 = vmatprep.subr.bf16.mxu0 0
        %1700 = vmatpush1.bf16.msra.mxu0 0
        %1701 = vmatprep.subr.bf16.mxu0 0
        %1702 = vmatpush1.bf16.msra.mxu0 0
        %1703 = vmatprep.subr.bf16.mxu0 0
        %1704 = vmatpush1.bf16.msra.mxu0 0
        %1705 = vmatprep.mubr.bf16.mxu0 0
        %1706 = vmatmul.mubr.bf16.gmra.mrb[0].mxu0 %v1671
        %v1707 = vpop.f32.mrb[0].mxu0
        %v1708 = vadd.f32 0.0, %v1707
        %v1709 = vpop.f32.mrb[0].mxu0
        %v1710 = vpop.f32.mrb[0].mxu0
        %v1711 = vpop.f32.mrb[0].mxu0
        %1712 = vdwg.mxu0
        %v1714 = vsel %vm1626, %v1608, 0
        %1716 = vmatprep.subr.bf16.mxu0 0
        %1717 = vmatpush1.bf16.msra.mxu0 %v1614
        %1718 = vmatprep.subr.bf16.mxu0 0
        %1719 = vmatpush1.bf16.msra.mxu0 %v1615
        %1720 = vmatprep.subr.bf16.mxu0 0
        %1721 = vmatpush1.bf16.msra.mxu0 0
        %1722 = vmatprep.subr.bf16.mxu0 0
        %1723 = vmatpush1.bf16.msra.mxu0 0
        %1724 = vmatprep.subr.bf16.mxu0 0
        %1725 = vmatpush1.bf16.msra.mxu0 0
        %1726 = vmatprep.subr.bf16.mxu0 0
        %1727 = vmatpush1.bf16.msra.mxu0 0
        %1728 = vmatprep.subr.bf16.mxu0 0
        %1729 = vmatpush1.bf16.msra.mxu0 0
        %1730 = vmatprep.subr.bf16.mxu0 0
        %1731 = vmatpush1.bf16.msra.mxu0 0
        %1732 = vmatprep.subr.bf16.mxu0 0
        %1733 = vmatpush1.bf16.msra.mxu0 0
        %1734 = vmatprep.subr.bf16.mxu0 0
        %1735 = vmatpush1.bf16.msra.mxu0 0
        %1736 = vmatprep.subr.bf16.mxu0 0
        %1737 = vmatpush1.bf16.msra.mxu0 0
        %1738 = vmatprep.subr.bf16.mxu0 0
        %1739 = vmatpush1.bf16.msra.mxu0 0
        %1740 = vmatprep.subr.bf16.mxu0 0
        %1741 = vmatpush1.bf16.msra.mxu0 0
        %1742 = vmatprep.subr.bf16.mxu0 0
        %1743 = vmatpush1.bf16.msra.mxu0 0
        %1744 = vmatprep.subr.bf16.mxu0 0
        %1745 = vmatpush1.bf16.msra.mxu0 0
        %1746 = vmatprep.subr.bf16.mxu0 0
        %1747 = vmatpush1.bf16.msra.mxu0 0
        %1748 = vmatprep.mubr.bf16.mxu0 0
        %1749 = vmatmul.mubr.bf16.gmra.mrb[0].mxu0 %v1714
        %v1750 = vpop.f32.mrb[0].mxu0
        %v1751 = vadd.f32 0.0, %v1750
        %v1752 = vpop.f32.mrb[0].mxu0
        %v1753 = vpop.f32.mrb[0].mxu0
        %v1754 = vpop.f32.mrb[0].mxu0
        %1755 = vdwg.mxu0
        %v1757 = vsel %vm1626, %v1609, 0
        %1759 = vmatprep.subr.bf16.mxu0 0
        %1760 = vmatpush1.bf16.msra.mxu0 %v1616
        %1761 = vmatprep.subr.bf16.mxu0 0
        %1762 = vmatpush1.bf16.msra.mxu0 %v1617
        %1763 = vmatprep.subr.bf16.mxu0 0
        %1764 = vmatpush1.bf16.msra.mxu0 0
        %1765 = vmatprep.subr.bf16.mxu0 0
        %1766 = vmatpush1.bf16.msra.mxu0 0
        %1767 = vmatprep.subr.bf16.mxu0 0
        %1768 = vmatpush1.bf16.msra.mxu0 0
        %1769 = vmatprep.subr.bf16.mxu0 0
        %1770 = vmatpush1.bf16.msra.mxu0 0
        %1771 = vmatprep.subr.bf16.mxu0 0
        %1772 = vmatpush1.bf16.msra.mxu0 0
        %1773 = vmatprep.subr.bf16.mxu0 0
        %1774 = vmatpush1.bf16.msra.mxu0 0
        %1775 = vmatprep.subr.bf16.mxu0 0
        %1776 = vmatpush1.bf16.msra.mxu0 0
        %1777 = vmatprep.subr.bf16.mxu0 0
        %1778 = vmatpush1.bf16.msra.mxu0 0
        %1779 = vmatprep.subr.bf16.mxu0 0
        %1780 = vmatpush1.bf16.msra.mxu0 0
        %1781 = vmatprep.subr.bf16.mxu0 0
        %1782 = vmatpush1.bf16.msra.mxu0 0
        %1783 = vmatprep.subr.bf16.mxu0 0
        %1784 = vmatpush1.bf16.msra.mxu0 0
        %1785 = vmatprep.subr.bf16.mxu0 0
        %1786 = vmatpush1.bf16.msra.mxu0 0
        %1787 = vmatprep.subr.bf16.mxu0 0
        %1788 = vmatpush1.bf16.msra.mxu0 0
        %1789 = vmatprep.subr.bf16.mxu0 0
        %1790 = vmatpush1.bf16.msra.mxu0 0
        %1791 = vmatprep.mubr.bf16.mxu0 0
        %1792 = vmatmul.mubr.bf16.gmra.mrb[0].mxu0 %v1757
        %v1793 = vpop.f32.mrb[0].mxu0
        %v1794 = vadd.f32 0.0, %v1793
        %v1795 = vpop.f32.mrb[0].mxu0
        %v1796 = vpop.f32.mrb[0].mxu0
        %v1797 = vpop.f32.mrb[0].mxu0
        %1798 = vdwg.mxu0
        %v1799 = vmul.f32 %v1665, 0.17677669
        %v1800 = vmul.f32 %v1708, 0.17677669
        %v1801 = vmul.f32 %v1751, 0.17677669
        %v1802 = vmul.f32 %v1794, 0.17677669
        %v1803 = vlaneseq
        %v1804 = vshrl.u32 %v1803, 7
        %v1805 = vlaneseq
        %v1806 = vand.u32 %v1805, 127
        %vm1807 = vcmp.le.s32.totalorder %v1806, %v1804
        %v1808 = vsel %vm1807, 0.0, -1e+09
        %v1809 = vadd.f32 %v1799, %v1808
        %v1810 = vadd.f32 %v1800, %v1808
        %v1811 = vadd.f32 %v1801, %v1808
        %v1812 = vadd.f32 %v1802, %v1808
        %vm1813 = vcmask 64512
        %v1814 = vsel %vm1813, %v1809, -inf
        %1815 = vmax.xlane.f32.xlu0 %v1814
        %v1816 = vpop.xlane.xlu0 %1815
        %v1817 = vsel %vm1813, %v1810, -inf
        %1818 = vmax.xlane.f32.xlu0 %v1817
        %v1819 = vpop.xlane.xlu0 %1818
        %v1820 = vsel %vm1813, %v1811, -inf
        %1821 = vmax.xlane.f32.xlu0 %v1820
        %v1822 = vpop.xlane.xlu0 %1821
        %v1823 = vsel %vm1813, %v1812, -inf
        %1824 = vmax.xlane.f32.xlu0 %v1823
        %v1825 = vpop.xlane.xlu0 %1824
        %v1826 = vsub.f32 %v1809, %v1816
        %v1827 = vsub.f32 %v1810, %v1819
        %v1828 = vsub.f32 %v1811, %v1822
        %v1829 = vsub.f32 %v1812, %v1825
        %v1830 = vmul.f32 %v1826, 1.442695
        %v1831 = vpow.pop %v1830
        %v1832 = vmul.f32 %v1827, 1.442695
        %v1833 = vpow.pop %v1832
        %v1834 = vmul.f32 %v1828, 1.442695
        %v1835 = vpow.pop %v1834
        %v1836 = vmul.f32 %v1829, 1.442695
        %v1837 = vpow.pop %v1836
        %v1838 = vsel %vm1813, %v1831, 0.0
        %1839 = vadd.xlane.f32.xlu0 %v1838
        %v1840 = vpop.xlane.xlu0 %1839
        %v1841 = vsel %vm1813, %v1833, 0.0
        %1842 = vadd.xlane.f32.xlu0 %v1841
        %v1843 = vpop.xlane.xlu0 %1842
        %v1844 = vsel %vm1813, %v1835, 0.0
        %1845 = vadd.xlane.f32.xlu0 %v1844
        %v1846 = vpop.xlane.xlu0 %1845
        %v1847 = vsel %vm1813, %v1837, 0.0
        %1848 = vadd.xlane.f32.xlu0 %v1847
        %v1849 = vpop.xlane.xlu0 %1848
        %v1850 = vrcp.pop %v1840
        %v1851 = vrcp.pop %v1843
        %v1852 = vrcp.pop %v1846
        %v1853 = vrcp.pop %v1849
        %v1854 = vmul.f32 %v1831, %v1850
        %v1855 = vmul.f32 %v1833, %v1851
        %v1856 = vmul.f32 %v1835, %v1852
        %v1857 = vmul.f32 %v1837, %v1853
        %v1858 = vpack.c.bf16 %v1854, %v1854
        %v1859 = vpack.c.bf16 %v1855, %v1855
        %v1860 = vpack.c.bf16 %v1856, %v1856
        %v1861 = vpack.c.bf16 %v1857, %v1857
        %v1863 = vsel %vm1813, %v1618, 0
        %v1866 = vsel %vm1813, %v1619, 0
        %v1869 = vsel %vm1813, %v1858, 0
        %1871 = vmatprep.subr.bf16.mxu0 0
        %1872 = vmatpush1.bf16.xpose.msra.mxu0 %v1869
        %1873 = vmatprep.subr.bf16.mxu0 0
        %1874 = vmatpush1.bf16.xpose.msra.mxu0 0
        %1875 = vmatprep.subr.bf16.mxu0 0
        %1876 = vmatpush1.bf16.xpose.msra.mxu0 0
        %1877 = vmatprep.subr.bf16.mxu0 0
        %1878 = vmatpush1.bf16.xpose.msra.mxu0 0
        %1879 = vmatprep.subr.bf16.mxu0 0
        %1880 = vmatpush1.bf16.xpose.msra.mxu0 0
        %1881 = vmatprep.subr.bf16.mxu0 0
        %1882 = vmatpush1.bf16.xpose.msra.mxu0 0
        %1883 = vmatprep.subr.bf16.mxu0 0
        %1884 = vmatpush1.bf16.xpose.msra.mxu0 0
        %1885 = vmatprep.subr.bf16.mxu0 0
        %1886 = vmatpush1.bf16.xpose.msra.mxu0 0
        %1887 = vmatprep.subr.bf16.mxu0 0
        %1888 = vmatpush1.bf16.xpose.msra.mxu0 0
        %1889 = vmatprep.subr.bf16.mxu0 0
        %1890 = vmatpush1.bf16.xpose.msra.mxu0 0
        %1891 = vmatprep.subr.bf16.mxu0 0
        %1892 = vmatpush1.bf16.xpose.msra.mxu0 0
        %1893 = vmatprep.subr.bf16.mxu0 0
        %1894 = vmatpush1.bf16.xpose.msra.mxu0 0
        %1895 = vmatprep.subr.bf16.mxu0 0
        %1896 = vmatpush1.bf16.xpose.msra.mxu0 0
        %1897 = vmatprep.subr.bf16.mxu0 0
        %1898 = vmatpush1.bf16.xpose.msra.mxu0 0
        %1899 = vmatprep.subr.bf16.mxu0 0
        %1900 = vmatpush1.bf16.xpose.msra.mxu0 0
        %1901 = vmatprep.subr.bf16.mxu0 0
        %1902 = vmatpush1.bf16.xpose.msra.mxu0 0
        %1903 = vmatprep.mubr.bf16.mxu0 0
        %1904 = vmatmul.mubr.bf16.gmra.mrb[0].mxu0 %v1863
        %v1905 = vpop.f32.mrb[0].mxu0
        %v1906 = vadd.f32 0.0, %v1905
        %v1907 = vpop.f32.mrb[0].mxu0
        %v1908 = vpop.f32.mrb[0].mxu0
        %v1909 = vadd.f32 0.0, %v1908
        %v1910 = vpop.f32.mrb[0].mxu0
        %1911 = vmatprep.mubr.bf16.mxu0 0
        %1912 = vmatmul.mubr.bf16.gmra.mrb[0].mxu0 %v1866
        %v1913 = vpop.f32.mrb[0].mxu0
        %v1914 = vadd.f32 0.0, %v1913
        %v1915 = vpop.f32.mrb[0].mxu0
        %v1916 = vpop.f32.mrb[0].mxu0
        %v1917 = vadd.f32 0.0, %v1916
        %v1918 = vpop.f32.mrb[0].mxu0
        %1919 = vdwg.mxu0
        %v1921 = vsel %vm1813, %v1620, 0
        %v1924 = vsel %vm1813, %v1621, 0
        %v1927 = vsel %vm1813, %v1859, 0
        %1929 = vmatprep.subr.bf16.mxu0 0
        %1930 = vmatpush1.bf16.xpose.msra.mxu0 %v1927
        %1931 = vmatprep.subr.bf16.mxu0 0
        %1932 = vmatpush1.bf16.xpose.msra.mxu0 0
        %1933 = vmatprep.subr.bf16.mxu0 0
        %1934 = vmatpush1.bf16.xpose.msra.mxu0 0
        %1935 = vmatprep.subr.bf16.mxu0 0
        %1936 = vmatpush1.bf16.xpose.msra.mxu0 0
        %1937 = vmatprep.subr.bf16.mxu0 0
        %1938 = vmatpush1.bf16.xpose.msra.mxu0 0
        %1939 = vmatprep.subr.bf16.mxu0 0
        %1940 = vmatpush1.bf16.xpose.msra.mxu0 0
        %1941 = vmatprep.subr.bf16.mxu0 0
        %1942 = vmatpush1.bf16.xpose.msra.mxu0 0
        %1943 = vmatprep.subr.bf16.mxu0 0
        %1944 = vmatpush1.bf16.xpose.msra.mxu0 0
        %1945 = vmatprep.subr.bf16.mxu0 0
        %1946 = vmatpush1.bf16.xpose.msra.mxu0 0
        %1947 = vmatprep.subr.bf16.mxu0 0
        %1948 = vmatpush1.bf16.xpose.msra.mxu0 0
        %1949 = vmatprep.subr.bf16.mxu0 0
        %1950 = vmatpush1.bf16.xpose.msra.mxu0 0
        %1951 = vmatprep.subr.bf16.mxu0 0
        %1952 = vmatpush1.bf16.xpose.msra.mxu0 0
        %1953 = vmatprep.subr.bf16.mxu0 0
        %1954 = vmatpush1.bf16.xpose.msra.mxu0 0
        %1955 = vmatprep.subr.bf16.mxu0 0
        %1956 = vmatpush1.bf16.xpose.msra.mxu0 0
        %1957 = vmatprep.subr.bf16.mxu0 0
        %1958 = vmatpush1.bf16.xpose.msra.mxu0 0
        %1959 = vmatprep.subr.bf16.mxu0 0
        %1960 = vmatpush1.bf16.xpose.msra.mxu0 0
        %1961 = vmatprep.mubr.bf16.mxu0 0
        %1962 = vmatmul.mubr.bf16.gmra.mrb[0].mxu0 %v1921
        %v1963 = vpop.f32.mrb[0].mxu0
        %v1964 = vadd.f32 0.0, %v1963
        %v1965 = vpop.f32.mrb[0].mxu0
        %v1966 = vpop.f32.mrb[0].mxu0
        %v1967 = vadd.f32 0.0, %v1966
        %v1968 = vpop.f32.mrb[0].mxu0
        %1969 = vmatprep.mubr.bf16.mxu0 0
        %1970 = vmatmul.mubr.bf16.gmra.mrb[0].mxu0 %v1924
        %v1971 = vpop.f32.mrb[0].mxu0
        %v1972 = vadd.f32 0.0, %v1971
        %v1973 = vpop.f32.mrb[0].mxu0
        %v1974 = vpop.f32.mrb[0].mxu0
        %v1975 = vadd.f32 0.0, %v1974
        %v1976 = vpop.f32.mrb[0].mxu0
        %1977 = vdwg.mxu0
        %v1979 = vsel %vm1813, %v1622, 0
        %v1982 = vsel %vm1813, %v1623, 0
        %v1985 = vsel %vm1813, %v1860, 0
        %1987 = vmatprep.subr.bf16.mxu0 0
        %1988 = vmatpush1.bf16.xpose.msra.mxu0 %v1985
        %1989 = vmatprep.subr.bf16.mxu0 0
        %1990 = vmatpush1.bf16.xpose.msra.mxu0 0
        %1991 = vmatprep.subr.bf16.mxu0 0
        %1992 = vmatpush1.bf16.xpose.msra.mxu0 0
        %1993 = vmatprep.subr.bf16.mxu0 0
        %1994 = vmatpush1.bf16.xpose.msra.mxu0 0
        %1995 = vmatprep.subr.bf16.mxu0 0
        %1996 = vmatpush1.bf16.xpose.msra.mxu0 0
        %1997 = vmatprep.subr.bf16.mxu0 0
        %1998 = vmatpush1.bf16.xpose.msra.mxu0 0
        %1999 = vmatprep.subr.bf16.mxu0 0
        %2000 = vmatpush1.bf16.xpose.msra.mxu0 0
        %2001 = vmatprep.subr.bf16.mxu0 0
        %2002 = vmatpush1.bf16.xpose.msra.mxu0 0
        %2003 = vmatprep.subr.bf16.mxu0 0
        %2004 = vmatpush1.bf16.xpose.msra.mxu0 0
        %2005 = vmatprep.subr.bf16.mxu0 0
        %2006 = vmatpush1.bf16.xpose.msra.mxu0 0
        %2007 = vmatprep.subr.bf16.mxu0 0
        %2008 = vmatpush1.bf16.xpose.msra.mxu0 0
        %2009 = vmatprep.subr.bf16.mxu0 0
        %2010 = vmatpush1.bf16.xpose.msra.mxu0 0
        %2011 = vmatprep.subr.bf16.mxu0 0
        %2012 = vmatpush1.bf16.xpose.msra.mxu0 0
        %2013 = vmatprep.subr.bf16.mxu0 0
        %2014 = vmatpush1.bf16.xpose.msra.mxu0 0
        %2015 = vmatprep.subr.bf16.mxu0 0
        %2016 = vmatpush1.bf16.xpose.msra.mxu0 0
        %2017 = vmatprep.subr.bf16.mxu0 0
        %2018 = vmatpush1.bf16.xpose.msra.mxu0 0
        %2019 = vmatprep.mubr.bf16.mxu0 0
        %2020 = vmatmul.mubr.bf16.gmra.mrb[0].mxu0 %v1979
        %v2021 = vpop.f32.mrb[0].mxu0
        %v2022 = vadd.f32 0.0, %v2021
        %v2023 = vpop.f32.mrb[0].mxu0
        %v2024 = vpop.f32.mrb[0].mxu0
        %v2025 = vadd.f32 0.0, %v2024
        %v2026 = vpop.f32.mrb[0].mxu0
        %2027 = vmatprep.mubr.bf16.mxu0 0
        %2028 = vmatmul.mubr.bf16.gmra.mrb[0].mxu0 %v1982
        %v2029 = vpop.f32.mrb[0].mxu0
        %v2030 = vadd.f32 0.0, %v2029
        %v2031 = vpop.f32.mrb[0].mxu0
        %v2032 = vpop.f32.mrb[0].mxu0
        %v2033 = vadd.f32 0.0, %v2032
        %v2034 = vpop.f32.mrb[0].mxu0
        %2035 = vdwg.mxu0
        %v2037 = vsel %vm1813, %v1624, 0
        %v2040 = vsel %vm1813, %v1625, 0
        %v2043 = vsel %vm1813, %v1861, 0
        %2045 = vmatprep.subr.bf16.mxu0 0
        %2046 = vmatpush1.bf16.xpose.msra.mxu0 %v2043
        %2047 = vmatprep.subr.bf16.mxu0 0
        %2048 = vmatpush1.bf16.xpose.msra.mxu0 0
        %2049 = vmatprep.subr.bf16.mxu0 0
        %2050 = vmatpush1.bf16.xpose.msra.mxu0 0
        %2051 = vmatprep.subr.bf16.mxu0 0
        %2052 = vmatpush1.bf16.xpose.msra.mxu0 0
        %2053 = vmatprep.subr.bf16.mxu0 0
        %2054 = vmatpush1.bf16.xpose.msra.mxu0 0
        %2055 = vmatprep.subr.bf16.mxu0 0
        %2056 = vmatpush1.bf16.xpose.msra.mxu0 0
        %2057 = vmatprep.subr.bf16.mxu0 0
        %2058 = vmatpush1.bf16.xpose.msra.mxu0 0
        %2059 = vmatprep.subr.bf16.mxu0 0
        %2060 = vmatpush1.bf16.xpose.msra.mxu0 0
        %2061 = vmatprep.subr.bf16.mxu0 0
        %2062 = vmatpush1.bf16.xpose.msra.mxu0 0
        %2063 = vmatprep.subr.bf16.mxu0 0
        %2064 = vmatpush1.bf16.xpose.msra.mxu0 0
        %2065 = vmatprep.subr.bf16.mxu0 0
        %2066 = vmatpush1.bf16.xpose.msra.mxu0 0
        %2067 = vmatprep.subr.bf16.mxu0 0
        %2068 = vmatpush1.bf16.xpose.msra.mxu0 0
        %2069 = vmatprep.subr.bf16.mxu0 0
        %2070 = vmatpush1.bf16.xpose.msra.mxu0 0
        %2071 = vmatprep.subr.bf16.mxu0 0
        %2072 = vmatpush1.bf16.xpose.msra.mxu0 0
        %2073 = vmatprep.subr.bf16.mxu0 0
        %2074 = vmatpush1.bf16.xpose.msra.mxu0 0
        %2075 = vmatprep.subr.bf16.mxu0 0
        %2076 = vmatpush1.bf16.xpose.msra.mxu0 0
        %2077 = vmatprep.mubr.bf16.mxu0 0
        %2078 = vmatmul.mubr.bf16.gmra.mrb[0].mxu0 %v2037
        %v2079 = vpop.f32.mrb[0].mxu0
        %v2080 = vadd.f32 0.0, %v2079
        %v2081 = vpop.f32.mrb[0].mxu0
        %v2082 = vpop.f32.mrb[0].mxu0
        %v2083 = vadd.f32 0.0, %v2082
        %v2084 = vpop.f32.mrb[0].mxu0
        %2085 = vmatprep.mubr.bf16.mxu0 0
        %2086 = vmatmul.mubr.bf16.gmra.mrb[0].mxu0 %v2040
        %v2087 = vpop.f32.mrb[0].mxu0
        %v2088 = vadd.f32 0.0, %v2087
        %v2089 = vpop.f32.mrb[0].mxu0
        %v2090 = vpop.f32.mrb[0].mxu0
        %v2091 = vadd.f32 0.0, %v2090
        %v2092 = vpop.f32.mrb[0].mxu0
        %2093 = vdwg.mxu0
        %2094 = vxpose.xlu0.b32.start [1/16] %v1906, 128
        %2095 = vxpose.xlu0.b32.cont [2/16] %v1909, 128
        %2096 = vxpose.xlu0.b32.cont [3/16] %v1914, 128
        %2097 = vxpose.xlu0.b32.cont [4/16] %v1917, 128
        %2098 = vxpose.xlu0.b32.cont [5/16] %v1964, 128
        %2099 = vxpose.xlu0.b32.cont [6/16] %v1967, 128
        %2100 = vxpose.xlu0.b32.cont [7/16] %v1972, 128
        %2101 = vxpose.xlu0.b32.cont [8/16] %v1975, 128
        %2102 = vxpose.xlu0.b32.cont [9/16] %v2022, 128
        %2103 = vxpose.xlu0.b32.cont [10/16] %v2025, 128
        %2104 = vxpose.xlu0.b32.cont [11/16] %v2030, 128
        %2105 = vxpose.xlu0.b32.cont [12/16] %v2033, 128
        %2106 = vxpose.xlu0.b32.cont [13/16] %v2080, 128
        %2107 = vxpose.xlu0.b32.cont [14/16] %v2083, 128
        %2108 = vxpose.xlu0.b32.cont [15/16] %v2088, 128
        %2109 = vxpose.xlu0.b32.end [16/16] %v2091, 128
        %v2110 = vpop.trf.xlu0
        %v2111 = vpop.trf.xlu0
        %v2112 = vpop.trf.xlu0
        %v2113 = vpop.trf.xlu0
        %v2114 = vpop.trf.xlu0
        %v2115 = vpop.trf.xlu0
        %v2116 = vpop.trf.xlu0
        %v2117 = vpop.trf.xlu0
        %v2118 = vpop.trf.xlu0
        %v2119 = vpop.trf.xlu0
        %v2120 = vpop.trf.xlu0
        %v2121 = vpop.trf.xlu0
        %v2122 = vpop.trf.xlu0
        %v2123 = vpop.trf.xlu0
        %v2124 = vpop.trf.xlu0
        %v2125 = vpop.trf.xlu0
        %v2126 = vpack.c.bf16 %v2110, %v2110
        %v2128 = vlaneseq
        %v2129 = vshrl.u32 %v2128, 7
        %v2130 = vsub.s32 0, %v2129
        %v2131 = vrot.slane %v1155, %v2130
        %v2149 = vunpack.c.l.b16 %v1139
        %v2150 = vunpack.c.l.b16 %v1140
        %v2151 = vunpack.c.l.b16 %v1141
        %v2152 = vunpack.c.l.b16 %v1142
        %v2153 = vunpack.c.l.b16 %v1143
        %v2154 = vunpack.c.l.b16 %v1144
        %v2155 = vunpack.c.l.b16 %v1145
        %v2156 = vunpack.c.l.b16 %v1146
        %v2157 = vunpack.c.l.b16 %v1147
        %v2158 = vunpack.c.l.b16 %v1148
        %v2159 = vunpack.c.l.b16 %v1149
        %v2160 = vunpack.c.l.b16 %v1150
        %v2161 = vunpack.c.l.b16 %v1151
        %v2162 = vunpack.c.l.b16 %v1152
        %v2163 = vunpack.c.l.b16 %v1153
        %v2164 = vunpack.c.l.b16 %v1154
        %v2165 = vpack.c.b16 %v2150, %v2149
        %v2166 = vpack.c.b16 %v2152, %v2151
        %v2167 = vpack.c.b16 %v2154, %v2153
        %v2168 = vpack.c.b16 %v2156, %v2155
        %v2169 = vpack.c.b16 %v2158, %v2157
        %v2170 = vpack.c.b16 %v2160, %v2159
        %v2171 = vpack.c.b16 %v2162, %v2161
        %v2172 = vpack.c.b16 %v2164, %v2163
        %2181 = vmatprep.subr.bf16.mxu0 0
        %2182 = vmatpush1.bf16.msra.mxu0 %v2165
        %2183 = vmatprep.subr.bf16.mxu0 0
        %2184 = vmatpush1.bf16.msra.mxu0 %v2166
        %2185 = vmatprep.subr.bf16.mxu0 0
        %2186 = vmatpush1.bf16.msra.mxu0 %v2167
        %2187 = vmatprep.subr.bf16.mxu0 0
        %2188 = vmatpush1.bf16.msra.mxu0 %v2168
        %2189 = vmatprep.subr.bf16.mxu0 0
        %2190 = vmatpush1.bf16.msra.mxu0 %v2169
        %2191 = vmatprep.subr.bf16.mxu0 0
        %2192 = vmatpush1.bf16.msra.mxu0 %v2170
        %2193 = vmatprep.subr.bf16.mxu0 0
        %2194 = vmatpush1.bf16.msra.mxu0 %v2171
        %2195 = vmatprep.subr.bf16.mxu0 0
        %2196 = vmatpush1.bf16.msra.mxu0 %v2172
        %2197 = vmatprep.subr.bf16.mxu0 0
        %2198 = vmatpush1.bf16.msra.mxu0 0
        %2199 = vmatprep.subr.bf16.mxu0 0
        %2200 = vmatpush1.bf16.msra.mxu0 0
        %2201 = vmatprep.subr.bf16.mxu0 0
        %2202 = vmatpush1.bf16.msra.mxu0 0
        %2203 = vmatprep.subr.bf16.mxu0 0
        %2204 = vmatpush1.bf16.msra.mxu0 0
        %2205 = vmatprep.subr.bf16.mxu0 0
        %2206 = vmatpush1.bf16.msra.mxu0 0
        %2207 = vmatprep.subr.bf16.mxu0 0
        %2208 = vmatpush1.bf16.msra.mxu0 0
        %2209 = vmatprep.subr.bf16.mxu0 0
        %2210 = vmatpush1.bf16.msra.mxu0 0
        %2211 = vmatprep.subr.bf16.mxu0 0
        %2212 = vmatpush1.bf16.msra.mxu0 0
        %2213 = vmatprep.mubr.bf16.mxu0 0
        %2214 = vmatmul.mubr.bf16.gmra.mrb[0].mxu0 %v2126
        %v2215 = vpop.f32.mrb[0].mxu0
        %v2216 = vadd.f32 %v2131, %v2215
        %v2217 = vpop.f32.mrb[0].mxu0
        %v2218 = vpop.f32.mrb[0].mxu0
        %v2219 = vpop.f32.mrb[0].mxu0
        %2220 = vdwg.mxu0
        %v2221 = vadd.f32 %v1105, %v2216
        %v2222 = vld [vmem:[%s1048] sm:$0x1]
        %v2223 = vld [vmem:[%s1051] sm:$0x1]
        %2224 = vadd.xlane.f32.xlu0 %v2221
        %v2225 = vpop.xlane.xlu0 %2224
        %v2226 = vrcp.pop 128.0
        %v2227 = vmul.f32 %v2225, %v2226
        %v2228 = vsub.f32 %v2221, %v2227
        %v2229 = vmul.f32 %v2228, %v2228
        %2230 = vadd.xlane.f32.xlu0 %v2229
        %v2231 = vpop.xlane.xlu0 %2230
        %v2232 = vmul.f32 %v2231, %v2226
        %v2233 = vadd.f32 %v2232, 1e-05
        %v2234 = vrsqrt.pop %v2233
        %v2235 = vmul.f32 %v2228, %v2234
        %v2237 = vlaneseq
        %v2238 = vshrl.u32 %v2237, 7
        %v2239 = vsub.s32 0, %v2238
        %v2240 = vrot.slane %v2222, %v2239
        %v2242 = vmul.f32 %v2235, %v2240
        %v2244 = vlaneseq
        %v2245 = vshrl.u32 %v2244, 7
        %v2246 = vsub.s32 0, %v2245
        %v2247 = vrot.slane %v2223, %v2246
        %v2249 = vadd.f32 %v2242, %v2247
        %v2250 = vld [vmem:[%s876] sm:$0xf]
        %v2251 = vld [vmem:[%s876 + $0x4] sm:$0xf]
        %v2252 = vld [vmem:[%s876 + $0x8] sm:$0xf]
        %v2253 = vld [vmem:[%s876 + $0xc] sm:$0xf]
        %v2254 = vld [vmem:[%s876 + $0x10] sm:$0xf]
        %v2255 = vld [vmem:[%s876 + $0x14] sm:$0xf]
        %v2256 = vld [vmem:[%s876 + $0x18] sm:$0xf]
        %v2257 = vld [vmem:[%s876 + $0x1c] sm:$0xf]
        %v2258 = vld [vmem:[%s876 + $0x20] sm:$0xf]
        %v2259 = vld [vmem:[%s876 + $0x24] sm:$0xf]
        %v2260 = vld [vmem:[%s876 + $0x28] sm:$0xf]
        %v2261 = vld [vmem:[%s876 + $0x2c] sm:$0xf]
        %v2262 = vld [vmem:[%s876 + $0x30] sm:$0xf]
        %v2263 = vld [vmem:[%s876 + $0x34] sm:$0xf]
        %v2264 = vld [vmem:[%s876 + $0x38] sm:$0xf]
        %v2265 = vld [vmem:[%s876 + $0x3c] sm:$0xf]
        %v2266 = vld [vmem:[%s1054] sm:$0x1]
        %v2267 = vld [vmem:[%s1059] sm:$0xff]
        %v2268 = vld [vmem:[%s1059 + $0x8] sm:$0xff]
        %v2269 = vld [vmem:[%s1059 + $0x10] sm:$0xff]
        %v2270 = vld [vmem:[%s1059 + $0x18] sm:$0xff]
        %v2271 = vld [vmem:[%s1059 + $0x20] sm:$0xff]
        %v2272 = vld [vmem:[%s1059 + $0x28] sm:$0xff]
        %v2273 = vld [vmem:[%s1059 + $0x30] sm:$0xff]
        %v2274 = vld [vmem:[%s1059 + $0x38] sm:$0xff]
        %v2275 = vld [vmem:[%s1059 + $0x40] sm:$0xff]
        %v2276 = vld [vmem:[%s1059 + $0x48] sm:$0xff]
        %v2277 = vld [vmem:[%s1059 + $0x50] sm:$0xff]
        %v2278 = vld [vmem:[%s1059 + $0x58] sm:$0xff]
        %v2279 = vld [vmem:[%s1059 + $0x60] sm:$0xff]
        %v2280 = vld [vmem:[%s1059 + $0x68] sm:$0xff]
        %v2281 = vld [vmem:[%s1059 + $0x70] sm:$0xff]
        %v2282 = vld [vmem:[%s1059 + $0x78] sm:$0xff]
        %v2283 = vld [vmem:[%s1063] sm:$0x3]
        %v2284 = vld [vmem:[%s885] sm:$0xf]
        %v2285 = vld [vmem:[%s885 + $0x4] sm:$0xf]
        %v2286 = vld [vmem:[%s885 + $0x8] sm:$0xf]
        %v2287 = vld [vmem:[%s885 + $0xc] sm:$0xf]
        %v2288 = vld [vmem:[%s885 + $0x10] sm:$0xf]
        %v2289 = vld [vmem:[%s885 + $0x14] sm:$0xf]
        %v2290 = vld [vmem:[%s885 + $0x18] sm:$0xf]
        %v2291 = vld [vmem:[%s885 + $0x1c] sm:$0xf]
        %v2292 = vld [vmem:[%s885 + $0x20] sm:$0xf]
        %v2293 = vld [vmem:[%s885 + $0x24] sm:$0xf]
        %v2294 = vld [vmem:[%s885 + $0x28] sm:$0xf]
        %v2295 = vld [vmem:[%s885 + $0x2c] sm:$0xf]
        %v2296 = vld [vmem:[%s885 + $0x30] sm:$0xf]
        %v2297 = vld [vmem:[%s885 + $0x34] sm:$0xf]
        %v2298 = vld [vmem:[%s885 + $0x38] sm:$0xf]
        %v2299 = vld [vmem:[%s885 + $0x3c] sm:$0xf]
        %v2300 = vld [vmem:[%s1066] sm:$0x1]
        %v2301 = vpack.c.bf16 %v2249, %v2249
        %v2303 = vlaneseq
        %v2304 = vshrl.u32 %v2303, 7
        %v2305 = vsub.s32 0, %v2304
        %v2306 = vrot.slane %v2266, %v2305
        %v2324 = vunpack.c.l.b16 %v2250
        %v2325 = vunpack.c.l.b16 %v2251
        %v2326 = vunpack.c.l.b16 %v2252
        %v2327 = vunpack.c.l.b16 %v2253
        %v2328 = vunpack.c.l.b16 %v2254
        %v2329 = vunpack.c.l.b16 %v2255
        %v2330 = vunpack.c.l.b16 %v2256
        %v2331 = vunpack.c.l.b16 %v2257
        %v2332 = vunpack.c.l.b16 %v2258
        %v2333 = vunpack.c.l.b16 %v2259
        %v2334 = vunpack.c.l.b16 %v2260
        %v2335 = vunpack.c.l.b16 %v2261
        %v2336 = vunpack.c.l.b16 %v2262
        %v2337 = vunpack.c.l.b16 %v2263
        %v2338 = vunpack.c.l.b16 %v2264
        %v2339 = vunpack.c.l.b16 %v2265
        %v2340 = vpack.c.b16 %v2325, %v2324
        %v2341 = vpack.c.b16 %v2327, %v2326
        %v2342 = vpack.c.b16 %v2329, %v2328
        %v2343 = vpack.c.b16 %v2331, %v2330
        %v2344 = vpack.c.b16 %v2333, %v2332
        %v2345 = vpack.c.b16 %v2335, %v2334
        %v2346 = vpack.c.b16 %v2337, %v2336
        %v2347 = vpack.c.b16 %v2339, %v2338
        %2356 = vmatprep.subr.bf16.mxu0 0
        %2357 = vmatpush1.bf16.msra.mxu0 %v2340
        %2358 = vmatprep.subr.bf16.mxu0 0
        %2359 = vmatpush1.bf16.msra.mxu0 %v2341
        %2360 = vmatprep.subr.bf16.mxu0 0
        %2361 = vmatpush1.bf16.msra.mxu0 %v2342
        %2362 = vmatprep.subr.bf16.mxu0 0
        %2363 = vmatpush1.bf16.msra.mxu0 %v2343
        %2364 = vmatprep.subr.bf16.mxu0 0
        %2365 = vmatpush1.bf16.msra.mxu0 %v2344
        %2366 = vmatprep.subr.bf16.mxu0 0
        %2367 = vmatpush1.bf16.msra.mxu0 %v2345
        %2368 = vmatprep.subr.bf16.mxu0 0
        %2369 = vmatpush1.bf16.msra.mxu0 %v2346
        %2370 = vmatprep.subr.bf16.mxu0 0
        %2371 = vmatpush1.bf16.msra.mxu0 %v2347
        %2372 = vmatprep.subr.bf16.mxu0 0
        %2373 = vmatpush1.bf16.msra.mxu0 0
        %2374 = vmatprep.subr.bf16.mxu0 0
        %2375 = vmatpush1.bf16.msra.mxu0 0
        %2376 = vmatprep.subr.bf16.mxu0 0
        %2377 = vmatpush1.bf16.msra.mxu0 0
        %2378 = vmatprep.subr.bf16.mxu0 0
        %2379 = vmatpush1.bf16.msra.mxu0 0
        %2380 = vmatprep.subr.bf16.mxu0 0
        %2381 = vmatpush1.bf16.msra.mxu0 0
        %2382 = vmatprep.subr.bf16.mxu0 0
        %2383 = vmatpush1.bf16.msra.mxu0 0
        %2384 = vmatprep.subr.bf16.mxu0 0
        %2385 = vmatpush1.bf16.msra.mxu0 0
        %2386 = vmatprep.subr.bf16.mxu0 0
        %2387 = vmatpush1.bf16.msra.mxu0 0
        %2388 = vmatprep.mubr.bf16.mxu0 0
        %2389 = vmatmul.mubr.bf16.gmra.mrb[0].mxu0 %v2301
        %v2390 = vpop.f32.mrb[0].mxu0
        %v2391 = vadd.f32 %v2306, %v2390
        %v2392 = vpop.f32.mrb[0].mxu0
        %v2393 = vpop.f32.mrb[0].mxu0
        %v2394 = vpop.f32.mrb[0].mxu0
        %2395 = vdwg.mxu0
        %2396 = vxpose.xlu0.b32.start [1/16] %v2391, 128
        %2397 = vxpose.xlu0.b32.cont [2/16] 0.0, 128
        %2398 = vxpose.xlu0.b32.cont [3/16] 0.0, 128
        %2399 = vxpose.xlu0.b32.cont [4/16] 0.0, 128
        %2400 = vxpose.xlu0.b32.cont [5/16] 0.0, 128
        %2401 = vxpose.xlu0.b32.cont [6/16] 0.0, 128
        %2402 = vxpose.xlu0.b32.cont [7/16] 0.0, 128
        %2403 = vxpose.xlu0.b32.cont [8/16] 0.0, 128
        %2404 = vxpose.xlu0.b32.cont [9/16] 0.0, 128
        %2405 = vxpose.xlu0.b32.cont [10/16] 0.0, 128
        %2406 = vxpose.xlu0.b32.cont [11/16] 0.0, 128
        %2407 = vxpose.xlu0.b32.cont [12/16] 0.0, 128
        %2408 = vxpose.xlu0.b32.cont [13/16] 0.0, 128
        %2409 = vxpose.xlu0.b32.cont [14/16] 0.0, 128
        %2410 = vxpose.xlu0.b32.cont [15/16] 0.0, 128
        %2411 = vxpose.xlu0.b32.end [16/16] 0.0, 128
        %v2412 = vpop.trf.xlu0
        %v2413 = vpop.trf.xlu0
        %v2414 = vpop.trf.xlu0
        %v2415 = vpop.trf.xlu0
        %v2416 = vpop.trf.xlu0
        %v2417 = vpop.trf.xlu0
        %v2418 = vpop.trf.xlu0
        %v2419 = vpop.trf.xlu0
        %v2420 = vpop.trf.xlu0
        %v2421 = vpop.trf.xlu0
        %v2422 = vpop.trf.xlu0
        %v2423 = vpop.trf.xlu0
        %v2424 = vpop.trf.xlu0
        %v2425 = vpop.trf.xlu0
        %v2426 = vpop.trf.xlu0
        %v2427 = vpop.trf.xlu0
        %v2429 = vlaneseq
        %v2430 = vshrl.u32 %v2429, 7
        %v2431 = vsub.s32 0, %v2430
        %v2432 = vrot.slane %v2283, %v2431
        %v2433 = vlaneseq
        %v2434 = vshrl.u32 %v2433, 7
        %v2435 = vsub.s32 1, %v2434
        %v2436 = vrot.slane %v2283, %v2435
        %v2455 = vunpack.c.l.b16 %v2267
        %v2456 = vunpack.c.h.b16 %v2267
        %v2457 = vunpack.c.l.b16 %v2268
        %v2458 = vunpack.c.h.b16 %v2268
        %v2459 = vunpack.c.l.b16 %v2269
        %v2460 = vunpack.c.h.b16 %v2269
        %v2461 = vunpack.c.l.b16 %v2270
        %v2462 = vunpack.c.h.b16 %v2270
        %v2463 = vunpack.c.l.b16 %v2271
        %v2464 = vunpack.c.h.b16 %v2271
        %v2465 = vunpack.c.l.b16 %v2272
        %v2466 = vunpack.c.h.b16 %v2272
        %v2467 = vunpack.c.l.b16 %v2273
        %v2468 = vunpack.c.h.b16 %v2273
        %v2469 = vunpack.c.l.b16 %v2274
        %v2470 = vunpack.c.h.b16 %v2274
        %v2471 = vunpack.c.l.b16 %v2275
        %v2472 = vunpack.c.h.b16 %v2275
        %v2473 = vunpack.c.l.b16 %v2276
        %v2474 = vunpack.c.h.b16 %v2276
        %v2475 = vunpack.c.l.b16 %v2277
        %v2476 = vunpack.c.h.b16 %v2277
        %v2477 = vunpack.c.l.b16 %v2278
        %v2478 = vunpack.c.h.b16 %v2278
        %v2479 = vunpack.c.l.b16 %v2279
        %v2480 = vunpack.c.h.b16 %v2279
        %v2481 = vunpack.c.l.b16 %v2280
        %v2482 = vunpack.c.h.b16 %v2280
        %v2483 = vunpack.c.l.b16 %v2281
        %v2484 = vunpack.c.h.b16 %v2281
        %v2485 = vunpack.c.l.b16 %v2282
        %v2486 = vunpack.c.h.b16 %v2282
        %v2487 = vpack.c.b16 %v2457, %v2455
        %v2488 = vpack.c.b16 %v2458, %v2456
        %v2489 = vpack.c.b16 %v2461, %v2459
        %v2490 = vpack.c.b16 %v2462, %v2460
        %v2491 = vpack.c.b16 %v2465, %v2463
        %v2492 = vpack.c.b16 %v2466, %v2464
        %v2493 = vpack.c.b16 %v2469, %v2467
        %v2494 = vpack.c.b16 %v2470, %v2468
        %v2495 = vpack.c.b16 %v2473, %v2471
        %v2496 = vpack.c.b16 %v2474, %v2472
        %v2497 = vpack.c.b16 %v2477, %v2475
        %v2498 = vpack.c.b16 %v2478, %v2476
        %v2499 = vpack.c.b16 %v2481, %v2479
        %v2500 = vpack.c.b16 %v2482, %v2480
        %v2501 = vpack.c.b16 %v2485, %v2483
        %v2502 = vpack.c.b16 %v2486, %v2484
        %2519 = vmatprep.subr.bf16.mxu0 %v2488
        %2520 = vmatpush1.bf16.msra.mxu0 %v2487
        %2521 = vmatprep.subr.bf16.mxu0 %v2490
        %2522 = vmatpush1.bf16.msra.mxu0 %v2489
        %2523 = vmatprep.subr.bf16.mxu0 %v2492
        %2524 = vmatpush1.bf16.msra.mxu0 %v2491
        %2525 = vmatprep.subr.bf16.mxu0 %v2494
        %2526 = vmatpush1.bf16.msra.mxu0 %v2493
        %2527 = vmatprep.subr.bf16.mxu0 %v2496
        %2528 = vmatpush1.bf16.msra.mxu0 %v2495
        %2529 = vmatprep.subr.bf16.mxu0 %v2498
        %2530 = vmatpush1.bf16.msra.mxu0 %v2497
        %2531 = vmatprep.subr.bf16.mxu0 %v2500
        %2532 = vmatpush1.bf16.msra.mxu0 %v2499
        %2533 = vmatprep.subr.bf16.mxu0 %v2502
        %2534 = vmatpush1.bf16.msra.mxu0 %v2501
        %2535 = vmatprep.subr.bf16.mxu0 0
        %2536 = vmatpush1.bf16.msra.mxu0 0
        %2537 = vmatprep.subr.bf16.mxu0 0
        %2538 = vmatpush1.bf16.msra.mxu0 0
        %2539 = vmatprep.subr.bf16.mxu0 0
        %2540 = vmatpush1.bf16.msra.mxu0 0
        %2541 = vmatprep.subr.bf16.mxu0 0
        %2542 = vmatpush1.bf16.msra.mxu0 0
        %2543 = vmatprep.subr.bf16.mxu0 0
        %2544 = vmatpush1.bf16.msra.mxu0 0
        %2545 = vmatprep.subr.bf16.mxu0 0
        %2546 = vmatpush1.bf16.msra.mxu0 0
        %2547 = vmatprep.subr.bf16.mxu0 0
        %2548 = vmatpush1.bf16.msra.mxu0 0
        %2549 = vmatprep.subr.bf16.mxu0 0
        %2550 = vmatpush1.bf16.msra.mxu0 0
        %2551 = vmatprep.mubr.bf16.mxu0 0
        %2552 = vmatmul.mubr.bf16.gmra.mrb[0].mxu0 %v1104
        %v2553 = vpop.f32.mrb[0].mxu0
        %v2554 = vadd.f32 %v2432, %v2553
        %v2555 = vpop.f32.mrb[0].mxu0
        %v2556 = vadd.f32 %v2436, %v2555
        %v2557 = vpop.f32.mrb[0].mxu0
        %v2558 = vpop.f32.mrb[0].mxu0
        %2559 = vdwg.mxu0
        %2560 = vxpose.xlu0.b32.start [1/16] %v2554, 128
        %2561 = vxpose.xlu0.b32.cont [2/16] 0.0, 128
        %2562 = vxpose.xlu0.b32.cont [3/16] 0.0, 128
        %2563 = vxpose.xlu0.b32.cont [4/16] 0.0, 128
        %2564 = vxpose.xlu0.b32.cont [5/16] 0.0, 128
        %2565 = vxpose.xlu0.b32.cont [6/16] 0.0, 128
        %2566 = vxpose.xlu0.b32.cont [7/16] 0.0, 128
        %2567 = vxpose.xlu0.b32.cont [8/16] 0.0, 128
        %2568 = vxpose.xlu0.b32.cont [9/16] 0.0, 128
        %2569 = vxpose.xlu0.b32.cont [10/16] 0.0, 128
        %2570 = vxpose.xlu0.b32.cont [11/16] 0.0, 128
        %2571 = vxpose.xlu0.b32.cont [12/16] 0.0, 128
        %2572 = vxpose.xlu0.b32.cont [13/16] 0.0, 128
        %2573 = vxpose.xlu0.b32.cont [14/16] 0.0, 128
        %2574 = vxpose.xlu0.b32.cont [15/16] 0.0, 128
        %2575 = vxpose.xlu0.b32.end [16/16] 0.0, 128
        %v2576 = vpop.trf.xlu0
        %v2577 = vpop.trf.xlu0
        %v2578 = vpop.trf.xlu0
        %v2579 = vpop.trf.xlu0
        %v2580 = vpop.trf.xlu0
        %v2581 = vpop.trf.xlu0
        %v2582 = vpop.trf.xlu0
        %v2583 = vpop.trf.xlu0
        %v2584 = vpop.trf.xlu0
        %v2585 = vpop.trf.xlu0
        %v2586 = vpop.trf.xlu0
        %v2587 = vpop.trf.xlu0
        %v2588 = vpop.trf.xlu0
        %v2589 = vpop.trf.xlu0
        %v2590 = vpop.trf.xlu0
        %v2591 = vpop.trf.xlu0
        %2592 = vxpose.xlu0.b32.start [1/16] %v2556, 128
        %2593 = vxpose.xlu0.b32.cont [2/16] 0.0, 128
        %2594 = vxpose.xlu0.b32.cont [3/16] 0.0, 128
        %2595 = vxpose.xlu0.b32.cont [4/16] 0.0, 128
        %2596 = vxpose.xlu0.b32.cont [5/16] 0.0, 128
        %2597 = vxpose.xlu0.b32.cont [6/16] 0.0, 128
        %2598 = vxpose.xlu0.b32.cont [7/16] 0.0, 128
        %2599 = vxpose.xlu0.b32.cont [8/16] 0.0, 128
        %2600 = vxpose.xlu0.b32.cont [9/16] 0.0, 128
        %2601 = vxpose.xlu0.b32.cont [10/16] 0.0, 128
        %2602 = vxpose.xlu0.b32.cont [11/16] 0.0, 128
        %2603 = vxpose.xlu0.b32.cont [12/16] 0.0, 128
        %2604 = vxpose.xlu0.b32.cont [13/16] 0.0, 128
        %2605 = vxpose.xlu0.b32.cont [14/16] 0.0, 128
        %2606 = vxpose.xlu0.b32.cont [15/16] 0.0, 128
        %2607 = vxpose.xlu0.b32.end [16/16] 0.0, 128
        %v2608 = vpop.trf.xlu0
        %v2609 = vpop.trf.xlu0
        %v2610 = vpop.trf.xlu0
        %v2611 = vpop.trf.xlu0
        %v2612 = vpop.trf.xlu0
        %v2613 = vpop.trf.xlu0
        %v2614 = vpop.trf.xlu0
        %v2615 = vpop.trf.xlu0
        %v2616 = vpop.trf.xlu0
        %v2617 = vpop.trf.xlu0
        %v2618 = vpop.trf.xlu0
        %v2619 = vpop.trf.xlu0
        %v2620 = vpop.trf.xlu0
        %v2621 = vpop.trf.xlu0
        %v2622 = vpop.trf.xlu0
        %v2623 = vpop.trf.xlu0
        %2624 = vxpose.xlu0.b32.start [1/16] %v2412, 128
        %2625 = vxpose.xlu0.b32.cont [2/16] %v2413, 128
        %2626 = vxpose.xlu0.b32.cont [3/16] %v2414, 128
        %2627 = vxpose.xlu0.b32.cont [4/16] %v2415, 128
        %2628 = vxpose.xlu0.b32.cont [5/16] 0.0, 128
        %2629 = vxpose.xlu0.b32.cont [6/16] 0.0, 128
        %2630 = vxpose.xlu0.b32.cont [7/16] 0.0, 128
        %2631 = vxpose.xlu0.b32.cont [8/16] 0.0, 128
        %2632 = vxpose.xlu0.b32.cont [9/16] 0.0, 128
        %2633 = vxpose.xlu0.b32.cont [10/16] 0.0, 128
        %2634 = vxpose.xlu0.b32.cont [11/16] 0.0, 128
        %2635 = vxpose.xlu0.b32.cont [12/16] 0.0, 128
        %2636 = vxpose.xlu0.b32.cont [13/16] 0.0, 128
        %2637 = vxpose.xlu0.b32.cont [14/16] 0.0, 128
        %2638 = vxpose.xlu0.b32.cont [15/16] 0.0, 128
        %2639 = vxpose.xlu0.b32.end [16/16] 0.0, 128
        %v2640 = vpop.trf.xlu0
        %v2641 = vpop.trf.xlu0
        %v2642 = vpop.trf.xlu0
        %v2643 = vpop.trf.xlu0
        %v2644 = vpop.trf.xlu0
        %v2645 = vpop.trf.xlu0
        %v2646 = vpop.trf.xlu0
        %v2647 = vpop.trf.xlu0
        %v2648 = vpop.trf.xlu0
        %v2649 = vpop.trf.xlu0
        %v2650 = vpop.trf.xlu0
        %v2651 = vpop.trf.xlu0
        %v2652 = vpop.trf.xlu0
        %v2653 = vpop.trf.xlu0
        %v2654 = vpop.trf.xlu0
        %v2655 = vpop.trf.xlu0
        %2656 = vxpose.xlu0.b32.start [1/16] %v2416, 128
        %2657 = vxpose.xlu0.b32.cont [2/16] %v2417, 128
        %2658 = vxpose.xlu0.b32.cont [3/16] %v2418, 128
        %2659 = vxpose.xlu0.b32.cont [4/16] %v2419, 128
        %2660 = vxpose.xlu0.b32.cont [5/16] 0.0, 128
        %2661 = vxpose.xlu0.b32.cont [6/16] 0.0, 128
        %2662 = vxpose.xlu0.b32.cont [7/16] 0.0, 128
        %2663 = vxpose.xlu0.b32.cont [8/16] 0.0, 128
        %2664 = vxpose.xlu0.b32.cont [9/16] 0.0, 128
        %2665 = vxpose.xlu0.b32.cont [10/16] 0.0, 128
        %2666 = vxpose.xlu0.b32.cont [11/16] 0.0, 128
        %2667 = vxpose.xlu0.b32.cont [12/16] 0.0, 128
        %2668 = vxpose.xlu0.b32.cont [13/16] 0.0, 128
        %2669 = vxpose.xlu0.b32.cont [14/16] 0.0, 128
        %2670 = vxpose.xlu0.b32.cont [15/16] 0.0, 128
        %2671 = vxpose.xlu0.b32.end [16/16] 0.0, 128
        %v2672 = vpop.trf.xlu0
        %v2673 = vpop.trf.xlu0
        %v2674 = vpop.trf.xlu0
        %v2675 = vpop.trf.xlu0
        %v2676 = vpop.trf.xlu0
        %v2677 = vpop.trf.xlu0
        %v2678 = vpop.trf.xlu0
        %v2679 = vpop.trf.xlu0
        %v2680 = vpop.trf.xlu0
        %v2681 = vpop.trf.xlu0
        %v2682 = vpop.trf.xlu0
        %v2683 = vpop.trf.xlu0
        %v2684 = vpop.trf.xlu0
        %v2685 = vpop.trf.xlu0
        %v2686 = vpop.trf.xlu0
        %v2687 = vpop.trf.xlu0
        %2688 = vxpose.xlu0.b32.start [1/16] %v2420, 128
        %2689 = vxpose.xlu0.b32.cont [2/16] %v2421, 128
        %2690 = vxpose.xlu0.b32.cont [3/16] %v2422, 128
        %2691 = vxpose.xlu0.b32.cont [4/16] %v2423, 128
        %2692 = vxpose.xlu0.b32.cont [5/16] 0.0, 128
        %2693 = vxpose.xlu0.b32.cont [6/16] 0.0, 128
        %2694 = vxpose.xlu0.b32.cont [7/16] 0.0, 128
        %2695 = vxpose.xlu0.b32.cont [8/16] 0.0, 128
        %2696 = vxpose.xlu0.b32.cont [9/16] 0.0, 128
        %2697 = vxpose.xlu0.b32.cont [10/16] 0.0, 128
        %2698 = vxpose.xlu0.b32.cont [11/16] 0.0, 128
        %2699 = vxpose.xlu0.b32.cont [12/16] 0.0, 128
        %2700 = vxpose.xlu0.b32.cont [13/16] 0.0, 128
        %2701 = vxpose.xlu0.b32.cont [14/16] 0.0, 128
        %2702 = vxpose.xlu0.b32.cont [15/16] 0.0, 128
        %2703 = vxpose.xlu0.b32.end [16/16] 0.0, 128
        %v2704 = vpop.trf.xlu0
        %v2705 = vpop.trf.xlu0
        %v2706 = vpop.trf.xlu0
        %v2707 = vpop.trf.xlu0
        %v2708 = vpop.trf.xlu0
        %v2709 = vpop.trf.xlu0
        %v2710 = vpop.trf.xlu0
        %v2711 = vpop.trf.xlu0
        %v2712 = vpop.trf.xlu0
        %v2713 = vpop.trf.xlu0
        %v2714 = vpop.trf.xlu0
        %v2715 = vpop.trf.xlu0
        %v2716 = vpop.trf.xlu0
        %v2717 = vpop.trf.xlu0
        %v2718 = vpop.trf.xlu0
        %v2719 = vpop.trf.xlu0
        %2720 = vxpose.xlu0.b32.start [1/16] %v2424, 128
        %2721 = vxpose.xlu0.b32.cont [2/16] %v2425, 128
        %2722 = vxpose.xlu0.b32.cont [3/16] %v2426, 128
        %2723 = vxpose.xlu0.b32.cont [4/16] %v2427, 128
        %2724 = vxpose.xlu0.b32.cont [5/16] 0.0, 128
        %2725 = vxpose.xlu0.b32.cont [6/16] 0.0, 128
        %2726 = vxpose.xlu0.b32.cont [7/16] 0.0, 128
        %2727 = vxpose.xlu0.b32.cont [8/16] 0.0, 128
        %2728 = vxpose.xlu0.b32.cont [9/16] 0.0, 128
        %2729 = vxpose.xlu0.b32.cont [10/16] 0.0, 128
        %2730 = vxpose.xlu0.b32.cont [11/16] 0.0, 128
        %2731 = vxpose.xlu0.b32.cont [12/16] 0.0, 128
        %2732 = vxpose.xlu0.b32.cont [13/16] 0.0, 128
        %2733 = vxpose.xlu0.b32.cont [14/16] 0.0, 128
        %2734 = vxpose.xlu0.b32.cont [15/16] 0.0, 128
        %2735 = vxpose.xlu0.b32.end [16/16] 0.0, 128
        %v2736 = vpop.trf.xlu0
        %v2737 = vpop.trf.xlu0
        %v2738 = vpop.trf.xlu0
        %v2739 = vpop.trf.xlu0
        %v2740 = vpop.trf.xlu0
        %v2741 = vpop.trf.xlu0
        %v2742 = vpop.trf.xlu0
        %v2743 = vpop.trf.xlu0
        %v2744 = vpop.trf.xlu0
        %v2745 = vpop.trf.xlu0
        %v2746 = vpop.trf.xlu0
        %v2747 = vpop.trf.xlu0
        %v2748 = vpop.trf.xlu0
        %v2749 = vpop.trf.xlu0
        %v2750 = vpop.trf.xlu0
        %v2751 = vpop.trf.xlu0
        %v2752 = vpack.c.bf16 %v2640, %v2640
        %v2753 = vpack.c.bf16 %v2672, %v2672
        %v2754 = vpack.c.bf16 %v2704, %v2704
        %v2755 = vpack.c.bf16 %v2736, %v2736
        %v2756 = vpack.c.bf16 %v2577, %v2576
        %v2757 = vpack.c.bf16 %v2579, %v2578
        %v2758 = vpack.c.bf16 %v2581, %v2580
        %v2759 = vpack.c.bf16 %v2583, %v2582
        %v2760 = vpack.c.bf16 %v2585, %v2584
        %v2761 = vpack.c.bf16 %v2587, %v2586
        %v2762 = vpack.c.bf16 %v2589, %v2588
        %v2763 = vpack.c.bf16 %v2591, %v2590
        %v2764 = vpack.c.bf16 %v2609, %v2608
        %v2765 = vpack.c.bf16 %v2611, %v2610
        %v2766 = vpack.c.bf16 %v2613, %v2612
        %v2767 = vpack.c.bf16 %v2615, %v2614
        %v2768 = vpack.c.bf16 %v2617, %v2616
        %v2769 = vpack.c.bf16 %v2619, %v2618
        %v2770 = vpack.c.bf16 %v2621, %v2620
        %v2771 = vpack.c.bf16 %v2623, %v2622
        %v2773 = vsel %vm1626, %v2752, 0
        %2775 = vmatprep.subr.bf16.mxu0 0
        %2776 = vmatpush1.bf16.msra.mxu0 %v2756
        %2777 = vmatprep.subr.bf16.mxu0 0
        %2778 = vmatpush1.bf16.msra.mxu0 %v2757
        %2779 = vmatprep.subr.bf16.mxu0 0
        %2780 = vmatpush1.bf16.msra.mxu0 0
        %2781 = vmatprep.subr.bf16.mxu0 0
        %2782 = vmatpush1.bf16.msra.mxu0 0
        %2783 = vmatprep.subr.bf16.mxu0 0
        %2784 = vmatpush1.bf16.msra.mxu0 0
        %2785 = vmatprep.subr.bf16.mxu0 0
        %2786 = vmatpush1.bf16.msra.mxu0 0
        %2787 = vmatprep.subr.bf16.mxu0 0
        %2788 = vmatpush1.bf16.msra.mxu0 0
        %2789 = vmatprep.subr.bf16.mxu0 0
        %2790 = vmatpush1.bf16.msra.mxu0 0
        %2791 = vmatprep.subr.bf16.mxu0 0
        %2792 = vmatpush1.bf16.msra.mxu0 0
        %2793 = vmatprep.subr.bf16.mxu0 0
        %2794 = vmatpush1.bf16.msra.mxu0 0
        %2795 = vmatprep.subr.bf16.mxu0 0
        %2796 = vmatpush1.bf16.msra.mxu0 0
        %2797 = vmatprep.subr.bf16.mxu0 0
        %2798 = vmatpush1.bf16.msra.mxu0 0
        %2799 = vmatprep.subr.bf16.mxu0 0
        %2800 = vmatpush1.bf16.msra.mxu0 0
        %2801 = vmatprep.subr.bf16.mxu0 0
        %2802 = vmatpush1.bf16.msra.mxu0 0
        %2803 = vmatprep.subr.bf16.mxu0 0
        %2804 = vmatpush1.bf16.msra.mxu0 0
        %2805 = vmatprep.subr.bf16.mxu0 0
        %2806 = vmatpush1.bf16.msra.mxu0 0
        %2807 = vmatprep.mubr.bf16.mxu0 0
        %2808 = vmatmul.mubr.bf16.gmra.mrb[0].mxu0 %v2773
        %v2809 = vpop.f32.mrb[0].mxu0
        %v2810 = vadd.f32 0.0, %v2809
        %v2811 = vpop.f32.mrb[0].mxu0
        %v2812 = vpop.f32.mrb[0].mxu0
        %v2813 = vpop.f32.mrb[0].mxu0
        %2814 = vdwg.mxu0
        %v2816 = vsel %vm1626, %v2753, 0
        %2818 = vmatprep.subr.bf16.mxu0 0
        %2819 = vmatpush1.bf16.msra.mxu0 %v2758
        %2820 = vmatprep.subr.bf16.mxu0 0
        %2821 = vmatpush1.bf16.msra.mxu0 %v2759
        %2822 = vmatprep.subr.bf16.mxu0 0
        %2823 = vmatpush1.bf16.msra.mxu0 0
        %2824 = vmatprep.subr.bf16.mxu0 0
        %2825 = vmatpush1.bf16.msra.mxu0 0
        %2826 = vmatprep.subr.bf16.mxu0 0
        %2827 = vmatpush1.bf16.msra.mxu0 0
        %2828 = vmatprep.subr.bf16.mxu0 0
        %2829 = vmatpush1.bf16.msra.mxu0 0
        %2830 = vmatprep.subr.bf16.mxu0 0
        %2831 = vmatpush1.bf16.msra.mxu0 0
        %2832 = vmatprep.subr.bf16.mxu0 0
        %2833 = vmatpush1.bf16.msra.mxu0 0
        %2834 = vmatprep.subr.bf16.mxu0 0
        %2835 = vmatpush1.bf16.msra.mxu0 0
        %2836 = vmatprep.subr.bf16.mxu0 0
        %2837 = vmatpush1.bf16.msra.mxu0 0
        %2838 = vmatprep.subr.bf16.mxu0 0
        %2839 = vmatpush1.bf16.msra.mxu0 0
        %2840 = vmatprep.subr.bf16.mxu0 0
        %2841 = vmatpush1.bf16.msra.mxu0 0
        %2842 = vmatprep.subr.bf16.mxu0 0
        %2843 = vmatpush1.bf16.msra.mxu0 0
        %2844 = vmatprep.subr.bf16.mxu0 0
        %2845 = vmatpush1.bf16.msra.mxu0 0
        %2846 = vmatprep.subr.bf16.mxu0 0
        %2847 = vmatpush1.bf16.msra.mxu0 0
        %2848 = vmatprep.subr.bf16.mxu0 0
        %2849 = vmatpush1.bf16.msra.mxu0 0
        %2850 = vmatprep.mubr.bf16.mxu0 0
        %2851 = vmatmul.mubr.bf16.gmra.mrb[0].mxu0 %v2816
        %v2852 = vpop.f32.mrb[0].mxu0
        %v2853 = vadd.f32 0.0, %v2852
        %v2854 = vpop.f32.mrb[0].mxu0
        %v2855 = vpop.f32.mrb[0].mxu0
        %v2856 = vpop.f32.mrb[0].mxu0
        %2857 = vdwg.mxu0
        %v2859 = vsel %vm1626, %v2754, 0
        %2861 = vmatprep.subr.bf16.mxu0 0
        %2862 = vmatpush1.bf16.msra.mxu0 %v2760
        %2863 = vmatprep.subr.bf16.mxu0 0
        %2864 = vmatpush1.bf16.msra.mxu0 %v2761
        %2865 = vmatprep.subr.bf16.mxu0 0
        %2866 = vmatpush1.bf16.msra.mxu0 0
        %2867 = vmatprep.subr.bf16.mxu0 0
        %2868 = vmatpush1.bf16.msra.mxu0 0
        %2869 = vmatprep.subr.bf16.mxu0 0
        %2870 = vmatpush1.bf16.msra.mxu0 0
        %2871 = vmatprep.subr.bf16.mxu0 0
        %2872 = vmatpush1.bf16.msra.mxu0 0
        %2873 = vmatprep.subr.bf16.mxu0 0
        %2874 = vmatpush1.bf16.msra.mxu0 0
        %2875 = vmatprep.subr.bf16.mxu0 0
        %2876 = vmatpush1.bf16.msra.mxu0 0
        %2877 = vmatprep.subr.bf16.mxu0 0
        %2878 = vmatpush1.bf16.msra.mxu0 0
        %2879 = vmatprep.subr.bf16.mxu0 0
        %2880 = vmatpush1.bf16.msra.mxu0 0
        %2881 = vmatprep.subr.bf16.mxu0 0
        %2882 = vmatpush1.bf16.msra.mxu0 0
        %2883 = vmatprep.subr.bf16.mxu0 0
        %2884 = vmatpush1.bf16.msra.mxu0 0
        %2885 = vmatprep.subr.bf16.mxu0 0
        %2886 = vmatpush1.bf16.msra.mxu0 0
        %2887 = vmatprep.subr.bf16.mxu0 0
        %2888 = vmatpush1.bf16.msra.mxu0 0
        %2889 = vmatprep.subr.bf16.mxu0 0
        %2890 = vmatpush1.bf16.msra.mxu0 0
        %2891 = vmatprep.subr.bf16.mxu0 0
        %2892 = vmatpush1.bf16.msra.mxu0 0
        %2893 = vmatprep.mubr.bf16.mxu0 0
        %2894 = vmatmul.mubr.bf16.gmra.mrb[0].mxu0 %v2859
        %v2895 = vpop.f32.mrb[0].mxu0
        %v2896 = vadd.f32 0.0, %v2895
        %v2897 = vpop.f32.mrb[0].mxu0
        %v2898 = vpop.f32.mrb[0].mxu0
        %v2899 = vpop.f32.mrb[0].mxu0
        %2900 = vdwg.mxu0
        %v2902 = vsel %vm1626, %v2755, 0
        %2904 = vmatprep.subr.bf16.mxu0 0
        %2905 = vmatpush1.bf16.msra.mxu0 %v2762
        %2906 = vmatprep.subr.bf16.mxu0 0
        %2907 = vmatpush1.bf16.msra.mxu0 %v2763
        %2908 = vmatprep.subr.bf16.mxu0 0
        %2909 = vmatpush1.bf16.msra.mxu0 0
        %2910 = vmatprep.subr.bf16.mxu0 0
        %2911 = vmatpush1.bf16.msra.mxu0 0
        %2912 = vmatprep.subr.bf16.mxu0 0
        %2913 = vmatpush1.bf16.msra.mxu0 0
        %2914 = vmatprep.subr.bf16.mxu0 0
        %2915 = vmatpush1.bf16.msra.mxu0 0
        %2916 = vmatprep.subr.bf16.mxu0 0
        %2917 = vmatpush1.bf16.msra.mxu0 0
        %2918 = vmatprep.subr.bf16.mxu0 0
        %2919 = vmatpush1.bf16.msra.mxu0 0
        %2920 = vmatprep.subr.bf16.mxu0 0
        %2921 = vmatpush1.bf16.msra.mxu0 0
        %2922 = vmatprep.subr.bf16.mxu0 0
        %2923 = vmatpush1.bf16.msra.mxu0 0
        %2924 = vmatprep.subr.bf16.mxu0 0
        %2925 = vmatpush1.bf16.msra.mxu0 0
        %2926 = vmatprep.subr.bf16.mxu0 0
        %2927 = vmatpush1.bf16.msra.mxu0 0
        %2928 = vmatprep.subr.bf16.mxu0 0
        %2929 = vmatpush1.bf16.msra.mxu0 0
        %2930 = vmatprep.subr.bf16.mxu0 0
        %2931 = vmatpush1.bf16.msra.mxu0 0
        %2932 = vmatprep.subr.bf16.mxu0 0
        %2933 = vmatpush1.bf16.msra.mxu0 0
        %2934 = vmatprep.subr.bf16.mxu0 0
        %2935 = vmatpush1.bf16.msra.mxu0 0
        %2936 = vmatprep.mubr.bf16.mxu0 0
        %2937 = vmatmul.mubr.bf16.gmra.mrb[0].mxu0 %v2902
        %v2938 = vpop.f32.mrb[0].mxu0
        %v2939 = vadd.f32 0.0, %v2938
        %v2940 = vpop.f32.mrb[0].mxu0
        %v2941 = vpop.f32.mrb[0].mxu0
        %v2942 = vpop.f32.mrb[0].mxu0
        %2943 = vdwg.mxu0
        %v2944 = vmul.f32 %v2810, 0.17677669
        %v2945 = vmul.f32 %v2853, 0.17677669
        %v2946 = vmul.f32 %v2896, 0.17677669
        %v2947 = vmul.f32 %v2939, 0.17677669
        %v2948 = vsel %vm1813, %v2944, -inf
        %2949 = vmax.xlane.f32.xlu0 %v2948
        %v2950 = vpop.xlane.xlu0 %2949
        %v2951 = vsel %vm1813, %v2945, -inf
        %2952 = vmax.xlane.f32.xlu0 %v2951
        %v2953 = vpop.xlane.xlu0 %2952
        %v2954 = vsel %vm1813, %v2946, -inf
        %2955 = vmax.xlane.f32.xlu0 %v2954
        %v2956 = vpop.xlane.xlu0 %2955
        %v2957 = vsel %vm1813, %v2947, -inf
        %2958 = vmax.xlane.f32.xlu0 %v2957
        %v2959 = vpop.xlane.xlu0 %2958
        %v2960 = vsub.f32 %v2944, %v2950
        %v2961 = vsub.f32 %v2945, %v2953
        %v2962 = vsub.f32 %v2946, %v2956
        %v2963 = vsub.f32 %v2947, %v2959
        %v2964 = vmul.f32 %v2960, 1.442695
        %v2965 = vpow.pop %v2964
        %v2966 = vmul.f32 %v2961, 1.442695
        %v2967 = vpow.pop %v2966
        %v2968 = vmul.f32 %v2962, 1.442695
        %v2969 = vpow.pop %v2968
        %v2970 = vmul.f32 %v2963, 1.442695
        %v2971 = vpow.pop %v2970
        %v2972 = vsel %vm1813, %v2965, 0.0
        %2973 = vadd.xlane.f32.xlu0 %v2972
        %v2974 = vpop.xlane.xlu0 %2973
        %v2975 = vsel %vm1813, %v2967, 0.0
        %2976 = vadd.xlane.f32.xlu0 %v2975
        %v2977 = vpop.xlane.xlu0 %2976
        %v2978 = vsel %vm1813, %v2969, 0.0
        %2979 = vadd.xlane.f32.xlu0 %v2978
        %v2980 = vpop.xlane.xlu0 %2979
        %v2981 = vsel %vm1813, %v2971, 0.0
        %2982 = vadd.xlane.f32.xlu0 %v2981
        %v2983 = vpop.xlane.xlu0 %2982
        %v2984 = vrcp.pop %v2974
        %v2985 = vrcp.pop %v2977
        %v2986 = vrcp.pop %v2980
        %v2987 = vrcp.pop %v2983
        %v2988 = vmul.f32 %v2965, %v2984
        %v2989 = vmul.f32 %v2967, %v2985
        %v2990 = vmul.f32 %v2969, %v2986
        %v2991 = vmul.f32 %v2971, %v2987
        %v2992 = vpack.c.bf16 %v2988, %v2988
        %v2993 = vpack.c.bf16 %v2989, %v2989
        %v2994 = vpack.c.bf16 %v2990, %v2990
        %v2995 = vpack.c.bf16 %v2991, %v2991
        %v2997 = vsel %vm1813, %v2764, 0
        %v3000 = vsel %vm1813, %v2765, 0
        %v3003 = vsel %vm1813, %v2992, 0
        %3005 = vmatprep.subr.bf16.mxu0 0
        %3006 = vmatpush1.bf16.xpose.msra.mxu0 %v3003
        %3007 = vmatprep.subr.bf16.mxu0 0
        %3008 = vmatpush1.bf16.xpose.msra.mxu0 0
        %3009 = vmatprep.subr.bf16.mxu0 0
        %3010 = vmatpush1.bf16.xpose.msra.mxu0 0
        %3011 = vmatprep.subr.bf16.mxu0 0
        %3012 = vmatpush1.bf16.xpose.msra.mxu0 0
        %3013 = vmatprep.subr.bf16.mxu0 0
        %3014 = vmatpush1.bf16.xpose.msra.mxu0 0
        %3015 = vmatprep.subr.bf16.mxu0 0
        %3016 = vmatpush1.bf16.xpose.msra.mxu0 0
        %3017 = vmatprep.subr.bf16.mxu0 0
        %3018 = vmatpush1.bf16.xpose.msra.mxu0 0
        %3019 = vmatprep.subr.bf16.mxu0 0
        %3020 = vmatpush1.bf16.xpose.msra.mxu0 0
        %3021 = vmatprep.subr.bf16.mxu0 0
        %3022 = vmatpush1.bf16.xpose.msra.mxu0 0
        %3023 = vmatprep.subr.bf16.mxu0 0
        %3024 = vmatpush1.bf16.xpose.msra.mxu0 0
        %3025 = vmatprep.subr.bf16.mxu0 0
        %3026 = vmatpush1.bf16.xpose.msra.mxu0 0
        %3027 = vmatprep.subr.bf16.mxu0 0
        %3028 = vmatpush1.bf16.xpose.msra.mxu0 0
        %3029 = vmatprep.subr.bf16.mxu0 0
        %3030 = vmatpush1.bf16.xpose.msra.mxu0 0
        %3031 = vmatprep.subr.bf16.mxu0 0
        %3032 = vmatpush1.bf16.xpose.msra.mxu0 0
        %3033 = vmatprep.subr.bf16.mxu0 0
        %3034 = vmatpush1.bf16.xpose.msra.mxu0 0
        %3035 = vmatprep.subr.bf16.mxu0 0
        %3036 = vmatpush1.bf16.xpose.msra.mxu0 0
        %3037 = vmatprep.mubr.bf16.mxu0 0
        %3038 = vmatmul.mubr.bf16.gmra.mrb[0].mxu0 %v2997
        %v3039 = vpop.f32.mrb[0].mxu0
        %v3040 = vadd.f32 0.0, %v3039
        %v3041 = vpop.f32.mrb[0].mxu0
        %v3042 = vpop.f32.mrb[0].mxu0
        %v3043 = vadd.f32 0.0, %v3042
        %v3044 = vpop.f32.mrb[0].mxu0
        %3045 = vmatprep.mubr.bf16.mxu0 0
        %3046 = vmatmul.mubr.bf16.gmra.mrb[0].mxu0 %v3000
        %v3047 = vpop.f32.mrb[0].mxu0
        %v3048 = vadd.f32 0.0, %v3047
        %v3049 = vpop.f32.mrb[0].mxu0
        %v3050 = vpop.f32.mrb[0].mxu0
        %v3051 = vadd.f32 0.0, %v3050
        %v3052 = vpop.f32.mrb[0].mxu0
        %3053 = vdwg.mxu0
        %v3055 = vsel %vm1813, %v2766, 0
        %v3058 = vsel %vm1813, %v2767, 0
        %v3061 = vsel %vm1813, %v2993, 0
        %3063 = vmatprep.subr.bf16.mxu0 0
        %3064 = vmatpush1.bf16.xpose.msra.mxu0 %v3061
        %3065 = vmatprep.subr.bf16.mxu0 0
        %3066 = vmatpush1.bf16.xpose.msra.mxu0 0
        %3067 = vmatprep.subr.bf16.mxu0 0
        %3068 = vmatpush1.bf16.xpose.msra.mxu0 0
        %3069 = vmatprep.subr.bf16.mxu0 0
        %3070 = vmatpush1.bf16.xpose.msra.mxu0 0
        %3071 = vmatprep.subr.bf16.mxu0 0
        %3072 = vmatpush1.bf16.xpose.msra.mxu0 0
        %3073 = vmatprep.subr.bf16.mxu0 0
        %3074 = vmatpush1.bf16.xpose.msra.mxu0 0
        %3075 = vmatprep.subr.bf16.mxu0 0
        %3076 = vmatpush1.bf16.xpose.msra.mxu0 0
        %3077 = vmatprep.subr.bf16.mxu0 0
        %3078 = vmatpush1.bf16.xpose.msra.mxu0 0
        %3079 = vmatprep.subr.bf16.mxu0 0
        %3080 = vmatpush1.bf16.xpose.msra.mxu0 0
        %3081 = vmatprep.subr.bf16.mxu0 0
        %3082 = vmatpush1.bf16.xpose.msra.mxu0 0
        %3083 = vmatprep.subr.bf16.mxu0 0
        %3084 = vmatpush1.bf16.xpose.msra.mxu0 0
        %3085 = vmatprep.subr.bf16.mxu0 0
        %3086 = vmatpush1.bf16.xpose.msra.mxu0 0
        %3087 = vmatprep.subr.bf16.mxu0 0
        %3088 = vmatpush1.bf16.xpose.msra.mxu0 0
        %3089 = vmatprep.subr.bf16.mxu0 0
        %3090 = vmatpush1.bf16.xpose.msra.mxu0 0
        %3091 = vmatprep.subr.bf16.mxu0 0
        %3092 = vmatpush1.bf16.xpose.msra.mxu0 0
        %3093 = vmatprep.subr.bf16.mxu0 0
        %3094 = vmatpush1.bf16.xpose.msra.mxu0 0
        %3095 = vmatprep.mubr.bf16.mxu0 0
        %3096 = vmatmul.mubr.bf16.gmra.mrb[0].mxu0 %v3055
        %v3097 = vpop.f32.mrb[0].mxu0
        %v3098 = vadd.f32 0.0, %v3097
        %v3099 = vpop.f32.mrb[0].mxu0
        %v3100 = vpop.f32.mrb[0].mxu0
        %v3101 = vadd.f32 0.0, %v3100
        %v3102 = vpop.f32.mrb[0].mxu0
        %3103 = vmatprep.mubr.bf16.mxu0 0
        %3104 = vmatmul.mubr.bf16.gmra.mrb[0].mxu0 %v3058
        %v3105 = vpop.f32.mrb[0].mxu0
        %v3106 = vadd.f32 0.0, %v3105
        %v3107 = vpop.f32.mrb[0].mxu0
        %v3108 = vpop.f32.mrb[0].mxu0
        %v3109 = vadd.f32 0.0, %v3108
        %v3110 = vpop.f32.mrb[0].mxu0
        %3111 = vdwg.mxu0
        %v3113 = vsel %vm1813, %v2768, 0
        %v3116 = vsel %vm1813, %v2769, 0
        %v3119 = vsel %vm1813, %v2994, 0
        %3121 = vmatprep.subr.bf16.mxu0 0
        %3122 = vmatpush1.bf16.xpose.msra.mxu0 %v3119
        %3123 = vmatprep.subr.bf16.mxu0 0
        %3124 = vmatpush1.bf16.xpose.msra.mxu0 0
        %3125 = vmatprep.subr.bf16.mxu0 0
        %3126 = vmatpush1.bf16.xpose.msra.mxu0 0
        %3127 = vmatprep.subr.bf16.mxu0 0
        %3128 = vmatpush1.bf16.xpose.msra.mxu0 0
        %3129 = vmatprep.subr.bf16.mxu0 0
        %3130 = vmatpush1.bf16.xpose.msra.mxu0 0
        %3131 = vmatprep.subr.bf16.mxu0 0
        %3132 = vmatpush1.bf16.xpose.msra.mxu0 0
        %3133 = vmatprep.subr.bf16.mxu0 0
        %3134 = vmatpush1.bf16.xpose.msra.mxu0 0
        %3135 = vmatprep.subr.bf16.mxu0 0
        %3136 = vmatpush1.bf16.xpose.msra.mxu0 0
        %3137 = vmatprep.subr.bf16.mxu0 0
        %3138 = vmatpush1.bf16.xpose.msra.mxu0 0
        %3139 = vmatprep.subr.bf16.mxu0 0
        %3140 = vmatpush1.bf16.xpose.msra.mxu0 0
        %3141 = vmatprep.subr.bf16.mxu0 0
        %3142 = vmatpush1.bf16.xpose.msra.mxu0 0
        %3143 = vmatprep.subr.bf16.mxu0 0
        %3144 = vmatpush1.bf16.xpose.msra.mxu0 0
        %3145 = vmatprep.subr.bf16.mxu0 0
        %3146 = vmatpush1.bf16.xpose.msra.mxu0 0
        %3147 = vmatprep.subr.bf16.mxu0 0
        %3148 = vmatpush1.bf16.xpose.msra.mxu0 0
        %3149 = vmatprep.subr.bf16.mxu0 0
        %3150 = vmatpush1.bf16.xpose.msra.mxu0 0
        %3151 = vmatprep.subr.bf16.mxu0 0
        %3152 = vmatpush1.bf16.xpose.msra.mxu0 0
        %3153 = vmatprep.mubr.bf16.mxu0 0
        %3154 = vmatmul.mubr.bf16.gmra.mrb[0].mxu0 %v3113
        %v3155 = vpop.f32.mrb[0].mxu0
        %v3156 = vadd.f32 0.0, %v3155
        %v3157 = vpop.f32.mrb[0].mxu0
        %v3158 = vpop.f32.mrb[0].mxu0
        %v3159 = vadd.f32 0.0, %v3158
        %v3160 = vpop.f32.mrb[0].mxu0
        %3161 = vmatprep.mubr.bf16.mxu0 0
        %3162 = vmatmul.mubr.bf16.gmra.mrb[0].mxu0 %v3116
        %v3163 = vpop.f32.mrb[0].mxu0
        %v3164 = vadd.f32 0.0, %v3163
        %v3165 = vpop.f32.mrb[0].mxu0
        %v3166 = vpop.f32.mrb[0].mxu0
        %v3167 = vadd.f32 0.0, %v3166
        %v3168 = vpop.f32.mrb[0].mxu0
        %3169 = vdwg.mxu0
        %v3171 = vsel %vm1813, %v2770, 0
        %v3174 = vsel %vm1813, %v2771, 0
        %v3177 = vsel %vm1813, %v2995, 0
        %3179 = vmatprep.subr.bf16.mxu0 0
        %3180 = vmatpush1.bf16.xpose.msra.mxu0 %v3177
        %3181 = vmatprep.subr.bf16.mxu0 0
        %3182 = vmatpush1.bf16.xpose.msra.mxu0 0
        %3183 = vmatprep.subr.bf16.mxu0 0
        %3184 = vmatpush1.bf16.xpose.msra.mxu0 0
        %3185 = vmatprep.subr.bf16.mxu0 0
        %3186 = vmatpush1.bf16.xpose.msra.mxu0 0
        %3187 = vmatprep.subr.bf16.mxu0 0
        %3188 = vmatpush1.bf16.xpose.msra.mxu0 0
        %3189 = vmatprep.subr.bf16.mxu0 0
        %3190 = vmatpush1.bf16.xpose.msra.mxu0 0
        %3191 = vmatprep.subr.bf16.mxu0 0
        %3192 = vmatpush1.bf16.xpose.msra.mxu0 0
        %3193 = vmatprep.subr.bf16.mxu0 0
        %3194 = vmatpush1.bf16.xpose.msra.mxu0 0
        %3195 = vmatprep.subr.bf16.mxu0 0
        %3196 = vmatpush1.bf16.xpose.msra.mxu0 0
        %3197 = vmatprep.subr.bf16.mxu0 0
        %3198 = vmatpush1.bf16.xpose.msra.mxu0 0
        %3199 = vmatprep.subr.bf16.mxu0 0
        %3200 = vmatpush1.bf16.xpose.msra.mxu0 0
        %3201 = vmatprep.subr.bf16.mxu0 0
        %3202 = vmatpush1.bf16.xpose.msra.mxu0 0
        %3203 = vmatprep.subr.bf16.mxu0 0
        %3204 = vmatpush1.bf16.xpose.msra.mxu0 0
        %3205 = vmatprep.subr.bf16.mxu0 0
        %3206 = vmatpush1.bf16.xpose.msra.mxu0 0
        %3207 = vmatprep.subr.bf16.mxu0 0
        %3208 = vmatpush1.bf16.xpose.msra.mxu0 0
        %3209 = vmatprep.subr.bf16.mxu0 0
        %3210 = vmatpush1.bf16.xpose.msra.mxu0 0
        %3211 = vmatprep.mubr.bf16.mxu0 0
        %3212 = vmatmul.mubr.bf16.gmra.mrb[0].mxu0 %v3171
        %v3213 = vpop.f32.mrb[0].mxu0
        %v3214 = vadd.f32 0.0, %v3213
        %v3215 = vpop.f32.mrb[0].mxu0
        %v3216 = vpop.f32.mrb[0].mxu0
        %v3217 = vadd.f32 0.0, %v3216
        %v3218 = vpop.f32.mrb[0].mxu0
        %3219 = vmatprep.mubr.bf16.mxu0 0
        %3220 = vmatmul.mubr.bf16.gmra.mrb[0].mxu0 %v3174
        %v3221 = vpop.f32.mrb[0].mxu0
        %v3222 = vadd.f32 0.0, %v3221
        %v3223 = vpop.f32.mrb[0].mxu0
        %v3224 = vpop.f32.mrb[0].mxu0
        %v3225 = vadd.f32 0.0, %v3224
        %v3226 = vpop.f32.mrb[0].mxu0
        %3227 = vdwg.mxu0
        %3228 = vxpose.xlu0.b32.start [1/16] %v3040, 128
        %3229 = vxpose.xlu0.b32.cont [2/16] %v3043, 128
        %3230 = vxpose.xlu0.b32.cont [3/16] %v3048, 128
        %3231 = vxpose.xlu0.b32.cont [4/16] %v3051, 128
        %3232 = vxpose.xlu0.b32.cont [5/16] %v3098, 128
        %3233 = vxpose.xlu0.b32.cont [6/16] %v3101, 128
        %3234 = vxpose.xlu0.b32.cont [7/16] %v3106, 128
        %3235 = vxpose.xlu0.b32.cont [8/16] %v3109, 128
        %3236 = vxpose.xlu0.b32.cont [9/16] %v3156, 128
        %3237 = vxpose.xlu0.b32.cont [10/16] %v3159, 128
        %3238 = vxpose.xlu0.b32.cont [11/16] %v3164, 128
        %3239 = vxpose.xlu0.b32.cont [12/16] %v3167, 128
        %3240 = vxpose.xlu0.b32.cont [13/16] %v3214, 128
        %3241 = vxpose.xlu0.b32.cont [14/16] %v3217, 128
        %3242 = vxpose.xlu0.b32.cont [15/16] %v3222, 128
        %3243 = vxpose.xlu0.b32.end [16/16] %v3225, 128
        %v3244 = vpop.trf.xlu0
        %v3245 = vpop.trf.xlu0
        %v3246 = vpop.trf.xlu0
        %v3247 = vpop.trf.xlu0
        %v3248 = vpop.trf.xlu0
        %v3249 = vpop.trf.xlu0
        %v3250 = vpop.trf.xlu0
        %v3251 = vpop.trf.xlu0
        %v3252 = vpop.trf.xlu0
        %v3253 = vpop.trf.xlu0
        %v3254 = vpop.trf.xlu0
        %v3255 = vpop.trf.xlu0
        %v3256 = vpop.trf.xlu0
        %v3257 = vpop.trf.xlu0
        %v3258 = vpop.trf.xlu0
        %v3259 = vpop.trf.xlu0
        %v3260 = vpack.c.bf16 %v3244, %v3244
        %v3262 = vlaneseq
        %v3263 = vshrl.u32 %v3262, 7
        %v3264 = vsub.s32 0, %v3263
        %v3265 = vrot.slane %v2300, %v3264
        %v3283 = vunpack.c.l.b16 %v2284
        %v3284 = vunpack.c.l.b16 %v2285
        %v3285 = vunpack.c.l.b16 %v2286
        %v3286 = vunpack.c.l.b16 %v2287
        %v3287 = vunpack.c.l.b16 %v2288
        %v3288 = vunpack.c.l.b16 %v2289
        %v3289 = vunpack.c.l.b16 %v2290
        %v3290 = vunpack.c.l.b16 %v2291
        %v3291 = vunpack.c.l.b16 %v2292
        %v3292 = vunpack.c.l.b16 %v2293
        %v3293 = vunpack.c.l.b16 %v2294
        %v3294 = vunpack.c.l.b16 %v2295
        %v3295 = vunpack.c.l.b16 %v2296
        %v3296 = vunpack.c.l.b16 %v2297
        %v3297 = vunpack.c.l.b16 %v2298
        %v3298 = vunpack.c.l.b16 %v2299
        %v3299 = vpack.c.b16 %v3284, %v3283
        %v3300 = vpack.c.b16 %v3286, %v3285
        %v3301 = vpack.c.b16 %v3288, %v3287
        %v3302 = vpack.c.b16 %v3290, %v3289
        %v3303 = vpack.c.b16 %v3292, %v3291
        %v3304 = vpack.c.b16 %v3294, %v3293
        %v3305 = vpack.c.b16 %v3296, %v3295
        %v3306 = vpack.c.b16 %v3298, %v3297
        %3315 = vmatprep.subr.bf16.mxu0 0
        %3316 = vmatpush1.bf16.msra.mxu0 %v3299
        %3317 = vmatprep.subr.bf16.mxu0 0
        %3318 = vmatpush1.bf16.msra.mxu0 %v3300
        %3319 = vmatprep.subr.bf16.mxu0 0
        %3320 = vmatpush1.bf16.msra.mxu0 %v3301
        %3321 = vmatprep.subr.bf16.mxu0 0
        %3322 = vmatpush1.bf16.msra.mxu0 %v3302
        %3323 = vmatprep.subr.bf16.mxu0 0
        %3324 = vmatpush1.bf16.msra.mxu0 %v3303
        %3325 = vmatprep.subr.bf16.mxu0 0
        %3326 = vmatpush1.bf16.msra.mxu0 %v3304
        %3327 = vmatprep.subr.bf16.mxu0 0
        %3328 = vmatpush1.bf16.msra.mxu0 %v3305
        %3329 = vmatprep.subr.bf16.mxu0 0
        %3330 = vmatpush1.bf16.msra.mxu0 %v3306
        %3331 = vmatprep.subr.bf16.mxu0 0
        %3332 = vmatpush1.bf16.msra.mxu0 0
        %3333 = vmatprep.subr.bf16.mxu0 0
        %3334 = vmatpush1.bf16.msra.mxu0 0
        %3335 = vmatprep.subr.bf16.mxu0 0
        %3336 = vmatpush1.bf16.msra.mxu0 0
        %3337 = vmatprep.subr.bf16.mxu0 0
        %3338 = vmatpush1.bf16.msra.mxu0 0
        %3339 = vmatprep.subr.bf16.mxu0 0
        %3340 = vmatpush1.bf16.msra.mxu0 0
        %3341 = vmatprep.subr.bf16.mxu0 0
        %3342 = vmatpush1.bf16.msra.mxu0 0
        %3343 = vmatprep.subr.bf16.mxu0 0
        %3344 = vmatpush1.bf16.msra.mxu0 0
        %3345 = vmatprep.subr.bf16.mxu0 0
        %3346 = vmatpush1.bf16.msra.mxu0 0
        %3347 = vmatprep.mubr.bf16.mxu0 0
        %3348 = vmatmul.mubr.bf16.gmra.mrb[0].mxu0 %v3260
        %v3349 = vpop.f32.mrb[0].mxu0
        %v3350 = vadd.f32 %v3265, %v3349
        %v3351 = vpop.f32.mrb[0].mxu0
        %v3352 = vpop.f32.mrb[0].mxu0
        %v3353 = vpop.f32.mrb[0].mxu0
        %3354 = vdwg.mxu0
        %v3355 = vadd.f32 %v2249, %v3350
        %v3356 = vld [vmem:[%s1069] sm:$0x1]
        %v3357 = vld [vmem:[%s1072] sm:$0x1]
        %3358 = vadd.xlane.f32.xlu0 %v3355
        %v3359 = vpop.xlane.xlu0 %3358
        %v3360 = vmul.f32 %v3359, %v2226
        %v3361 = vsub.f32 %v3355, %v3360
        %v3362 = vmul.f32 %v3361, %v3361
        %3363 = vadd.xlane.f32.xlu0 %v3362
        %v3364 = vpop.xlane.xlu0 %3363
        %v3365 = vmul.f32 %v3364, %v2226
        %v3366 = vadd.f32 %v3365, 1e-05
        %v3367 = vrsqrt.pop %v3366
        %v3368 = vmul.f32 %v3361, %v3367
        %v3370 = vlaneseq
        %v3371 = vshrl.u32 %v3370, 7
        %v3372 = vsub.s32 0, %v3371
        %v3373 = vrot.slane %v3356, %v3372
        %v3375 = vmul.f32 %v3368, %v3373
        %v3377 = vlaneseq
        %v3378 = vshrl.u32 %v3377, 7
        %v3379 = vsub.s32 0, %v3378
        %v3380 = vrot.slane %v3357, %v3379
        %v3382 = vadd.f32 %v3375, %v3380
        %v3383 = vld [vmem:[%s1077] sm:$0xff]
        %v3384 = vld [vmem:[%s1077 + $0x8] sm:$0xff]
        %v3385 = vld [vmem:[%s1077 + $0x10] sm:$0xff]
        %v3386 = vld [vmem:[%s1077 + $0x18] sm:$0xff]
        %v3387 = vld [vmem:[%s1077 + $0x20] sm:$0xff]
        %v3388 = vld [vmem:[%s1077 + $0x28] sm:$0xff]
        %v3389 = vld [vmem:[%s1077 + $0x30] sm:$0xff]
        %v3390 = vld [vmem:[%s1077 + $0x38] sm:$0xff]
        %v3391 = vld [vmem:[%s1077 + $0x40] sm:$0xff]
        %v3392 = vld [vmem:[%s1077 + $0x48] sm:$0xff]
        %v3393 = vld [vmem:[%s1077 + $0x50] sm:$0xff]
        %v3394 = vld [vmem:[%s1077 + $0x58] sm:$0xff]
        %v3395 = vld [vmem:[%s1077 + $0x60] sm:$0xff]
        %v3396 = vld [vmem:[%s1077 + $0x68] sm:$0xff]
        %v3397 = vld [vmem:[%s1077 + $0x70] sm:$0xff]
        %v3398 = vld [vmem:[%s1077 + $0x78] sm:$0xff]
        %v3399 = vld [vmem:[%s1081] sm:$0x3]
        %v3400 = vld [vmem:[%s1086] sm:$0xf]
        %v3401 = vld [vmem:[%s1086 + $0x4] sm:$0xf]
        %v3402 = vld [vmem:[%s1086 + $0x8] sm:$0xf]
        %v3403 = vld [vmem:[%s1086 + $0xc] sm:$0xf]
        %v3404 = vld [vmem:[%s1086 + $0x10] sm:$0xf]
        %v3405 = vld [vmem:[%s1086 + $0x14] sm:$0xf]
        %v3406 = vld [vmem:[%s1086 + $0x18] sm:$0xf]
        %v3407 = vld [vmem:[%s1086 + $0x1c] sm:$0xf]
        %v3408 = vld [vmem:[%s1086 + $0x20] sm:$0xf]
        %v3409 = vld [vmem:[%s1086 + $0x24] sm:$0xf]
        %v3410 = vld [vmem:[%s1086 + $0x28] sm:$0xf]
        %v3411 = vld [vmem:[%s1086 + $0x2c] sm:$0xf]
        %v3412 = vld [vmem:[%s1086 + $0x30] sm:$0xf]
        %v3413 = vld [vmem:[%s1086 + $0x34] sm:$0xf]
        %v3414 = vld [vmem:[%s1086 + $0x38] sm:$0xf]
        %v3415 = vld [vmem:[%s1086 + $0x3c] sm:$0xf]
        %v3416 = vld [vmem:[%s1086 + $0x40] sm:$0xf]
        %v3417 = vld [vmem:[%s1086 + $0x44] sm:$0xf]
        %v3418 = vld [vmem:[%s1086 + $0x48] sm:$0xf]
        %v3419 = vld [vmem:[%s1086 + $0x4c] sm:$0xf]
        %v3420 = vld [vmem:[%s1086 + $0x50] sm:$0xf]
        %v3421 = vld [vmem:[%s1086 + $0x54] sm:$0xf]
        %v3422 = vld [vmem:[%s1086 + $0x58] sm:$0xf]
        %v3423 = vld [vmem:[%s1086 + $0x5c] sm:$0xf]
        %v3424 = vld [vmem:[%s1086 + $0x60] sm:$0xf]
        %v3425 = vld [vmem:[%s1086 + $0x64] sm:$0xf]
        %v3426 = vld [vmem:[%s1086 + $0x68] sm:$0xf]
        %v3427 = vld [vmem:[%s1086 + $0x6c] sm:$0xf]
        %v3428 = vld [vmem:[%s1086 + $0x70] sm:$0xf]
        %v3429 = vld [vmem:[%s1086 + $0x74] sm:$0xf]
        %v3430 = vld [vmem:[%s1086 + $0x78] sm:$0xf]
        %v3431 = vld [vmem:[%s1086 + $0x7c] sm:$0xf]
        %v3432 = vld [vmem:[%s1089] sm:$0x1]
        %v3433 = vpack.c.bf16 %v3382, %v3382
        %v3435 = vlaneseq
        %v3436 = vshrl.u32 %v3435, 7
        %v3437 = vsub.s32 0, %v3436
        %v3438 = vrot.slane %v3399, %v3437
        %v3439 = vlaneseq
        %v3440 = vshrl.u32 %v3439, 7
        %v3441 = vsub.s32 1, %v3440
        %v3442 = vrot.slane %v3399, %v3441
        %v3461 = vunpack.c.l.b16 %v3383
        %v3462 = vunpack.c.h.b16 %v3383
        %v3463 = vunpack.c.l.b16 %v3384
        %v3464 = vunpack.c.h.b16 %v3384
        %v3465 = vunpack.c.l.b16 %v3385
        %v3466 = vunpack.c.h.b16 %v3385
        %v3467 = vunpack.c.l.b16 %v3386
        %v3468 = vunpack.c.h.b16 %v3386
        %v3469 = vunpack.c.l.b16 %v3387
        %v3470 = vunpack.c.h.b16 %v3387
        %v3471 = vunpack.c.l.b16 %v3388
        %v3472 = vunpack.c.h.b16 %v3388
        %v3473 = vunpack.c.l.b16 %v3389
        %v3474 = vunpack.c.h.b16 %v3389
        %v3475 = vunpack.c.l.b16 %v3390
        %v3476 = vunpack.c.h.b16 %v3390
        %v3477 = vunpack.c.l.b16 %v3391
        %v3478 = vunpack.c.h.b16 %v3391
        %v3479 = vunpack.c.l.b16 %v3392
        %v3480 = vunpack.c.h.b16 %v3392
        %v3481 = vunpack.c.l.b16 %v3393
        %v3482 = vunpack.c.h.b16 %v3393
        %v3483 = vunpack.c.l.b16 %v3394
        %v3484 = vunpack.c.h.b16 %v3394
        %v3485 = vunpack.c.l.b16 %v3395
        %v3486 = vunpack.c.h.b16 %v3395
        %v3487 = vunpack.c.l.b16 %v3396
        %v3488 = vunpack.c.h.b16 %v3396
        %v3489 = vunpack.c.l.b16 %v3397
        %v3490 = vunpack.c.h.b16 %v3397
        %v3491 = vunpack.c.l.b16 %v3398
        %v3492 = vunpack.c.h.b16 %v3398
        %v3493 = vpack.c.b16 %v3463, %v3461
        %v3494 = vpack.c.b16 %v3464, %v3462
        %v3495 = vpack.c.b16 %v3467, %v3465
        %v3496 = vpack.c.b16 %v3468, %v3466
        %v3497 = vpack.c.b16 %v3471, %v3469
        %v3498 = vpack.c.b16 %v3472, %v3470
        %v3499 = vpack.c.b16 %v3475, %v3473
        %v3500 = vpack.c.b16 %v3476, %v3474
        %v3501 = vpack.c.b16 %v3479, %v3477
        %v3502 = vpack.c.b16 %v3480, %v3478
        %v3503 = vpack.c.b16 %v3483, %v3481
        %v3504 = vpack.c.b16 %v3484, %v3482
        %v3505 = vpack.c.b16 %v3487, %v3485
        %v3506 = vpack.c.b16 %v3488, %v3486
        %v3507 = vpack.c.b16 %v3491, %v3489
        %v3508 = vpack.c.b16 %v3492, %v3490
        %3525 = vmatprep.subr.bf16.mxu0 %v3494
        %3526 = vmatpush1.bf16.msra.mxu0 %v3493
        %3527 = vmatprep.subr.bf16.mxu0 %v3496
        %3528 = vmatpush1.bf16.msra.mxu0 %v3495
        %3529 = vmatprep.subr.bf16.mxu0 %v3498
        %3530 = vmatpush1.bf16.msra.mxu0 %v3497
        %3531 = vmatprep.subr.bf16.mxu0 %v3500
        %3532 = vmatpush1.bf16.msra.mxu0 %v3499
        %3533 = vmatprep.subr.bf16.mxu0 %v3502
        %3534 = vmatpush1.bf16.msra.mxu0 %v3501
        %3535 = vmatprep.subr.bf16.mxu0 %v3504
        %3536 = vmatpush1.bf16.msra.mxu0 %v3503
        %3537 = vmatprep.subr.bf16.mxu0 %v3506
        %3538 = vmatpush1.bf16.msra.mxu0 %v3505
        %3539 = vmatprep.subr.bf16.mxu0 %v3508
        %3540 = vmatpush1.bf16.msra.mxu0 %v3507
        %3541 = vmatprep.subr.bf16.mxu0 0
        %3542 = vmatpush1.bf16.msra.mxu0 0
        %3543 = vmatprep.subr.bf16.mxu0 0
        %3544 = vmatpush1.bf16.msra.mxu0 0
        %3545 = vmatprep.subr.bf16.mxu0 0
        %3546 = vmatpush1.bf16.msra.mxu0 0
        %3547 = vmatprep.subr.bf16.mxu0 0
        %3548 = vmatpush1.bf16.msra.mxu0 0
        %3549 = vmatprep.subr.bf16.mxu0 0
        %3550 = vmatpush1.bf16.msra.mxu0 0
        %3551 = vmatprep.subr.bf16.mxu0 0
        %3552 = vmatpush1.bf16.msra.mxu0 0
        %3553 = vmatprep.subr.bf16.mxu0 0
        %3554 = vmatpush1.bf16.msra.mxu0 0
        %3555 = vmatprep.subr.bf16.mxu0 0
        %3556 = vmatpush1.bf16.msra.mxu0 0
        %3557 = vmatprep.mubr.bf16.mxu0 0
        %3558 = vmatmul.mubr.bf16.gmra.mrb[0].mxu0 %v3433
        %v3559 = vpop.f32.mrb[0].mxu0
        %v3560 = vadd.f32 %v3438, %v3559
        %v3561 = vpop.f32.mrb[0].mxu0
        %v3562 = vadd.f32 %v3442, %v3561
        %v3563 = vpop.f32.mrb[0].mxu0
        %v3564 = vpop.f32.mrb[0].mxu0
        %3565 = vdwg.mxu0
        %v3566 = vmax.f32 %v3560, 0.0
        %v3567 = vmax.f32 %v3562, 0.0
        %v3568 = vpack.c.bf16 %v3566, %v3566
        %v3569 = vpack.c.bf16 %v3567, %v3567
        %v3571 = vlaneseq
        %v3572 = vshrl.u32 %v3571, 7
        %v3573 = vsub.s32 0, %v3572
        %v3574 = vrot.slane %v3432, %v3573
        %v3608 = vunpack.c.l.b16 %v3400
        %v3609 = vunpack.c.l.b16 %v3401
        %v3610 = vunpack.c.l.b16 %v3402
        %v3611 = vunpack.c.l.b16 %v3403
        %v3612 = vunpack.c.l.b16 %v3404
        %v3613 = vunpack.c.l.b16 %v3405
        %v3614 = vunpack.c.l.b16 %v3406
        %v3615 = vunpack.c.l.b16 %v3407
        %v3616 = vunpack.c.l.b16 %v3408
        %v3617 = vunpack.c.l.b16 %v3409
        %v3618 = vunpack.c.l.b16 %v3410
        %v3619 = vunpack.c.l.b16 %v3411
        %v3620 = vunpack.c.l.b16 %v3412
        %v3621 = vunpack.c.l.b16 %v3413
        %v3622 = vunpack.c.l.b16 %v3414
        %v3623 = vunpack.c.l.b16 %v3415
        %v3624 = vunpack.c.l.b16 %v3416
        %v3625 = vunpack.c.l.b16 %v3417
        %v3626 = vunpack.c.l.b16 %v3418
        %v3627 = vunpack.c.l.b16 %v3419
        %v3628 = vunpack.c.l.b16 %v3420
        %v3629 = vunpack.c.l.b16 %v3421
        %v3630 = vunpack.c.l.b16 %v3422
        %v3631 = vunpack.c.l.b16 %v3423
        %v3632 = vunpack.c.l.b16 %v3424
        %v3633 = vunpack.c.l.b16 %v3425
        %v3634 = vunpack.c.l.b16 %v3426
        %v3635 = vunpack.c.l.b16 %v3427
        %v3636 = vunpack.c.l.b16 %v3428
        %v3637 = vunpack.c.l.b16 %v3429
        %v3638 = vunpack.c.l.b16 %v3430
        %v3639 = vunpack.c.l.b16 %v3431
        %v3640 = vpack.c.b16 %v3609, %v3608
        %v3641 = vpack.c.b16 %v3611, %v3610
        %v3642 = vpack.c.b16 %v3613, %v3612
        %v3643 = vpack.c.b16 %v3615, %v3614
        %v3644 = vpack.c.b16 %v3617, %v3616
        %v3645 = vpack.c.b16 %v3619, %v3618
        %v3646 = vpack.c.b16 %v3621, %v3620
        %v3647 = vpack.c.b16 %v3623, %v3622
        %v3648 = vpack.c.b16 %v3625, %v3624
        %v3649 = vpack.c.b16 %v3627, %v3626
        %v3650 = vpack.c.b16 %v3629, %v3628
        %v3651 = vpack.c.b16 %v3631, %v3630
        %v3652 = vpack.c.b16 %v3633, %v3632
        %v3653 = vpack.c.b16 %v3635, %v3634
        %v3654 = vpack.c.b16 %v3637, %v3636
        %v3655 = vpack.c.b16 %v3639, %v3638
        %3672 = vmatprep.subr.bf16.mxu0 0
        %3673 = vmatpush1.bf16.msra.mxu0 %v3640
        %3674 = vmatprep.subr.bf16.mxu0 0
        %3675 = vmatpush1.bf16.msra.mxu0 %v3641
        %3676 = vmatprep.subr.bf16.mxu0 0
        %3677 = vmatpush1.bf16.msra.mxu0 %v3642
        %3678 = vmatprep.subr.bf16.mxu0 0
        %3679 = vmatpush1.bf16.msra.mxu0 %v3643
        %3680 = vmatprep.subr.bf16.mxu0 0
        %3681 = vmatpush1.bf16.msra.mxu0 %v3644
        %3682 = vmatprep.subr.bf16.mxu0 0
        %3683 = vmatpush1.bf16.msra.mxu0 %v3645
        %3684 = vmatprep.subr.bf16.mxu0 0
        %3685 = vmatpush1.bf16.msra.mxu0 %v3646
        %3686 = vmatprep.subr.bf16.mxu0 0
        %3687 = vmatpush1.bf16.msra.mxu0 %v3647
        %3688 = vmatprep.subr.bf16.mxu0 0
        %3689 = vmatpush1.bf16.msra.mxu0 %v3648
        %3690 = vmatprep.subr.bf16.mxu0 0
        %3691 = vmatpush1.bf16.msra.mxu0 %v3649
        %3692 = vmatprep.subr.bf16.mxu0 0
        %3693 = vmatpush1.bf16.msra.mxu0 %v3650
        %3694 = vmatprep.subr.bf16.mxu0 0
        %3695 = vmatpush1.bf16.msra.mxu0 %v3651
        %3696 = vmatprep.subr.bf16.mxu0 0
        %3697 = vmatpush1.bf16.msra.mxu0 %v3652
        %3698 = vmatprep.subr.bf16.mxu0 0
        %3699 = vmatpush1.bf16.msra.mxu0 %v3653
        %3700 = vmatprep.subr.bf16.mxu0 0
        %3701 = vmatpush1.bf16.msra.mxu0 %v3654
        %3702 = vmatprep.subr.bf16.mxu0 0
        %3703 = vmatpush1.bf16.msra.mxu0 %v3655
        %3704 = vmatprep.mubr.bf16.mxu0 %v3569
        %3705 = vmatmul.mubr.bf16.gmra.mrb[0].mxu0 %v3568
        %v3706 = vpop.f32.mrb[0].mxu0
        %v3707 = vadd.f32 %v3574, %v3706
        %v3708 = vpop.f32.mrb[0].mxu0
        %v3709 = vpop.f32.mrb[0].mxu0
        %v3710 = vpop.f32.mrb[0].mxu0
        %3711 = vdwg.mxu0
        %v3712 = vadd.f32 %v3382, %v3707
        %v3713 = vld [vmem:[%s1092] sm:$0x1]
        %v3714 = vld [vmem:[%s1095] sm:$0x1]
        %3715 = vadd.xlane.f32.xlu0 %v3712
        %v3716 = vpop.xlane.xlu0 %3715
        %v3717 = vmul.f32 %v3716, %v2226
        %v3718 = vsub.f32 %v3712, %v3717
        %v3719 = vmul.f32 %v3718, %v3718
        %3720 = vadd.xlane.f32.xlu0 %v3719
        %v3721 = vpop.xlane.xlu0 %3720
        %v3722 = vmul.f32 %v3721, %v2226
        %v3723 = vadd.f32 %v3722, 1e-05
        %v3724 = vrsqrt.pop %v3723
        %v3725 = vmul.f32 %v3718, %v3724
        %v3727 = vlaneseq
        %v3728 = vshrl.u32 %v3727, 7
        %v3729 = vsub.s32 0, %v3728
        %v3730 = vrot.slane %v3713, %v3729
        %v3732 = vmul.f32 %v3725, %v3730
        %v3734 = vlaneseq
        %v3735 = vshrl.u32 %v3734, 7
        %v3736 = vsub.s32 0, %v3735
        %v3737 = vrot.slane %v3714, %v3736
        %v3739 = vadd.f32 %v3732, %v3737
        %3740 = vst [vmem:[#allocation2] sm:$0xff] %v3739
        %p3741 = scmp.eq.s32.totalorder %s47, 1
        // Predicated region
        $region125: #{transformer_forward.3} parent=107 // pred_check
          %p3742 = pneg %p3741
        $region126: #{transformer_forward.3} parent=107 // pred_check_branch
          %3744 = sbr.rel (%p3742) target = $region128
        $region127: #{transformer_forward.3} parent=107 // pred_region
          %3745 = vst [vmem:[%s1025] sm:$0xff] %v3739
        $region128: #{transformer_forward.3} parent=107 // pred_fallthru
          _
        %s3746 = sand.u32 %s634, 1
        %s3747 = scalar_lea.sflag [#allocation5], %s3746
        %s3748 = sand.u32 %s634, 1
        %s3749 = smul.addr %s3748, 8
        %s3750 = scalar_lea.vmem [#allocation9], %s3749
        // Predicated region
        $region129: #{transformer_forward.3} parent=107 // pred_check
          %p3751 = pneg %p644
        $region130: #{transformer_forward.3} parent=107 // pred_check_branch
          %3753 = sbr.rel (%p3751) target = $region132
        $region131: #{transformer_forward.3} parent=107 // pred_region
          %s3755 = ssub.s32 128, 128
          %3756 = vsyncadd %s3747, %s3755
          %s3757 = smul.addr %s46, 128
          %s3758 = scalar_lea.hbm %s22, %s3757
          %s3760 = sshll.u32 %s3750, 4
          %s3761 = int_to_ptr.vmem [resolvable:$true] %s3760
          %3763 = dma.vmem_to_hbm [thread:$0]  %s3761, 128, %s3758, %s3747
        $region132: #{transformer_forward.3} parent=107 // pred_fallthru
          _
      $region108: #{transformer_forward.3} parent=5 // pred_fallthru
        _
      %p3764 = scmp.le.s32.totalorder 2, %s37
      // Predicated region
      $region133: #{transformer_forward.3} parent=5 // pred_check
        %p3765 = pneg %p3764
      $region134: #{transformer_forward.3} parent=5 // pred_check_branch
        %3767 = sbr.rel (%p3765) target = $region136
      $region135: #{transformer_forward.3} parent=5 // pred_region
        %s3768 = ssub.s32 %s37, 2
        // Predicated region
        $region137: #{transformer_forward.3} parent=135 // pred_check
          %p3769 = pneg %p650
        $region138: #{transformer_forward.3} parent=135 // pred_check_branch
          %3771 = sbr.rel (%p3769) target = $region140
        $region139: #{transformer_forward.3} parent=135 // pred_region
          %s3772 = sand.u32 %s635, 1
          %s3773 = scalar_lea.sflag [#allocation5], %s3772
          %s3774 = sand.u32 %s635, 1
          %s3775 = smul.addr %s3774, 8
          %s3776 = scalar_lea.vmem [#allocation9], %s3775
          %3777 = dma.done %s3773, 128
        $region140: #{transformer_forward.3} parent=135 // pred_fallthru
          _
      $region136: #{transformer_forward.3} parent=5 // pred_fallthru
        _
    $region6: #{transformer_forward.3} parent=1 // loop_footer
      %s41 = sadd.s32 1, %s37
    $region7: #{transformer_forward.3} parent=1 // loop_footer_branch
      %36 = sbr.rel target = $region3
    $region8: #{transformer_forward.3} parent=1 // loop_exit
      _
    %3778 = vsyncpa [#allocation4], 1
    %s3779 = scalar_lea.sflag [#allocation4], 1
    %3780 = vsyncpa %s3779, 1
    %3781 = vsyncpa [#allocation7], 1
    %s3782 = scalar_lea.sflag [#allocation7], 1
    %3783 = vsyncpa %s3782, 1
    %3784 = vsyncpa [#allocation5], 1
    %s3785 = scalar_lea.sflag [#allocation5], 1
    %3786 = vsyncpa %s3785, 1

</llo_original>
